<compile_context>
chip_gen: v5e
topology: v5e:2x2
jax: 0.10.0
libtpu: 0.0.40
codegen_flags: <defaults>
</compile_context>

<pallas_src>
import jax
import jax.numpy as jnp
from jax import lax
from jax.experimental import pallas as pl
from jax.experimental.pallas import tpu as pltpu

jax.config.update("jax_default_matmul_precision", "highest")


# ----------------------------------------------------------------------------------
# shared math helpers (used both inside the Pallas kernel and in the XLA reference)
# ----------------------------------------------------------------------------------
def _lrelu(x, slope):
    return jnp.where(x > 0, x, slope * x)


def _sigmoid(x):
    return 1.0 / (1.0 + jnp.exp(-x))


def _gelu_tanh(x):
    c = 0.7978845608028654  # sqrt(2/pi)
    return 0.5 * x * (1.0 + jnp.tanh(c * (x + 0.044715 * x * x * x)))


def _round_up(n, m):
    return ((n + m - 1) // m) * m


# ----------------------------------------------------------------------------------
# weight packing: stack 2-D arrays along rows into a few lane-grouped slabs; each piece
# padded to a multiple of 8 rows so in-kernel static slices are sublane-tile aligned.
# ----------------------------------------------------------------------------------
def _pack_rows(entries):
    cols = int(entries[0][1].shape[1])
    offs, parts, row = {}, [], 0
    for name, a in entries:
        a = jnp.asarray(a, jnp.float32)
        assert a.ndim == 2 and a.shape[1] == cols, (name, a.shape)
        r = int(a.shape[0])
        offs[name] = (row, r)
        rp = _round_up(r, 8)
        if rp > r:
            a = jnp.concatenate([a, jnp.zeros((rp - r, cols), jnp.float32)], axis=0)
        parts.append(a)
        row += rp
    return jnp.concatenate(parts, axis=0), offs


# ----------------------------------------------------------------------------------
# fused Vision_Block kernel (one grid step == one batch element)
# ----------------------------------------------------------------------------------
def _make_vision_kernel(C, H, W, hidden_pad, offs):
    HW = H * W
    HP = hidden_pad

    def kernel(x_ref, w8_ref, w4_ref, w16_ref, w24_ref, w9_ref, b_ref, dwm_ref, o_ref):
        f32 = jnp.float32

        def sl(ref, name):
            s, r = offs[name]
            return ref[s:s + r, :]

        def mm(a, b):
            return jnp.dot(a, b, preferred_element_type=f32)

        dwm = dwm_ref[...]                       # (9, HW) 0/1 border masks, loaded once

        def dwconv3x3(x, w9, bias=None):
            """Depthwise 3x3 (stride 1, pad 1) on (Cb, HW) via XLU lane rolls + masks."""
            acc = x * w9[:, 4:5]                 # center tap, no roll / no mask
            for kh in range(3):
                for kw in range(3):
                    t = kh * 3 + kw
                    dh, dw = kh - 1, kw - 1
                    if dh == 0 and dw == 0:
                        continue
                    shift = (-(dh * W + dw)) % HW
                    shifted = pltpu.roll(x, shift=shift, axis=1)
                    acc = acc + (shifted * dwm[t:t + 1, :]) * w9[:, t:t + 1]
            if bias is not None:
                acc = acc + bias
            return acc

        def layernorm_c(x, w, b):
            """WithBias LayerNorm over the channel (sublane) axis; w, b are (Cb, 1)."""
            mu = jnp.mean(x, axis=0, keepdims=True)
            var = jnp.mean((x - mu) * (x - mu), axis=0, keepdims=True)
            return (x - mu) * lax.rsqrt(var + 1e-5) * w + b

        def afdu(x, pfx):
            wd = sl(w8_ref, pfx + ".wd"); bd = sl(b_ref, pfx + ".bd")
            we = sl(w4_ref, pfx + ".we"); be = sl(b_ref, pfx + ".be")
            w1a = sl(w8_ref, pfx + ".w1a")
            w1b = sl(w8_ref, pfx + ".w1b"); b1 = sl(b_ref, pfx + ".b1")
            wca1 = sl(w8_ref, pfx + ".wca1"); bca1 = sl(b_ref, pfx + ".bca1")
            wca2 = sl(w4_ref, pfx + ".wca2"); bca2 = sl(b_ref, pfx + ".bca2")
            wdw = sl(w9_ref, pfx + ".wdw"); bdw = sl(b_ref, pfx + ".bdw")
            wpw = sl(w8_ref, pfx + ".wpw"); bpw = sl(b_ref, pfx + ".bpw")

            thumb = _lrelu(mm(wd, x) + bd, 0.01)                         # deduction
            expd = mm(we, thumb) + be                                    # expansion
            c1 = _lrelu(mm(w1a, expd) + mm(w1b, x) + b1, 0.01)           # conv1(concat)
            pooled = jnp.mean(c1, axis=1, keepdims=True)                 # (C, 1)
            sq = jnp.maximum(mm(wca1, pooled) + bca1, 0.0)
            ca = _sigmoid(mm(wca2, sq) + bca2)
            att = c1 * ca                                                # channel attention
            dw = dwconv3x3(att, wdw, bdw)
            pw = mm(wpw, dw) + bpw                                       # conv3 pointwise
            return pw + x                                                # AFDU residual

        def mamba_block(x):
            lnw = sl(b_ref, "mamba.lnw"); lnb = sl(b_ref, "mamba.lnb")
            w1 = sl(w8_ref, "mamba.w1"); b1 = sl(b_ref, "mamba.b1")
            w2 = sl(w16_ref, "mamba.w2"); b2 = sl(b_ref, "mamba.b2")
            xn = layernorm_c(x, lnw, lnb)
            # TODO(synk): Mamba SSM (external `mamba_ssm` dependency) treated as identity.
            xm = layernorm_c(xn + x, lnw, lnb)
            h = _gelu_tanh(mm(w1, xm) + b1)
            return mm(w2, h) + b2

        def transformer(x):
            n1w = sl(b_ref, "tr.n1w"); n1b = sl(b_ref, "tr.n1b")
            n2w = sl(b_ref, "tr.n2w"); n2b = sl(b_ref, "tr.n2b")
            wqkv = sl(w8_ref, "tr.wqkv")
            wdwqkv = sl(w9_ref, "tr.wdwqkv")
            scale = sl(b_ref, "tr.scale")                 # per-channel temperature (C,1)
            mask = sl(w8_ref, "tr.mask")                  # (C,C) block-diag 0 / -1e30
            wpo = sl(w8_ref, "tr.wpo")
            wpi = sl(w8_ref, "tr.wpi")                    # (2*HP, C), zero padded
            wdwffn = sl(w9_ref, "tr.wdwffn")              # (2*HP, 9), zero padded
            wff = sl(w24_ref, "tr.wff")                   # (C, HP), zero padded

            # ---- x + Attention(norm1(x)): all heads as one masked (C,C) softmax
            xn = layernorm_c(x, n1w, n1b)
            qkv = dwconv3x3(mm(wqkv, xn), wdwqkv)         # (3C, HW)
            q, k, v = qkv[:C], qkv[C:2 * C], qkv[2 * C:3 * C]
            qn = q * lax.rsqrt(jnp.maximum(jnp.sum(q * q, axis=1, keepdims=True), 1e-24))
            kn = k * lax.rsqrt(jnp.maximum(jnp.sum(k * k, axis=1, keepdims=True), 1e-24))
            logits = lax.dot_general(qn, kn, (((1,), (1,)), ((), ())),
                                     preferred_element_type=f32)         # (C, C)
            logits = logits * scale + mask
            logits = logits - jnp.max(logits, axis=-1, keepdims=True)
            p = jnp.exp(logits)
            attn = p / jnp.sum(p, axis=-1, keepdims=True)
            x1 = x + mm(wpo, mm(attn, v))

            # ---- x + FFN(norm2(x)): gated-dwconv feed-forward
            xn2 = layernorm_c(x1, n2w, n2b)
            h = dwconv3x3(mm(wpi, xn2), wdwffn)                          # (2*HP, HW)
            g = _gelu_tanh(h[:HP]) * h[HP:2 * HP]
            return x1 + mm(wff, g)

        x = x_ref[0]                                   # (C, HW); also the outer identity
        a1 = _lrelu(afdu(x, "afdu1"), 0.2)
        xm = mamba_block(a1) + x                       # + identity
        a2 = _lrelu(afdu(xm, "afdu2"), 0.2)
        out = transformer(a2) + xm                     # + identity2
        o_ref[0] = out.astype(o_ref.dtype)

    return kernel


# ----------------------------------------------------------------------------------
# wrapper: pack weights into slabs, build masks, launch one fused pallas_call
# ----------------------------------------------------------------------------------
def vision_block_forward(x_nchw, params, num_heads):
    B, C, H, W = x_nchw.shape
    HW = H * W
    ch = C // num_heads
    hidden = int(params["tr"]["wff"].shape[1])
    hp = _round_up(hidden, 8)

    col = lambda v: jnp.asarray(v, jnp.float32).reshape(-1, 1)

    def pad_rows(a, rows):
        a = jnp.asarray(a, jnp.float32)
        if rows == a.shape[0]:
            return a
        return jnp.concatenate(
            [a, jnp.zeros((rows - a.shape[0], a.shape[1]), jnp.float32)], axis=0)

    tr = params["tr"]
    temperature = jnp.asarray(tr["temperature"], jnp.float32)
    scale_col = jnp.repeat(temperature, ch).reshape(C, 1)               # per-channel temp
    head_id = jnp.arange(C) // ch
    attn_mask = jnp.where(head_id[:, None] == head_id[None, :], 0.0, -1e30).astype(jnp.float32)

    wpi = jnp.asarray(tr["wpi"], jnp.float32)
    wdwffn = jnp.asarray(tr["wdwffn"], jnp.float32)
    wpi_pad = jnp.concatenate([pad_rows(wpi[:hidden], hp), pad_rows(wpi[hidden:], hp)], axis=0)
    wdwffn_pad = jnp.concatenate(
        [pad_rows(wdwffn[:hidden], hp), pad_rows(wdwffn[hidden:], hp)], axis=0)
    wff_pad = jnp.concatenate(
        [jnp.asarray(tr["wff"], jnp.float32), jnp.zeros((C, hp - hidden), jnp.float32)], axis=1)

    # ---- pack the ~45 tiny parameters into 6 slabs (few DMAs, aligned static slices)
    e8, e4, e16, e24, e9, eb = [], [], [], [], [], []
    for pfx in ("afdu1", "afdu2"):
        p = params[pfx]
        w1 = jnp.asarray(p["w1"], jnp.float32)
        e8 += [(pfx + ".wd", p["wd"]), (pfx + ".w1a", w1[:, :C]), (pfx + ".w1b", w1[:, C:]),
               (pfx + ".wca1", p["wca1"]), (pfx + ".wpw", p["wpw"])]
        e4 += [(pfx + ".we", p["we"]), (pfx + ".wca2", p["wca2"])]
        e9 += [(pfx + ".wdw", p["wdw"])]
        eb += [(pfx + ".bd", col(p["bd"])), (pfx + ".be", col(p["be"])),
               (pfx + ".b1", col(p["b1"])), (pfx + ".bca1", col(p["bca1"])),
               (pfx + ".bca2", col(p["bca2"])), (pfx + ".bdw", col(p["bdw"])),
               (pfx + ".bpw", col(p["bpw"]))]
    pm = params["mamba"]
    e8 += [("mamba.w1", pm["w1"])]
    e16 += [("mamba.w2", pm["w2"])]
    eb += [("mamba.lnw", col(pm["lnw"])), ("mamba.lnb", col(pm["lnb"])),
           ("mamba.b1", col(pm["b1"])), ("mamba.b2", col(pm["b2"]))]
    e8 += [("tr.wqkv", tr["wqkv"]), ("tr.wpo", tr["wpo"]),
           ("tr.mask", attn_mask), ("tr.wpi", wpi_pad)]
    e24 += [("tr.wff", wff_pad)]
    e9 += [("tr.wdwqkv", tr["wdwqkv"]), ("tr.wdwffn", wdwffn_pad)]
    eb += [("tr.n1w", col(tr["n1w"])), ("tr.n1b", col(tr["n1b"])),
           ("tr.n2w", col(tr["n2w"])), ("tr.n2b", col(tr["n2b"])),
           ("tr.scale", scale_col)]

    s8, o8 = _pack_rows(e8)
    s4, o4 = _pack_rows(e4)
    s16, o16 = _pack_rows(e16)
    s24, o24 = _pack_rows(e24)
    s9, o9 = _pack_rows(e9)
    sb, ob = _pack_rows(eb)
    offs = {**o8, **o4, **o16, **o24, **o9, **ob}

    # ---- precomputed 3x3 border masks (one row per tap), shared by every dwconv
    hh = jnp.arange(HW, dtype=jnp.int32) // W
    ww = jnp.arange(HW, dtype=jnp.int32) % W
    rows = []
    for kh in range(3):
        for kw in range(3):
            dh, dw = kh - 1, kw - 1
            ok = (hh + dh >= 0) & (hh + dh <= H - 1) & (ww + dw >= 0) & (ww + dw <= W - 1)
            rows.append(ok.astype(jnp.float32))
    dwmask = jnp.stack(rows, axis=0)                                     # (9, HW)

    x3 = jnp.asarray(x_nchw, jnp.float32).reshape(B, C, HW)              # lane-dense, no transpose

    kernel = _make_vision_kernel(C, H, W, hp, offs)

    def const_spec(a):
        return pl.BlockSpec(a.shape, lambda n: (0, 0))

    out = pl.pallas_call(
        kernel,
        out_shape=jax.ShapeDtypeStruct((B, C, HW), jnp.float32),
        grid=(B,),
        in_specs=[pl.BlockSpec((1, C, HW), lambda n: (n, 0, 0))]
                 + [const_spec(a) for a in (s8, s4, s16, s24, s9, sb, dwmask)],
        out_specs=pl.BlockSpec((1, C, HW), lambda n: (n, 0, 0)),
        compiler_params=pltpu.CompilerParams(dimension_semantics=("parallel",)),
    )(x3, s8, s4, s16, s24, s9, sb, dwmask)
    return out.reshape(B, C, H, W)


# ----------------------------------------------------------------------------------
# plain-JAX (XLA) reference with identical semantics (unpacked params, lax.conv dwconv)
# ----------------------------------------------------------------------------------
def _ref_conv1x1(x, w, b=None):                       # x (B,Cin,L); w (Cout,Cin)
    y = jnp.einsum('oc,bcl->bol', w, x)
    if b is not None:
        y = y + b.reshape(1, -1, 1)
    return y


def _ref_dwconv3x3(x, w, b=None):                     # x (B,C,H,W); w (C,9)
    C = x.shape[1]
    y = lax.conv_general_dilated(
        x, w.reshape(C, 1, 3, 3), window_strides=(1, 1), padding=((1, 1), (1, 1)),
        dimension_numbers=('NCHW', 'OIHW', 'NCHW'), feature_group_count=C)
    if b is not None:
        y = y + b.reshape(1, C, 1, 1)
    return y


def _ref_layernorm_c(x, w, b):                        # x (B,C,L); LN over C
    mu = jnp.mean(x, axis=1, keepdims=True)
    var = jnp.mean((x - mu) ** 2, axis=1, keepdims=True)
    return (x - mu) * lax.rsqrt(var + 1e-5) * w.reshape(1, -1, 1) + b.reshape(1, -1, 1)


def _ref_afdu(x, p):
    B, C, H, W = x.shape
    L = H * W
    xf = x.reshape(B, C, L)
    thumb = _lrelu(_ref_conv1x1(xf, p["wd"], p["bd"]), 0.01)
    expd = _ref_conv1x1(thumb, p["we"], p["be"])
    cat = jnp.concatenate([expd, xf], axis=1)
    c1 = _lrelu(_ref_conv1x1(cat, p["w1"], p["b1"]), 0.01)
    pooled = jnp.mean(c1, axis=2, keepdims=True)
    sq = jnp.maximum(_ref_conv1x1(pooled, p["wca1"], p["bca1"]), 0.0)
    ca = _sigmoid(_ref_conv1x1(sq, p["wca2"], p["bca2"]))
    att = (c1 * ca).reshape(B, C, H, W)
    dw = _ref_dwconv3x3(att, p["wdw"], p["bdw"])
    pw = _ref_conv1x1(dw.reshape(B, C, L), p["wpw"], p["bpw"])
    return pw.reshape(B, C, H, W) + x


def _ref_mamba(x, p):
    B, C, H, W = x.shape
    xf = x.reshape(B, C, H * W)
    xn = _ref_layernorm_c(xf, p["lnw"], p["lnb"])
    # TODO(synk): Mamba SSM treated as identity (external dependency; undefined in spec).
    xm = _ref_layernorm_c(xn + xf, p["lnw"], p["lnb"])
    h = _gelu_tanh(_ref_conv1x1(xm, p["w1"], p["b1"]))
    y = _ref_conv1x1(h, p["w2"], p["b2"])
    return y.reshape(B, C, H, W)


def _ref_transformer(x, p, num_heads):
    B, C, H, W = x.shape
    L = H * W
    ch = C // num_heads
    xf = x.reshape(B, C, L)
    xn = _ref_layernorm_c(xf, p["n1w"], p["n1b"])
    qkv = _ref_conv1x1(xn, p["wqkv"]).reshape(B, 3 * C, H, W)
    qkv = _ref_dwconv3x3(qkv, p["wdwqkv"]).reshape(B, 3 * C, L)
    q, k, v = qkv[:, :C], qkv[:, C:2 * C], qkv[:, 2 * C:]
    q = q.reshape(B, num_heads, ch, L)
    k = k.reshape(B, num_heads, ch, L)
    v = v.reshape(B, num_heads, ch, L)
    q = q * lax.rsqrt(jnp.maximum(jnp.sum(q * q, axis=-1, keepdims=True), 1e-24))
    k = k * lax.rsqrt(jnp.maximum(jnp.sum(k * k, axis=-1, keepdims=True), 1e-24))
    logits = jnp.einsum('bhcl,bhdl->bhcd', q, k) * p["temperature"].reshape(1, num_heads, 1, 1)
    attn = jax.nn.softmax(logits, axis=-1)
    out = jnp.einsum('bhcd,bhdl->bhcl', attn, v).reshape(B, C, L)
    x1 = xf + _ref_conv1x1(out, p["wpo"])

    xn2 = _ref_layernorm_c(x1, p["n2w"], p["n2b"])
    hidden = p["wff"].shape[1]
    h = _ref_conv1x1(xn2, p["wpi"]).reshape(B, 2 * hidden, H, W)
    h = _ref_dwconv3x3(h, p["wdwffn"]).reshape(B, 2 * hidden, L)
    g = _gelu_tanh(h[:, :hidden]) * h[:, hidden:]
    ffn = _ref_conv1x1(g, p["wff"])
    return (x1 + ffn).reshape(B, C, H, W)


def vision_block_reference(x, params, num_heads):
    identity = x
    x = _lrelu(_ref_afdu(x, params["afdu1"]), 0.2)
    x = _ref_mamba(x, params["mamba"]) + identity
    identity2 = x
    x = _lrelu(_ref_afdu(x, params["afdu2"]), 0.2)
    x = _ref_transformer(x, params["tr"], num_heads) + identity2
    return x


# ----------------------------------------------------------------------------------
# deterministic synthetic parameters (torch Conv2d/Linear (out,in) weight convention)
# ----------------------------------------------------------------------------------
def make_params(key, C, num_heads, hidden):
    ks = iter(jax.random.split(key, 64))

    def nrm(shape, s=0.1):
        return s * jax.random.normal(next(ks), shape, dtype=jnp.float32)

    def afdu():
        return dict(
            wd=nrm((C // 2, C)), bd=nrm((C // 2,)),
            we=nrm((C, C // 2)), be=nrm((C,)),
            w1=nrm((C, 2 * C)), b1=nrm((C,)),
            wca1=nrm((C // 2, C)), bca1=nrm((C // 2,)),
            wca2=nrm((C, C // 2)), bca2=nrm((C,)),
            wdw=nrm((C, 9)), bdw=nrm((C,)),
            wpw=nrm((C, C)), bpw=nrm((C,)),
        )

    mamba = dict(
        lnw=1.0 + nrm((C,)), lnb=nrm((C,)),
        w1=nrm((2 * C, C)), b1=nrm((2 * C,)),
        w2=nrm((C, 2 * C)), b2=nrm((C,)),
    )
    tr = dict(
        n1w=1.0 + nrm((C,)), n1b=nrm((C,)),
        n2w=1.0 + nrm((C,)), n2b=nrm((C,)),
        wqkv=nrm((3 * C, C)),
        wdwqkv=nrm((3 * C, 9)),
        temperature=1.0 + nrm((num_heads,)),
        wpo=nrm((C, C)),
        wpi=nrm((2 * hidden, C)),
        wdwffn=nrm((2 * hidden, 9)),
        wff=nrm((C, hidden)),
    )
    return dict(afdu1=afdu(), afdu2=afdu(), mamba=mamba, tr=tr)


if __name__ == "__main__":
    key = jax.random.PRNGKey(0)
    k_x, k_p = jax.random.split(key)

    B, C, H, W = 2, 8, 16, 16
    NUM_HEADS = 4                       # TransformerBlock default
    HIDDEN = int(C * 2.66)              # FeedForward hidden_features (=21, padded to 24 in-kernel)

    x = jax.random.normal(k_x, (B, C, H, W), dtype=jnp.float32)
    params = make_params(k_p, C, NUM_HEADS, HIDDEN)

    out = jax.block_until_ready(vision_block_forward(x, params, NUM_HEADS))
    ref = jax.block_until_ready(vision_block_reference(x, params, NUM_HEADS))

    assert out.shape == (B, C, H, W), out.shape
    err = float(jnp.max(jnp.abs(out - ref)))
    assert jnp.allclose(out, ref, atol=1e-3, rtol=1e-3), \
        "mismatch vs XLA reference: max abs err = %e" % err
    print("KERNEL_OK")
</pallas_src>

<mosaic_0001>
module attributes {stable_mosaic.version = 11 : i64} {
  func.func @kernel(%arg0: i32, %arg1: memref<1x8x256xf32, #tpu.memory_space<vmem>>, %arg2: memref<184x8xf32, #tpu.memory_space<vmem>>, %arg3: memref<32x4xf32, #tpu.memory_space<vmem>>, %arg4: memref<8x16xf32, #tpu.memory_space<vmem>>, %arg5: memref<8x24xf32, #tpu.memory_space<vmem>>, %arg6: memref<88x9xf32, #tpu.memory_space<vmem>>, %arg7: memref<192x1xf32, #tpu.memory_space<vmem>>, %arg8: memref<9x256xf32, #tpu.memory_space<vmem>>, %arg9: memref<1x8x256xf32, #tpu.memory_space<vmem>>) attributes {dimension_semantics = [#tpu.dimension_semantics<parallel>], iteration_bounds = array<i64: 2>, scalar_prefetch = 0 : i64, scratch_operands = 0 : i64, tpu.core_type = #tpu.core_type<tc>, window_params = [{transform_indices = @transform_0, window_bounds = array<i64: 1, 8, 256>}, {pipeline_mode = #tpu.pipeline_mode<synchronous>, transform_indices = @transform_1, window_bounds = array<i64: 184, 8>}, {pipeline_mode = #tpu.pipeline_mode<synchronous>, transform_indices = @transform_2, window_bounds = array<i64: 32, 4>}, {pipeline_mode = #tpu.pipeline_mode<synchronous>, transform_indices = @transform_3, window_bounds = array<i64: 8, 16>}, {pipeline_mode = #tpu.pipeline_mode<synchronous>, transform_indices = @transform_4, window_bounds = array<i64: 8, 24>}, {pipeline_mode = #tpu.pipeline_mode<synchronous>, transform_indices = @transform_5, window_bounds = array<i64: 88, 9>}, {pipeline_mode = #tpu.pipeline_mode<synchronous>, transform_indices = @transform_6, window_bounds = array<i64: 192, 1>}, {pipeline_mode = #tpu.pipeline_mode<synchronous>, transform_indices = @transform_7, window_bounds = array<i64: 9, 256>}, {transform_indices = @transform_8, window_bounds = array<i64: 1, 8, 256>}]} {
    %c0 = arith.constant 0 : index
    %c0_0 = arith.constant 0 : index
    %0 = vector.load %arg8[%c0, %c0_0] : memref<9x256xf32, #tpu.memory_space<vmem>>, vector<9x256xf32>
    %c0_1 = arith.constant 0 : index
    %c0_2 = arith.constant 0 : index
    %c0_3 = arith.constant 0 : index
    %1 = vector.load %arg1[%c0_1, %c0_2, %c0_3] : memref<1x8x256xf32, #tpu.memory_space<vmem>>, vector<1x8x256xf32>
    %2 = vector.shape_cast %1 : vector<1x8x256xf32> to vector<8x256xf32>
    %c0_4 = arith.constant 0 : index
    %c0_5 = arith.constant 0 : index
    %3 = vector.load %arg2[%c0_4, %c0_5] : memref<184x8xf32, #tpu.memory_space<vmem>>, vector<4x8xf32>
    %c0_6 = arith.constant 0 : index
    %c0_7 = arith.constant 0 : index
    %4 = vector.load %arg7[%c0_6, %c0_7] : memref<192x1xf32, #tpu.memory_space<vmem>>, vector<4x1xf32>
    %c0_8 = arith.constant 0 : index
    %c0_9 = arith.constant 0 : index
    %5 = vector.load %arg3[%c0_8, %c0_9] : memref<32x4xf32, #tpu.memory_space<vmem>>, vector<8x4xf32>
    %c8 = arith.constant 8 : index
    %c0_10 = arith.constant 0 : index
    %6 = vector.load %arg7[%c8, %c0_10] : memref<192x1xf32, #tpu.memory_space<vmem>>, vector<8x1xf32>
    %c8_11 = arith.constant 8 : index
    %c0_12 = arith.constant 0 : index
    %7 = vector.load %arg2[%c8_11, %c0_12] : memref<184x8xf32, #tpu.memory_space<vmem>>, vector<8x8xf32>
    %c16 = arith.constant 16 : index
    %c0_13 = arith.constant 0 : index
    %8 = vector.load %arg2[%c16, %c0_13] : memref<184x8xf32, #tpu.memory_space<vmem>>, vector<8x8xf32>
    %c16_14 = arith.constant 16 : index
    %c0_15 = arith.constant 0 : index
    %9 = vector.load %arg7[%c16_14, %c0_15] : memref<192x1xf32, #tpu.memory_space<vmem>>, vector<8x1xf32>
    %c24 = arith.constant 24 : index
    %c0_16 = arith.constant 0 : index
    %10 = vector.load %arg2[%c24, %c0_16] : memref<184x8xf32, #tpu.memory_space<vmem>>, vector<4x8xf32>
    %c24_17 = arith.constant 24 : index
    %c0_18 = arith.constant 0 : index
    %11 = vector.load %arg7[%c24_17, %c0_18] : memref<192x1xf32, #tpu.memory_space<vmem>>, vector<4x1xf32>
    %c8_19 = arith.constant 8 : index
    %c0_20 = arith.constant 0 : index
    %12 = vector.load %arg3[%c8_19, %c0_20] : memref<32x4xf32, #tpu.memory_space<vmem>>, vector<8x4xf32>
    %c32 = arith.constant 32 : index
    %c0_21 = arith.constant 0 : index
    %13 = vector.load %arg7[%c32, %c0_21] : memref<192x1xf32, #tpu.memory_space<vmem>>, vector<8x1xf32>
    %c0_22 = arith.constant 0 : index
    %c0_23 = arith.constant 0 : index
    %14 = vector.load %arg6[%c0_22, %c0_23] : memref<88x9xf32, #tpu.memory_space<vmem>>, vector<8x9xf32>
    %c40 = arith.constant 40 : index
    %c0_24 = arith.constant 0 : index
    %15 = vector.load %arg7[%c40, %c0_24] : memref<192x1xf32, #tpu.memory_space<vmem>>, vector<8x1xf32>
    %c32_25 = arith.constant 32 : index
    %c0_26 = arith.constant 0 : index
    %16 = vector.load %arg2[%c32_25, %c0_26] : memref<184x8xf32, #tpu.memory_space<vmem>>, vector<8x8xf32>
    %c48 = arith.constant 48 : index
    %c0_27 = arith.constant 0 : index
    %17 = vector.load %arg7[%c48, %c0_27] : memref<192x1xf32, #tpu.memory_space<vmem>>, vector<8x1xf32>
    %cst = arith.constant dense<0.000000e+00> : vector<4x256xf32>
    %18 = tpu.matmul %3, %2, %cst {dimension_numbers = #tpu.dot_dimension_numbers<[1], [0], [0], [1], [0, 0, 1, 1], [], []>, precision = #tpu.contract_precision<fp32>} : vector<4x8xf32>, vector<8x256xf32>, vector<4x256xf32> -> vector<4x256xf32>
    %19 = vector.broadcast %4 : vector<4x1xf32> to vector<4x256xf32>
    %20 = arith.addf %18, %19 : vector<4x256xf32>
    %cst_28 = arith.constant 0.000000e+00 : f32
    %21 = vector.broadcast %cst_28 : f32 to vector<4x256xf32>
    %22 = arith.cmpf ogt, %20, %21 : vector<4x256xf32>
    %cst_29 = arith.constant 0.00999999977 : f32
    %23 = vector.broadcast %cst_29 : f32 to vector<4x256xf32>
    %24 = arith.mulf %23, %20 : vector<4x256xf32>
    %25 = arith.select %22, %20, %24 : vector<4x256xi1>, vector<4x256xf32>
    %cst_30 = arith.constant dense<0.000000e+00> : vector<8x256xf32>
    %26 = tpu.matmul %5, %25, %cst_30 {dimension_numbers = #tpu.dot_dimension_numbers<[1], [0], [0], [1], [0, 0, 1, 1], [], []>, precision = #tpu.contract_precision<fp32>} : vector<8x4xf32>, vector<4x256xf32>, vector<8x256xf32> -> vector<8x256xf32>
    %27 = vector.broadcast %6 : vector<8x1xf32> to vector<8x256xf32>
    %28 = arith.addf %26, %27 : vector<8x256xf32>
    %cst_31 = arith.constant dense<0.000000e+00> : vector<8x256xf32>
    %29 = tpu.matmul %7, %28, %cst_31 {dimension_numbers = #tpu.dot_dimension_numbers<[1], [0], [0], [1], [0, 0, 1, 1], [], []>, precision = #tpu.contract_precision<fp32>} : vector<8x8xf32>, vector<8x256xf32>, vector<8x256xf32> -> vector<8x256xf32>
    %cst_32 = arith.constant dense<0.000000e+00> : vector<8x256xf32>
    %30 = tpu.matmul %8, %2, %cst_32 {dimension_numbers = #tpu.dot_dimension_numbers<[1], [0], [0], [1], [0, 0, 1, 1], [], []>, precision = #tpu.contract_precision<fp32>} : vector<8x8xf32>, vector<8x256xf32>, vector<8x256xf32> -> vector<8x256xf32>
    %31 = arith.addf %29, %30 : vector<8x256xf32>
    %32 = vector.broadcast %9 : vector<8x1xf32> to vector<8x256xf32>
    %33 = arith.addf %31, %32 : vector<8x256xf32>
    %cst_33 = arith.constant 0.000000e+00 : f32
    %34 = vector.broadcast %cst_33 : f32 to vector<8x256xf32>
    %35 = arith.cmpf ogt, %33, %34 : vector<8x256xf32>
    %cst_34 = arith.constant 0.00999999977 : f32
    %36 = vector.broadcast %cst_34 : f32 to vector<8x256xf32>
    %37 = arith.mulf %36, %33 : vector<8x256xf32>
    %38 = arith.select %35, %33, %37 : vector<8x256xi1>, vector<8x256xf32>
    %cst_35 = arith.constant dense<0.000000e+00> : vector<8xf32>
    %39 = vector.multi_reduction <add>, %38, %cst_35 [1] : vector<8x256xf32> to vector<8xf32>
    %40 = vector.shape_cast %39 : vector<8xf32> to vector<8x1xf32>
    %cst_36 = arith.constant 2.560000e+02 : f32
    %41 = vector.broadcast %cst_36 : f32 to vector<8x1xf32>
    %42 = arith.divf %40, %41 : vector<8x1xf32>
    %cst_37 = arith.constant dense<0.000000e+00> : vector<4x1xf32>
    %43 = tpu.matmul %10, %42, %cst_37 {dimension_numbers = #tpu.dot_dimension_numbers<[1], [0], [0], [1], [0, 0, 1, 1], [], []>, precision = #tpu.contract_precision<fp32>} : vector<4x8xf32>, vector<8x1xf32>, vector<4x1xf32> -> vector<4x1xf32>
    %44 = arith.addf %43, %11 : vector<4x1xf32>
    %cst_38 = arith.constant 0.000000e+00 : f32
    %45 = vector.broadcast %cst_38 : f32 to vector<4x1xf32>
    %46 = arith.maximumf %44, %45 : vector<4x1xf32>
    %cst_39 = arith.constant dense<0.000000e+00> : vector<8x1xf32>
    %47 = tpu.matmul %12, %46, %cst_39 {dimension_numbers = #tpu.dot_dimension_numbers<[1], [0], [0], [1], [0, 0, 1, 1], [], []>, precision = #tpu.contract_precision<fp32>} : vector<8x4xf32>, vector<4x1xf32>, vector<8x1xf32> -> vector<8x1xf32>
    %48 = arith.addf %47, %13 : vector<8x1xf32>
    %cst_40 = arith.constant 0.000000e+00 : f32
    %49 = vector.broadcast %cst_40 : f32 to vector<8x1xf32>
    %50 = arith.subf %49, %48 : vector<8x1xf32>
    %51 = math.exp %50 : vector<8x1xf32>
    %cst_41 = arith.constant 1.000000e+00 : f32
    %52 = vector.broadcast %cst_41 : f32 to vector<8x1xf32>
    %53 = arith.addf %52, %51 : vector<8x1xf32>
    %cst_42 = arith.constant 1.000000e+00 : f32
    %54 = vector.broadcast %cst_42 : f32 to vector<8x1xf32>
    %55 = arith.divf %54, %53 : vector<8x1xf32>
    %56 = vector.broadcast %55 : vector<8x1xf32> to vector<8x256xf32>
    %57 = arith.mulf %38, %56 : vector<8x256xf32>
    %58 = vector.extract_strided_slice %14 {offsets = [0, 4], sizes = [8, 1], strides = [1, 1]} : vector<8x9xf32> to vector<8x1xf32>
    %59 = vector.broadcast %58 : vector<8x1xf32> to vector<8x256xf32>
    %60 = arith.mulf %57, %59 : vector<8x256xf32>
    %c17_i32 = arith.constant 17 : i32
    %61 = tpu.dynamic_rotate %57 by %c17_i32 dim 1 : vector<8x256xf32>, i32 -> vector<8x256xf32>
    %62 = vector.extract_strided_slice %0 {offsets = [0, 0], sizes = [1, 256], strides = [1, 1]} : vector<9x256xf32> to vector<1x256xf32>
    %63 = vector.broadcast %62 : vector<1x256xf32> to vector<8x256xf32>
    %64 = arith.mulf %61, %63 : vector<8x256xf32>
    %65 = vector.extract_strided_slice %14 {offsets = [0, 0], sizes = [8, 1], strides = [1, 1]} : vector<8x9xf32> to vector<8x1xf32>
    %66 = vector.broadcast %65 : vector<8x1xf32> to vector<8x256xf32>
    %67 = arith.mulf %64, %66 : vector<8x256xf32>
    %68 = arith.addf %60, %67 : vector<8x256xf32>
    %c16_i32 = arith.constant 16 : i32
    %69 = tpu.dynamic_rotate %57 by %c16_i32 dim 1 : vector<8x256xf32>, i32 -> vector<8x256xf32>
    %70 = vector.extract_strided_slice %0 {offsets = [1, 0], sizes = [1, 256], strides = [1, 1]} : vector<9x256xf32> to vector<1x256xf32>
    %71 = vector.broadcast %70 : vector<1x256xf32> to vector<8x256xf32>
    %72 = arith.mulf %69, %71 : vector<8x256xf32>
    %73 = vector.extract_strided_slice %14 {offsets = [0, 1], sizes = [8, 1], strides = [1, 1]} : vector<8x9xf32> to vector<8x1xf32>
    %74 = vector.broadcast %73 : vector<8x1xf32> to vector<8x256xf32>
    %75 = arith.mulf %72, %74 : vector<8x256xf32>
    %76 = arith.addf %68, %75 : vector<8x256xf32>
    %c15_i32 = arith.constant 15 : i32
    %77 = tpu.dynamic_rotate %57 by %c15_i32 dim 1 : vector<8x256xf32>, i32 -> vector<8x256xf32>
    %78 = vector.extract_strided_slice %0 {offsets = [2, 0], sizes = [1, 256], strides = [1, 1]} : vector<9x256xf32> to vector<1x256xf32>
    %79 = vector.broadcast %78 : vector<1x256xf32> to vector<8x256xf32>
    %80 = arith.mulf %77, %79 : vector<8x256xf32>
    %81 = vector.extract_strided_slice %14 {offsets = [0, 2], sizes = [8, 1], strides = [1, 1]} : vector<8x9xf32> to vector<8x1xf32>
    %82 = vector.broadcast %81 : vector<8x1xf32> to vector<8x256xf32>
    %83 = arith.mulf %80, %82 : vector<8x256xf32>
    %84 = arith.addf %76, %83 : vector<8x256xf32>
    %c1_i32 = arith.constant 1 : i32
    %85 = tpu.dynamic_rotate %57 by %c1_i32 dim 1 : vector<8x256xf32>, i32 -> vector<8x256xf32>
    %86 = vector.extract_strided_slice %0 {offsets = [3, 0], sizes = [1, 256], strides = [1, 1]} : vector<9x256xf32> to vector<1x256xf32>
    %87 = vector.broadcast %86 : vector<1x256xf32> to vector<8x256xf32>
    %88 = arith.mulf %85, %87 : vector<8x256xf32>
    %89 = vector.extract_strided_slice %14 {offsets = [0, 3], sizes = [8, 1], strides = [1, 1]} : vector<8x9xf32> to vector<8x1xf32>
    %90 = vector.broadcast %89 : vector<8x1xf32> to vector<8x256xf32>
    %91 = arith.mulf %88, %90 : vector<8x256xf32>
    %92 = arith.addf %84, %91 : vector<8x256xf32>
    %c255_i32 = arith.constant 255 : i32
    %93 = tpu.dynamic_rotate %57 by %c255_i32 dim 1 : vector<8x256xf32>, i32 -> vector<8x256xf32>
    %94 = vector.extract_strided_slice %0 {offsets = [5, 0], sizes = [1, 256], strides = [1, 1]} : vector<9x256xf32> to vector<1x256xf32>
    %95 = vector.broadcast %94 : vector<1x256xf32> to vector<8x256xf32>
    %96 = arith.mulf %93, %95 : vector<8x256xf32>
    %97 = vector.extract_strided_slice %14 {offsets = [0, 5], sizes = [8, 1], strides = [1, 1]} : vector<8x9xf32> to vector<8x1xf32>
    %98 = vector.broadcast %97 : vector<8x1xf32> to vector<8x256xf32>
    %99 = arith.mulf %96, %98 : vector<8x256xf32>
    %100 = arith.addf %92, %99 : vector<8x256xf32>
    %c241_i32 = arith.constant 241 : i32
    %101 = tpu.dynamic_rotate %57 by %c241_i32 dim 1 : vector<8x256xf32>, i32 -> vector<8x256xf32>
    %102 = vector.extract_strided_slice %0 {offsets = [6, 0], sizes = [1, 256], strides = [1, 1]} : vector<9x256xf32> to vector<1x256xf32>
    %103 = vector.broadcast %102 : vector<1x256xf32> to vector<8x256xf32>
    %104 = arith.mulf %101, %103 : vector<8x256xf32>
    %105 = vector.extract_strided_slice %14 {offsets = [0, 6], sizes = [8, 1], strides = [1, 1]} : vector<8x9xf32> to vector<8x1xf32>
    %106 = vector.broadcast %105 : vector<8x1xf32> to vector<8x256xf32>
    %107 = arith.mulf %104, %106 : vector<8x256xf32>
    %108 = arith.addf %100, %107 : vector<8x256xf32>
    %c240_i32 = arith.constant 240 : i32
    %109 = tpu.dynamic_rotate %57 by %c240_i32 dim 1 : vector<8x256xf32>, i32 -> vector<8x256xf32>
    %110 = vector.extract_strided_slice %0 {offsets = [7, 0], sizes = [1, 256], strides = [1, 1]} : vector<9x256xf32> to vector<1x256xf32>
    %111 = vector.broadcast %110 : vector<1x256xf32> to vector<8x256xf32>
    %112 = arith.mulf %109, %111 : vector<8x256xf32>
    %113 = vector.extract_strided_slice %14 {offsets = [0, 7], sizes = [8, 1], strides = [1, 1]} : vector<8x9xf32> to vector<8x1xf32>
    %114 = vector.broadcast %113 : vector<8x1xf32> to vector<8x256xf32>
    %115 = arith.mulf %112, %114 : vector<8x256xf32>
    %116 = arith.addf %108, %115 : vector<8x256xf32>
    %c239_i32 = arith.constant 239 : i32
    %117 = tpu.dynamic_rotate %57 by %c239_i32 dim 1 : vector<8x256xf32>, i32 -> vector<8x256xf32>
    %118 = vector.extract_strided_slice %0 {offsets = [8, 0], sizes = [1, 256], strides = [1, 1]} : vector<9x256xf32> to vector<1x256xf32>
    %119 = vector.broadcast %118 : vector<1x256xf32> to vector<8x256xf32>
    %120 = arith.mulf %117, %119 : vector<8x256xf32>
    %121 = vector.extract_strided_slice %14 {offsets = [0, 8], sizes = [8, 1], strides = [1, 1]} : vector<8x9xf32> to vector<8x1xf32>
    %122 = vector.broadcast %121 : vector<8x1xf32> to vector<8x256xf32>
    %123 = arith.mulf %120, %122 : vector<8x256xf32>
    %124 = arith.addf %116, %123 : vector<8x256xf32>
    %125 = vector.broadcast %15 : vector<8x1xf32> to vector<8x256xf32>
    %126 = arith.addf %124, %125 : vector<8x256xf32>
    %cst_43 = arith.constant dense<0.000000e+00> : vector<8x256xf32>
    %127 = tpu.matmul %16, %126, %cst_43 {dimension_numbers = #tpu.dot_dimension_numbers<[1], [0], [0], [1], [0, 0, 1, 1], [], []>, precision = #tpu.contract_precision<fp32>} : vector<8x8xf32>, vector<8x256xf32>, vector<8x256xf32> -> vector<8x256xf32>
    %128 = vector.broadcast %17 : vector<8x1xf32> to vector<8x256xf32>
    %129 = arith.addf %127, %128 : vector<8x256xf32>
    %130 = arith.addf %129, %2 : vector<8x256xf32>
    %cst_44 = arith.constant 0.000000e+00 : f32
    %131 = vector.broadcast %cst_44 : f32 to vector<8x256xf32>
    %132 = arith.cmpf ogt, %130, %131 : vector<8x256xf32>
    %cst_45 = arith.constant 2.000000e-01 : f32
    %133 = vector.broadcast %cst_45 : f32 to vector<8x256xf32>
    %134 = arith.mulf %133, %130 : vector<8x256xf32>
    %135 = arith.select %132, %130, %134 : vector<8x256xi1>, vector<8x256xf32>
    %c112 = arith.constant 112 : index
    %c0_46 = arith.constant 0 : index
    %136 = vector.load %arg7[%c112, %c0_46] : memref<192x1xf32, #tpu.memory_space<vmem>>, vector<8x1xf32>
    %c120 = arith.constant 120 : index
    %c0_47 = arith.constant 0 : index
    %137 = vector.load %arg7[%c120, %c0_47] : memref<192x1xf32, #tpu.memory_space<vmem>>, vector<8x1xf32>
    %c80 = arith.constant 80 : index
    %c0_48 = arith.constant 0 : index
    %138 = vector.load %arg2[%c80, %c0_48] : memref<184x8xf32, #tpu.memory_space<vmem>>, vector<16x8xf32>
    %c128 = arith.constant 128 : index
    %c0_49 = arith.constant 0 : index
    %139 = vector.load %arg7[%c128, %c0_49] : memref<192x1xf32, #tpu.memory_space<vmem>>, vector<16x1xf32>
    %c0_50 = arith.constant 0 : index
    %c0_51 = arith.constant 0 : index
    %140 = vector.load %arg4[%c0_50, %c0_51] : memref<8x16xf32, #tpu.memory_space<vmem>>, vector<8x16xf32>
    %c144 = arith.constant 144 : index
    %c0_52 = arith.constant 0 : index
    %141 = vector.load %arg7[%c144, %c0_52] : memref<192x1xf32, #tpu.memory_space<vmem>>, vector<8x1xf32>
    %cst_53 = arith.constant dense<0.000000e+00> : vector<256xf32>
    %142 = vector.multi_reduction <add>, %135, %cst_53 [0] : vector<8x256xf32> to vector<256xf32>
    %143 = vector.shape_cast %142 : vector<256xf32> to vector<1x256xf32>
    %cst_54 = arith.constant 8.000000e+00 : f32
    %144 = vector.broadcast %cst_54 : f32 to vector<1x256xf32>
    %145 = arith.divf %143, %144 : vector<1x256xf32>
    %146 = vector.broadcast %145 : vector<1x256xf32> to vector<8x256xf32>
    %147 = arith.subf %135, %146 : vector<8x256xf32>
    %148 = vector.broadcast %145 : vector<1x256xf32> to vector<8x256xf32>
    %149 = arith.subf %135, %148 : vector<8x256xf32>
    %150 = arith.mulf %147, %149 : vector<8x256xf32>
    %cst_55 = arith.constant dense<0.000000e+00> : vector<256xf32>
    %151 = vector.multi_reduction <add>, %150, %cst_55 [0] : vector<8x256xf32> to vector<256xf32>
    %152 = vector.shape_cast %151 : vector<256xf32> to vector<1x256xf32>
    %cst_56 = arith.constant 8.000000e+00 : f32
    %153 = vector.broadcast %cst_56 : f32 to vector<1x256xf32>
    %154 = arith.divf %152, %153 : vector<1x256xf32>
    %155 = vector.broadcast %145 : vector<1x256xf32> to vector<8x256xf32>
    %156 = arith.subf %135, %155 : vector<8x256xf32>
    %cst_57 = arith.constant 9.99999974E-6 : f32
    %157 = vector.broadcast %cst_57 : f32 to vector<1x256xf32>
    %158 = arith.addf %154, %157 : vector<1x256xf32>
    %159 = math.rsqrt %158 : vector<1x256xf32>
    %160 = vector.broadcast %159 : vector<1x256xf32> to vector<8x256xf32>
    %161 = arith.mulf %156, %160 : vector<8x256xf32>
    %162 = vector.broadcast %136 : vector<8x1xf32> to vector<8x256xf32>
    %163 = arith.mulf %161, %162 : vector<8x256xf32>
    %164 = vector.broadcast %137 : vector<8x1xf32> to vector<8x256xf32>
    %165 = arith.addf %163, %164 : vector<8x256xf32>
    %166 = arith.addf %165, %135 : vector<8x256xf32>
    %cst_58 = arith.constant dense<0.000000e+00> : vector<256xf32>
    %167 = vector.multi_reduction <add>, %166, %cst_58 [0] : vector<8x256xf32> to vector<256xf32>
    %168 = vector.shape_cast %167 : vector<256xf32> to vector<1x256xf32>
    %cst_59 = arith.constant 8.000000e+00 : f32
    %169 = vector.broadcast %cst_59 : f32 to vector<1x256xf32>
    %170 = arith.divf %168, %169 : vector<1x256xf32>
    %171 = vector.broadcast %170 : vector<1x256xf32> to vector<8x256xf32>
    %172 = arith.subf %166, %171 : vector<8x256xf32>
    %173 = vector.broadcast %170 : vector<1x256xf32> to vector<8x256xf32>
    %174 = arith.subf %166, %173 : vector<8x256xf32>
    %175 = arith.mulf %172, %174 : vector<8x256xf32>
    %cst_60 = arith.constant dense<0.000000e+00> : vector<256xf32>
    %176 = vector.multi_reduction <add>, %175, %cst_60 [0] : vector<8x256xf32> to vector<256xf32>
    %177 = vector.shape_cast %176 : vector<256xf32> to vector<1x256xf32>
    %cst_61 = arith.constant 8.000000e+00 : f32
    %178 = vector.broadcast %cst_61 : f32 to vector<1x256xf32>
    %179 = arith.divf %177, %178 : vector<1x256xf32>
    %180 = vector.broadcast %170 : vector<1x256xf32> to vector<8x256xf32>
    %181 = arith.subf %166, %180 : vector<8x256xf32>
    %cst_62 = arith.constant 9.99999974E-6 : f32
    %182 = vector.broadcast %cst_62 : f32 to vector<1x256xf32>
    %183 = arith.addf %179, %182 : vector<1x256xf32>
    %184 = math.rsqrt %183 : vector<1x256xf32>
    %185 = vector.broadcast %184 : vector<1x256xf32> to vector<8x256xf32>
    %186 = arith.mulf %181, %185 : vector<8x256xf32>
    %187 = vector.broadcast %136 : vector<8x1xf32> to vector<8x256xf32>
    %188 = arith.mulf %186, %187 : vector<8x256xf32>
    %189 = vector.broadcast %137 : vector<8x1xf32> to vector<8x256xf32>
    %190 = arith.addf %188, %189 : vector<8x256xf32>
    %cst_63 = arith.constant dense<0.000000e+00> : vector<16x256xf32>
    %191 = tpu.matmul %138, %190, %cst_63 {dimension_numbers = #tpu.dot_dimension_numbers<[1], [0], [0], [1], [0, 0, 1, 1], [], []>, precision = #tpu.contract_precision<fp32>} : vector<16x8xf32>, vector<8x256xf32>, vector<16x256xf32> -> vector<16x256xf32>
    %192 = vector.broadcast %139 : vector<16x1xf32> to vector<16x256xf32>
    %193 = arith.addf %191, %192 : vector<16x256xf32>
    %cst_64 = arith.constant 5.000000e-01 : f32
    %194 = vector.broadcast %cst_64 : f32 to vector<16x256xf32>
    %195 = arith.mulf %194, %193 : vector<16x256xf32>
    %cst_65 = arith.constant 4.471500e-02 : f32
    %196 = vector.broadcast %cst_65 : f32 to vector<16x256xf32>
    %197 = arith.mulf %196, %193 : vector<16x256xf32>
    %198 = arith.mulf %197, %193 : vector<16x256xf32>
    %199 = arith.mulf %198, %193 : vector<16x256xf32>
    %200 = arith.addf %193, %199 : vector<16x256xf32>
    %cst_66 = arith.constant 0.797884583 : f32
    %201 = vector.broadcast %cst_66 : f32 to vector<16x256xf32>
    %202 = arith.mulf %201, %200 : vector<16x256xf32>
    %203 = math.tanh %202 : vector<16x256xf32>
    %cst_67 = arith.constant 1.000000e+00 : f32
    %204 = vector.broadcast %cst_67 : f32 to vector<16x256xf32>
    %205 = arith.addf %204, %203 : vector<16x256xf32>
    %206 = arith.mulf %195, %205 : vector<16x256xf32>
    %cst_68 = arith.constant dense<0.000000e+00> : vector<8x256xf32>
    %207 = tpu.matmul %140, %206, %cst_68 {dimension_numbers = #tpu.dot_dimension_numbers<[1], [0], [0], [1], [0, 0, 1, 1], [], []>, precision = #tpu.contract_precision<fp32>} : vector<8x16xf32>, vector<16x256xf32>, vector<8x256xf32> -> vector<8x256xf32>
    %208 = vector.broadcast %141 : vector<8x1xf32> to vector<8x256xf32>
    %209 = arith.addf %207, %208 : vector<8x256xf32>
    %210 = arith.addf %209, %2 : vector<8x256xf32>
    %c40_69 = arith.constant 40 : index
    %c0_70 = arith.constant 0 : index
    %211 = vector.load %arg2[%c40_69, %c0_70] : memref<184x8xf32, #tpu.memory_space<vmem>>, vector<4x8xf32>
    %c56 = arith.constant 56 : index
    %c0_71 = arith.constant 0 : index
    %212 = vector.load %arg7[%c56, %c0_71] : memref<192x1xf32, #tpu.memory_space<vmem>>, vector<4x1xf32>
    %c16_72 = arith.constant 16 : index
    %c0_73 = arith.constant 0 : index
    %213 = vector.load %arg3[%c16_72, %c0_73] : memref<32x4xf32, #tpu.memory_space<vmem>>, vector<8x4xf32>
    %c64 = arith.constant 64 : index
    %c0_74 = arith.constant 0 : index
    %214 = vector.load %arg7[%c64, %c0_74] : memref<192x1xf32, #tpu.memory_space<vmem>>, vector<8x1xf32>
    %c48_75 = arith.constant 48 : index
    %c0_76 = arith.constant 0 : index
    %215 = vector.load %arg2[%c48_75, %c0_76] : memref<184x8xf32, #tpu.memory_space<vmem>>, vector<8x8xf32>
    %c56_77 = arith.constant 56 : index
    %c0_78 = arith.constant 0 : index
    %216 = vector.load %arg2[%c56_77, %c0_78] : memref<184x8xf32, #tpu.memory_space<vmem>>, vector<8x8xf32>
    %c72 = arith.constant 72 : index
    %c0_79 = arith.constant 0 : index
    %217 = vector.load %arg7[%c72, %c0_79] : memref<192x1xf32, #tpu.memory_space<vmem>>, vector<8x1xf32>
    %c64_80 = arith.constant 64 : index
    %c0_81 = arith.constant 0 : index
    %218 = vector.load %arg2[%c64_80, %c0_81] : memref<184x8xf32, #tpu.memory_space<vmem>>, vector<4x8xf32>
    %c80_82 = arith.constant 80 : index
    %c0_83 = arith.constant 0 : index
    %219 = vector.load %arg7[%c80_82, %c0_83] : memref<192x1xf32, #tpu.memory_space<vmem>>, vector<4x1xf32>
    %c24_84 = arith.constant 24 : index
    %c0_85 = arith.constant 0 : index
    %220 = vector.load %arg3[%c24_84, %c0_85] : memref<32x4xf32, #tpu.memory_space<vmem>>, vector<8x4xf32>
    %c88 = arith.constant 88 : index
    %c0_86 = arith.constant 0 : index
    %221 = vector.load %arg7[%c88, %c0_86] : memref<192x1xf32, #tpu.memory_space<vmem>>, vector<8x1xf32>
    %c8_87 = arith.constant 8 : index
    %c0_88 = arith.constant 0 : index
    %222 = vector.load %arg6[%c8_87, %c0_88] : memref<88x9xf32, #tpu.memory_space<vmem>>, vector<8x9xf32>
    %c96 = arith.constant 96 : index
    %c0_89 = arith.constant 0 : index
    %223 = vector.load %arg7[%c96, %c0_89] : memref<192x1xf32, #tpu.memory_space<vmem>>, vector<8x1xf32>
    %c72_90 = arith.constant 72 : index
    %c0_91 = arith.constant 0 : index
    %224 = vector.load %arg2[%c72_90, %c0_91] : memref<184x8xf32, #tpu.memory_space<vmem>>, vector<8x8xf32>
    %c104 = arith.constant 104 : index
    %c0_92 = arith.constant 0 : index
    %225 = vector.load %arg7[%c104, %c0_92] : memref<192x1xf32, #tpu.memory_space<vmem>>, vector<8x1xf32>
    %cst_93 = arith.constant dense<0.000000e+00> : vector<4x256xf32>
    %226 = tpu.matmul %211, %210, %cst_93 {dimension_numbers = #tpu.dot_dimension_numbers<[1], [0], [0], [1], [0, 0, 1, 1], [], []>, precision = #tpu.contract_precision<fp32>} : vector<4x8xf32>, vector<8x256xf32>, vector<4x256xf32> -> vector<4x256xf32>
    %227 = vector.broadcast %212 : vector<4x1xf32> to vector<4x256xf32>
    %228 = arith.addf %226, %227 : vector<4x256xf32>
    %cst_94 = arith.constant 0.000000e+00 : f32
    %229 = vector.broadcast %cst_94 : f32 to vector<4x256xf32>
    %230 = arith.cmpf ogt, %228, %229 : vector<4x256xf32>
    %cst_95 = arith.constant 0.00999999977 : f32
    %231 = vector.broadcast %cst_95 : f32 to vector<4x256xf32>
    %232 = arith.mulf %231, %228 : vector<4x256xf32>
    %233 = arith.select %230, %228, %232 : vector<4x256xi1>, vector<4x256xf32>
    %cst_96 = arith.constant dense<0.000000e+00> : vector<8x256xf32>
    %234 = tpu.matmul %213, %233, %cst_96 {dimension_numbers = #tpu.dot_dimension_numbers<[1], [0], [0], [1], [0, 0, 1, 1], [], []>, precision = #tpu.contract_precision<fp32>} : vector<8x4xf32>, vector<4x256xf32>, vector<8x256xf32> -> vector<8x256xf32>
    %235 = vector.broadcast %214 : vector<8x1xf32> to vector<8x256xf32>
    %236 = arith.addf %234, %235 : vector<8x256xf32>
    %cst_97 = arith.constant dense<0.000000e+00> : vector<8x256xf32>
    %237 = tpu.matmul %215, %236, %cst_97 {dimension_numbers = #tpu.dot_dimension_numbers<[1], [0], [0], [1], [0, 0, 1, 1], [], []>, precision = #tpu.contract_precision<fp32>} : vector<8x8xf32>, vector<8x256xf32>, vector<8x256xf32> -> vector<8x256xf32>
    %cst_98 = arith.constant dense<0.000000e+00> : vector<8x256xf32>
    %238 = tpu.matmul %216, %210, %cst_98 {dimension_numbers = #tpu.dot_dimension_numbers<[1], [0], [0], [1], [0, 0, 1, 1], [], []>, precision = #tpu.contract_precision<fp32>} : vector<8x8xf32>, vector<8x256xf32>, vector<8x256xf32> -> vector<8x256xf32>
    %239 = arith.addf %237, %238 : vector<8x256xf32>
    %240 = vector.broadcast %217 : vector<8x1xf32> to vector<8x256xf32>
    %241 = arith.addf %239, %240 : vector<8x256xf32>
    %cst_99 = arith.constant 0.000000e+00 : f32
    %242 = vector.broadcast %cst_99 : f32 to vector<8x256xf32>
    %243 = arith.cmpf ogt, %241, %242 : vector<8x256xf32>
    %cst_100 = arith.constant 0.00999999977 : f32
    %244 = vector.broadcast %cst_100 : f32 to vector<8x256xf32>
    %245 = arith.mulf %244, %241 : vector<8x256xf32>
    %246 = arith.select %243, %241, %245 : vector<8x256xi1>, vector<8x256xf32>
    %cst_101 = arith.constant dense<0.000000e+00> : vector<8xf32>
    %247 = vector.multi_reduction <add>, %246, %cst_101 [1] : vector<8x256xf32> to vector<8xf32>
    %248 = vector.shape_cast %247 : vector<8xf32> to vector<8x1xf32>
    %cst_102 = arith.constant 2.560000e+02 : f32
    %249 = vector.broadcast %cst_102 : f32 to vector<8x1xf32>
    %250 = arith.divf %248, %249 : vector<8x1xf32>
    %cst_103 = arith.constant dense<0.000000e+00> : vector<4x1xf32>
    %251 = tpu.matmul %218, %250, %cst_103 {dimension_numbers = #tpu.dot_dimension_numbers<[1], [0], [0], [1], [0, 0, 1, 1], [], []>, precision = #tpu.contract_precision<fp32>} : vector<4x8xf32>, vector<8x1xf32>, vector<4x1xf32> -> vector<4x1xf32>
    %252 = arith.addf %251, %219 : vector<4x1xf32>
    %cst_104 = arith.constant 0.000000e+00 : f32
    %253 = vector.broadcast %cst_104 : f32 to vector<4x1xf32>
    %254 = arith.maximumf %252, %253 : vector<4x1xf32>
    %cst_105 = arith.constant dense<0.000000e+00> : vector<8x1xf32>
    %255 = tpu.matmul %220, %254, %cst_105 {dimension_numbers = #tpu.dot_dimension_numbers<[1], [0], [0], [1], [0, 0, 1, 1], [], []>, precision = #tpu.contract_precision<fp32>} : vector<8x4xf32>, vector<4x1xf32>, vector<8x1xf32> -> vector<8x1xf32>
    %256 = arith.addf %255, %221 : vector<8x1xf32>
    %cst_106 = arith.constant 0.000000e+00 : f32
    %257 = vector.broadcast %cst_106 : f32 to vector<8x1xf32>
    %258 = arith.subf %257, %256 : vector<8x1xf32>
    %259 = math.exp %258 : vector<8x1xf32>
    %cst_107 = arith.constant 1.000000e+00 : f32
    %260 = vector.broadcast %cst_107 : f32 to vector<8x1xf32>
    %261 = arith.addf %260, %259 : vector<8x1xf32>
    %cst_108 = arith.constant 1.000000e+00 : f32
    %262 = vector.broadcast %cst_108 : f32 to vector<8x1xf32>
    %263 = arith.divf %262, %261 : vector<8x1xf32>
    %264 = vector.broadcast %263 : vector<8x1xf32> to vector<8x256xf32>
    %265 = arith.mulf %246, %264 : vector<8x256xf32>
    %266 = vector.extract_strided_slice %222 {offsets = [0, 4], sizes = [8, 1], strides = [1, 1]} : vector<8x9xf32> to vector<8x1xf32>
    %267 = vector.broadcast %266 : vector<8x1xf32> to vector<8x256xf32>
    %268 = arith.mulf %265, %267 : vector<8x256xf32>
    %c17_i32_109 = arith.constant 17 : i32
    %269 = tpu.dynamic_rotate %265 by %c17_i32_109 dim 1 : vector<8x256xf32>, i32 -> vector<8x256xf32>
    %270 = vector.extract_strided_slice %0 {offsets = [0, 0], sizes = [1, 256], strides = [1, 1]} : vector<9x256xf32> to vector<1x256xf32>
    %271 = vector.broadcast %270 : vector<1x256xf32> to vector<8x256xf32>
    %272 = arith.mulf %269, %271 : vector<8x256xf32>
    %273 = vector.extract_strided_slice %222 {offsets = [0, 0], sizes = [8, 1], strides = [1, 1]} : vector<8x9xf32> to vector<8x1xf32>
    %274 = vector.broadcast %273 : vector<8x1xf32> to vector<8x256xf32>
    %275 = arith.mulf %272, %274 : vector<8x256xf32>
    %276 = arith.addf %268, %275 : vector<8x256xf32>
    %c16_i32_110 = arith.constant 16 : i32
    %277 = tpu.dynamic_rotate %265 by %c16_i32_110 dim 1 : vector<8x256xf32>, i32 -> vector<8x256xf32>
    %278 = vector.extract_strided_slice %0 {offsets = [1, 0], sizes = [1, 256], strides = [1, 1]} : vector<9x256xf32> to vector<1x256xf32>
    %279 = vector.broadcast %278 : vector<1x256xf32> to vector<8x256xf32>
    %280 = arith.mulf %277, %279 : vector<8x256xf32>
    %281 = vector.extract_strided_slice %222 {offsets = [0, 1], sizes = [8, 1], strides = [1, 1]} : vector<8x9xf32> to vector<8x1xf32>
    %282 = vector.broadcast %281 : vector<8x1xf32> to vector<8x256xf32>
    %283 = arith.mulf %280, %282 : vector<8x256xf32>
    %284 = arith.addf %276, %283 : vector<8x256xf32>
    %c15_i32_111 = arith.constant 15 : i32
    %285 = tpu.dynamic_rotate %265 by %c15_i32_111 dim 1 : vector<8x256xf32>, i32 -> vector<8x256xf32>
    %286 = vector.extract_strided_slice %0 {offsets = [2, 0], sizes = [1, 256], strides = [1, 1]} : vector<9x256xf32> to vector<1x256xf32>
    %287 = vector.broadcast %286 : vector<1x256xf32> to vector<8x256xf32>
    %288 = arith.mulf %285, %287 : vector<8x256xf32>
    %289 = vector.extract_strided_slice %222 {offsets = [0, 2], sizes = [8, 1], strides = [1, 1]} : vector<8x9xf32> to vector<8x1xf32>
    %290 = vector.broadcast %289 : vector<8x1xf32> to vector<8x256xf32>
    %291 = arith.mulf %288, %290 : vector<8x256xf32>
    %292 = arith.addf %284, %291 : vector<8x256xf32>
    %c1_i32_112 = arith.constant 1 : i32
    %293 = tpu.dynamic_rotate %265 by %c1_i32_112 dim 1 : vector<8x256xf32>, i32 -> vector<8x256xf32>
    %294 = vector.extract_strided_slice %0 {offsets = [3, 0], sizes = [1, 256], strides = [1, 1]} : vector<9x256xf32> to vector<1x256xf32>
    %295 = vector.broadcast %294 : vector<1x256xf32> to vector<8x256xf32>
    %296 = arith.mulf %293, %295 : vector<8x256xf32>
    %297 = vector.extract_strided_slice %222 {offsets = [0, 3], sizes = [8, 1], strides = [1, 1]} : vector<8x9xf32> to vector<8x1xf32>
    %298 = vector.broadcast %297 : vector<8x1xf32> to vector<8x256xf32>
    %299 = arith.mulf %296, %298 : vector<8x256xf32>
    %300 = arith.addf %292, %299 : vector<8x256xf32>
    %c255_i32_113 = arith.constant 255 : i32
    %301 = tpu.dynamic_rotate %265 by %c255_i32_113 dim 1 : vector<8x256xf32>, i32 -> vector<8x256xf32>
    %302 = vector.extract_strided_slice %0 {offsets = [5, 0], sizes = [1, 256], strides = [1, 1]} : vector<9x256xf32> to vector<1x256xf32>
    %303 = vector.broadcast %302 : vector<1x256xf32> to vector<8x256xf32>
    %304 = arith.mulf %301, %303 : vector<8x256xf32>
    %305 = vector.extract_strided_slice %222 {offsets = [0, 5], sizes = [8, 1], strides = [1, 1]} : vector<8x9xf32> to vector<8x1xf32>
    %306 = vector.broadcast %305 : vector<8x1xf32> to vector<8x256xf32>
    %307 = arith.mulf %304, %306 : vector<8x256xf32>
    %308 = arith.addf %300, %307 : vector<8x256xf32>
    %c241_i32_114 = arith.constant 241 : i32
    %309 = tpu.dynamic_rotate %265 by %c241_i32_114 dim 1 : vector<8x256xf32>, i32 -> vector<8x256xf32>
    %310 = vector.extract_strided_slice %0 {offsets = [6, 0], sizes = [1, 256], strides = [1, 1]} : vector<9x256xf32> to vector<1x256xf32>
    %311 = vector.broadcast %310 : vector<1x256xf32> to vector<8x256xf32>
    %312 = arith.mulf %309, %311 : vector<8x256xf32>
    %313 = vector.extract_strided_slice %222 {offsets = [0, 6], sizes = [8, 1], strides = [1, 1]} : vector<8x9xf32> to vector<8x1xf32>
    %314 = vector.broadcast %313 : vector<8x1xf32> to vector<8x256xf32>
    %315 = arith.mulf %312, %314 : vector<8x256xf32>
    %316 = arith.addf %308, %315 : vector<8x256xf32>
    %c240_i32_115 = arith.constant 240 : i32
    %317 = tpu.dynamic_rotate %265 by %c240_i32_115 dim 1 : vector<8x256xf32>, i32 -> vector<8x256xf32>
    %318 = vector.extract_strided_slice %0 {offsets = [7, 0], sizes = [1, 256], strides = [1, 1]} : vector<9x256xf32> to vector<1x256xf32>
    %319 = vector.broadcast %318 : vector<1x256xf32> to vector<8x256xf32>
    %320 = arith.mulf %317, %319 : vector<8x256xf32>
    %321 = vector.extract_strided_slice %222 {offsets = [0, 7], sizes = [8, 1], strides = [1, 1]} : vector<8x9xf32> to vector<8x1xf32>
    %322 = vector.broadcast %321 : vector<8x1xf32> to vector<8x256xf32>
    %323 = arith.mulf %320, %322 : vector<8x256xf32>
    %324 = arith.addf %316, %323 : vector<8x256xf32>
    %c239_i32_116 = arith.constant 239 : i32
    %325 = tpu.dynamic_rotate %265 by %c239_i32_116 dim 1 : vector<8x256xf32>, i32 -> vector<8x256xf32>
    %326 = vector.extract_strided_slice %0 {offsets = [8, 0], sizes = [1, 256], strides = [1, 1]} : vector<9x256xf32> to vector<1x256xf32>
    %327 = vector.broadcast %326 : vector<1x256xf32> to vector<8x256xf32>
    %328 = arith.mulf %325, %327 : vector<8x256xf32>
    %329 = vector.extract_strided_slice %222 {offsets = [0, 8], sizes = [8, 1], strides = [1, 1]} : vector<8x9xf32> to vector<8x1xf32>
    %330 = vector.broadcast %329 : vector<8x1xf32> to vector<8x256xf32>
    %331 = arith.mulf %328, %330 : vector<8x256xf32>
    %332 = arith.addf %324, %331 : vector<8x256xf32>
    %333 = vector.broadcast %223 : vector<8x1xf32> to vector<8x256xf32>
    %334 = arith.addf %332, %333 : vector<8x256xf32>
    %cst_117 = arith.constant dense<0.000000e+00> : vector<8x256xf32>
    %335 = tpu.matmul %224, %334, %cst_117 {dimension_numbers = #tpu.dot_dimension_numbers<[1], [0], [0], [1], [0, 0, 1, 1], [], []>, precision = #tpu.contract_precision<fp32>} : vector<8x8xf32>, vector<8x256xf32>, vector<8x256xf32> -> vector<8x256xf32>
    %336 = vector.broadcast %225 : vector<8x1xf32> to vector<8x256xf32>
    %337 = arith.addf %335, %336 : vector<8x256xf32>
    %338 = arith.addf %337, %210 : vector<8x256xf32>
    %cst_118 = arith.constant 0.000000e+00 : f32
    %339 = vector.broadcast %cst_118 : f32 to vector<8x256xf32>
    %340 = arith.cmpf ogt, %338, %339 : vector<8x256xf32>
    %cst_119 = arith.constant 2.000000e-01 : f32
    %341 = vector.broadcast %cst_119 : f32 to vector<8x256xf32>
    %342 = arith.mulf %341, %338 : vector<8x256xf32>
    %343 = arith.select %340, %338, %342 : vector<8x256xi1>, vector<8x256xf32>
    %c152 = arith.constant 152 : index
    %c0_120 = arith.constant 0 : index
    %344 = vector.load %arg7[%c152, %c0_120] : memref<192x1xf32, #tpu.memory_space<vmem>>, vector<8x1xf32>
    %c160 = arith.constant 160 : index
    %c0_121 = arith.constant 0 : index
    %345 = vector.load %arg7[%c160, %c0_121] : memref<192x1xf32, #tpu.memory_space<vmem>>, vector<8x1xf32>
    %c168 = arith.constant 168 : index
    %c0_122 = arith.constant 0 : index
    %346 = vector.load %arg7[%c168, %c0_122] : memref<192x1xf32, #tpu.memory_space<vmem>>, vector<8x1xf32>
    %c176 = arith.constant 176 : index
    %c0_123 = arith.constant 0 : index
    %347 = vector.load %arg7[%c176, %c0_123] : memref<192x1xf32, #tpu.memory_space<vmem>>, vector<8x1xf32>
    %c96_124 = arith.constant 96 : index
    %c0_125 = arith.constant 0 : index
    %348 = vector.load %arg2[%c96_124, %c0_125] : memref<184x8xf32, #tpu.memory_space<vmem>>, vector<24x8xf32>
    %c16_126 = arith.constant 16 : index
    %c0_127 = arith.constant 0 : index
    %349 = vector.load %arg6[%c16_126, %c0_127] : memref<88x9xf32, #tpu.memory_space<vmem>>, vector<24x9xf32>
    %c184 = arith.constant 184 : index
    %c0_128 = arith.constant 0 : index
    %350 = vector.load %arg7[%c184, %c0_128] : memref<192x1xf32, #tpu.memory_space<vmem>>, vector<8x1xf32>
    %c128_129 = arith.constant 128 : index
    %c0_130 = arith.constant 0 : index
    %351 = vector.load %arg2[%c128_129, %c0_130] : memref<184x8xf32, #tpu.memory_space<vmem>>, vector<8x8xf32>
    %c120_131 = arith.constant 120 : index
    %c0_132 = arith.constant 0 : index
    %352 = vector.load %arg2[%c120_131, %c0_132] : memref<184x8xf32, #tpu.memory_space<vmem>>, vector<8x8xf32>
    %c136 = arith.constant 136 : index
    %c0_133 = arith.constant 0 : index
    %353 = vector.load %arg2[%c136, %c0_133] : memref<184x8xf32, #tpu.memory_space<vmem>>, vector<48x8xf32>
    %c40_134 = arith.constant 40 : index
    %c0_135 = arith.constant 0 : index
    %354 = vector.load %arg6[%c40_134, %c0_135] : memref<88x9xf32, #tpu.memory_space<vmem>>, vector<48x9xf32>
    %c0_136 = arith.constant 0 : index
    %c0_137 = arith.constant 0 : index
    %355 = vector.load %arg5[%c0_136, %c0_137] : memref<8x24xf32, #tpu.memory_space<vmem>>, vector<8x24xf32>
    %cst_138 = arith.constant dense<0.000000e+00> : vector<256xf32>
    %356 = vector.multi_reduction <add>, %343, %cst_138 [0] : vector<8x256xf32> to vector<256xf32>
    %357 = vector.shape_cast %356 : vector<256xf32> to vector<1x256xf32>
    %cst_139 = arith.constant 8.000000e+00 : f32
    %358 = vector.broadcast %cst_139 : f32 to vector<1x256xf32>
    %359 = arith.divf %357, %358 : vector<1x256xf32>
    %360 = vector.broadcast %359 : vector<1x256xf32> to vector<8x256xf32>
    %361 = arith.subf %343, %360 : vector<8x256xf32>
    %362 = vector.broadcast %359 : vector<1x256xf32> to vector<8x256xf32>
    %363 = arith.subf %343, %362 : vector<8x256xf32>
    %364 = arith.mulf %361, %363 : vector<8x256xf32>
    %cst_140 = arith.constant dense<0.000000e+00> : vector<256xf32>
    %365 = vector.multi_reduction <add>, %364, %cst_140 [0] : vector<8x256xf32> to vector<256xf32>
    %366 = vector.shape_cast %365 : vector<256xf32> to vector<1x256xf32>
    %cst_141 = arith.constant 8.000000e+00 : f32
    %367 = vector.broadcast %cst_141 : f32 to vector<1x256xf32>
    %368 = arith.divf %366, %367 : vector<1x256xf32>
    %369 = vector.broadcast %359 : vector<1x256xf32> to vector<8x256xf32>
    %370 = arith.subf %343, %369 : vector<8x256xf32>
    %cst_142 = arith.constant 9.99999974E-6 : f32
    %371 = vector.broadcast %cst_142 : f32 to vector<1x256xf32>
    %372 = arith.addf %368, %371 : vector<1x256xf32>
    %373 = math.rsqrt %372 : vector<1x256xf32>
    %374 = vector.broadcast %373 : vector<1x256xf32> to vector<8x256xf32>
    %375 = arith.mulf %370, %374 : vector<8x256xf32>
    %376 = vector.broadcast %344 : vector<8x1xf32> to vector<8x256xf32>
    %377 = arith.mulf %375, %376 : vector<8x256xf32>
    %378 = vector.broadcast %345 : vector<8x1xf32> to vector<8x256xf32>
    %379 = arith.addf %377, %378 : vector<8x256xf32>
    %cst_143 = arith.constant dense<0.000000e+00> : vector<24x256xf32>
    %380 = tpu.matmul %348, %379, %cst_143 {dimension_numbers = #tpu.dot_dimension_numbers<[1], [0], [0], [1], [0, 0, 1, 1], [], []>, precision = #tpu.contract_precision<fp32>} : vector<24x8xf32>, vector<8x256xf32>, vector<24x256xf32> -> vector<24x256xf32>
    %381 = vector.extract_strided_slice %349 {offsets = [0, 4], sizes = [24, 1], strides = [1, 1]} : vector<24x9xf32> to vector<24x1xf32>
    %382 = vector.broadcast %381 : vector<24x1xf32> to vector<24x256xf32>
    %383 = arith.mulf %380, %382 : vector<24x256xf32>
    %c17_i32_144 = arith.constant 17 : i32
    %384 = tpu.dynamic_rotate %380 by %c17_i32_144 dim 1 : vector<24x256xf32>, i32 -> vector<24x256xf32>
    %385 = vector.extract_strided_slice %0 {offsets = [0, 0], sizes = [1, 256], strides = [1, 1]} : vector<9x256xf32> to vector<1x256xf32>
    %386 = vector.broadcast %385 : vector<1x256xf32> to vector<24x256xf32>
    %387 = arith.mulf %384, %386 : vector<24x256xf32>
    %388 = vector.extract_strided_slice %349 {offsets = [0, 0], sizes = [24, 1], strides = [1, 1]} : vector<24x9xf32> to vector<24x1xf32>
    %389 = vector.broadcast %388 : vector<24x1xf32> to vector<24x256xf32>
    %390 = arith.mulf %387, %389 : vector<24x256xf32>
    %391 = arith.addf %383, %390 : vector<24x256xf32>
    %c16_i32_145 = arith.constant 16 : i32
    %392 = tpu.dynamic_rotate %380 by %c16_i32_145 dim 1 : vector<24x256xf32>, i32 -> vector<24x256xf32>
    %393 = vector.extract_strided_slice %0 {offsets = [1, 0], sizes = [1, 256], strides = [1, 1]} : vector<9x256xf32> to vector<1x256xf32>
    %394 = vector.broadcast %393 : vector<1x256xf32> to vector<24x256xf32>
    %395 = arith.mulf %392, %394 : vector<24x256xf32>
    %396 = vector.extract_strided_slice %349 {offsets = [0, 1], sizes = [24, 1], strides = [1, 1]} : vector<24x9xf32> to vector<24x1xf32>
    %397 = vector.broadcast %396 : vector<24x1xf32> to vector<24x256xf32>
    %398 = arith.mulf %395, %397 : vector<24x256xf32>
    %399 = arith.addf %391, %398 : vector<24x256xf32>
    %c15_i32_146 = arith.constant 15 : i32
    %400 = tpu.dynamic_rotate %380 by %c15_i32_146 dim 1 : vector<24x256xf32>, i32 -> vector<24x256xf32>
    %401 = vector.extract_strided_slice %0 {offsets = [2, 0], sizes = [1, 256], strides = [1, 1]} : vector<9x256xf32> to vector<1x256xf32>
    %402 = vector.broadcast %401 : vector<1x256xf32> to vector<24x256xf32>
    %403 = arith.mulf %400, %402 : vector<24x256xf32>
    %404 = vector.extract_strided_slice %349 {offsets = [0, 2], sizes = [24, 1], strides = [1, 1]} : vector<24x9xf32> to vector<24x1xf32>
    %405 = vector.broadcast %404 : vector<24x1xf32> to vector<24x256xf32>
    %406 = arith.mulf %403, %405 : vector<24x256xf32>
    %407 = arith.addf %399, %406 : vector<24x256xf32>
    %c1_i32_147 = arith.constant 1 : i32
    %408 = tpu.dynamic_rotate %380 by %c1_i32_147 dim 1 : vector<24x256xf32>, i32 -> vector<24x256xf32>
    %409 = vector.extract_strided_slice %0 {offsets = [3, 0], sizes = [1, 256], strides = [1, 1]} : vector<9x256xf32> to vector<1x256xf32>
    %410 = vector.broadcast %409 : vector<1x256xf32> to vector<24x256xf32>
    %411 = arith.mulf %408, %410 : vector<24x256xf32>
    %412 = vector.extract_strided_slice %349 {offsets = [0, 3], sizes = [24, 1], strides = [1, 1]} : vector<24x9xf32> to vector<24x1xf32>
    %413 = vector.broadcast %412 : vector<24x1xf32> to vector<24x256xf32>
    %414 = arith.mulf %411, %413 : vector<24x256xf32>
    %415 = arith.addf %407, %414 : vector<24x256xf32>
    %c255_i32_148 = arith.constant 255 : i32
    %416 = tpu.dynamic_rotate %380 by %c255_i32_148 dim 1 : vector<24x256xf32>, i32 -> vector<24x256xf32>
    %417 = vector.extract_strided_slice %0 {offsets = [5, 0], sizes = [1, 256], strides = [1, 1]} : vector<9x256xf32> to vector<1x256xf32>
    %418 = vector.broadcast %417 : vector<1x256xf32> to vector<24x256xf32>
    %419 = arith.mulf %416, %418 : vector<24x256xf32>
    %420 = vector.extract_strided_slice %349 {offsets = [0, 5], sizes = [24, 1], strides = [1, 1]} : vector<24x9xf32> to vector<24x1xf32>
    %421 = vector.broadcast %420 : vector<24x1xf32> to vector<24x256xf32>
    %422 = arith.mulf %419, %421 : vector<24x256xf32>
    %423 = arith.addf %415, %422 : vector<24x256xf32>
    %c241_i32_149 = arith.constant 241 : i32
    %424 = tpu.dynamic_rotate %380 by %c241_i32_149 dim 1 : vector<24x256xf32>, i32 -> vector<24x256xf32>
    %425 = vector.extract_strided_slice %0 {offsets = [6, 0], sizes = [1, 256], strides = [1, 1]} : vector<9x256xf32> to vector<1x256xf32>
    %426 = vector.broadcast %425 : vector<1x256xf32> to vector<24x256xf32>
    %427 = arith.mulf %424, %426 : vector<24x256xf32>
    %428 = vector.extract_strided_slice %349 {offsets = [0, 6], sizes = [24, 1], strides = [1, 1]} : vector<24x9xf32> to vector<24x1xf32>
    %429 = vector.broadcast %428 : vector<24x1xf32> to vector<24x256xf32>
    %430 = arith.mulf %427, %429 : vector<24x256xf32>
    %431 = arith.addf %423, %430 : vector<24x256xf32>
    %c240_i32_150 = arith.constant 240 : i32
    %432 = tpu.dynamic_rotate %380 by %c240_i32_150 dim 1 : vector<24x256xf32>, i32 -> vector<24x256xf32>
    %433 = vector.extract_strided_slice %0 {offsets = [7, 0], sizes = [1, 256], strides = [1, 1]} : vector<9x256xf32> to vector<1x256xf32>
    %434 = vector.broadcast %433 : vector<1x256xf32> to vector<24x256xf32>
    %435 = arith.mulf %432, %434 : vector<24x256xf32>
    %436 = vector.extract_strided_slice %349 {offsets = [0, 7], sizes = [24, 1], strides = [1, 1]} : vector<24x9xf32> to vector<24x1xf32>
    %437 = vector.broadcast %436 : vector<24x1xf32> to vector<24x256xf32>
    %438 = arith.mulf %435, %437 : vector<24x256xf32>
    %439 = arith.addf %431, %438 : vector<24x256xf32>
    %c239_i32_151 = arith.constant 239 : i32
    %440 = tpu.dynamic_rotate %380 by %c239_i32_151 dim 1 : vector<24x256xf32>, i32 -> vector<24x256xf32>
    %441 = vector.extract_strided_slice %0 {offsets = [8, 0], sizes = [1, 256], strides = [1, 1]} : vector<9x256xf32> to vector<1x256xf32>
    %442 = vector.broadcast %441 : vector<1x256xf32> to vector<24x256xf32>
    %443 = arith.mulf %440, %442 : vector<24x256xf32>
    %444 = vector.extract_strided_slice %349 {offsets = [0, 8], sizes = [24, 1], strides = [1, 1]} : vector<24x9xf32> to vector<24x1xf32>
    %445 = vector.broadcast %444 : vector<24x1xf32> to vector<24x256xf32>
    %446 = arith.mulf %443, %445 : vector<24x256xf32>
    %447 = arith.addf %439, %446 : vector<24x256xf32>
    %448 = vector.extract_strided_slice %447 {offsets = [0, 0], sizes = [8, 256], strides = [1, 1]} : vector<24x256xf32> to vector<8x256xf32>
    %449 = vector.extract_strided_slice %447 {offsets = [8, 0], sizes = [8, 256], strides = [1, 1]} : vector<24x256xf32> to vector<8x256xf32>
    %450 = vector.extract_strided_slice %447 {offsets = [16, 0], sizes = [8, 256], strides = [1, 1]} : vector<24x256xf32> to vector<8x256xf32>
    %451 = arith.mulf %448, %448 : vector<8x256xf32>
    %cst_152 = arith.constant dense<0.000000e+00> : vector<8xf32>
    %452 = vector.multi_reduction <add>, %451, %cst_152 [1] : vector<8x256xf32> to vector<8xf32>
    %453 = vector.shape_cast %452 : vector<8xf32> to vector<8x1xf32>
    %cst_153 = arith.constant 1.000000e-24 : f32
    %454 = vector.broadcast %cst_153 : f32 to vector<8x1xf32>
    %455 = arith.maximumf %453, %454 : vector<8x1xf32>
    %456 = math.rsqrt %455 : vector<8x1xf32>
    %457 = vector.broadcast %456 : vector<8x1xf32> to vector<8x256xf32>
    %458 = arith.mulf %448, %457 : vector<8x256xf32>
    %459 = arith.mulf %449, %449 : vector<8x256xf32>
    %cst_154 = arith.constant dense<0.000000e+00> : vector<8xf32>
    %460 = vector.multi_reduction <add>, %459, %cst_154 [1] : vector<8x256xf32> to vector<8xf32>
    %461 = vector.shape_cast %460 : vector<8xf32> to vector<8x1xf32>
    %cst_155 = arith.constant 1.000000e-24 : f32
    %462 = vector.broadcast %cst_155 : f32 to vector<8x1xf32>
    %463 = arith.maximumf %461, %462 : vector<8x1xf32>
    %464 = math.rsqrt %463 : vector<8x1xf32>
    %465 = vector.broadcast %464 : vector<8x1xf32> to vector<8x256xf32>
    %466 = arith.mulf %449, %465 : vector<8x256xf32>
    %cst_156 = arith.constant dense<0.000000e+00> : vector<8x8xf32>
    %467 = tpu.matmul %458, %466, %cst_156 {dimension_numbers = #tpu.dot_dimension_numbers<[1], [1], [0], [0], [0, 0, 1, 0], [], []>, precision = #tpu.contract_precision<fp32>} : vector<8x256xf32>, vector<8x256xf32>, vector<8x8xf32> -> vector<8x8xf32>
    %468 = vector.broadcast %350 : vector<8x1xf32> to vector<8x8xf32>
    %469 = arith.mulf %467, %468 : vector<8x8xf32>
    %470 = arith.addf %469, %351 : vector<8x8xf32>
    %cst_157 = arith.constant dense<0xFF800000> : vector<8xf32>
    %471 = vector.multi_reduction <maximumf>, %470, %cst_157 [1] : vector<8x8xf32> to vector<8xf32>
    %472 = vector.shape_cast %471 : vector<8xf32> to vector<8x1xf32>
    %473 = vector.broadcast %472 : vector<8x1xf32> to vector<8x8xf32>
    %474 = arith.subf %470, %473 : vector<8x8xf32>
    %475 = math.exp %474 : vector<8x8xf32>
    %cst_158 = arith.constant dense<0.000000e+00> : vector<8xf32>
    %476 = vector.multi_reduction <add>, %475, %cst_158 [1] : vector<8x8xf32> to vector<8xf32>
    %477 = vector.shape_cast %476 : vector<8xf32> to vector<8x1xf32>
    %478 = vector.broadcast %477 : vector<8x1xf32> to vector<8x8xf32>
    %479 = arith.divf %475, %478 : vector<8x8xf32>
    %cst_159 = arith.constant dense<0.000000e+00> : vector<8x256xf32>
    %480 = tpu.matmul %479, %450, %cst_159 {dimension_numbers = #tpu.dot_dimension_numbers<[1], [0], [0], [1], [0, 0, 1, 1], [], []>, precision = #tpu.contract_precision<fp32>} : vector<8x8xf32>, vector<8x256xf32>, vector<8x256xf32> -> vector<8x256xf32>
    %cst_160 = arith.constant dense<0.000000e+00> : vector<8x256xf32>
    %481 = tpu.matmul %352, %480, %cst_160 {dimension_numbers = #tpu.dot_dimension_numbers<[1], [0], [0], [1], [0, 0, 1, 1], [], []>, precision = #tpu.contract_precision<fp32>} : vector<8x8xf32>, vector<8x256xf32>, vector<8x256xf32> -> vector<8x256xf32>
    %482 = arith.addf %343, %481 : vector<8x256xf32>
    %cst_161 = arith.constant dense<0.000000e+00> : vector<256xf32>
    %483 = vector.multi_reduction <add>, %482, %cst_161 [0] : vector<8x256xf32> to vector<256xf32>
    %484 = vector.shape_cast %483 : vector<256xf32> to vector<1x256xf32>
    %cst_162 = arith.constant 8.000000e+00 : f32
    %485 = vector.broadcast %cst_162 : f32 to vector<1x256xf32>
    %486 = arith.divf %484, %485 : vector<1x256xf32>
    %487 = vector.broadcast %486 : vector<1x256xf32> to vector<8x256xf32>
    %488 = arith.subf %482, %487 : vector<8x256xf32>
    %489 = vector.broadcast %486 : vector<1x256xf32> to vector<8x256xf32>
    %490 = arith.subf %482, %489 : vector<8x256xf32>
    %491 = arith.mulf %488, %490 : vector<8x256xf32>
    %cst_163 = arith.constant dense<0.000000e+00> : vector<256xf32>
    %492 = vector.multi_reduction <add>, %491, %cst_163 [0] : vector<8x256xf32> to vector<256xf32>
    %493 = vector.shape_cast %492 : vector<256xf32> to vector<1x256xf32>
    %cst_164 = arith.constant 8.000000e+00 : f32
    %494 = vector.broadcast %cst_164 : f32 to vector<1x256xf32>
    %495 = arith.divf %493, %494 : vector<1x256xf32>
    %496 = vector.broadcast %486 : vector<1x256xf32> to vector<8x256xf32>
    %497 = arith.subf %482, %496 : vector<8x256xf32>
    %cst_165 = arith.constant 9.99999974E-6 : f32
    %498 = vector.broadcast %cst_165 : f32 to vector<1x256xf32>
    %499 = arith.addf %495, %498 : vector<1x256xf32>
    %500 = math.rsqrt %499 : vector<1x256xf32>
    %501 = vector.broadcast %500 : vector<1x256xf32> to vector<8x256xf32>
    %502 = arith.mulf %497, %501 : vector<8x256xf32>
    %503 = vector.broadcast %346 : vector<8x1xf32> to vector<8x256xf32>
    %504 = arith.mulf %502, %503 : vector<8x256xf32>
    %505 = vector.broadcast %347 : vector<8x1xf32> to vector<8x256xf32>
    %506 = arith.addf %504, %505 : vector<8x256xf32>
    %cst_166 = arith.constant dense<0.000000e+00> : vector<48x256xf32>
    %507 = tpu.matmul %353, %506, %cst_166 {dimension_numbers = #tpu.dot_dimension_numbers<[1], [0], [0], [1], [0, 0, 1, 1], [], []>, precision = #tpu.contract_precision<fp32>} : vector<48x8xf32>, vector<8x256xf32>, vector<48x256xf32> -> vector<48x256xf32>
    %508 = vector.extract_strided_slice %354 {offsets = [0, 4], sizes = [48, 1], strides = [1, 1]} : vector<48x9xf32> to vector<48x1xf32>
    %509 = vector.broadcast %508 : vector<48x1xf32> to vector<48x256xf32>
    %510 = arith.mulf %507, %509 : vector<48x256xf32>
    %c17_i32_167 = arith.constant 17 : i32
    %511 = tpu.dynamic_rotate %507 by %c17_i32_167 dim 1 : vector<48x256xf32>, i32 -> vector<48x256xf32>
    %512 = vector.extract_strided_slice %0 {offsets = [0, 0], sizes = [1, 256], strides = [1, 1]} : vector<9x256xf32> to vector<1x256xf32>
    %513 = vector.broadcast %512 : vector<1x256xf32> to vector<48x256xf32>
    %514 = arith.mulf %511, %513 : vector<48x256xf32>
    %515 = vector.extract_strided_slice %354 {offsets = [0, 0], sizes = [48, 1], strides = [1, 1]} : vector<48x9xf32> to vector<48x1xf32>
    %516 = vector.broadcast %515 : vector<48x1xf32> to vector<48x256xf32>
    %517 = arith.mulf %514, %516 : vector<48x256xf32>
    %518 = arith.addf %510, %517 : vector<48x256xf32>
    %c16_i32_168 = arith.constant 16 : i32
    %519 = tpu.dynamic_rotate %507 by %c16_i32_168 dim 1 : vector<48x256xf32>, i32 -> vector<48x256xf32>
    %520 = vector.extract_strided_slice %0 {offsets = [1, 0], sizes = [1, 256], strides = [1, 1]} : vector<9x256xf32> to vector<1x256xf32>
    %521 = vector.broadcast %520 : vector<1x256xf32> to vector<48x256xf32>
    %522 = arith.mulf %519, %521 : vector<48x256xf32>
    %523 = vector.extract_strided_slice %354 {offsets = [0, 1], sizes = [48, 1], strides = [1, 1]} : vector<48x9xf32> to vector<48x1xf32>
    %524 = vector.broadcast %523 : vector<48x1xf32> to vector<48x256xf32>
    %525 = arith.mulf %522, %524 : vector<48x256xf32>
    %526 = arith.addf %518, %525 : vector<48x256xf32>
    %c15_i32_169 = arith.constant 15 : i32
    %527 = tpu.dynamic_rotate %507 by %c15_i32_169 dim 1 : vector<48x256xf32>, i32 -> vector<48x256xf32>
    %528 = vector.extract_strided_slice %0 {offsets = [2, 0], sizes = [1, 256], strides = [1, 1]} : vector<9x256xf32> to vector<1x256xf32>
    %529 = vector.broadcast %528 : vector<1x256xf32> to vector<48x256xf32>
    %530 = arith.mulf %527, %529 : vector<48x256xf32>
    %531 = vector.extract_strided_slice %354 {offsets = [0, 2], sizes = [48, 1], strides = [1, 1]} : vector<48x9xf32> to vector<48x1xf32>
    %532 = vector.broadcast %531 : vector<48x1xf32> to vector<48x256xf32>
    %533 = arith.mulf %530, %532 : vector<48x256xf32>
    %534 = arith.addf %526, %533 : vector<48x256xf32>
    %c1_i32_170 = arith.constant 1 : i32
    %535 = tpu.dynamic_rotate %507 by %c1_i32_170 dim 1 : vector<48x256xf32>, i32 -> vector<48x256xf32>
    %536 = vector.extract_strided_slice %0 {offsets = [3, 0], sizes = [1, 256], strides = [1, 1]} : vector<9x256xf32> to vector<1x256xf32>
    %537 = vector.broadcast %536 : vector<1x256xf32> to vector<48x256xf32>
    %538 = arith.mulf %535, %537 : vector<48x256xf32>
    %539 = vector.extract_strided_slice %354 {offsets = [0, 3], sizes = [48, 1], strides = [1, 1]} : vector<48x9xf32> to vector<48x1xf32>
    %540 = vector.broadcast %539 : vector<48x1xf32> to vector<48x256xf32>
    %541 = arith.mulf %538, %540 : vector<48x256xf32>
    %542 = arith.addf %534, %541 : vector<48x256xf32>
    %c255_i32_171 = arith.constant 255 : i32
    %543 = tpu.dynamic_rotate %507 by %c255_i32_171 dim 1 : vector<48x256xf32>, i32 -> vector<48x256xf32>
    %544 = vector.extract_strided_slice %0 {offsets = [5, 0], sizes = [1, 256], strides = [1, 1]} : vector<9x256xf32> to vector<1x256xf32>
    %545 = vector.broadcast %544 : vector<1x256xf32> to vector<48x256xf32>
    %546 = arith.mulf %543, %545 : vector<48x256xf32>
    %547 = vector.extract_strided_slice %354 {offsets = [0, 5], sizes = [48, 1], strides = [1, 1]} : vector<48x9xf32> to vector<48x1xf32>
    %548 = vector.broadcast %547 : vector<48x1xf32> to vector<48x256xf32>
    %549 = arith.mulf %546, %548 : vector<48x256xf32>
    %550 = arith.addf %542, %549 : vector<48x256xf32>
    %c241_i32_172 = arith.constant 241 : i32
    %551 = tpu.dynamic_rotate %507 by %c241_i32_172 dim 1 : vector<48x256xf32>, i32 -> vector<48x256xf32>
    %552 = vector.extract_strided_slice %0 {offsets = [6, 0], sizes = [1, 256], strides = [1, 1]} : vector<9x256xf32> to vector<1x256xf32>
    %553 = vector.broadcast %552 : vector<1x256xf32> to vector<48x256xf32>
    %554 = arith.mulf %551, %553 : vector<48x256xf32>
    %555 = vector.extract_strided_slice %354 {offsets = [0, 6], sizes = [48, 1], strides = [1, 1]} : vector<48x9xf32> to vector<48x1xf32>
    %556 = vector.broadcast %555 : vector<48x1xf32> to vector<48x256xf32>
    %557 = arith.mulf %554, %556 : vector<48x256xf32>
    %558 = arith.addf %550, %557 : vector<48x256xf32>
    %c240_i32_173 = arith.constant 240 : i32
    %559 = tpu.dynamic_rotate %507 by %c240_i32_173 dim 1 : vector<48x256xf32>, i32 -> vector<48x256xf32>
    %560 = vector.extract_strided_slice %0 {offsets = [7, 0], sizes = [1, 256], strides = [1, 1]} : vector<9x256xf32> to vector<1x256xf32>
    %561 = vector.broadcast %560 : vector<1x256xf32> to vector<48x256xf32>
    %562 = arith.mulf %559, %561 : vector<48x256xf32>
    %563 = vector.extract_strided_slice %354 {offsets = [0, 7], sizes = [48, 1], strides = [1, 1]} : vector<48x9xf32> to vector<48x1xf32>
    %564 = vector.broadcast %563 : vector<48x1xf32> to vector<48x256xf32>
    %565 = arith.mulf %562, %564 : vector<48x256xf32>
    %566 = arith.addf %558, %565 : vector<48x256xf32>
    %c239_i32_174 = arith.constant 239 : i32
    %567 = tpu.dynamic_rotate %507 by %c239_i32_174 dim 1 : vector<48x256xf32>, i32 -> vector<48x256xf32>
    %568 = vector.extract_strided_slice %0 {offsets = [8, 0], sizes = [1, 256], strides = [1, 1]} : vector<9x256xf32> to vector<1x256xf32>
    %569 = vector.broadcast %568 : vector<1x256xf32> to vector<48x256xf32>
    %570 = arith.mulf %567, %569 : vector<48x256xf32>
    %571 = vector.extract_strided_slice %354 {offsets = [0, 8], sizes = [48, 1], strides = [1, 1]} : vector<48x9xf32> to vector<48x1xf32>
    %572 = vector.broadcast %571 : vector<48x1xf32> to vector<48x256xf32>
    %573 = arith.mulf %570, %572 : vector<48x256xf32>
    %574 = arith.addf %566, %573 : vector<48x256xf32>
    %575 = vector.extract_strided_slice %574 {offsets = [0, 0], sizes = [24, 256], strides = [1, 1]} : vector<48x256xf32> to vector<24x256xf32>
    %cst_175 = arith.constant 5.000000e-01 : f32
    %576 = vector.broadcast %cst_175 : f32 to vector<24x256xf32>
    %577 = arith.mulf %576, %575 : vector<24x256xf32>
    %cst_176 = arith.constant 4.471500e-02 : f32
    %578 = vector.broadcast %cst_176 : f32 to vector<24x256xf32>
    %579 = arith.mulf %578, %575 : vector<24x256xf32>
    %580 = arith.mulf %579, %575 : vector<24x256xf32>
    %581 = arith.mulf %580, %575 : vector<24x256xf32>
    %582 = arith.addf %575, %581 : vector<24x256xf32>
    %cst_177 = arith.constant 0.797884583 : f32
    %583 = vector.broadcast %cst_177 : f32 to vector<24x256xf32>
    %584 = arith.mulf %583, %582 : vector<24x256xf32>
    %585 = math.tanh %584 : vector<24x256xf32>
    %cst_178 = arith.constant 1.000000e+00 : f32
    %586 = vector.broadcast %cst_178 : f32 to vector<24x256xf32>
    %587 = arith.addf %586, %585 : vector<24x256xf32>
    %588 = arith.mulf %577, %587 : vector<24x256xf32>
    %589 = vector.extract_strided_slice %574 {offsets = [24, 0], sizes = [24, 256], strides = [1, 1]} : vector<48x256xf32> to vector<24x256xf32>
    %590 = arith.mulf %588, %589 : vector<24x256xf32>
    %cst_179 = arith.constant dense<0.000000e+00> : vector<8x256xf32>
    %591 = tpu.matmul %355, %590, %cst_179 {dimension_numbers = #tpu.dot_dimension_numbers<[1], [0], [0], [1], [0, 0, 1, 1], [], []>, precision = #tpu.contract_precision<fp32>} : vector<8x24xf32>, vector<24x256xf32>, vector<8x256xf32> -> vector<8x256xf32>
    %592 = arith.addf %482, %591 : vector<8x256xf32>
    %593 = arith.addf %592, %210 : vector<8x256xf32>
    %c0_180 = arith.constant 0 : index
    %c0_181 = arith.constant 0 : index
    %c0_182 = arith.constant 0 : index
    %594 = vector.load %arg9[%c0_180, %c0_181, %c0_182] : memref<1x8x256xf32, #tpu.memory_space<vmem>>, vector<1x8x256xf32>
    %595 = vector.shape_cast %594 : vector<1x8x256xf32> to vector<8x256xf32>
    %596 = vector.shape_cast %593 : vector<8x256xf32> to vector<1x8x256xf32>
    tpu.vector_store %arg9[%c0_180, %c0_181, %c0_182], %596 {strides = array<i32>} : memref<1x8x256xf32, #tpu.memory_space<vmem>>, vector<1x8x256xf32>,
    return
  }
  func.func @transform_0(%arg0: i32) -> (i32, i32, i32) {
    %c0_i32 = arith.constant 0 : i32
    %c0_i32_0 = arith.constant 0 : i32
    %c0_i32_1 = arith.constant 0 : i32
    return %arg0, %c0_i32, %c0_i32_0 : i32, i32, i32
  }
  func.func @transform_1(%arg0: i32) -> (i32, i32) {
    %c0_i32 = arith.constant 0 : i32
    %c0_i32_0 = arith.constant 0 : i32
    %c0_i32_1 = arith.constant 0 : i32
    return %c0_i32, %c0_i32_0 : i32, i32
  }
  func.func @transform_2(%arg0: i32) -> (i32, i32) {
    %c0_i32 = arith.constant 0 : i32
    %c0_i32_0 = arith.constant 0 : i32
    %c0_i32_1 = arith.constant 0 : i32
    return %c0_i32, %c0_i32_0 : i32, i32
  }
  func.func @transform_3(%arg0: i32) -> (i32, i32) {
    %c0_i32 = arith.constant 0 : i32
    %c0_i32_0 = arith.constant 0 : i32
    %c0_i32_1 = arith.constant 0 : i32
    return %c0_i32, %c0_i32_0 : i32, i32
  }
  func.func @transform_4(%arg0: i32) -> (i32, i32) {
    %c0_i32 = arith.constant 0 : i32
    %c0_i32_0 = arith.constant 0 : i32
    %c0_i32_1 = arith.constant 0 : i32
    return %c0_i32, %c0_i32_0 : i32, i32
  }
  func.func @transform_5(%arg0: i32) -> (i32, i32) {
    %c0_i32 = arith.constant 0 : i32
    %c0_i32_0 = arith.constant 0 : i32
    %c0_i32_1 = arith.constant 0 : i32
    return %c0_i32, %c0_i32_0 : i32, i32
  }
  func.func @transform_6(%arg0: i32) -> (i32, i32) {
    %c0_i32 = arith.constant 0 : i32
    %c0_i32_0 = arith.constant 0 : i32
    %c0_i32_1 = arith.constant 0 : i32
    return %c0_i32, %c0_i32_0 : i32, i32
  }
  func.func @transform_7(%arg0: i32) -> (i32, i32) {
    %c0_i32 = arith.constant 0 : i32
    %c0_i32_0 = arith.constant 0 : i32
    %c0_i32_1 = arith.constant 0 : i32
    return %c0_i32, %c0_i32_0 : i32, i32
  }
  func.func @transform_8(%arg0: i32) -> (i32, i32, i32) {
    %c0_i32 = arith.constant 0 : i32
    %c0_i32_0 = arith.constant 0 : i32
    %c0_i32_1 = arith.constant 0 : i32
    return %arg0, %c0_i32, %c0_i32_0 : i32, i32, i32
  }
}

</mosaic_0001>

<llo_original>
// kernel: tpu_custom_call.1
$region0: #{tpu_custom_call.1}
  #allocation0 [shape = 'u32[]', space=smem, size = 0x4, offset = 0x4, fixed_abs, tag = 'smem constant byte address 0x4 - core index']
  #allocation1 [shape = 'u32[72,128]{1,0:T(1,128)}', space=vmem, size = 0x9000, scoped, tag = 'internal scratch']
  %s0 = inlined_call_operand.vmem [shape: f32[2,8,256], index: 0, kind: input, shape index: {}]
  %s1 = inlined_call_operand.vmem [shape: f32[184,8], index: 1, kind: input, shape index: {}]
  %s2 = inlined_call_operand.vmem [shape: f32[32,4], index: 2, kind: input, shape index: {}]
  %s3 = inlined_call_operand.vmem [shape: f32[8,16], index: 3, kind: input, shape index: {}]
  %s4 = inlined_call_operand.vmem [shape: f32[8,24], index: 4, kind: input, shape index: {}]
  %s5 = inlined_call_operand.vmem [shape: f32[88,9], index: 5, kind: input, shape index: {}]
  %s6 = inlined_call_operand.vmem [shape: f32[192,1], index: 6, kind: input, shape index: {}]
  %s7 = inlined_call_operand.vmem [shape: f32[9,256], index: 7, kind: input, shape index: {}]
  %s8 = inlined_call_operand.hbm [shape: f32[2,8,256], index: 8, kind: output, shape index: {}]
  %s9 = sld [smem:[#allocation0]]
  $region65: #{tpu_custom_call.1} parent=0
    _
  %s11 = ssub.s32 1, %s9
  %s12 = scalar_select 0, %s11, %s9
  $region1: #{tpu_custom_call.1} parent=0
    #allocation2 [shape = 'u8[16384]{0}', space=vmem, size = 0x4000, scoped, tag = 'output window, operand 0']
    #allocation3 [shape = 's32[2]{0}', space=sflag, size = 0x8, scoped, tag = 'scoped memory for tpu_custom_call.1']
    %13 = vsyncpa [#allocation3], 0
    %s14 = scalar_lea.sflag [#allocation3], 1
    %15 = vsyncpa %s14, 0
    loop: start=0, step=1, limit=4
    $region2: #{tpu_custom_call.1} parent=1 // loop_pre_header
      _
    $region3: #{tpu_custom_call.1} parent=1 // loop_header
      %s17 = sphi 0, %s21
      %p18 = scmp.ge.s32.totalorder %s17, 4
      %s27 = sphi 0, %s29
      %s30 = sphi 0, %s27
      %s31 = sphi 0, %s30
      %s47 = sphi 0, %s31
      %s51 = sphi 0, %s51
      %s53 = sphi 0, %s51
      %s54 = sphi 0, %s53
      %s68 = sphi 0, %s54
      %s72 = sphi 0, %s72
      %s74 = sphi 0, %s72
      %s75 = sphi 0, %s74
      %s89 = sphi 0, %s75
      %s93 = sphi 0, %s93
      %s95 = sphi 0, %s93
      %s96 = sphi 0, %s95
      %s110 = sphi 0, %s96
      %s114 = sphi 0, %s114
      %s116 = sphi 0, %s114
      %s117 = sphi 0, %s116
      %s131 = sphi 0, %s117
      %s135 = sphi 0, %s135
      %s137 = sphi 0, %s135
      %s138 = sphi 0, %s137
      %s152 = sphi 0, %s138
      %s156 = sphi 0, %s156
      %s158 = sphi 0, %s156
      %s159 = sphi 0, %s158
      %s173 = sphi 0, %s159
      %s177 = sphi 0, %s177
      %s179 = sphi 0, %s177
      %s180 = sphi 0, %s179
      %s194 = sphi 0, %s180
      %s200 = sphi 0, %s202
      %s203 = sphi 0, %s200
      %s204 = sphi 0, %s203
      %s220 = sphi 0, %s204
    $region4: #{tpu_custom_call.1} parent=1 // loop_header_branch
      %20 = sbr.rel (%p18) target = $region8
    $region5: #{tpu_custom_call.1} parent=1 // loop_body
      %s22 = ssub.s32 %s17, 1
      %s23 = ssub.s32 %s17, 2
      %s24 = sadd.s32 %s17, 1
      %s25 = ssub.s32 %s17, %s24
      %p26 = scmp.eq.s32.totalorder %s25, 0
      %s28 = sadd.s32 %s27, 1
      %s29 = scalar_select %p26, %s27, %s28
      %p32 = pneg %p26
      %p33 = scmp.eq.s32.totalorder %s17, 1
      %p34 = por %p32, %p33
      %p35 = scmp.ne.s32.totalorder %s27, %s30
      %p36 = scmp.eq.s32.totalorder %s17, 0
      %p37 = por %p35, %p36
      %p38 = scmp.ne.s32.totalorder %s27, %s30
      %p39 = scmp.eq.s32.totalorder %s22, 1
      %p40 = por %p38, %p39
      %p41 = scmp.ne.s32.totalorder %s30, %s31
      %p42 = scmp.eq.s32.totalorder %s22, 0
      %p43 = por %p41, %p42
      %p44 = scmp.ne.s32.totalorder %s30, %s31
      %p45 = scmp.eq.s32.totalorder %s23, 1
      %p46 = por %p44, %p45
      %p48 = scmp.ne.s32.totalorder %s31, %s47
      %p49 = scmp.eq.s32.totalorder %s23, 0
      %p50 = por %p48, %p49
      %s52 = sadd.s32 %s51, 1
      %p55 = scmp.eq.s32.totalorder %s17, 1
      %p56 = scmp.ne.s32.totalorder %s51, %s53
      %p57 = scmp.eq.s32.totalorder %s17, 0
      %p58 = por %p56, %p57
      %p59 = scmp.ne.s32.totalorder %s51, %s53
      %p60 = scmp.eq.s32.totalorder %s22, 1
      %p61 = por %p59, %p60
      %p62 = scmp.ne.s32.totalorder %s53, %s54
      %p63 = scmp.eq.s32.totalorder %s22, 0
      %p64 = por %p62, %p63
      %p65 = scmp.ne.s32.totalorder %s53, %s54
      %p66 = scmp.eq.s32.totalorder %s23, 1
      %p67 = por %p65, %p66
      %p69 = scmp.ne.s32.totalorder %s54, %s68
      %p70 = scmp.eq.s32.totalorder %s23, 0
      %p71 = por %p69, %p70
      %s73 = sadd.s32 %s72, 1
      %p76 = scmp.eq.s32.totalorder %s17, 1
      %p77 = scmp.ne.s32.totalorder %s72, %s74
      %p78 = scmp.eq.s32.totalorder %s17, 0
      %p79 = por %p77, %p78
      %p80 = scmp.ne.s32.totalorder %s72, %s74
      %p81 = scmp.eq.s32.totalorder %s22, 1
      %p82 = por %p80, %p81
      %p83 = scmp.ne.s32.totalorder %s74, %s75
      %p84 = scmp.eq.s32.totalorder %s22, 0
      %p85 = por %p83, %p84
      %p86 = scmp.ne.s32.totalorder %s74, %s75
      %p87 = scmp.eq.s32.totalorder %s23, 1
      %p88 = por %p86, %p87
      %p90 = scmp.ne.s32.totalorder %s75, %s89
      %p91 = scmp.eq.s32.totalorder %s23, 0
      %p92 = por %p90, %p91
      %s94 = sadd.s32 %s93, 1
      %p97 = scmp.eq.s32.totalorder %s17, 1
      %p98 = scmp.ne.s32.totalorder %s93, %s95
      %p99 = scmp.eq.s32.totalorder %s17, 0
      %p100 = por %p98, %p99
      %p101 = scmp.ne.s32.totalorder %s93, %s95
      %p102 = scmp.eq.s32.totalorder %s22, 1
      %p103 = por %p101, %p102
      %p104 = scmp.ne.s32.totalorder %s95, %s96
      %p105 = scmp.eq.s32.totalorder %s22, 0
      %p106 = por %p104, %p105
      %p107 = scmp.ne.s32.totalorder %s95, %s96
      %p108 = scmp.eq.s32.totalorder %s23, 1
      %p109 = por %p107, %p108
      %p111 = scmp.ne.s32.totalorder %s96, %s110
      %p112 = scmp.eq.s32.totalorder %s23, 0
      %p113 = por %p111, %p112
      %s115 = sadd.s32 %s114, 1
      %p118 = scmp.eq.s32.totalorder %s17, 1
      %p119 = scmp.ne.s32.totalorder %s114, %s116
      %p120 = scmp.eq.s32.totalorder %s17, 0
      %p121 = por %p119, %p120
      %p122 = scmp.ne.s32.totalorder %s114, %s116
      %p123 = scmp.eq.s32.totalorder %s22, 1
      %p124 = por %p122, %p123
      %p125 = scmp.ne.s32.totalorder %s116, %s117
      %p126 = scmp.eq.s32.totalorder %s22, 0
      %p127 = por %p125, %p126
      %p128 = scmp.ne.s32.totalorder %s116, %s117
      %p129 = scmp.eq.s32.totalorder %s23, 1
      %p130 = por %p128, %p129
      %p132 = scmp.ne.s32.totalorder %s117, %s131
      %p133 = scmp.eq.s32.totalorder %s23, 0
      %p134 = por %p132, %p133
      %s136 = sadd.s32 %s135, 1
      %p139 = scmp.eq.s32.totalorder %s17, 1
      %p140 = scmp.ne.s32.totalorder %s135, %s137
      %p141 = scmp.eq.s32.totalorder %s17, 0
      %p142 = por %p140, %p141
      %p143 = scmp.ne.s32.totalorder %s135, %s137
      %p144 = scmp.eq.s32.totalorder %s22, 1
      %p145 = por %p143, %p144
      %p146 = scmp.ne.s32.totalorder %s137, %s138
      %p147 = scmp.eq.s32.totalorder %s22, 0
      %p148 = por %p146, %p147
      %p149 = scmp.ne.s32.totalorder %s137, %s138
      %p150 = scmp.eq.s32.totalorder %s23, 1
      %p151 = por %p149, %p150
      %p153 = scmp.ne.s32.totalorder %s138, %s152
      %p154 = scmp.eq.s32.totalorder %s23, 0
      %p155 = por %p153, %p154
      %s157 = sadd.s32 %s156, 1
      %p160 = scmp.eq.s32.totalorder %s17, 1
      %p161 = scmp.ne.s32.totalorder %s156, %s158
      %p162 = scmp.eq.s32.totalorder %s17, 0
      %p163 = por %p161, %p162
      %p164 = scmp.ne.s32.totalorder %s156, %s158
      %p165 = scmp.eq.s32.totalorder %s22, 1
      %p166 = por %p164, %p165
      %p167 = scmp.ne.s32.totalorder %s158, %s159
      %p168 = scmp.eq.s32.totalorder %s22, 0
      %p169 = por %p167, %p168
      %p170 = scmp.ne.s32.totalorder %s158, %s159
      %p171 = scmp.eq.s32.totalorder %s23, 1
      %p172 = por %p170, %p171
      %p174 = scmp.ne.s32.totalorder %s159, %s173
      %p175 = scmp.eq.s32.totalorder %s23, 0
      %p176 = por %p174, %p175
      %s178 = sadd.s32 %s177, 1
      %p181 = scmp.eq.s32.totalorder %s17, 1
      %p182 = scmp.ne.s32.totalorder %s177, %s179
      %p183 = scmp.eq.s32.totalorder %s17, 0
      %p184 = por %p182, %p183
      %p185 = scmp.ne.s32.totalorder %s177, %s179
      %p186 = scmp.eq.s32.totalorder %s22, 1
      %p187 = por %p185, %p186
      %p188 = scmp.ne.s32.totalorder %s179, %s180
      %p189 = scmp.eq.s32.totalorder %s22, 0
      %p190 = por %p188, %p189
      %p191 = scmp.ne.s32.totalorder %s179, %s180
      %p192 = scmp.eq.s32.totalorder %s23, 1
      %p193 = por %p191, %p192
      %p195 = scmp.ne.s32.totalorder %s180, %s194
      %p196 = scmp.eq.s32.totalorder %s23, 0
      %p197 = por %p195, %p196
      %s198 = ssub.s32 %s17, %s24
      %p199 = scmp.eq.s32.totalorder %s198, 0
      %s201 = sadd.s32 %s200, 1
      %s202 = scalar_select %p199, %s200, %s201
      %p205 = pneg %p199
      %p206 = scmp.eq.s32.totalorder %s17, 1
      %p207 = por %p205, %p206
      %p208 = scmp.ne.s32.totalorder %s200, %s203
      %p209 = scmp.eq.s32.totalorder %s17, 0
      %p210 = por %p208, %p209
      %p211 = scmp.ne.s32.totalorder %s200, %s203
      %p212 = scmp.eq.s32.totalorder %s22, 1
      %p213 = por %p211, %p212
      %p214 = scmp.ne.s32.totalorder %s203, %s204
      %p215 = scmp.eq.s32.totalorder %s22, 0
      %p216 = por %p214, %p215
      %p217 = scmp.ne.s32.totalorder %s203, %s204
      %p218 = scmp.eq.s32.totalorder %s23, 1
      %p219 = por %p217, %p218
      %p221 = scmp.ne.s32.totalorder %s204, %s220
      %p222 = scmp.eq.s32.totalorder %s23, 0
      %p223 = por %p221, %p222
      %p224 = scmp.le.s32.totalorder 1, %s17
      %p225 = scmp.lt.s32.totalorder %s17, 3
      %p226 = pnand %p224, %p225
      %p227 = pneg %p226
      // Predicated region
      $region9: #{tpu_custom_call.1} parent=5 // pred_check
        _
      $region10: #{tpu_custom_call.1} parent=5 // pred_check_branch
        %229 = sbr.rel (%p226) target = $region12
      $region11: #{tpu_custom_call.1} parent=5 // pred_region
        %s230 = ssub.s32 %s17, 1
        // Predicated region
        $region13: #{tpu_custom_call.1} parent=11 // pred_check
          %p231 = pneg %p64
        $region14: #{tpu_custom_call.1} parent=11 // pred_check_branch
          %233 = sbr.rel (%p231) target = $region16
        $region15: #{tpu_custom_call.1} parent=11 // pred_region
          _
        $region16: #{tpu_custom_call.1} parent=11 // pred_fallthru
          _
        // Predicated region
        $region17: #{tpu_custom_call.1} parent=11 // pred_check
          %p234 = pneg %p85
        $region18: #{tpu_custom_call.1} parent=11 // pred_check_branch
          %236 = sbr.rel (%p234) target = $region20
        $region19: #{tpu_custom_call.1} parent=11 // pred_region
          _
        $region20: #{tpu_custom_call.1} parent=11 // pred_fallthru
          _
        // Predicated region
        $region21: #{tpu_custom_call.1} parent=11 // pred_check
          %p237 = pneg %p106
        $region22: #{tpu_custom_call.1} parent=11 // pred_check_branch
          %239 = sbr.rel (%p237) target = $region24
        $region23: #{tpu_custom_call.1} parent=11 // pred_region
          _
        $region24: #{tpu_custom_call.1} parent=11 // pred_fallthru
          _
        // Predicated region
        $region25: #{tpu_custom_call.1} parent=11 // pred_check
          %p240 = pneg %p127
        $region26: #{tpu_custom_call.1} parent=11 // pred_check_branch
          %242 = sbr.rel (%p240) target = $region28
        $region27: #{tpu_custom_call.1} parent=11 // pred_region
          _
        $region28: #{tpu_custom_call.1} parent=11 // pred_fallthru
          _
        // Predicated region
        $region29: #{tpu_custom_call.1} parent=11 // pred_check
          %p243 = pneg %p148
        $region30: #{tpu_custom_call.1} parent=11 // pred_check_branch
          %245 = sbr.rel (%p243) target = $region32
        $region31: #{tpu_custom_call.1} parent=11 // pred_region
          _
        $region32: #{tpu_custom_call.1} parent=11 // pred_fallthru
          _
        // Predicated region
        $region33: #{tpu_custom_call.1} parent=11 // pred_check
          %p246 = pneg %p169
        $region34: #{tpu_custom_call.1} parent=11 // pred_check_branch
          %248 = sbr.rel (%p246) target = $region36
        $region35: #{tpu_custom_call.1} parent=11 // pred_region
          _
        $region36: #{tpu_custom_call.1} parent=11 // pred_fallthru
          _
        // Predicated region
        $region37: #{tpu_custom_call.1} parent=11 // pred_check
          %p249 = pneg %p190
        $region38: #{tpu_custom_call.1} parent=11 // pred_check_branch
          %251 = sbr.rel (%p249) target = $region40
        $region39: #{tpu_custom_call.1} parent=11 // pred_region
          _
        $region40: #{tpu_custom_call.1} parent=11 // pred_fallthru
          _
      $region12: #{tpu_custom_call.1} parent=5 // pred_fallthru
        _
      %p252 = scmp.lt.s32.totalorder %s17, 2
      // Predicated region
      $region41: #{tpu_custom_call.1} parent=5 // pred_check
        %p253 = pneg %p252
      $region42: #{tpu_custom_call.1} parent=5 // pred_check_branch
        %255 = sbr.rel (%p253) target = $region44
      $region43: #{tpu_custom_call.1} parent=5 // pred_region
        // Predicated region
        $region45: #{tpu_custom_call.1} parent=43 // pred_check
          %p256 = pneg %p37
        $region46: #{tpu_custom_call.1} parent=43 // pred_check_branch
          %258 = sbr.rel (%p256) target = $region48
        $region47: #{tpu_custom_call.1} parent=43 // pred_region
          %p259 = scmp.lt.s32.totalorder %s17, 1
          %s260 = scalar_select %p259, %s17, 1
          %s261 = smul.addr %s260, 2
          %s262 = smul.addr %s261, 8
          %s263 = scalar_lea.vmem %s0, %s262
        $region48: #{tpu_custom_call.1} parent=43 // pred_fallthru
          _
      $region44: #{tpu_custom_call.1} parent=5 // pred_fallthru
        _
      %p264 = scmp.le.s32.totalorder 1, %s17
      %p265 = scmp.lt.s32.totalorder %s17, 3
      %p266 = pnand %p264, %p265
      %p267 = pneg %p266
      // Predicated region
      $region49: #{tpu_custom_call.1} parent=5 // pred_check
        _
      $region50: #{tpu_custom_call.1} parent=5 // pred_check_branch
        %269 = sbr.rel (%p266) target = $region52
      $region51: #{tpu_custom_call.1} parent=5 // pred_region
        %s270 = ssub.s32 %s17, 1
        %p271 = scmp.lt.s32.totalorder %s22, 1
        %s272 = scalar_select %p271, %s22, 1
        %s273 = smul.addr %s272, 2
        %s274 = smul.addr %s273, 8
        %s275 = scalar_lea.vmem %s0, %s274
        %p276 = pneg %p43
        %p277 = pneg %p40
        %p278 = pneg %p64
        %p279 = pneg %p61
        %p280 = pneg %p85
        %p281 = pneg %p82
        %p282 = pneg %p106
        %p283 = pneg %p103
        %p284 = pneg %p127
        %p285 = pneg %p124
        %p286 = pneg %p148
        %p287 = pneg %p145
        %p288 = pneg %p169
        %p289 = pneg %p166
        %p290 = pneg %p190
        %p291 = pneg %p187
        %p292 = pneg %p216
        %p293 = pneg %p213
        %s294 = sand.u32 %s203, 1
        %s295 = scalar_lea.sflag [#allocation3], %s294
        %s296 = sand.u32 %s203, 1
        %s297 = smul.addr %s296, 16
        %s298 = scalar_lea.vmem [#allocation2], %s297
        %p299 = scmp.lt.s32.totalorder %s22, 1
        %s300 = scalar_select %p299, %s22, 1
        %s301 = smul.addr %s300, 2
        %s302 = smul.addr %s301, 8
        %s303 = scalar_lea.vmem %s0, %s302
        %v304 = vld [vmem:[%s7] sm:$0xff]
        %v305 = vld [vmem:[%s7 + $0x8] sm:$0xff]
        %v306 = vld [vmem:[%s7 + $0x10] sm:$0x1]
        %v307 = vld [vmem:[%s7 + $0x18] sm:$0x1]
        %v308 = vld [vmem:[%s303] sm:$0xff]
        %v309 = vld [vmem:[%s303 + $0x8] sm:$0xff]
        %v310 = vld [vmem:[%s1] sm:$0xf]
        %v311 = vld [vmem:[%s6] sm:$0xf]
        %v312 = vld [vmem:[%s2] sm:$0xff]
        %v313 = vld [vmem:[%s6 + $0x8] sm:$0xff]
        %v314 = vld [vmem:[%s1 + $0x8] sm:$0xff]
        %v315 = vld [vmem:[%s1 + $0x10] sm:$0xff]
        %v316 = vld [vmem:[%s6 + $0x10] sm:$0xff]
        %v317 = vld [vmem:[%s1 + $0x18] sm:$0xf]
        %v318 = vld [vmem:[%s6 + $0x18] sm:$0xf]
        %v319 = vld [vmem:[%s2 + $0x8] sm:$0xff]
        %v320 = vld [vmem:[%s6 + $0x20] sm:$0xff]
        %v321 = vld [vmem:[%s5] sm:$0xff]
        %v322 = vld [vmem:[%s6 + $0x28] sm:$0xff]
        %v323 = vld [vmem:[%s1 + $0x20] sm:$0xff]
        %v324 = vld [vmem:[%s6 + $0x30] sm:$0xff]
        %326 = vset.pattern.permute.xlu0 0
        %327 = vperm.xlu0 %326, %v311
        %v328 = vpop.permute.xlu0 %327
        %vm330 = vcmask 64512
        %v332 = vsel %vm330, %v310, 0
        %334 = vmatpush.msra.mxu0 0.0
        %335 = vmatpush.msra.mxu0 0.0
        %336 = vmatpush.msra.mxu0 0.0
        %337 = vmatpush.msra.mxu0 0.0
        %338 = vmatpush.msra.mxu0 0.0
        %339 = vmatpush.msra.mxu0 0.0
        %340 = vmatpush.msra.mxu0 0.0
        %341 = vmatpush.msra.mxu0 0.0
        %342 = vmatpush.msra.mxu0 0.0
        %343 = vmatpush.msra.mxu0 0.0
        %344 = vmatpush.msra.mxu0 0.0
        %345 = vmatpush.msra.mxu0 0.0
        %346 = vmatpush.msra.mxu0 0.0
        %347 = vmatpush.msra.mxu0 0.0
        %348 = vmatpush.msra.mxu0 0.0
        %v349 = vand.u32 %v308, 4294901760
        %350 = vmatpush.msra.mxu0 %v349
        %v351 = vand.u32 %v332, 4294901760
        %v352 = vsub.f32 %v332, %v351
        %v353 = vand.u32 %v352, 4294901760
        %v354 = vsub.f32 %v352, %v353
        %v355 = vand.u32 %v354, 4294901760
        %356 = vmatmul.f32.gmra.mxu0 %v355
        %v357 = vpop.f32.mrf.mxu0
        %v358 = vadd.f32 %v328, %v357
        %359 = vdwg.mxu0
        %360 = vmatpush.msra.mxu0 0.0
        %361 = vmatpush.msra.mxu0 0.0
        %362 = vmatpush.msra.mxu0 0.0
        %363 = vmatpush.msra.mxu0 0.0
        %364 = vmatpush.msra.mxu0 0.0
        %365 = vmatpush.msra.mxu0 0.0
        %366 = vmatpush.msra.mxu0 0.0
        %367 = vmatpush.msra.mxu0 0.0
        %368 = vmatpush.msra.mxu0 0.0
        %369 = vmatpush.msra.mxu0 0.0
        %370 = vmatpush.msra.mxu0 0.0
        %371 = vmatpush.msra.mxu0 0.0
        %372 = vmatpush.msra.mxu0 0.0
        %373 = vmatpush.msra.mxu0 0.0
        %374 = vmatpush.msra.mxu0 0.0
        %v375 = vand.u32 %v308, 4294901760
        %v376 = vsub.f32 %v308, %v375
        %v377 = vand.u32 %v376, 4294901760
        %v378 = vsub.f32 %v376, %v377
        %v379 = vand.u32 %v378, 4294901760
        %380 = vmatpush.msra.mxu0 %v379
        %v381 = vand.u32 %v332, 4294901760
        %382 = vmatmul.f32.gmra.mxu0 %v381
        %v383 = vpop.f32.mrf.mxu0
        %v384 = vadd.f32 %v358, %v383
        %385 = vdwg.mxu0
        %386 = vmatpush.msra.mxu0 0.0
        %387 = vmatpush.msra.mxu0 0.0
        %388 = vmatpush.msra.mxu0 0.0
        %389 = vmatpush.msra.mxu0 0.0
        %390 = vmatpush.msra.mxu0 0.0
        %391 = vmatpush.msra.mxu0 0.0
        %392 = vmatpush.msra.mxu0 0.0
        %393 = vmatpush.msra.mxu0 0.0
        %394 = vmatpush.msra.mxu0 0.0
        %395 = vmatpush.msra.mxu0 0.0
        %396 = vmatpush.msra.mxu0 0.0
        %397 = vmatpush.msra.mxu0 0.0
        %398 = vmatpush.msra.mxu0 0.0
        %399 = vmatpush.msra.mxu0 0.0
        %400 = vmatpush.msra.mxu0 0.0
        %v401 = vand.u32 %v308, 4294901760
        %v402 = vsub.f32 %v308, %v401
        %403 = vmatpush.msra.mxu0 %v402
        %v404 = vand.u32 %v332, 4294901760
        %v405 = vsub.f32 %v332, %v404
        %406 = vmatmul.f32.gmra.mxu0 %v405
        %v407 = vpop.f32.mrf.mxu0
        %v408 = vadd.f32 %v384, %v407
        %409 = vdwg.mxu0
        %410 = vmatpush.msra.mxu0 0.0
        %411 = vmatpush.msra.mxu0 0.0
        %412 = vmatpush.msra.mxu0 0.0
        %413 = vmatpush.msra.mxu0 0.0
        %414 = vmatpush.msra.mxu0 0.0
        %415 = vmatpush.msra.mxu0 0.0
        %416 = vmatpush.msra.mxu0 0.0
        %417 = vmatpush.msra.mxu0 0.0
        %418 = vmatpush.msra.mxu0 0.0
        %419 = vmatpush.msra.mxu0 0.0
        %420 = vmatpush.msra.mxu0 0.0
        %421 = vmatpush.msra.mxu0 0.0
        %422 = vmatpush.msra.mxu0 0.0
        %423 = vmatpush.msra.mxu0 0.0
        %424 = vmatpush.msra.mxu0 0.0
        %v425 = vand.u32 %v308, 4294901760
        %426 = vmatpush.msra.mxu0 %v425
        %v427 = vand.u32 %v332, 4294901760
        %v428 = vsub.f32 %v332, %v427
        %v429 = vand.u32 %v428, 4294901760
        %430 = vmatmul.f32.gmra.mxu0 %v429
        %v431 = vpop.f32.mrf.mxu0
        %v432 = vadd.f32 %v408, %v431
        %433 = vdwg.mxu0
        %434 = vmatpush.msra.mxu0 0.0
        %435 = vmatpush.msra.mxu0 0.0
        %436 = vmatpush.msra.mxu0 0.0
        %437 = vmatpush.msra.mxu0 0.0
        %438 = vmatpush.msra.mxu0 0.0
        %439 = vmatpush.msra.mxu0 0.0
        %440 = vmatpush.msra.mxu0 0.0
        %441 = vmatpush.msra.mxu0 0.0
        %442 = vmatpush.msra.mxu0 0.0
        %443 = vmatpush.msra.mxu0 0.0
        %444 = vmatpush.msra.mxu0 0.0
        %445 = vmatpush.msra.mxu0 0.0
        %446 = vmatpush.msra.mxu0 0.0
        %447 = vmatpush.msra.mxu0 0.0
        %448 = vmatpush.msra.mxu0 0.0
        %v449 = vand.u32 %v308, 4294901760
        %v450 = vsub.f32 %v308, %v449
        %v451 = vand.u32 %v450, 4294901760
        %452 = vmatpush.msra.mxu0 %v451
        %v453 = vand.u32 %v332, 4294901760
        %454 = vmatmul.f32.gmra.mxu0 %v453
        %v455 = vpop.f32.mrf.mxu0
        %v456 = vadd.f32 %v432, %v455
        %457 = vdwg.mxu0
        %458 = vmatpush.msra.mxu0 0.0
        %459 = vmatpush.msra.mxu0 0.0
        %460 = vmatpush.msra.mxu0 0.0
        %461 = vmatpush.msra.mxu0 0.0
        %462 = vmatpush.msra.mxu0 0.0
        %463 = vmatpush.msra.mxu0 0.0
        %464 = vmatpush.msra.mxu0 0.0
        %465 = vmatpush.msra.mxu0 0.0
        %466 = vmatpush.msra.mxu0 0.0
        %467 = vmatpush.msra.mxu0 0.0
        %468 = vmatpush.msra.mxu0 0.0
        %469 = vmatpush.msra.mxu0 0.0
        %470 = vmatpush.msra.mxu0 0.0
        %471 = vmatpush.msra.mxu0 0.0
        %472 = vmatpush.msra.mxu0 0.0
        %v473 = vand.u32 %v308, 4294901760
        %474 = vmatpush.msra.mxu0 %v473
        %v475 = vand.u32 %v332, 4294901760
        %476 = vmatmul.f32.gmra.mxu0 %v475
        %v477 = vpop.f32.mrf.mxu0
        %v478 = vadd.f32 %v456, %v477
        %479 = vdwg.mxu0
        %480 = vmatpush.msra.mxu0 0.0
        %481 = vmatpush.msra.mxu0 0.0
        %482 = vmatpush.msra.mxu0 0.0
        %483 = vmatpush.msra.mxu0 0.0
        %484 = vmatpush.msra.mxu0 0.0
        %485 = vmatpush.msra.mxu0 0.0
        %486 = vmatpush.msra.mxu0 0.0
        %487 = vmatpush.msra.mxu0 0.0
        %488 = vmatpush.msra.mxu0 0.0
        %489 = vmatpush.msra.mxu0 0.0
        %490 = vmatpush.msra.mxu0 0.0
        %491 = vmatpush.msra.mxu0 0.0
        %492 = vmatpush.msra.mxu0 0.0
        %493 = vmatpush.msra.mxu0 0.0
        %494 = vmatpush.msra.mxu0 0.0
        %v495 = vand.u32 %v309, 4294901760
        %496 = vmatpush.msra.mxu0 %v495
        %v497 = vand.u32 %v332, 4294901760
        %v498 = vsub.f32 %v332, %v497
        %v499 = vand.u32 %v498, 4294901760
        %v500 = vsub.f32 %v498, %v499
        %v501 = vand.u32 %v500, 4294901760
        %502 = vmatmul.f32.gmra.mxu0 %v501
        %v503 = vpop.f32.mrf.mxu0
        %v504 = vadd.f32 %v328, %v503
        %505 = vdwg.mxu0
        %506 = vmatpush.msra.mxu0 0.0
        %507 = vmatpush.msra.mxu0 0.0
        %508 = vmatpush.msra.mxu0 0.0
        %509 = vmatpush.msra.mxu0 0.0
        %510 = vmatpush.msra.mxu0 0.0
        %511 = vmatpush.msra.mxu0 0.0
        %512 = vmatpush.msra.mxu0 0.0
        %513 = vmatpush.msra.mxu0 0.0
        %514 = vmatpush.msra.mxu0 0.0
        %515 = vmatpush.msra.mxu0 0.0
        %516 = vmatpush.msra.mxu0 0.0
        %517 = vmatpush.msra.mxu0 0.0
        %518 = vmatpush.msra.mxu0 0.0
        %519 = vmatpush.msra.mxu0 0.0
        %520 = vmatpush.msra.mxu0 0.0
        %v521 = vand.u32 %v309, 4294901760
        %v522 = vsub.f32 %v309, %v521
        %v523 = vand.u32 %v522, 4294901760
        %v524 = vsub.f32 %v522, %v523
        %v525 = vand.u32 %v524, 4294901760
        %526 = vmatpush.msra.mxu0 %v525
        %v527 = vand.u32 %v332, 4294901760
        %528 = vmatmul.f32.gmra.mxu0 %v527
        %v529 = vpop.f32.mrf.mxu0
        %v530 = vadd.f32 %v504, %v529
        %531 = vdwg.mxu0
        %532 = vmatpush.msra.mxu0 0.0
        %533 = vmatpush.msra.mxu0 0.0
        %534 = vmatpush.msra.mxu0 0.0
        %535 = vmatpush.msra.mxu0 0.0
        %536 = vmatpush.msra.mxu0 0.0
        %537 = vmatpush.msra.mxu0 0.0
        %538 = vmatpush.msra.mxu0 0.0
        %539 = vmatpush.msra.mxu0 0.0
        %540 = vmatpush.msra.mxu0 0.0
        %541 = vmatpush.msra.mxu0 0.0
        %542 = vmatpush.msra.mxu0 0.0
        %543 = vmatpush.msra.mxu0 0.0
        %544 = vmatpush.msra.mxu0 0.0
        %545 = vmatpush.msra.mxu0 0.0
        %546 = vmatpush.msra.mxu0 0.0
        %v547 = vand.u32 %v309, 4294901760
        %v548 = vsub.f32 %v309, %v547
        %549 = vmatpush.msra.mxu0 %v548
        %v550 = vand.u32 %v332, 4294901760
        %v551 = vsub.f32 %v332, %v550
        %552 = vmatmul.f32.gmra.mxu0 %v551
        %v553 = vpop.f32.mrf.mxu0
        %v554 = vadd.f32 %v530, %v553
        %555 = vdwg.mxu0
        %556 = vmatpush.msra.mxu0 0.0
        %557 = vmatpush.msra.mxu0 0.0
        %558 = vmatpush.msra.mxu0 0.0
        %559 = vmatpush.msra.mxu0 0.0
        %560 = vmatpush.msra.mxu0 0.0
        %561 = vmatpush.msra.mxu0 0.0
        %562 = vmatpush.msra.mxu0 0.0
        %563 = vmatpush.msra.mxu0 0.0
        %564 = vmatpush.msra.mxu0 0.0
        %565 = vmatpush.msra.mxu0 0.0
        %566 = vmatpush.msra.mxu0 0.0
        %567 = vmatpush.msra.mxu0 0.0
        %568 = vmatpush.msra.mxu0 0.0
        %569 = vmatpush.msra.mxu0 0.0
        %570 = vmatpush.msra.mxu0 0.0
        %v571 = vand.u32 %v309, 4294901760
        %572 = vmatpush.msra.mxu0 %v571
        %v573 = vand.u32 %v332, 4294901760
        %v574 = vsub.f32 %v332, %v573
        %v575 = vand.u32 %v574, 4294901760
        %576 = vmatmul.f32.gmra.mxu0 %v575
        %v577 = vpop.f32.mrf.mxu0
        %v578 = vadd.f32 %v554, %v577
        %579 = vdwg.mxu0
        %580 = vmatpush.msra.mxu0 0.0
        %581 = vmatpush.msra.mxu0 0.0
        %582 = vmatpush.msra.mxu0 0.0
        %583 = vmatpush.msra.mxu0 0.0
        %584 = vmatpush.msra.mxu0 0.0
        %585 = vmatpush.msra.mxu0 0.0
        %586 = vmatpush.msra.mxu0 0.0
        %587 = vmatpush.msra.mxu0 0.0
        %588 = vmatpush.msra.mxu0 0.0
        %589 = vmatpush.msra.mxu0 0.0
        %590 = vmatpush.msra.mxu0 0.0
        %591 = vmatpush.msra.mxu0 0.0
        %592 = vmatpush.msra.mxu0 0.0
        %593 = vmatpush.msra.mxu0 0.0
        %594 = vmatpush.msra.mxu0 0.0
        %v595 = vand.u32 %v309, 4294901760
        %v596 = vsub.f32 %v309, %v595
        %v597 = vand.u32 %v596, 4294901760
        %598 = vmatpush.msra.mxu0 %v597
        %v599 = vand.u32 %v332, 4294901760
        %600 = vmatmul.f32.gmra.mxu0 %v599
        %v601 = vpop.f32.mrf.mxu0
        %v602 = vadd.f32 %v578, %v601
        %603 = vdwg.mxu0
        %604 = vmatpush.msra.mxu0 0.0
        %605 = vmatpush.msra.mxu0 0.0
        %606 = vmatpush.msra.mxu0 0.0
        %607 = vmatpush.msra.mxu0 0.0
        %608 = vmatpush.msra.mxu0 0.0
        %609 = vmatpush.msra.mxu0 0.0
        %610 = vmatpush.msra.mxu0 0.0
        %611 = vmatpush.msra.mxu0 0.0
        %612 = vmatpush.msra.mxu0 0.0
        %613 = vmatpush.msra.mxu0 0.0
        %614 = vmatpush.msra.mxu0 0.0
        %615 = vmatpush.msra.mxu0 0.0
        %616 = vmatpush.msra.mxu0 0.0
        %617 = vmatpush.msra.mxu0 0.0
        %618 = vmatpush.msra.mxu0 0.0
        %v619 = vand.u32 %v309, 4294901760
        %620 = vmatpush.msra.mxu0 %v619
        %v621 = vand.u32 %v332, 4294901760
        %622 = vmatmul.f32.gmra.mxu0 %v621
        %v623 = vpop.f32.mrf.mxu0
        %v624 = vadd.f32 %v602, %v623
        %625 = vdwg.mxu0
        %vm626 = vcmp.gt.f32.partialorder %v478, 0.0
        %vm627 = vcmp.gt.f32.partialorder %v624, 0.0
        %v628 = vmul.f32 %v478, 0.01
        %v629 = vmul.f32 %v624, 0.01
        %v630 = vsel %vm626, %v478, %v628
        %v631 = vsel %vm627, %v624, %v629
        %633 = vset.pattern.permute.xlu0 0
        %634 = vperm.xlu0 %633, %v313
        %v635 = vpop.permute.xlu0 %634
        %vm637 = vcmask 31744
        %v639 = vsel %vm637, %v312, 0
        %vm641 = vcmask 1043456
        %v643 = vsel %vm641, %v630, 0
        %v646 = vsel %vm641, %v631, 0
        %648 = vmatpush.msra.mxu0 0.0
        %649 = vmatpush.msra.mxu0 0.0
        %650 = vmatpush.msra.mxu0 0.0
        %651 = vmatpush.msra.mxu0 0.0
        %652 = vmatpush.msra.mxu0 0.0
        %653 = vmatpush.msra.mxu0 0.0
        %654 = vmatpush.msra.mxu0 0.0
        %655 = vmatpush.msra.mxu0 0.0
        %656 = vmatpush.msra.mxu0 0.0
        %657 = vmatpush.msra.mxu0 0.0
        %658 = vmatpush.msra.mxu0 0.0
        %659 = vmatpush.msra.mxu0 0.0
        %660 = vmatpush.msra.mxu0 0.0
        %661 = vmatpush.msra.mxu0 0.0
        %662 = vmatpush.msra.mxu0 0.0
        %v663 = vand.u32 %v643, 4294901760
        %664 = vmatpush.msra.mxu0 %v663
        %v665 = vand.u32 %v639, 4294901760
        %v666 = vsub.f32 %v639, %v665
        %v667 = vand.u32 %v666, 4294901760
        %v668 = vsub.f32 %v666, %v667
        %v669 = vand.u32 %v668, 4294901760
        %670 = vmatmul.f32.gmra.mxu0 %v669
        %v671 = vpop.f32.mrf.mxu0
        %v672 = vadd.f32 %v635, %v671
        %673 = vdwg.mxu0
        %674 = vmatpush.msra.mxu0 0.0
        %675 = vmatpush.msra.mxu0 0.0
        %676 = vmatpush.msra.mxu0 0.0
        %677 = vmatpush.msra.mxu0 0.0
        %678 = vmatpush.msra.mxu0 0.0
        %679 = vmatpush.msra.mxu0 0.0
        %680 = vmatpush.msra.mxu0 0.0
        %681 = vmatpush.msra.mxu0 0.0
        %682 = vmatpush.msra.mxu0 0.0
        %683 = vmatpush.msra.mxu0 0.0
        %684 = vmatpush.msra.mxu0 0.0
        %685 = vmatpush.msra.mxu0 0.0
        %686 = vmatpush.msra.mxu0 0.0
        %687 = vmatpush.msra.mxu0 0.0
        %688 = vmatpush.msra.mxu0 0.0
        %v689 = vand.u32 %v643, 4294901760
        %v690 = vsub.f32 %v643, %v689
        %v691 = vand.u32 %v690, 4294901760
        %v692 = vsub.f32 %v690, %v691
        %v693 = vand.u32 %v692, 4294901760
        %694 = vmatpush.msra.mxu0 %v693
        %v695 = vand.u32 %v639, 4294901760
        %696 = vmatmul.f32.gmra.mxu0 %v695
        %v697 = vpop.f32.mrf.mxu0
        %v698 = vadd.f32 %v672, %v697
        %699 = vdwg.mxu0
        %700 = vmatpush.msra.mxu0 0.0
        %701 = vmatpush.msra.mxu0 0.0
        %702 = vmatpush.msra.mxu0 0.0
        %703 = vmatpush.msra.mxu0 0.0
        %704 = vmatpush.msra.mxu0 0.0
        %705 = vmatpush.msra.mxu0 0.0
        %706 = vmatpush.msra.mxu0 0.0
        %707 = vmatpush.msra.mxu0 0.0
        %708 = vmatpush.msra.mxu0 0.0
        %709 = vmatpush.msra.mxu0 0.0
        %710 = vmatpush.msra.mxu0 0.0
        %711 = vmatpush.msra.mxu0 0.0
        %712 = vmatpush.msra.mxu0 0.0
        %713 = vmatpush.msra.mxu0 0.0
        %714 = vmatpush.msra.mxu0 0.0
        %v715 = vand.u32 %v643, 4294901760
        %v716 = vsub.f32 %v643, %v715
        %717 = vmatpush.msra.mxu0 %v716
        %v718 = vand.u32 %v639, 4294901760
        %v719 = vsub.f32 %v639, %v718
        %720 = vmatmul.f32.gmra.mxu0 %v719
        %v721 = vpop.f32.mrf.mxu0
        %v722 = vadd.f32 %v698, %v721
        %723 = vdwg.mxu0
        %724 = vmatpush.msra.mxu0 0.0
        %725 = vmatpush.msra.mxu0 0.0
        %726 = vmatpush.msra.mxu0 0.0
        %727 = vmatpush.msra.mxu0 0.0
        %728 = vmatpush.msra.mxu0 0.0
        %729 = vmatpush.msra.mxu0 0.0
        %730 = vmatpush.msra.mxu0 0.0
        %731 = vmatpush.msra.mxu0 0.0
        %732 = vmatpush.msra.mxu0 0.0
        %733 = vmatpush.msra.mxu0 0.0
        %734 = vmatpush.msra.mxu0 0.0
        %735 = vmatpush.msra.mxu0 0.0
        %736 = vmatpush.msra.mxu0 0.0
        %737 = vmatpush.msra.mxu0 0.0
        %738 = vmatpush.msra.mxu0 0.0
        %v739 = vand.u32 %v643, 4294901760
        %740 = vmatpush.msra.mxu0 %v739
        %v741 = vand.u32 %v639, 4294901760
        %v742 = vsub.f32 %v639, %v741
        %v743 = vand.u32 %v742, 4294901760
        %744 = vmatmul.f32.gmra.mxu0 %v743
        %v745 = vpop.f32.mrf.mxu0
        %v746 = vadd.f32 %v722, %v745
        %747 = vdwg.mxu0
        %748 = vmatpush.msra.mxu0 0.0
        %749 = vmatpush.msra.mxu0 0.0
        %750 = vmatpush.msra.mxu0 0.0
        %751 = vmatpush.msra.mxu0 0.0
        %752 = vmatpush.msra.mxu0 0.0
        %753 = vmatpush.msra.mxu0 0.0
        %754 = vmatpush.msra.mxu0 0.0
        %755 = vmatpush.msra.mxu0 0.0
        %756 = vmatpush.msra.mxu0 0.0
        %757 = vmatpush.msra.mxu0 0.0
        %758 = vmatpush.msra.mxu0 0.0
        %759 = vmatpush.msra.mxu0 0.0
        %760 = vmatpush.msra.mxu0 0.0
        %761 = vmatpush.msra.mxu0 0.0
        %762 = vmatpush.msra.mxu0 0.0
        %v763 = vand.u32 %v643, 4294901760
        %v764 = vsub.f32 %v643, %v763
        %v765 = vand.u32 %v764, 4294901760
        %766 = vmatpush.msra.mxu0 %v765
        %v767 = vand.u32 %v639, 4294901760
        %768 = vmatmul.f32.gmra.mxu0 %v767
        %v769 = vpop.f32.mrf.mxu0
        %v770 = vadd.f32 %v746, %v769
        %771 = vdwg.mxu0
        %772 = vmatpush.msra.mxu0 0.0
        %773 = vmatpush.msra.mxu0 0.0
        %774 = vmatpush.msra.mxu0 0.0
        %775 = vmatpush.msra.mxu0 0.0
        %776 = vmatpush.msra.mxu0 0.0
        %777 = vmatpush.msra.mxu0 0.0
        %778 = vmatpush.msra.mxu0 0.0
        %779 = vmatpush.msra.mxu0 0.0
        %780 = vmatpush.msra.mxu0 0.0
        %781 = vmatpush.msra.mxu0 0.0
        %782 = vmatpush.msra.mxu0 0.0
        %783 = vmatpush.msra.mxu0 0.0
        %784 = vmatpush.msra.mxu0 0.0
        %785 = vmatpush.msra.mxu0 0.0
        %786 = vmatpush.msra.mxu0 0.0
        %v787 = vand.u32 %v643, 4294901760
        %788 = vmatpush.msra.mxu0 %v787
        %v789 = vand.u32 %v639, 4294901760
        %790 = vmatmul.f32.gmra.mxu0 %v789
        %v791 = vpop.f32.mrf.mxu0
        %v792 = vadd.f32 %v770, %v791
        %793 = vdwg.mxu0
        %794 = vmatpush.msra.mxu0 0.0
        %795 = vmatpush.msra.mxu0 0.0
        %796 = vmatpush.msra.mxu0 0.0
        %797 = vmatpush.msra.mxu0 0.0
        %798 = vmatpush.msra.mxu0 0.0
        %799 = vmatpush.msra.mxu0 0.0
        %800 = vmatpush.msra.mxu0 0.0
        %801 = vmatpush.msra.mxu0 0.0
        %802 = vmatpush.msra.mxu0 0.0
        %803 = vmatpush.msra.mxu0 0.0
        %804 = vmatpush.msra.mxu0 0.0
        %805 = vmatpush.msra.mxu0 0.0
        %806 = vmatpush.msra.mxu0 0.0
        %807 = vmatpush.msra.mxu0 0.0
        %808 = vmatpush.msra.mxu0 0.0
        %v809 = vand.u32 %v646, 4294901760
        %810 = vmatpush.msra.mxu0 %v809
        %v811 = vand.u32 %v639, 4294901760
        %v812 = vsub.f32 %v639, %v811
        %v813 = vand.u32 %v812, 4294901760
        %v814 = vsub.f32 %v812, %v813
        %v815 = vand.u32 %v814, 4294901760
        %816 = vmatmul.f32.gmra.mxu0 %v815
        %v817 = vpop.f32.mrf.mxu0
        %v818 = vadd.f32 %v635, %v817
        %819 = vdwg.mxu0
        %820 = vmatpush.msra.mxu0 0.0
        %821 = vmatpush.msra.mxu0 0.0
        %822 = vmatpush.msra.mxu0 0.0
        %823 = vmatpush.msra.mxu0 0.0
        %824 = vmatpush.msra.mxu0 0.0
        %825 = vmatpush.msra.mxu0 0.0
        %826 = vmatpush.msra.mxu0 0.0
        %827 = vmatpush.msra.mxu0 0.0
        %828 = vmatpush.msra.mxu0 0.0
        %829 = vmatpush.msra.mxu0 0.0
        %830 = vmatpush.msra.mxu0 0.0
        %831 = vmatpush.msra.mxu0 0.0
        %832 = vmatpush.msra.mxu0 0.0
        %833 = vmatpush.msra.mxu0 0.0
        %834 = vmatpush.msra.mxu0 0.0
        %v835 = vand.u32 %v646, 4294901760
        %v836 = vsub.f32 %v646, %v835
        %v837 = vand.u32 %v836, 4294901760
        %v838 = vsub.f32 %v836, %v837
        %v839 = vand.u32 %v838, 4294901760
        %840 = vmatpush.msra.mxu0 %v839
        %v841 = vand.u32 %v639, 4294901760
        %842 = vmatmul.f32.gmra.mxu0 %v841
        %v843 = vpop.f32.mrf.mxu0
        %v844 = vadd.f32 %v818, %v843
        %845 = vdwg.mxu0
        %846 = vmatpush.msra.mxu0 0.0
        %847 = vmatpush.msra.mxu0 0.0
        %848 = vmatpush.msra.mxu0 0.0
        %849 = vmatpush.msra.mxu0 0.0
        %850 = vmatpush.msra.mxu0 0.0
        %851 = vmatpush.msra.mxu0 0.0
        %852 = vmatpush.msra.mxu0 0.0
        %853 = vmatpush.msra.mxu0 0.0
        %854 = vmatpush.msra.mxu0 0.0
        %855 = vmatpush.msra.mxu0 0.0
        %856 = vmatpush.msra.mxu0 0.0
        %857 = vmatpush.msra.mxu0 0.0
        %858 = vmatpush.msra.mxu0 0.0
        %859 = vmatpush.msra.mxu0 0.0
        %860 = vmatpush.msra.mxu0 0.0
        %v861 = vand.u32 %v646, 4294901760
        %v862 = vsub.f32 %v646, %v861
        %863 = vmatpush.msra.mxu0 %v862
        %v864 = vand.u32 %v639, 4294901760
        %v865 = vsub.f32 %v639, %v864
        %866 = vmatmul.f32.gmra.mxu0 %v865
        %v867 = vpop.f32.mrf.mxu0
        %v868 = vadd.f32 %v844, %v867
        %869 = vdwg.mxu0
        %870 = vmatpush.msra.mxu0 0.0
        %871 = vmatpush.msra.mxu0 0.0
        %872 = vmatpush.msra.mxu0 0.0
        %873 = vmatpush.msra.mxu0 0.0
        %874 = vmatpush.msra.mxu0 0.0
        %875 = vmatpush.msra.mxu0 0.0
        %876 = vmatpush.msra.mxu0 0.0
        %877 = vmatpush.msra.mxu0 0.0
        %878 = vmatpush.msra.mxu0 0.0
        %879 = vmatpush.msra.mxu0 0.0
        %880 = vmatpush.msra.mxu0 0.0
        %881 = vmatpush.msra.mxu0 0.0
        %882 = vmatpush.msra.mxu0 0.0
        %883 = vmatpush.msra.mxu0 0.0
        %884 = vmatpush.msra.mxu0 0.0
        %v885 = vand.u32 %v646, 4294901760
        %886 = vmatpush.msra.mxu0 %v885
        %v887 = vand.u32 %v639, 4294901760
        %v888 = vsub.f32 %v639, %v887
        %v889 = vand.u32 %v888, 4294901760
        %890 = vmatmul.f32.gmra.mxu0 %v889
        %v891 = vpop.f32.mrf.mxu0
        %v892 = vadd.f32 %v868, %v891
        %893 = vdwg.mxu0
        %894 = vmatpush.msra.mxu0 0.0
        %895 = vmatpush.msra.mxu0 0.0
        %896 = vmatpush.msra.mxu0 0.0
        %897 = vmatpush.msra.mxu0 0.0
        %898 = vmatpush.msra.mxu0 0.0
        %899 = vmatpush.msra.mxu0 0.0
        %900 = vmatpush.msra.mxu0 0.0
        %901 = vmatpush.msra.mxu0 0.0
        %902 = vmatpush.msra.mxu0 0.0
        %903 = vmatpush.msra.mxu0 0.0
        %904 = vmatpush.msra.mxu0 0.0
        %905 = vmatpush.msra.mxu0 0.0
        %906 = vmatpush.msra.mxu0 0.0
        %907 = vmatpush.msra.mxu0 0.0
        %908 = vmatpush.msra.mxu0 0.0
        %v909 = vand.u32 %v646, 4294901760
        %v910 = vsub.f32 %v646, %v909
        %v911 = vand.u32 %v910, 4294901760
        %912 = vmatpush.msra.mxu0 %v911
        %v913 = vand.u32 %v639, 4294901760
        %914 = vmatmul.f32.gmra.mxu0 %v913
        %v915 = vpop.f32.mrf.mxu0
        %v916 = vadd.f32 %v892, %v915
        %917 = vdwg.mxu0
        %918 = vmatpush.msra.mxu0 0.0
        %919 = vmatpush.msra.mxu0 0.0
        %920 = vmatpush.msra.mxu0 0.0
        %921 = vmatpush.msra.mxu0 0.0
        %922 = vmatpush.msra.mxu0 0.0
        %923 = vmatpush.msra.mxu0 0.0
        %924 = vmatpush.msra.mxu0 0.0
        %925 = vmatpush.msra.mxu0 0.0
        %926 = vmatpush.msra.mxu0 0.0
        %927 = vmatpush.msra.mxu0 0.0
        %928 = vmatpush.msra.mxu0 0.0
        %929 = vmatpush.msra.mxu0 0.0
        %930 = vmatpush.msra.mxu0 0.0
        %931 = vmatpush.msra.mxu0 0.0
        %932 = vmatpush.msra.mxu0 0.0
        %v933 = vand.u32 %v646, 4294901760
        %934 = vmatpush.msra.mxu0 %v933
        %v935 = vand.u32 %v639, 4294901760
        %936 = vmatmul.f32.gmra.mxu0 %v935
        %v937 = vpop.f32.mrf.mxu0
        %v938 = vadd.f32 %v916, %v937
        %939 = vdwg.mxu0
        %v941 = vsel %vm330, %v315, 0
        %943 = vmatpush.msra.mxu0 0.0
        %944 = vmatpush.msra.mxu0 0.0
        %945 = vmatpush.msra.mxu0 0.0
        %946 = vmatpush.msra.mxu0 0.0
        %947 = vmatpush.msra.mxu0 0.0
        %948 = vmatpush.msra.mxu0 0.0
        %949 = vmatpush.msra.mxu0 0.0
        %950 = vmatpush.msra.mxu0 0.0
        %951 = vmatpush.msra.mxu0 0.0
        %952 = vmatpush.msra.mxu0 0.0
        %953 = vmatpush.msra.mxu0 0.0
        %954 = vmatpush.msra.mxu0 0.0
        %955 = vmatpush.msra.mxu0 0.0
        %956 = vmatpush.msra.mxu0 0.0
        %957 = vmatpush.msra.mxu0 0.0
        %v958 = vand.u32 %v308, 4294901760
        %959 = vmatpush.msra.mxu0 %v958
        %v960 = vand.u32 %v941, 4294901760
        %v961 = vsub.f32 %v941, %v960
        %v962 = vand.u32 %v961, 4294901760
        %v963 = vsub.f32 %v961, %v962
        %v964 = vand.u32 %v963, 4294901760
        %965 = vmatmul.f32.gmra.mxu0 %v964
        %v966 = vpop.f32.mrf.mxu0
        %v967 = vadd.f32 0.0, %v966
        %968 = vdwg.mxu0
        %969 = vmatpush.msra.mxu0 0.0
        %970 = vmatpush.msra.mxu0 0.0
        %971 = vmatpush.msra.mxu0 0.0
        %972 = vmatpush.msra.mxu0 0.0
        %973 = vmatpush.msra.mxu0 0.0
        %974 = vmatpush.msra.mxu0 0.0
        %975 = vmatpush.msra.mxu0 0.0
        %976 = vmatpush.msra.mxu0 0.0
        %977 = vmatpush.msra.mxu0 0.0
        %978 = vmatpush.msra.mxu0 0.0
        %979 = vmatpush.msra.mxu0 0.0
        %980 = vmatpush.msra.mxu0 0.0
        %981 = vmatpush.msra.mxu0 0.0
        %982 = vmatpush.msra.mxu0 0.0
        %983 = vmatpush.msra.mxu0 0.0
        %v984 = vand.u32 %v308, 4294901760
        %v985 = vsub.f32 %v308, %v984
        %v986 = vand.u32 %v985, 4294901760
        %v987 = vsub.f32 %v985, %v986
        %v988 = vand.u32 %v987, 4294901760
        %989 = vmatpush.msra.mxu0 %v988
        %v990 = vand.u32 %v941, 4294901760
        %991 = vmatmul.f32.gmra.mxu0 %v990
        %v992 = vpop.f32.mrf.mxu0
        %v993 = vadd.f32 %v967, %v992
        %994 = vdwg.mxu0
        %995 = vmatpush.msra.mxu0 0.0
        %996 = vmatpush.msra.mxu0 0.0
        %997 = vmatpush.msra.mxu0 0.0
        %998 = vmatpush.msra.mxu0 0.0
        %999 = vmatpush.msra.mxu0 0.0
        %1000 = vmatpush.msra.mxu0 0.0
        %1001 = vmatpush.msra.mxu0 0.0
        %1002 = vmatpush.msra.mxu0 0.0
        %1003 = vmatpush.msra.mxu0 0.0
        %1004 = vmatpush.msra.mxu0 0.0
        %1005 = vmatpush.msra.mxu0 0.0
        %1006 = vmatpush.msra.mxu0 0.0
        %1007 = vmatpush.msra.mxu0 0.0
        %1008 = vmatpush.msra.mxu0 0.0
        %1009 = vmatpush.msra.mxu0 0.0
        %v1010 = vand.u32 %v308, 4294901760
        %v1011 = vsub.f32 %v308, %v1010
        %1012 = vmatpush.msra.mxu0 %v1011
        %v1013 = vand.u32 %v941, 4294901760
        %v1014 = vsub.f32 %v941, %v1013
        %1015 = vmatmul.f32.gmra.mxu0 %v1014
        %v1016 = vpop.f32.mrf.mxu0
        %v1017 = vadd.f32 %v993, %v1016
        %1018 = vdwg.mxu0
        %1019 = vmatpush.msra.mxu0 0.0
        %1020 = vmatpush.msra.mxu0 0.0
        %1021 = vmatpush.msra.mxu0 0.0
        %1022 = vmatpush.msra.mxu0 0.0
        %1023 = vmatpush.msra.mxu0 0.0
        %1024 = vmatpush.msra.mxu0 0.0
        %1025 = vmatpush.msra.mxu0 0.0
        %1026 = vmatpush.msra.mxu0 0.0
        %1027 = vmatpush.msra.mxu0 0.0
        %1028 = vmatpush.msra.mxu0 0.0
        %1029 = vmatpush.msra.mxu0 0.0
        %1030 = vmatpush.msra.mxu0 0.0
        %1031 = vmatpush.msra.mxu0 0.0
        %1032 = vmatpush.msra.mxu0 0.0
        %1033 = vmatpush.msra.mxu0 0.0
        %v1034 = vand.u32 %v308, 4294901760
        %1035 = vmatpush.msra.mxu0 %v1034
        %v1036 = vand.u32 %v941, 4294901760
        %v1037 = vsub.f32 %v941, %v1036
        %v1038 = vand.u32 %v1037, 4294901760
        %1039 = vmatmul.f32.gmra.mxu0 %v1038
        %v1040 = vpop.f32.mrf.mxu0
        %v1041 = vadd.f32 %v1017, %v1040
        %1042 = vdwg.mxu0
        %1043 = vmatpush.msra.mxu0 0.0
        %1044 = vmatpush.msra.mxu0 0.0
        %1045 = vmatpush.msra.mxu0 0.0
        %1046 = vmatpush.msra.mxu0 0.0
        %1047 = vmatpush.msra.mxu0 0.0
        %1048 = vmatpush.msra.mxu0 0.0
        %1049 = vmatpush.msra.mxu0 0.0
        %1050 = vmatpush.msra.mxu0 0.0
        %1051 = vmatpush.msra.mxu0 0.0
        %1052 = vmatpush.msra.mxu0 0.0
        %1053 = vmatpush.msra.mxu0 0.0
        %1054 = vmatpush.msra.mxu0 0.0
        %1055 = vmatpush.msra.mxu0 0.0
        %1056 = vmatpush.msra.mxu0 0.0
        %1057 = vmatpush.msra.mxu0 0.0
        %v1058 = vand.u32 %v308, 4294901760
        %v1059 = vsub.f32 %v308, %v1058
        %v1060 = vand.u32 %v1059, 4294901760
        %1061 = vmatpush.msra.mxu0 %v1060
        %v1062 = vand.u32 %v941, 4294901760
        %1063 = vmatmul.f32.gmra.mxu0 %v1062
        %v1064 = vpop.f32.mrf.mxu0
        %v1065 = vadd.f32 %v1041, %v1064
        %1066 = vdwg.mxu0
        %1067 = vmatpush.msra.mxu0 0.0
        %1068 = vmatpush.msra.mxu0 0.0
        %1069 = vmatpush.msra.mxu0 0.0
        %1070 = vmatpush.msra.mxu0 0.0
        %1071 = vmatpush.msra.mxu0 0.0
        %1072 = vmatpush.msra.mxu0 0.0
        %1073 = vmatpush.msra.mxu0 0.0
        %1074 = vmatpush.msra.mxu0 0.0
        %1075 = vmatpush.msra.mxu0 0.0
        %1076 = vmatpush.msra.mxu0 0.0
        %1077 = vmatpush.msra.mxu0 0.0
        %1078 = vmatpush.msra.mxu0 0.0
        %1079 = vmatpush.msra.mxu0 0.0
        %1080 = vmatpush.msra.mxu0 0.0
        %1081 = vmatpush.msra.mxu0 0.0
        %v1082 = vand.u32 %v308, 4294901760
        %1083 = vmatpush.msra.mxu0 %v1082
        %v1084 = vand.u32 %v941, 4294901760
        %1085 = vmatmul.f32.gmra.mxu0 %v1084
        %v1086 = vpop.f32.mrf.mxu0
        %v1087 = vadd.f32 %v1065, %v1086
        %1088 = vdwg.mxu0
        %1089 = vmatpush.msra.mxu0 0.0
        %1090 = vmatpush.msra.mxu0 0.0
        %1091 = vmatpush.msra.mxu0 0.0
        %1092 = vmatpush.msra.mxu0 0.0
        %1093 = vmatpush.msra.mxu0 0.0
        %1094 = vmatpush.msra.mxu0 0.0
        %1095 = vmatpush.msra.mxu0 0.0
        %1096 = vmatpush.msra.mxu0 0.0
        %1097 = vmatpush.msra.mxu0 0.0
        %1098 = vmatpush.msra.mxu0 0.0
        %1099 = vmatpush.msra.mxu0 0.0
        %1100 = vmatpush.msra.mxu0 0.0
        %1101 = vmatpush.msra.mxu0 0.0
        %1102 = vmatpush.msra.mxu0 0.0
        %1103 = vmatpush.msra.mxu0 0.0
        %v1104 = vand.u32 %v309, 4294901760
        %1105 = vmatpush.msra.mxu0 %v1104
        %v1106 = vand.u32 %v941, 4294901760
        %v1107 = vsub.f32 %v941, %v1106
        %v1108 = vand.u32 %v1107, 4294901760
        %v1109 = vsub.f32 %v1107, %v1108
        %v1110 = vand.u32 %v1109, 4294901760
        %1111 = vmatmul.f32.gmra.mxu0 %v1110
        %v1112 = vpop.f32.mrf.mxu0
        %v1113 = vadd.f32 0.0, %v1112
        %1114 = vdwg.mxu0
        %1115 = vmatpush.msra.mxu0 0.0
        %1116 = vmatpush.msra.mxu0 0.0
        %1117 = vmatpush.msra.mxu0 0.0
        %1118 = vmatpush.msra.mxu0 0.0
        %1119 = vmatpush.msra.mxu0 0.0
        %1120 = vmatpush.msra.mxu0 0.0
        %1121 = vmatpush.msra.mxu0 0.0
        %1122 = vmatpush.msra.mxu0 0.0
        %1123 = vmatpush.msra.mxu0 0.0
        %1124 = vmatpush.msra.mxu0 0.0
        %1125 = vmatpush.msra.mxu0 0.0
        %1126 = vmatpush.msra.mxu0 0.0
        %1127 = vmatpush.msra.mxu0 0.0
        %1128 = vmatpush.msra.mxu0 0.0
        %1129 = vmatpush.msra.mxu0 0.0
        %v1130 = vand.u32 %v309, 4294901760
        %v1131 = vsub.f32 %v309, %v1130
        %v1132 = vand.u32 %v1131, 4294901760
        %v1133 = vsub.f32 %v1131, %v1132
        %v1134 = vand.u32 %v1133, 4294901760
        %1135 = vmatpush.msra.mxu0 %v1134
        %v1136 = vand.u32 %v941, 4294901760
        %1137 = vmatmul.f32.gmra.mxu0 %v1136
        %v1138 = vpop.f32.mrf.mxu0
        %v1139 = vadd.f32 %v1113, %v1138
        %1140 = vdwg.mxu0
        %1141 = vmatpush.msra.mxu0 0.0
        %1142 = vmatpush.msra.mxu0 0.0
        %1143 = vmatpush.msra.mxu0 0.0
        %1144 = vmatpush.msra.mxu0 0.0
        %1145 = vmatpush.msra.mxu0 0.0
        %1146 = vmatpush.msra.mxu0 0.0
        %1147 = vmatpush.msra.mxu0 0.0
        %1148 = vmatpush.msra.mxu0 0.0
        %1149 = vmatpush.msra.mxu0 0.0
        %1150 = vmatpush.msra.mxu0 0.0
        %1151 = vmatpush.msra.mxu0 0.0
        %1152 = vmatpush.msra.mxu0 0.0
        %1153 = vmatpush.msra.mxu0 0.0
        %1154 = vmatpush.msra.mxu0 0.0
        %1155 = vmatpush.msra.mxu0 0.0
        %v1156 = vand.u32 %v309, 4294901760
        %v1157 = vsub.f32 %v309, %v1156
        %1158 = vmatpush.msra.mxu0 %v1157
        %v1159 = vand.u32 %v941, 4294901760
        %v1160 = vsub.f32 %v941, %v1159
        %1161 = vmatmul.f32.gmra.mxu0 %v1160
        %v1162 = vpop.f32.mrf.mxu0
        %v1163 = vadd.f32 %v1139, %v1162
        %1164 = vdwg.mxu0
        %1165 = vmatpush.msra.mxu0 0.0
        %1166 = vmatpush.msra.mxu0 0.0
        %1167 = vmatpush.msra.mxu0 0.0
        %1168 = vmatpush.msra.mxu0 0.0
        %1169 = vmatpush.msra.mxu0 0.0
        %1170 = vmatpush.msra.mxu0 0.0
        %1171 = vmatpush.msra.mxu0 0.0
        %1172 = vmatpush.msra.mxu0 0.0
        %1173 = vmatpush.msra.mxu0 0.0
        %1174 = vmatpush.msra.mxu0 0.0
        %1175 = vmatpush.msra.mxu0 0.0
        %1176 = vmatpush.msra.mxu0 0.0
        %1177 = vmatpush.msra.mxu0 0.0
        %1178 = vmatpush.msra.mxu0 0.0
        %1179 = vmatpush.msra.mxu0 0.0
        %v1180 = vand.u32 %v309, 4294901760
        %1181 = vmatpush.msra.mxu0 %v1180
        %v1182 = vand.u32 %v941, 4294901760
        %v1183 = vsub.f32 %v941, %v1182
        %v1184 = vand.u32 %v1183, 4294901760
        %1185 = vmatmul.f32.gmra.mxu0 %v1184
        %v1186 = vpop.f32.mrf.mxu0
        %v1187 = vadd.f32 %v1163, %v1186
        %1188 = vdwg.mxu0
        %1189 = vmatpush.msra.mxu0 0.0
        %1190 = vmatpush.msra.mxu0 0.0
        %1191 = vmatpush.msra.mxu0 0.0
        %1192 = vmatpush.msra.mxu0 0.0
        %1193 = vmatpush.msra.mxu0 0.0
        %1194 = vmatpush.msra.mxu0 0.0
        %1195 = vmatpush.msra.mxu0 0.0
        %1196 = vmatpush.msra.mxu0 0.0
        %1197 = vmatpush.msra.mxu0 0.0
        %1198 = vmatpush.msra.mxu0 0.0
        %1199 = vmatpush.msra.mxu0 0.0
        %1200 = vmatpush.msra.mxu0 0.0
        %1201 = vmatpush.msra.mxu0 0.0
        %1202 = vmatpush.msra.mxu0 0.0
        %1203 = vmatpush.msra.mxu0 0.0
        %v1204 = vand.u32 %v309, 4294901760
        %v1205 = vsub.f32 %v309, %v1204
        %v1206 = vand.u32 %v1205, 4294901760
        %1207 = vmatpush.msra.mxu0 %v1206
        %v1208 = vand.u32 %v941, 4294901760
        %1209 = vmatmul.f32.gmra.mxu0 %v1208
        %v1210 = vpop.f32.mrf.mxu0
        %v1211 = vadd.f32 %v1187, %v1210
        %1212 = vdwg.mxu0
        %1213 = vmatpush.msra.mxu0 0.0
        %1214 = vmatpush.msra.mxu0 0.0
        %1215 = vmatpush.msra.mxu0 0.0
        %1216 = vmatpush.msra.mxu0 0.0
        %1217 = vmatpush.msra.mxu0 0.0
        %1218 = vmatpush.msra.mxu0 0.0
        %1219 = vmatpush.msra.mxu0 0.0
        %1220 = vmatpush.msra.mxu0 0.0
        %1221 = vmatpush.msra.mxu0 0.0
        %1222 = vmatpush.msra.mxu0 0.0
        %1223 = vmatpush.msra.mxu0 0.0
        %1224 = vmatpush.msra.mxu0 0.0
        %1225 = vmatpush.msra.mxu0 0.0
        %1226 = vmatpush.msra.mxu0 0.0
        %1227 = vmatpush.msra.mxu0 0.0
        %v1228 = vand.u32 %v309, 4294901760
        %1229 = vmatpush.msra.mxu0 %v1228
        %v1230 = vand.u32 %v941, 4294901760
        %1231 = vmatmul.f32.gmra.mxu0 %v1230
        %v1232 = vpop.f32.mrf.mxu0
        %v1233 = vadd.f32 %v1211, %v1232
        %1234 = vdwg.mxu0
        %v1236 = vsel %vm330, %v314, 0
        %1238 = vmatpush.msra.mxu0 0.0
        %1239 = vmatpush.msra.mxu0 0.0
        %1240 = vmatpush.msra.mxu0 0.0
        %1241 = vmatpush.msra.mxu0 0.0
        %1242 = vmatpush.msra.mxu0 0.0
        %1243 = vmatpush.msra.mxu0 0.0
        %1244 = vmatpush.msra.mxu0 0.0
        %1245 = vmatpush.msra.mxu0 0.0
        %1246 = vmatpush.msra.mxu0 0.0
        %1247 = vmatpush.msra.mxu0 0.0
        %1248 = vmatpush.msra.mxu0 0.0
        %1249 = vmatpush.msra.mxu0 0.0
        %1250 = vmatpush.msra.mxu0 0.0
        %1251 = vmatpush.msra.mxu0 0.0
        %1252 = vmatpush.msra.mxu0 0.0
        %v1253 = vand.u32 %v792, 4294901760
        %1254 = vmatpush.msra.mxu0 %v1253
        %v1255 = vand.u32 %v1236, 4294901760
        %v1256 = vsub.f32 %v1236, %v1255
        %v1257 = vand.u32 %v1256, 4294901760
        %v1258 = vsub.f32 %v1256, %v1257
        %v1259 = vand.u32 %v1258, 4294901760
        %1260 = vmatmul.f32.gmra.mxu0 %v1259
        %v1261 = vpop.f32.mrf.mxu0
        %v1262 = vadd.f32 %v1087, %v1261
        %1263 = vdwg.mxu0
        %1264 = vmatpush.msra.mxu0 0.0
        %1265 = vmatpush.msra.mxu0 0.0
        %1266 = vmatpush.msra.mxu0 0.0
        %1267 = vmatpush.msra.mxu0 0.0
        %1268 = vmatpush.msra.mxu0 0.0
        %1269 = vmatpush.msra.mxu0 0.0
        %1270 = vmatpush.msra.mxu0 0.0
        %1271 = vmatpush.msra.mxu0 0.0
        %1272 = vmatpush.msra.mxu0 0.0
        %1273 = vmatpush.msra.mxu0 0.0
        %1274 = vmatpush.msra.mxu0 0.0
        %1275 = vmatpush.msra.mxu0 0.0
        %1276 = vmatpush.msra.mxu0 0.0
        %1277 = vmatpush.msra.mxu0 0.0
        %1278 = vmatpush.msra.mxu0 0.0
        %v1279 = vand.u32 %v792, 4294901760
        %v1280 = vsub.f32 %v792, %v1279
        %v1281 = vand.u32 %v1280, 4294901760
        %v1282 = vsub.f32 %v1280, %v1281
        %v1283 = vand.u32 %v1282, 4294901760
        %1284 = vmatpush.msra.mxu0 %v1283
        %v1285 = vand.u32 %v1236, 4294901760
        %1286 = vmatmul.f32.gmra.mxu0 %v1285
        %v1287 = vpop.f32.mrf.mxu0
        %v1288 = vadd.f32 %v1262, %v1287
        %1289 = vdwg.mxu0
        %1290 = vmatpush.msra.mxu0 0.0
        %1291 = vmatpush.msra.mxu0 0.0
        %1292 = vmatpush.msra.mxu0 0.0
        %1293 = vmatpush.msra.mxu0 0.0
        %1294 = vmatpush.msra.mxu0 0.0
        %1295 = vmatpush.msra.mxu0 0.0
        %1296 = vmatpush.msra.mxu0 0.0
        %1297 = vmatpush.msra.mxu0 0.0
        %1298 = vmatpush.msra.mxu0 0.0
        %1299 = vmatpush.msra.mxu0 0.0
        %1300 = vmatpush.msra.mxu0 0.0
        %1301 = vmatpush.msra.mxu0 0.0
        %1302 = vmatpush.msra.mxu0 0.0
        %1303 = vmatpush.msra.mxu0 0.0
        %1304 = vmatpush.msra.mxu0 0.0
        %v1305 = vand.u32 %v792, 4294901760
        %v1306 = vsub.f32 %v792, %v1305
        %1307 = vmatpush.msra.mxu0 %v1306
        %v1308 = vand.u32 %v1236, 4294901760
        %v1309 = vsub.f32 %v1236, %v1308
        %1310 = vmatmul.f32.gmra.mxu0 %v1309
        %v1311 = vpop.f32.mrf.mxu0
        %v1312 = vadd.f32 %v1288, %v1311
        %1313 = vdwg.mxu0
        %1314 = vmatpush.msra.mxu0 0.0
        %1315 = vmatpush.msra.mxu0 0.0
        %1316 = vmatpush.msra.mxu0 0.0
        %1317 = vmatpush.msra.mxu0 0.0
        %1318 = vmatpush.msra.mxu0 0.0
        %1319 = vmatpush.msra.mxu0 0.0
        %1320 = vmatpush.msra.mxu0 0.0
        %1321 = vmatpush.msra.mxu0 0.0
        %1322 = vmatpush.msra.mxu0 0.0
        %1323 = vmatpush.msra.mxu0 0.0
        %1324 = vmatpush.msra.mxu0 0.0
        %1325 = vmatpush.msra.mxu0 0.0
        %1326 = vmatpush.msra.mxu0 0.0
        %1327 = vmatpush.msra.mxu0 0.0
        %1328 = vmatpush.msra.mxu0 0.0
        %v1329 = vand.u32 %v792, 4294901760
        %1330 = vmatpush.msra.mxu0 %v1329
        %v1331 = vand.u32 %v1236, 4294901760
        %v1332 = vsub.f32 %v1236, %v1331
        %v1333 = vand.u32 %v1332, 4294901760
        %1334 = vmatmul.f32.gmra.mxu0 %v1333
        %v1335 = vpop.f32.mrf.mxu0
        %v1336 = vadd.f32 %v1312, %v1335
        %1337 = vdwg.mxu0
        %1338 = vmatpush.msra.mxu0 0.0
        %1339 = vmatpush.msra.mxu0 0.0
        %1340 = vmatpush.msra.mxu0 0.0
        %1341 = vmatpush.msra.mxu0 0.0
        %1342 = vmatpush.msra.mxu0 0.0
        %1343 = vmatpush.msra.mxu0 0.0
        %1344 = vmatpush.msra.mxu0 0.0
        %1345 = vmatpush.msra.mxu0 0.0
        %1346 = vmatpush.msra.mxu0 0.0
        %1347 = vmatpush.msra.mxu0 0.0
        %1348 = vmatpush.msra.mxu0 0.0
        %1349 = vmatpush.msra.mxu0 0.0
        %1350 = vmatpush.msra.mxu0 0.0
        %1351 = vmatpush.msra.mxu0 0.0
        %1352 = vmatpush.msra.mxu0 0.0
        %v1353 = vand.u32 %v792, 4294901760
        %v1354 = vsub.f32 %v792, %v1353
        %v1355 = vand.u32 %v1354, 4294901760
        %1356 = vmatpush.msra.mxu0 %v1355
        %v1357 = vand.u32 %v1236, 4294901760
        %1358 = vmatmul.f32.gmra.mxu0 %v1357
        %v1359 = vpop.f32.mrf.mxu0
        %v1360 = vadd.f32 %v1336, %v1359
        %1361 = vdwg.mxu0
        %1362 = vmatpush.msra.mxu0 0.0
        %1363 = vmatpush.msra.mxu0 0.0
        %1364 = vmatpush.msra.mxu0 0.0
        %1365 = vmatpush.msra.mxu0 0.0
        %1366 = vmatpush.msra.mxu0 0.0
        %1367 = vmatpush.msra.mxu0 0.0
        %1368 = vmatpush.msra.mxu0 0.0
        %1369 = vmatpush.msra.mxu0 0.0
        %1370 = vmatpush.msra.mxu0 0.0
        %1371 = vmatpush.msra.mxu0 0.0
        %1372 = vmatpush.msra.mxu0 0.0
        %1373 = vmatpush.msra.mxu0 0.0
        %1374 = vmatpush.msra.mxu0 0.0
        %1375 = vmatpush.msra.mxu0 0.0
        %1376 = vmatpush.msra.mxu0 0.0
        %v1377 = vand.u32 %v792, 4294901760
        %1378 = vmatpush.msra.mxu0 %v1377
        %v1379 = vand.u32 %v1236, 4294901760
        %1380 = vmatmul.f32.gmra.mxu0 %v1379
        %v1381 = vpop.f32.mrf.mxu0
        %v1382 = vadd.f32 %v1360, %v1381
        %1383 = vdwg.mxu0
        %1384 = vmatpush.msra.mxu0 0.0
        %1385 = vmatpush.msra.mxu0 0.0
        %1386 = vmatpush.msra.mxu0 0.0
        %1387 = vmatpush.msra.mxu0 0.0
        %1388 = vmatpush.msra.mxu0 0.0
        %1389 = vmatpush.msra.mxu0 0.0
        %1390 = vmatpush.msra.mxu0 0.0
        %1391 = vmatpush.msra.mxu0 0.0
        %1392 = vmatpush.msra.mxu0 0.0
        %1393 = vmatpush.msra.mxu0 0.0
        %1394 = vmatpush.msra.mxu0 0.0
        %1395 = vmatpush.msra.mxu0 0.0
        %1396 = vmatpush.msra.mxu0 0.0
        %1397 = vmatpush.msra.mxu0 0.0
        %1398 = vmatpush.msra.mxu0 0.0
        %v1399 = vand.u32 %v938, 4294901760
        %1400 = vmatpush.msra.mxu0 %v1399
        %v1401 = vand.u32 %v1236, 4294901760
        %v1402 = vsub.f32 %v1236, %v1401
        %v1403 = vand.u32 %v1402, 4294901760
        %v1404 = vsub.f32 %v1402, %v1403
        %v1405 = vand.u32 %v1404, 4294901760
        %1406 = vmatmul.f32.gmra.mxu0 %v1405
        %v1407 = vpop.f32.mrf.mxu0
        %v1408 = vadd.f32 %v1233, %v1407
        %1409 = vdwg.mxu0
        %1410 = vmatpush.msra.mxu0 0.0
        %1411 = vmatpush.msra.mxu0 0.0
        %1412 = vmatpush.msra.mxu0 0.0
        %1413 = vmatpush.msra.mxu0 0.0
        %1414 = vmatpush.msra.mxu0 0.0
        %1415 = vmatpush.msra.mxu0 0.0
        %1416 = vmatpush.msra.mxu0 0.0
        %1417 = vmatpush.msra.mxu0 0.0
        %1418 = vmatpush.msra.mxu0 0.0
        %1419 = vmatpush.msra.mxu0 0.0
        %1420 = vmatpush.msra.mxu0 0.0
        %1421 = vmatpush.msra.mxu0 0.0
        %1422 = vmatpush.msra.mxu0 0.0
        %1423 = vmatpush.msra.mxu0 0.0
        %1424 = vmatpush.msra.mxu0 0.0
        %v1425 = vand.u32 %v938, 4294901760
        %v1426 = vsub.f32 %v938, %v1425
        %v1427 = vand.u32 %v1426, 4294901760
        %v1428 = vsub.f32 %v1426, %v1427
        %v1429 = vand.u32 %v1428, 4294901760
        %1430 = vmatpush.msra.mxu0 %v1429
        %v1431 = vand.u32 %v1236, 4294901760
        %1432 = vmatmul.f32.gmra.mxu0 %v1431
        %v1433 = vpop.f32.mrf.mxu0
        %v1434 = vadd.f32 %v1408, %v1433
        %1435 = vdwg.mxu0
        %1436 = vmatpush.msra.mxu0 0.0
        %1437 = vmatpush.msra.mxu0 0.0
        %1438 = vmatpush.msra.mxu0 0.0
        %1439 = vmatpush.msra.mxu0 0.0
        %1440 = vmatpush.msra.mxu0 0.0
        %1441 = vmatpush.msra.mxu0 0.0
        %1442 = vmatpush.msra.mxu0 0.0
        %1443 = vmatpush.msra.mxu0 0.0
        %1444 = vmatpush.msra.mxu0 0.0
        %1445 = vmatpush.msra.mxu0 0.0
        %1446 = vmatpush.msra.mxu0 0.0
        %1447 = vmatpush.msra.mxu0 0.0
        %1448 = vmatpush.msra.mxu0 0.0
        %1449 = vmatpush.msra.mxu0 0.0
        %1450 = vmatpush.msra.mxu0 0.0
        %v1451 = vand.u32 %v938, 4294901760
        %v1452 = vsub.f32 %v938, %v1451
        %1453 = vmatpush.msra.mxu0 %v1452
        %v1454 = vand.u32 %v1236, 4294901760
        %v1455 = vsub.f32 %v1236, %v1454
        %1456 = vmatmul.f32.gmra.mxu0 %v1455
        %v1457 = vpop.f32.mrf.mxu0
        %v1458 = vadd.f32 %v1434, %v1457
        %1459 = vdwg.mxu0
        %1460 = vmatpush.msra.mxu0 0.0
        %1461 = vmatpush.msra.mxu0 0.0
        %1462 = vmatpush.msra.mxu0 0.0
        %1463 = vmatpush.msra.mxu0 0.0
        %1464 = vmatpush.msra.mxu0 0.0
        %1465 = vmatpush.msra.mxu0 0.0
        %1466 = vmatpush.msra.mxu0 0.0
        %1467 = vmatpush.msra.mxu0 0.0
        %1468 = vmatpush.msra.mxu0 0.0
        %1469 = vmatpush.msra.mxu0 0.0
        %1470 = vmatpush.msra.mxu0 0.0
        %1471 = vmatpush.msra.mxu0 0.0
        %1472 = vmatpush.msra.mxu0 0.0
        %1473 = vmatpush.msra.mxu0 0.0
        %1474 = vmatpush.msra.mxu0 0.0
        %v1475 = vand.u32 %v938, 4294901760
        %1476 = vmatpush.msra.mxu0 %v1475
        %v1477 = vand.u32 %v1236, 4294901760
        %v1478 = vsub.f32 %v1236, %v1477
        %v1479 = vand.u32 %v1478, 4294901760
        %1480 = vmatmul.f32.gmra.mxu0 %v1479
        %v1481 = vpop.f32.mrf.mxu0
        %v1482 = vadd.f32 %v1458, %v1481
        %1483 = vdwg.mxu0
        %1484 = vmatpush.msra.mxu0 0.0
        %1485 = vmatpush.msra.mxu0 0.0
        %1486 = vmatpush.msra.mxu0 0.0
        %1487 = vmatpush.msra.mxu0 0.0
        %1488 = vmatpush.msra.mxu0 0.0
        %1489 = vmatpush.msra.mxu0 0.0
        %1490 = vmatpush.msra.mxu0 0.0
        %1491 = vmatpush.msra.mxu0 0.0
        %1492 = vmatpush.msra.mxu0 0.0
        %1493 = vmatpush.msra.mxu0 0.0
        %1494 = vmatpush.msra.mxu0 0.0
        %1495 = vmatpush.msra.mxu0 0.0
        %1496 = vmatpush.msra.mxu0 0.0
        %1497 = vmatpush.msra.mxu0 0.0
        %1498 = vmatpush.msra.mxu0 0.0
        %v1499 = vand.u32 %v938, 4294901760
        %v1500 = vsub.f32 %v938, %v1499
        %v1501 = vand.u32 %v1500, 4294901760
        %1502 = vmatpush.msra.mxu0 %v1501
        %v1503 = vand.u32 %v1236, 4294901760
        %1504 = vmatmul.f32.gmra.mxu0 %v1503
        %v1505 = vpop.f32.mrf.mxu0
        %v1506 = vadd.f32 %v1482, %v1505
        %1507 = vdwg.mxu0
        %1508 = vmatpush.msra.mxu0 0.0
        %1509 = vmatpush.msra.mxu0 0.0
        %1510 = vmatpush.msra.mxu0 0.0
        %1511 = vmatpush.msra.mxu0 0.0
        %1512 = vmatpush.msra.mxu0 0.0
        %1513 = vmatpush.msra.mxu0 0.0
        %1514 = vmatpush.msra.mxu0 0.0
        %1515 = vmatpush.msra.mxu0 0.0
        %1516 = vmatpush.msra.mxu0 0.0
        %1517 = vmatpush.msra.mxu0 0.0
        %1518 = vmatpush.msra.mxu0 0.0
        %1519 = vmatpush.msra.mxu0 0.0
        %1520 = vmatpush.msra.mxu0 0.0
        %1521 = vmatpush.msra.mxu0 0.0
        %1522 = vmatpush.msra.mxu0 0.0
        %v1523 = vand.u32 %v938, 4294901760
        %1524 = vmatpush.msra.mxu0 %v1523
        %v1525 = vand.u32 %v1236, 4294901760
        %1526 = vmatmul.f32.gmra.mxu0 %v1525
        %v1527 = vpop.f32.mrf.mxu0
        %v1528 = vadd.f32 %v1506, %v1527
        %1529 = vdwg.mxu0
        %1531 = vset.pattern.permute.xlu0 0
        %1532 = vperm.xlu0 %1531, %v316
        %v1533 = vpop.permute.xlu0 %1532
        %v1535 = vadd.f32 %v1382, %v1533
        %v1536 = vadd.f32 %v1528, %v1533
        %vm1537 = vcmp.gt.f32.partialorder %v1535, 0.0
        %vm1538 = vcmp.gt.f32.partialorder %v1536, 0.0
        %v1539 = vmul.f32 %v1535, 0.01
        %v1540 = vmul.f32 %v1536, 0.01
        %v1541 = vsel %vm1537, %v1535, %v1539
        %v1542 = vsel %vm1538, %v1536, %v1540
        %v1543 = vadd.f32 %v1541, %v1542
        %1544 = vadd.xlane.f32.xlu0 %v1543
        %v1545 = vpop.xlane.xlu0 %1544
        %v1546 = vrcp.pop 256.0
        %v1547 = vmul.f32 256.0, %v1546
        %v1548 = vsub.f32 1.0, %v1547
        %v1549 = vmul.f32 %v1546, %v1548
        %v1550 = vadd.f32 %v1546, %v1549
        %vm1551 = vweird.f32 %v1546
        %v1552 = vsel %vm1551, %v1546, %v1550
        %v1553 = vmul.f32 %v1545, %v1552
        %v1555 = vsel %vm330, %v317, 0
        %1557 = vmatpush.msra.mxu0 0.0
        %1558 = vmatpush.msra.mxu0 0.0
        %1559 = vmatpush.msra.mxu0 0.0
        %1560 = vmatpush.msra.mxu0 0.0
        %1561 = vmatpush.msra.mxu0 0.0
        %1562 = vmatpush.msra.mxu0 0.0
        %1563 = vmatpush.msra.mxu0 0.0
        %1564 = vmatpush.msra.mxu0 0.0
        %1565 = vmatpush.msra.mxu0 0.0
        %1566 = vmatpush.msra.mxu0 0.0
        %1567 = vmatpush.msra.mxu0 0.0
        %1568 = vmatpush.msra.mxu0 0.0
        %1569 = vmatpush.msra.mxu0 0.0
        %1570 = vmatpush.msra.mxu0 0.0
        %1571 = vmatpush.msra.mxu0 0.0
        %v1572 = vand.u32 %v1553, 4294901760
        %1573 = vmatpush.msra.mxu0 %v1572
        %v1574 = vand.u32 %v1555, 4294901760
        %v1575 = vsub.f32 %v1555, %v1574
        %v1576 = vand.u32 %v1575, 4294901760
        %v1577 = vsub.f32 %v1575, %v1576
        %v1578 = vand.u32 %v1577, 4294901760
        %1579 = vmatmul.f32.gmra.mxu0 %v1578
        %v1580 = vpop.f32.mrf.mxu0
        %v1581 = vadd.f32 %v318, %v1580
        %1582 = vdwg.mxu0
        %1583 = vmatpush.msra.mxu0 0.0
        %1584 = vmatpush.msra.mxu0 0.0
        %1585 = vmatpush.msra.mxu0 0.0
        %1586 = vmatpush.msra.mxu0 0.0
        %1587 = vmatpush.msra.mxu0 0.0
        %1588 = vmatpush.msra.mxu0 0.0
        %1589 = vmatpush.msra.mxu0 0.0
        %1590 = vmatpush.msra.mxu0 0.0
        %1591 = vmatpush.msra.mxu0 0.0
        %1592 = vmatpush.msra.mxu0 0.0
        %1593 = vmatpush.msra.mxu0 0.0
        %1594 = vmatpush.msra.mxu0 0.0
        %1595 = vmatpush.msra.mxu0 0.0
        %1596 = vmatpush.msra.mxu0 0.0
        %1597 = vmatpush.msra.mxu0 0.0
        %v1598 = vand.u32 %v1553, 4294901760
        %v1599 = vsub.f32 %v1553, %v1598
        %v1600 = vand.u32 %v1599, 4294901760
        %v1601 = vsub.f32 %v1599, %v1600
        %v1602 = vand.u32 %v1601, 4294901760
        %1603 = vmatpush.msra.mxu0 %v1602
        %v1604 = vand.u32 %v1555, 4294901760
        %1605 = vmatmul.f32.gmra.mxu0 %v1604
        %v1606 = vpop.f32.mrf.mxu0
        %v1607 = vadd.f32 %v1581, %v1606
        %1608 = vdwg.mxu0
        %1609 = vmatpush.msra.mxu0 0.0
        %1610 = vmatpush.msra.mxu0 0.0
        %1611 = vmatpush.msra.mxu0 0.0
        %1612 = vmatpush.msra.mxu0 0.0
        %1613 = vmatpush.msra.mxu0 0.0
        %1614 = vmatpush.msra.mxu0 0.0
        %1615 = vmatpush.msra.mxu0 0.0
        %1616 = vmatpush.msra.mxu0 0.0
        %1617 = vmatpush.msra.mxu0 0.0
        %1618 = vmatpush.msra.mxu0 0.0
        %1619 = vmatpush.msra.mxu0 0.0
        %1620 = vmatpush.msra.mxu0 0.0
        %1621 = vmatpush.msra.mxu0 0.0
        %1622 = vmatpush.msra.mxu0 0.0
        %1623 = vmatpush.msra.mxu0 0.0
        %v1624 = vand.u32 %v1553, 4294901760
        %v1625 = vsub.f32 %v1553, %v1624
        %1626 = vmatpush.msra.mxu0 %v1625
        %v1627 = vand.u32 %v1555, 4294901760
        %v1628 = vsub.f32 %v1555, %v1627
        %1629 = vmatmul.f32.gmra.mxu0 %v1628
        %v1630 = vpop.f32.mrf.mxu0
        %v1631 = vadd.f32 %v1607, %v1630
        %1632 = vdwg.mxu0
        %1633 = vmatpush.msra.mxu0 0.0
        %1634 = vmatpush.msra.mxu0 0.0
        %1635 = vmatpush.msra.mxu0 0.0
        %1636 = vmatpush.msra.mxu0 0.0
        %1637 = vmatpush.msra.mxu0 0.0
        %1638 = vmatpush.msra.mxu0 0.0
        %1639 = vmatpush.msra.mxu0 0.0
        %1640 = vmatpush.msra.mxu0 0.0
        %1641 = vmatpush.msra.mxu0 0.0
        %1642 = vmatpush.msra.mxu0 0.0
        %1643 = vmatpush.msra.mxu0 0.0
        %1644 = vmatpush.msra.mxu0 0.0
        %1645 = vmatpush.msra.mxu0 0.0
        %1646 = vmatpush.msra.mxu0 0.0
        %1647 = vmatpush.msra.mxu0 0.0
        %v1648 = vand.u32 %v1553, 4294901760
        %1649 = vmatpush.msra.mxu0 %v1648
        %v1650 = vand.u32 %v1555, 4294901760
        %v1651 = vsub.f32 %v1555, %v1650
        %v1652 = vand.u32 %v1651, 4294901760
        %1653 = vmatmul.f32.gmra.mxu0 %v1652
        %v1654 = vpop.f32.mrf.mxu0
        %v1655 = vadd.f32 %v1631, %v1654
        %1656 = vdwg.mxu0
        %1657 = vmatpush.msra.mxu0 0.0
        %1658 = vmatpush.msra.mxu0 0.0
        %1659 = vmatpush.msra.mxu0 0.0
        %1660 = vmatpush.msra.mxu0 0.0
        %1661 = vmatpush.msra.mxu0 0.0
        %1662 = vmatpush.msra.mxu0 0.0
        %1663 = vmatpush.msra.mxu0 0.0
        %1664 = vmatpush.msra.mxu0 0.0
        %1665 = vmatpush.msra.mxu0 0.0
        %1666 = vmatpush.msra.mxu0 0.0
        %1667 = vmatpush.msra.mxu0 0.0
        %1668 = vmatpush.msra.mxu0 0.0
        %1669 = vmatpush.msra.mxu0 0.0
        %1670 = vmatpush.msra.mxu0 0.0
        %1671 = vmatpush.msra.mxu0 0.0
        %v1672 = vand.u32 %v1553, 4294901760
        %v1673 = vsub.f32 %v1553, %v1672
        %v1674 = vand.u32 %v1673, 4294901760
        %1675 = vmatpush.msra.mxu0 %v1674
        %v1676 = vand.u32 %v1555, 4294901760
        %1677 = vmatmul.f32.gmra.mxu0 %v1676
        %v1678 = vpop.f32.mrf.mxu0
        %v1679 = vadd.f32 %v1655, %v1678
        %1680 = vdwg.mxu0
        %1681 = vmatpush.msra.mxu0 0.0
        %1682 = vmatpush.msra.mxu0 0.0
        %1683 = vmatpush.msra.mxu0 0.0
        %1684 = vmatpush.msra.mxu0 0.0
        %1685 = vmatpush.msra.mxu0 0.0
        %1686 = vmatpush.msra.mxu0 0.0
        %1687 = vmatpush.msra.mxu0 0.0
        %1688 = vmatpush.msra.mxu0 0.0
        %1689 = vmatpush.msra.mxu0 0.0
        %1690 = vmatpush.msra.mxu0 0.0
        %1691 = vmatpush.msra.mxu0 0.0
        %1692 = vmatpush.msra.mxu0 0.0
        %1693 = vmatpush.msra.mxu0 0.0
        %1694 = vmatpush.msra.mxu0 0.0
        %1695 = vmatpush.msra.mxu0 0.0
        %v1696 = vand.u32 %v1553, 4294901760
        %1697 = vmatpush.msra.mxu0 %v1696
        %v1698 = vand.u32 %v1555, 4294901760
        %1699 = vmatmul.f32.gmra.mxu0 %v1698
        %v1700 = vpop.f32.mrf.mxu0
        %v1701 = vadd.f32 %v1679, %v1700
        %1702 = vdwg.mxu0
        %v1703 = vmax.f32 %v1701, 0.0
        %v1705 = vsel %vm637, %v319, 0
        %v1708 = vsel %vm641, %v1703, 0
        %1710 = vmatpush.msra.mxu0 0.0
        %1711 = vmatpush.msra.mxu0 0.0
        %1712 = vmatpush.msra.mxu0 0.0
        %1713 = vmatpush.msra.mxu0 0.0
        %1714 = vmatpush.msra.mxu0 0.0
        %1715 = vmatpush.msra.mxu0 0.0
        %1716 = vmatpush.msra.mxu0 0.0
        %1717 = vmatpush.msra.mxu0 0.0
        %1718 = vmatpush.msra.mxu0 0.0
        %1719 = vmatpush.msra.mxu0 0.0
        %1720 = vmatpush.msra.mxu0 0.0
        %1721 = vmatpush.msra.mxu0 0.0
        %1722 = vmatpush.msra.mxu0 0.0
        %1723 = vmatpush.msra.mxu0 0.0
        %1724 = vmatpush.msra.mxu0 0.0
        %v1725 = vand.u32 %v1708, 4294901760
        %1726 = vmatpush.msra.mxu0 %v1725
        %v1727 = vand.u32 %v1705, 4294901760
        %v1728 = vsub.f32 %v1705, %v1727
        %v1729 = vand.u32 %v1728, 4294901760
        %v1730 = vsub.f32 %v1728, %v1729
        %v1731 = vand.u32 %v1730, 4294901760
        %1732 = vmatmul.f32.gmra.mxu0 %v1731
        %v1733 = vpop.f32.mrf.mxu0
        %v1734 = vadd.f32 %v320, %v1733
        %1735 = vdwg.mxu0
        %1736 = vmatpush.msra.mxu0 0.0
        %1737 = vmatpush.msra.mxu0 0.0
        %1738 = vmatpush.msra.mxu0 0.0
        %1739 = vmatpush.msra.mxu0 0.0
        %1740 = vmatpush.msra.mxu0 0.0
        %1741 = vmatpush.msra.mxu0 0.0
        %1742 = vmatpush.msra.mxu0 0.0
        %1743 = vmatpush.msra.mxu0 0.0
        %1744 = vmatpush.msra.mxu0 0.0
        %1745 = vmatpush.msra.mxu0 0.0
        %1746 = vmatpush.msra.mxu0 0.0
        %1747 = vmatpush.msra.mxu0 0.0
        %1748 = vmatpush.msra.mxu0 0.0
        %1749 = vmatpush.msra.mxu0 0.0
        %1750 = vmatpush.msra.mxu0 0.0
        %v1751 = vand.u32 %v1708, 4294901760
        %v1752 = vsub.f32 %v1708, %v1751
        %v1753 = vand.u32 %v1752, 4294901760
        %v1754 = vsub.f32 %v1752, %v1753
        %v1755 = vand.u32 %v1754, 4294901760
        %1756 = vmatpush.msra.mxu0 %v1755
        %v1757 = vand.u32 %v1705, 4294901760
        %1758 = vmatmul.f32.gmra.mxu0 %v1757
        %v1759 = vpop.f32.mrf.mxu0
        %v1760 = vadd.f32 %v1734, %v1759
        %1761 = vdwg.mxu0
        %1762 = vmatpush.msra.mxu0 0.0
        %1763 = vmatpush.msra.mxu0 0.0
        %1764 = vmatpush.msra.mxu0 0.0
        %1765 = vmatpush.msra.mxu0 0.0
        %1766 = vmatpush.msra.mxu0 0.0
        %1767 = vmatpush.msra.mxu0 0.0
        %1768 = vmatpush.msra.mxu0 0.0
        %1769 = vmatpush.msra.mxu0 0.0
        %1770 = vmatpush.msra.mxu0 0.0
        %1771 = vmatpush.msra.mxu0 0.0
        %1772 = vmatpush.msra.mxu0 0.0
        %1773 = vmatpush.msra.mxu0 0.0
        %1774 = vmatpush.msra.mxu0 0.0
        %1775 = vmatpush.msra.mxu0 0.0
        %1776 = vmatpush.msra.mxu0 0.0
        %v1777 = vand.u32 %v1708, 4294901760
        %v1778 = vsub.f32 %v1708, %v1777
        %1779 = vmatpush.msra.mxu0 %v1778
        %v1780 = vand.u32 %v1705, 4294901760
        %v1781 = vsub.f32 %v1705, %v1780
        %1782 = vmatmul.f32.gmra.mxu0 %v1781
        %v1783 = vpop.f32.mrf.mxu0
        %v1784 = vadd.f32 %v1760, %v1783
        %1785 = vdwg.mxu0
        %1786 = vmatpush.msra.mxu0 0.0
        %1787 = vmatpush.msra.mxu0 0.0
        %1788 = vmatpush.msra.mxu0 0.0
        %1789 = vmatpush.msra.mxu0 0.0
        %1790 = vmatpush.msra.mxu0 0.0
        %1791 = vmatpush.msra.mxu0 0.0
        %1792 = vmatpush.msra.mxu0 0.0
        %1793 = vmatpush.msra.mxu0 0.0
        %1794 = vmatpush.msra.mxu0 0.0
        %1795 = vmatpush.msra.mxu0 0.0
        %1796 = vmatpush.msra.mxu0 0.0
        %1797 = vmatpush.msra.mxu0 0.0
        %1798 = vmatpush.msra.mxu0 0.0
        %1799 = vmatpush.msra.mxu0 0.0
        %1800 = vmatpush.msra.mxu0 0.0
        %v1801 = vand.u32 %v1708, 4294901760
        %1802 = vmatpush.msra.mxu0 %v1801
        %v1803 = vand.u32 %v1705, 4294901760
        %v1804 = vsub.f32 %v1705, %v1803
        %v1805 = vand.u32 %v1804, 4294901760
        %1806 = vmatmul.f32.gmra.mxu0 %v1805
        %v1807 = vpop.f32.mrf.mxu0
        %v1808 = vadd.f32 %v1784, %v1807
        %1809 = vdwg.mxu0
        %1810 = vmatpush.msra.mxu0 0.0
        %1811 = vmatpush.msra.mxu0 0.0
        %1812 = vmatpush.msra.mxu0 0.0
        %1813 = vmatpush.msra.mxu0 0.0
        %1814 = vmatpush.msra.mxu0 0.0
        %1815 = vmatpush.msra.mxu0 0.0
        %1816 = vmatpush.msra.mxu0 0.0
        %1817 = vmatpush.msra.mxu0 0.0
        %1818 = vmatpush.msra.mxu0 0.0
        %1819 = vmatpush.msra.mxu0 0.0
        %1820 = vmatpush.msra.mxu0 0.0
        %1821 = vmatpush.msra.mxu0 0.0
        %1822 = vmatpush.msra.mxu0 0.0
        %1823 = vmatpush.msra.mxu0 0.0
        %1824 = vmatpush.msra.mxu0 0.0
        %v1825 = vand.u32 %v1708, 4294901760
        %v1826 = vsub.f32 %v1708, %v1825
        %v1827 = vand.u32 %v1826, 4294901760
        %1828 = vmatpush.msra.mxu0 %v1827
        %v1829 = vand.u32 %v1705, 4294901760
        %1830 = vmatmul.f32.gmra.mxu0 %v1829
        %v1831 = vpop.f32.mrf.mxu0
        %v1832 = vadd.f32 %v1808, %v1831
        %1833 = vdwg.mxu0
        %1834 = vmatpush.msra.mxu0 0.0
        %1835 = vmatpush.msra.mxu0 0.0
        %1836 = vmatpush.msra.mxu0 0.0
        %1837 = vmatpush.msra.mxu0 0.0
        %1838 = vmatpush.msra.mxu0 0.0
        %1839 = vmatpush.msra.mxu0 0.0
        %1840 = vmatpush.msra.mxu0 0.0
        %1841 = vmatpush.msra.mxu0 0.0
        %1842 = vmatpush.msra.mxu0 0.0
        %1843 = vmatpush.msra.mxu0 0.0
        %1844 = vmatpush.msra.mxu0 0.0
        %1845 = vmatpush.msra.mxu0 0.0
        %1846 = vmatpush.msra.mxu0 0.0
        %1847 = vmatpush.msra.mxu0 0.0
        %1848 = vmatpush.msra.mxu0 0.0
        %v1849 = vand.u32 %v1708, 4294901760
        %1850 = vmatpush.msra.mxu0 %v1849
        %v1851 = vand.u32 %v1705, 4294901760
        %1852 = vmatmul.f32.gmra.mxu0 %v1851
        %v1853 = vpop.f32.mrf.mxu0
        %v1854 = vadd.f32 %v1832, %v1853
        %1855 = vdwg.mxu0
        %v1856 = vsub.f32 0.0, %v1854
        %v1857 = vmul.f32 %v1856, 1.442695
        %v1858 = vpow.pop %v1857
        %v1859 = vadd.f32 %v1858, 1.0
        %v1860 = vrcp.pop %v1859
        %v1861 = vmul.f32 %v1859, %v1860
        %v1862 = vsub.f32 1.0, %v1861
        %v1863 = vmul.f32 %v1860, %v1862
        %v1864 = vadd.f32 %v1860, %v1863
        %vm1865 = vweird.f32 %v1859
        %vm1866 = vweird.f32 %v1860
        %vm1867 = vmor %vm1865, %vm1866
        %v1868 = vsel %vm1867, %v1860, %v1864
        %v1869 = vand.u32 2147483647, %v1859
        %vm1870 = vcmp.eq.f32.partialorder %v1869, 8.507059e+37
        %v1871 = vand.u32 %v1859, 2147483648
        %v1872 = vor.u32 1.1754944e-38, %v1871
        %v1873 = vsel %vm1870, %v1872, %v1868
        %v1874 = vmul.f32 1.0, %v1873
        %1876 = vset.pattern.permute.xlu0 0
        %1877 = vperm.xlu0 %1876, %v1874
        %v1878 = vpop.permute.xlu0 %1877
        %v1880 = vmul.f32 %v1541, %v1878
        %v1881 = vmul.f32 %v1542, %v1878
        %1883 = vset.pattern.permute.xlu0 4
        %1884 = vperm.xlu0 %1883, %v321
        %v1885 = vpop.permute.xlu0 %1884
        %v1887 = vmul.f32 %v1880, %v1885
        %v1888 = vmul.f32 %v1881, %v1885
        %1889 = vrot.lane.b32.xlu0 %v1880, 17
        %v1890 = vpop.permute.xlu0 %1889
        %1891 = vrot.lane.b32.xlu0 %v1881, 17
        %v1892 = vpop.permute.xlu0 %1891
        %v1893 = vlaneseq
        %v1894 = vand.u32 %v1893, 127
        %vm1895 = vcmp.lt.s32.totalorder %v1894, 17
        %v1896 = vsel %vm1895, %v1890, %v1892
        %v1897 = vsel %vm1895, %v1892, %v1890
        %v1898 = vperm.slane %v304, 0
        %v1899 = vperm.slane %v305, 0
        %v1900 = vmul.f32 %v1897, %v1898
        %v1901 = vmul.f32 %v1896, %v1899
        %1902 = vset.pattern.permute.xlu0 0
        %1903 = vperm.xlu0 %1902, %v321
        %v1904 = vpop.permute.xlu0 %1903
        %v1906 = vmul.f32 %v1900, %v1904
        %v1907 = vmul.f32 %v1901, %v1904
        %v1908 = vadd.f32 %v1887, %v1906
        %v1909 = vadd.f32 %v1888, %v1907
        %1910 = vrot.lane.b32.xlu0 %v1880, 16
        %v1911 = vpop.permute.xlu0 %1910
        %1912 = vrot.lane.b32.xlu0 %v1881, 16
        %v1913 = vpop.permute.xlu0 %1912
        %vm1914 = vcmp.lt.s32.totalorder %v1894, 16
        %v1915 = vsel %vm1914, %v1911, %v1913
        %v1916 = vsel %vm1914, %v1913, %v1911
        %v1917 = vperm.slane %v304, 1
        %v1918 = vperm.slane %v305, 1
        %v1919 = vmul.f32 %v1916, %v1917
        %v1920 = vmul.f32 %v1915, %v1918
        %1921 = vset.pattern.permute.xlu0 1
        %1922 = vperm.xlu0 %1921, %v321
        %v1923 = vpop.permute.xlu0 %1922
        %v1925 = vmul.f32 %v1919, %v1923
        %v1926 = vmul.f32 %v1920, %v1923
        %v1927 = vadd.f32 %v1908, %v1925
        %v1928 = vadd.f32 %v1909, %v1926
        %1929 = vrot.lane.b32.xlu0 %v1880, 15
        %v1930 = vpop.permute.xlu0 %1929
        %1931 = vrot.lane.b32.xlu0 %v1881, 15
        %v1932 = vpop.permute.xlu0 %1931
        %vm1933 = vcmp.lt.s32.totalorder %v1894, 15
        %v1934 = vsel %vm1933, %v1930, %v1932
        %v1935 = vsel %vm1933, %v1932, %v1930
        %v1936 = vperm.slane %v304, 2
        %v1937 = vperm.slane %v305, 2
        %v1938 = vmul.f32 %v1935, %v1936
        %v1939 = vmul.f32 %v1934, %v1937
        %1940 = vset.pattern.permute.xlu0 2
        %1941 = vperm.xlu0 %1940, %v321
        %v1942 = vpop.permute.xlu0 %1941
        %v1944 = vmul.f32 %v1938, %v1942
        %v1945 = vmul.f32 %v1939, %v1942
        %v1946 = vadd.f32 %v1927, %v1944
        %v1947 = vadd.f32 %v1928, %v1945
        %1948 = vrot.lane.b32.xlu0 %v1880, 1
        %v1949 = vpop.permute.xlu0 %1948
        %1950 = vrot.lane.b32.xlu0 %v1881, 1
        %v1951 = vpop.permute.xlu0 %1950
        %vm1952 = vcmp.lt.s32.totalorder %v1894, 1
        %v1953 = vsel %vm1952, %v1949, %v1951
        %v1954 = vsel %vm1952, %v1951, %v1949
        %v1955 = vperm.slane %v304, 3
        %v1956 = vperm.slane %v305, 3
        %v1957 = vmul.f32 %v1954, %v1955
        %v1958 = vmul.f32 %v1953, %v1956
        %1959 = vset.pattern.permute.xlu0 3
        %1960 = vperm.xlu0 %1959, %v321
        %v1961 = vpop.permute.xlu0 %1960
        %v1963 = vmul.f32 %v1957, %v1961
        %v1964 = vmul.f32 %v1958, %v1961
        %v1965 = vadd.f32 %v1946, %v1963
        %v1966 = vadd.f32 %v1947, %v1964
        %1967 = vrot.lane.b32.xlu0 %v1880, 127
        %v1968 = vpop.permute.xlu0 %1967
        %1969 = vrot.lane.b32.xlu0 %v1881, 127
        %v1970 = vpop.permute.xlu0 %1969
        %vm1971 = vcmp.lt.s32.totalorder %v1894, 127
        %v1972 = vsel %vm1971, %v1968, %v1970
        %v1973 = vsel %vm1971, %v1970, %v1968
        %v1974 = vperm.slane %v304, 5
        %v1975 = vperm.slane %v305, 5
        %v1976 = vmul.f32 %v1972, %v1974
        %v1977 = vmul.f32 %v1973, %v1975
        %1978 = vset.pattern.permute.xlu0 5
        %1979 = vperm.xlu0 %1978, %v321
        %v1980 = vpop.permute.xlu0 %1979
        %v1982 = vmul.f32 %v1976, %v1980
        %v1983 = vmul.f32 %v1977, %v1980
        %v1984 = vadd.f32 %v1965, %v1982
        %v1985 = vadd.f32 %v1966, %v1983
        %1986 = vrot.lane.b32.xlu0 %v1880, 113
        %v1987 = vpop.permute.xlu0 %1986
        %1988 = vrot.lane.b32.xlu0 %v1881, 113
        %v1989 = vpop.permute.xlu0 %1988
        %vm1990 = vcmp.lt.s32.totalorder %v1894, 113
        %v1991 = vsel %vm1990, %v1987, %v1989
        %v1992 = vsel %vm1990, %v1989, %v1987
        %v1993 = vperm.slane %v304, 6
        %v1994 = vperm.slane %v305, 6
        %v1995 = vmul.f32 %v1991, %v1993
        %v1996 = vmul.f32 %v1992, %v1994
        %1997 = vset.pattern.permute.xlu0 6
        %1998 = vperm.xlu0 %1997, %v321
        %v1999 = vpop.permute.xlu0 %1998
        %v2001 = vmul.f32 %v1995, %v1999
        %v2002 = vmul.f32 %v1996, %v1999
        %v2003 = vadd.f32 %v1984, %v2001
        %v2004 = vadd.f32 %v1985, %v2002
        %2005 = vrot.lane.b32.xlu0 %v1880, 112
        %v2006 = vpop.permute.xlu0 %2005
        %2007 = vrot.lane.b32.xlu0 %v1881, 112
        %v2008 = vpop.permute.xlu0 %2007
        %vm2009 = vcmp.lt.s32.totalorder %v1894, 112
        %v2010 = vsel %vm2009, %v2006, %v2008
        %v2011 = vsel %vm2009, %v2008, %v2006
        %v2012 = vperm.slane %v304, 7
        %v2013 = vperm.slane %v305, 7
        %v2014 = vmul.f32 %v2010, %v2012
        %v2015 = vmul.f32 %v2011, %v2013
        %2016 = vset.pattern.permute.xlu0 7
        %2017 = vperm.xlu0 %2016, %v321
        %v2018 = vpop.permute.xlu0 %2017
        %v2020 = vmul.f32 %v2014, %v2018
        %v2021 = vmul.f32 %v2015, %v2018
        %v2022 = vadd.f32 %v2003, %v2020
        %v2023 = vadd.f32 %v2004, %v2021
        %2024 = vrot.lane.b32.xlu0 %v1880, 111
        %v2025 = vpop.permute.xlu0 %2024
        %2026 = vrot.lane.b32.xlu0 %v1881, 111
        %v2027 = vpop.permute.xlu0 %2026
        %vm2028 = vcmp.lt.s32.totalorder %v1894, 111
        %v2029 = vsel %vm2028, %v2025, %v2027
        %v2030 = vsel %vm2028, %v2027, %v2025
        %v2031 = vperm.slane %v306, 0
        %v2032 = vperm.slane %v307, 0
        %v2033 = vmul.f32 %v2029, %v2031
        %v2034 = vmul.f32 %v2030, %v2032
        %2035 = vset.pattern.permute.xlu0 8
        %2036 = vperm.xlu0 %2035, %v321
        %v2037 = vpop.permute.xlu0 %2036
        %v2039 = vmul.f32 %v2033, %v2037
        %v2040 = vmul.f32 %v2034, %v2037
        %v2041 = vadd.f32 %v2022, %v2039
        %v2042 = vadd.f32 %v2023, %v2040
        %2044 = vset.pattern.permute.xlu0 0
        %2045 = vperm.xlu0 %2044, %v322
        %v2046 = vpop.permute.xlu0 %2045
        %v2048 = vadd.f32 %v2041, %v2046
        %v2049 = vadd.f32 %v2042, %v2046
        %2051 = vset.pattern.permute.xlu0 0
        %2052 = vperm.xlu0 %2051, %v324
        %v2053 = vpop.permute.xlu0 %2052
        %v2056 = vsel %vm330, %v323, 0
        %2058 = vmatpush.msra.mxu0 0.0
        %2059 = vmatpush.msra.mxu0 0.0
        %2060 = vmatpush.msra.mxu0 0.0
        %2061 = vmatpush.msra.mxu0 0.0
        %2062 = vmatpush.msra.mxu0 0.0
        %2063 = vmatpush.msra.mxu0 0.0
        %2064 = vmatpush.msra.mxu0 0.0
        %2065 = vmatpush.msra.mxu0 0.0
        %2066 = vmatpush.msra.mxu0 0.0
        %2067 = vmatpush.msra.mxu0 0.0
        %2068 = vmatpush.msra.mxu0 0.0
        %2069 = vmatpush.msra.mxu0 0.0
        %2070 = vmatpush.msra.mxu0 0.0
        %2071 = vmatpush.msra.mxu0 0.0
        %2072 = vmatpush.msra.mxu0 0.0
        %v2073 = vand.u32 %v2048, 4294901760
        %2074 = vmatpush.msra.mxu0 %v2073
        %v2075 = vand.u32 %v2056, 4294901760
        %v2076 = vsub.f32 %v2056, %v2075
        %v2077 = vand.u32 %v2076, 4294901760
        %v2078 = vsub.f32 %v2076, %v2077
        %v2079 = vand.u32 %v2078, 4294901760
        %2080 = vmatmul.f32.gmra.mxu0 %v2079
        %v2081 = vpop.f32.mrf.mxu0
        %v2082 = vadd.f32 %v2053, %v2081
        %2083 = vdwg.mxu0
        %2084 = vmatpush.msra.mxu0 0.0
        %2085 = vmatpush.msra.mxu0 0.0
        %2086 = vmatpush.msra.mxu0 0.0
        %2087 = vmatpush.msra.mxu0 0.0
        %2088 = vmatpush.msra.mxu0 0.0
        %2089 = vmatpush.msra.mxu0 0.0
        %2090 = vmatpush.msra.mxu0 0.0
        %2091 = vmatpush.msra.mxu0 0.0
        %2092 = vmatpush.msra.mxu0 0.0
        %2093 = vmatpush.msra.mxu0 0.0
        %2094 = vmatpush.msra.mxu0 0.0
        %2095 = vmatpush.msra.mxu0 0.0
        %2096 = vmatpush.msra.mxu0 0.0
        %2097 = vmatpush.msra.mxu0 0.0
        %2098 = vmatpush.msra.mxu0 0.0
        %v2099 = vand.u32 %v2048, 4294901760
        %v2100 = vsub.f32 %v2048, %v2099
        %v2101 = vand.u32 %v2100, 4294901760
        %v2102 = vsub.f32 %v2100, %v2101
        %v2103 = vand.u32 %v2102, 4294901760
        %2104 = vmatpush.msra.mxu0 %v2103
        %v2105 = vand.u32 %v2056, 4294901760
        %2106 = vmatmul.f32.gmra.mxu0 %v2105
        %v2107 = vpop.f32.mrf.mxu0
        %v2108 = vadd.f32 %v2082, %v2107
        %2109 = vdwg.mxu0
        %2110 = vmatpush.msra.mxu0 0.0
        %2111 = vmatpush.msra.mxu0 0.0
        %2112 = vmatpush.msra.mxu0 0.0
        %2113 = vmatpush.msra.mxu0 0.0
        %2114 = vmatpush.msra.mxu0 0.0
        %2115 = vmatpush.msra.mxu0 0.0
        %2116 = vmatpush.msra.mxu0 0.0
        %2117 = vmatpush.msra.mxu0 0.0
        %2118 = vmatpush.msra.mxu0 0.0
        %2119 = vmatpush.msra.mxu0 0.0
        %2120 = vmatpush.msra.mxu0 0.0
        %2121 = vmatpush.msra.mxu0 0.0
        %2122 = vmatpush.msra.mxu0 0.0
        %2123 = vmatpush.msra.mxu0 0.0
        %2124 = vmatpush.msra.mxu0 0.0
        %v2125 = vand.u32 %v2048, 4294901760
        %v2126 = vsub.f32 %v2048, %v2125
        %2127 = vmatpush.msra.mxu0 %v2126
        %v2128 = vand.u32 %v2056, 4294901760
        %v2129 = vsub.f32 %v2056, %v2128
        %2130 = vmatmul.f32.gmra.mxu0 %v2129
        %v2131 = vpop.f32.mrf.mxu0
        %v2132 = vadd.f32 %v2108, %v2131
        %2133 = vdwg.mxu0
        %2134 = vmatpush.msra.mxu0 0.0
        %2135 = vmatpush.msra.mxu0 0.0
        %2136 = vmatpush.msra.mxu0 0.0
        %2137 = vmatpush.msra.mxu0 0.0
        %2138 = vmatpush.msra.mxu0 0.0
        %2139 = vmatpush.msra.mxu0 0.0
        %2140 = vmatpush.msra.mxu0 0.0
        %2141 = vmatpush.msra.mxu0 0.0
        %2142 = vmatpush.msra.mxu0 0.0
        %2143 = vmatpush.msra.mxu0 0.0
        %2144 = vmatpush.msra.mxu0 0.0
        %2145 = vmatpush.msra.mxu0 0.0
        %2146 = vmatpush.msra.mxu0 0.0
        %2147 = vmatpush.msra.mxu0 0.0
        %2148 = vmatpush.msra.mxu0 0.0
        %v2149 = vand.u32 %v2048, 4294901760
        %2150 = vmatpush.msra.mxu0 %v2149
        %v2151 = vand.u32 %v2056, 4294901760
        %v2152 = vsub.f32 %v2056, %v2151
        %v2153 = vand.u32 %v2152, 4294901760
        %2154 = vmatmul.f32.gmra.mxu0 %v2153
        %v2155 = vpop.f32.mrf.mxu0
        %v2156 = vadd.f32 %v2132, %v2155
        %2157 = vdwg.mxu0
        %2158 = vmatpush.msra.mxu0 0.0
        %2159 = vmatpush.msra.mxu0 0.0
        %2160 = vmatpush.msra.mxu0 0.0
        %2161 = vmatpush.msra.mxu0 0.0
        %2162 = vmatpush.msra.mxu0 0.0
        %2163 = vmatpush.msra.mxu0 0.0
        %2164 = vmatpush.msra.mxu0 0.0
        %2165 = vmatpush.msra.mxu0 0.0
        %2166 = vmatpush.msra.mxu0 0.0
        %2167 = vmatpush.msra.mxu0 0.0
        %2168 = vmatpush.msra.mxu0 0.0
        %2169 = vmatpush.msra.mxu0 0.0
        %2170 = vmatpush.msra.mxu0 0.0
        %2171 = vmatpush.msra.mxu0 0.0
        %2172 = vmatpush.msra.mxu0 0.0
        %v2173 = vand.u32 %v2048, 4294901760
        %v2174 = vsub.f32 %v2048, %v2173
        %v2175 = vand.u32 %v2174, 4294901760
        %2176 = vmatpush.msra.mxu0 %v2175
        %v2177 = vand.u32 %v2056, 4294901760
        %2178 = vmatmul.f32.gmra.mxu0 %v2177
        %v2179 = vpop.f32.mrf.mxu0
        %v2180 = vadd.f32 %v2156, %v2179
        %2181 = vdwg.mxu0
        %2182 = vmatpush.msra.mxu0 0.0
        %2183 = vmatpush.msra.mxu0 0.0
        %2184 = vmatpush.msra.mxu0 0.0
        %2185 = vmatpush.msra.mxu0 0.0
        %2186 = vmatpush.msra.mxu0 0.0
        %2187 = vmatpush.msra.mxu0 0.0
        %2188 = vmatpush.msra.mxu0 0.0
        %2189 = vmatpush.msra.mxu0 0.0
        %2190 = vmatpush.msra.mxu0 0.0
        %2191 = vmatpush.msra.mxu0 0.0
        %2192 = vmatpush.msra.mxu0 0.0
        %2193 = vmatpush.msra.mxu0 0.0
        %2194 = vmatpush.msra.mxu0 0.0
        %2195 = vmatpush.msra.mxu0 0.0
        %2196 = vmatpush.msra.mxu0 0.0
        %v2197 = vand.u32 %v2048, 4294901760
        %2198 = vmatpush.msra.mxu0 %v2197
        %v2199 = vand.u32 %v2056, 4294901760
        %2200 = vmatmul.f32.gmra.mxu0 %v2199
        %v2201 = vpop.f32.mrf.mxu0
        %v2202 = vadd.f32 %v2180, %v2201
        %2203 = vdwg.mxu0
        %2204 = vmatpush.msra.mxu0 0.0
        %2205 = vmatpush.msra.mxu0 0.0
        %2206 = vmatpush.msra.mxu0 0.0
        %2207 = vmatpush.msra.mxu0 0.0
        %2208 = vmatpush.msra.mxu0 0.0
        %2209 = vmatpush.msra.mxu0 0.0
        %2210 = vmatpush.msra.mxu0 0.0
        %2211 = vmatpush.msra.mxu0 0.0
        %2212 = vmatpush.msra.mxu0 0.0
        %2213 = vmatpush.msra.mxu0 0.0
        %2214 = vmatpush.msra.mxu0 0.0
        %2215 = vmatpush.msra.mxu0 0.0
        %2216 = vmatpush.msra.mxu0 0.0
        %2217 = vmatpush.msra.mxu0 0.0
        %2218 = vmatpush.msra.mxu0 0.0
        %v2219 = vand.u32 %v2049, 4294901760
        %2220 = vmatpush.msra.mxu0 %v2219
        %v2221 = vand.u32 %v2056, 4294901760
        %v2222 = vsub.f32 %v2056, %v2221
        %v2223 = vand.u32 %v2222, 4294901760
        %v2224 = vsub.f32 %v2222, %v2223
        %v2225 = vand.u32 %v2224, 4294901760
        %2226 = vmatmul.f32.gmra.mxu0 %v2225
        %v2227 = vpop.f32.mrf.mxu0
        %v2228 = vadd.f32 %v2053, %v2227
        %2229 = vdwg.mxu0
        %2230 = vmatpush.msra.mxu0 0.0
        %2231 = vmatpush.msra.mxu0 0.0
        %2232 = vmatpush.msra.mxu0 0.0
        %2233 = vmatpush.msra.mxu0 0.0
        %2234 = vmatpush.msra.mxu0 0.0
        %2235 = vmatpush.msra.mxu0 0.0
        %2236 = vmatpush.msra.mxu0 0.0
        %2237 = vmatpush.msra.mxu0 0.0
        %2238 = vmatpush.msra.mxu0 0.0
        %2239 = vmatpush.msra.mxu0 0.0
        %2240 = vmatpush.msra.mxu0 0.0
        %2241 = vmatpush.msra.mxu0 0.0
        %2242 = vmatpush.msra.mxu0 0.0
        %2243 = vmatpush.msra.mxu0 0.0
        %2244 = vmatpush.msra.mxu0 0.0
        %v2245 = vand.u32 %v2049, 4294901760
        %v2246 = vsub.f32 %v2049, %v2245
        %v2247 = vand.u32 %v2246, 4294901760
        %v2248 = vsub.f32 %v2246, %v2247
        %v2249 = vand.u32 %v2248, 4294901760
        %2250 = vmatpush.msra.mxu0 %v2249
        %v2251 = vand.u32 %v2056, 4294901760
        %2252 = vmatmul.f32.gmra.mxu0 %v2251
        %v2253 = vpop.f32.mrf.mxu0
        %v2254 = vadd.f32 %v2228, %v2253
        %2255 = vdwg.mxu0
        %2256 = vmatpush.msra.mxu0 0.0
        %2257 = vmatpush.msra.mxu0 0.0
        %2258 = vmatpush.msra.mxu0 0.0
        %2259 = vmatpush.msra.mxu0 0.0
        %2260 = vmatpush.msra.mxu0 0.0
        %2261 = vmatpush.msra.mxu0 0.0
        %2262 = vmatpush.msra.mxu0 0.0
        %2263 = vmatpush.msra.mxu0 0.0
        %2264 = vmatpush.msra.mxu0 0.0
        %2265 = vmatpush.msra.mxu0 0.0
        %2266 = vmatpush.msra.mxu0 0.0
        %2267 = vmatpush.msra.mxu0 0.0
        %2268 = vmatpush.msra.mxu0 0.0
        %2269 = vmatpush.msra.mxu0 0.0
        %2270 = vmatpush.msra.mxu0 0.0
        %v2271 = vand.u32 %v2049, 4294901760
        %v2272 = vsub.f32 %v2049, %v2271
        %2273 = vmatpush.msra.mxu0 %v2272
        %v2274 = vand.u32 %v2056, 4294901760
        %v2275 = vsub.f32 %v2056, %v2274
        %2276 = vmatmul.f32.gmra.mxu0 %v2275
        %v2277 = vpop.f32.mrf.mxu0
        %v2278 = vadd.f32 %v2254, %v2277
        %2279 = vdwg.mxu0
        %2280 = vmatpush.msra.mxu0 0.0
        %2281 = vmatpush.msra.mxu0 0.0
        %2282 = vmatpush.msra.mxu0 0.0
        %2283 = vmatpush.msra.mxu0 0.0
        %2284 = vmatpush.msra.mxu0 0.0
        %2285 = vmatpush.msra.mxu0 0.0
        %2286 = vmatpush.msra.mxu0 0.0
        %2287 = vmatpush.msra.mxu0 0.0
        %2288 = vmatpush.msra.mxu0 0.0
        %2289 = vmatpush.msra.mxu0 0.0
        %2290 = vmatpush.msra.mxu0 0.0
        %2291 = vmatpush.msra.mxu0 0.0
        %2292 = vmatpush.msra.mxu0 0.0
        %2293 = vmatpush.msra.mxu0 0.0
        %2294 = vmatpush.msra.mxu0 0.0
        %v2295 = vand.u32 %v2049, 4294901760
        %2296 = vmatpush.msra.mxu0 %v2295
        %v2297 = vand.u32 %v2056, 4294901760
        %v2298 = vsub.f32 %v2056, %v2297
        %v2299 = vand.u32 %v2298, 4294901760
        %2300 = vmatmul.f32.gmra.mxu0 %v2299
        %v2301 = vpop.f32.mrf.mxu0
        %v2302 = vadd.f32 %v2278, %v2301
        %2303 = vdwg.mxu0
        %2304 = vmatpush.msra.mxu0 0.0
        %2305 = vmatpush.msra.mxu0 0.0
        %2306 = vmatpush.msra.mxu0 0.0
        %2307 = vmatpush.msra.mxu0 0.0
        %2308 = vmatpush.msra.mxu0 0.0
        %2309 = vmatpush.msra.mxu0 0.0
        %2310 = vmatpush.msra.mxu0 0.0
        %2311 = vmatpush.msra.mxu0 0.0
        %2312 = vmatpush.msra.mxu0 0.0
        %2313 = vmatpush.msra.mxu0 0.0
        %2314 = vmatpush.msra.mxu0 0.0
        %2315 = vmatpush.msra.mxu0 0.0
        %2316 = vmatpush.msra.mxu0 0.0
        %2317 = vmatpush.msra.mxu0 0.0
        %2318 = vmatpush.msra.mxu0 0.0
        %v2319 = vand.u32 %v2049, 4294901760
        %v2320 = vsub.f32 %v2049, %v2319
        %v2321 = vand.u32 %v2320, 4294901760
        %2322 = vmatpush.msra.mxu0 %v2321
        %v2323 = vand.u32 %v2056, 4294901760
        %2324 = vmatmul.f32.gmra.mxu0 %v2323
        %v2325 = vpop.f32.mrf.mxu0
        %v2326 = vadd.f32 %v2302, %v2325
        %2327 = vdwg.mxu0
        %2328 = vmatpush.msra.mxu0 0.0
        %2329 = vmatpush.msra.mxu0 0.0
        %2330 = vmatpush.msra.mxu0 0.0
        %2331 = vmatpush.msra.mxu0 0.0
        %2332 = vmatpush.msra.mxu0 0.0
        %2333 = vmatpush.msra.mxu0 0.0
        %2334 = vmatpush.msra.mxu0 0.0
        %2335 = vmatpush.msra.mxu0 0.0
        %2336 = vmatpush.msra.mxu0 0.0
        %2337 = vmatpush.msra.mxu0 0.0
        %2338 = vmatpush.msra.mxu0 0.0
        %2339 = vmatpush.msra.mxu0 0.0
        %2340 = vmatpush.msra.mxu0 0.0
        %2341 = vmatpush.msra.mxu0 0.0
        %2342 = vmatpush.msra.mxu0 0.0
        %v2343 = vand.u32 %v2049, 4294901760
        %2344 = vmatpush.msra.mxu0 %v2343
        %v2345 = vand.u32 %v2056, 4294901760
        %2346 = vmatmul.f32.gmra.mxu0 %v2345
        %v2347 = vpop.f32.mrf.mxu0
        %v2348 = vadd.f32 %v2326, %v2347
        %2349 = vdwg.mxu0
        %v2350 = vadd.f32 %v2202, %v308
        %v2351 = vadd.f32 %v2348, %v309
        %vm2352 = vcmp.gt.f32.partialorder %v2350, 0.0
        %vm2353 = vcmp.gt.f32.partialorder %v2351, 0.0
        %v2354 = vmul.f32 %v2350, 0.2
        %v2355 = vmul.f32 %v2351, 0.2
        %v2356 = vsel %vm2352, %v2350, %v2354
        %v2357 = vsel %vm2353, %v2351, %v2355
        %v2358 = vld [vmem:[%s6 + $0x70] sm:$0xff]
        %v2359 = vld [vmem:[%s6 + $0x78] sm:$0xff]
        %v2360 = vld [vmem:[%s1 + $0x50] sm:$0xff]
        %v2361 = vld [vmem:[%s1 + $0x58] sm:$0xff]
        %v2362 = vld [vmem:[%s6 + $0x80] sm:$0xff]
        %v2363 = vld [vmem:[%s6 + $0x88] sm:$0xff]
        %v2364 = vld [vmem:[%s3] sm:$0xff]
        %v2365 = vld [vmem:[%s6 + $0x90] sm:$0xff]
        %v2366 = vrot.slane %v2356, 4
        %v2367 = vadd.f32 %v2356, %v2366
        %v2368 = vrot.slane %v2367, 2
        %v2369 = vadd.f32 %v2367, %v2368
        %v2370 = vrot.slane %v2369, 1
        %v2371 = vadd.f32 %v2369, %v2370
        %v2372 = vrot.slane %v2357, 4
        %v2373 = vadd.f32 %v2357, %v2372
        %v2374 = vrot.slane %v2373, 2
        %v2375 = vadd.f32 %v2373, %v2374
        %v2376 = vrot.slane %v2375, 1
        %v2377 = vadd.f32 %v2375, %v2376
        %v2378 = vrcp.pop 8.0
        %v2379 = vmul.f32 8.0, %v2378
        %v2380 = vsub.f32 1.0, %v2379
        %v2381 = vmul.f32 %v2378, %v2380
        %v2382 = vadd.f32 %v2378, %v2381
        %vm2383 = vweird.f32 %v2378
        %v2384 = vsel %vm2383, %v2378, %v2382
        %v2385 = vmul.f32 %v2371, %v2384
        %v2386 = vmul.f32 %v2377, %v2384
        %v2387 = vsub.f32 %v2356, %v2385
        %v2388 = vsub.f32 %v2357, %v2386
        %v2389 = vmul.f32 %v2387, %v2387
        %v2390 = vmul.f32 %v2388, %v2388
        %v2391 = vrot.slane %v2389, 4
        %v2392 = vadd.f32 %v2389, %v2391
        %v2393 = vrot.slane %v2392, 2
        %v2394 = vadd.f32 %v2392, %v2393
        %v2395 = vrot.slane %v2394, 1
        %v2396 = vadd.f32 %v2394, %v2395
        %v2397 = vrot.slane %v2390, 4
        %v2398 = vadd.f32 %v2390, %v2397
        %v2399 = vrot.slane %v2398, 2
        %v2400 = vadd.f32 %v2398, %v2399
        %v2401 = vrot.slane %v2400, 1
        %v2402 = vadd.f32 %v2400, %v2401
        %v2403 = vmul.f32 %v2396, %v2384
        %v2404 = vmul.f32 %v2402, %v2384
        %v2405 = vadd.f32 %v2403, 1e-05
        %v2406 = vadd.f32 %v2404, 1e-05
        %v2407 = vrsqrt.pop %v2405
        %v2408 = vmul.f32 %v2407, %v2405
        %v2409 = vmul.f32 %v2408, %v2407
        %v2410 = vmul.f32 0.5, %v2409
        %v2411 = vsub.f32 1.5, %v2410
        %v2412 = vmul.f32 %v2407, %v2411
        %vm2413 = vweird.f32 %v2405
        %vm2414 = vweird.f32 %v2407
        %vm2415 = vmor %vm2413, %vm2414
        %v2416 = vsel %vm2415, %v2407, %v2412
        %v2417 = vrsqrt.pop %v2406
        %v2418 = vmul.f32 %v2417, %v2406
        %v2419 = vmul.f32 %v2418, %v2417
        %v2420 = vmul.f32 0.5, %v2419
        %v2421 = vsub.f32 1.5, %v2420
        %v2422 = vmul.f32 %v2417, %v2421
        %vm2423 = vweird.f32 %v2406
        %vm2424 = vweird.f32 %v2417
        %vm2425 = vmor %vm2423, %vm2424
        %v2426 = vsel %vm2425, %v2417, %v2422
        %v2427 = vmul.f32 %v2387, %v2416
        %v2428 = vmul.f32 %v2388, %v2426
        %2430 = vset.pattern.permute.xlu0 0
        %2431 = vperm.xlu0 %2430, %v2358
        %v2432 = vpop.permute.xlu0 %2431
        %v2434 = vmul.f32 %v2427, %v2432
        %v2435 = vmul.f32 %v2428, %v2432
        %2437 = vset.pattern.permute.xlu0 0
        %2438 = vperm.xlu0 %2437, %v2359
        %v2439 = vpop.permute.xlu0 %2438
        %v2441 = vadd.f32 %v2434, %v2439
        %v2442 = vadd.f32 %v2435, %v2439
        %v2443 = vadd.f32 %v2441, %v2356
        %v2444 = vadd.f32 %v2442, %v2357
        %v2445 = vrot.slane %v2443, 4
        %v2446 = vadd.f32 %v2443, %v2445
        %v2447 = vrot.slane %v2446, 2
        %v2448 = vadd.f32 %v2446, %v2447
        %v2449 = vrot.slane %v2448, 1
        %v2450 = vadd.f32 %v2448, %v2449
        %v2451 = vrot.slane %v2444, 4
        %v2452 = vadd.f32 %v2444, %v2451
        %v2453 = vrot.slane %v2452, 2
        %v2454 = vadd.f32 %v2452, %v2453
        %v2455 = vrot.slane %v2454, 1
        %v2456 = vadd.f32 %v2454, %v2455
        %v2457 = vmul.f32 %v2450, %v2384
        %v2458 = vmul.f32 %v2456, %v2384
        %v2459 = vsub.f32 %v2443, %v2457
        %v2460 = vsub.f32 %v2444, %v2458
        %v2461 = vmul.f32 %v2459, %v2459
        %v2462 = vmul.f32 %v2460, %v2460
        %v2463 = vrot.slane %v2461, 4
        %v2464 = vadd.f32 %v2461, %v2463
        %v2465 = vrot.slane %v2464, 2
        %v2466 = vadd.f32 %v2464, %v2465
        %v2467 = vrot.slane %v2466, 1
        %v2468 = vadd.f32 %v2466, %v2467
        %v2469 = vrot.slane %v2462, 4
        %v2470 = vadd.f32 %v2462, %v2469
        %v2471 = vrot.slane %v2470, 2
        %v2472 = vadd.f32 %v2470, %v2471
        %v2473 = vrot.slane %v2472, 1
        %v2474 = vadd.f32 %v2472, %v2473
        %v2475 = vmul.f32 %v2468, %v2384
        %v2476 = vmul.f32 %v2474, %v2384
        %v2477 = vadd.f32 %v2475, 1e-05
        %v2478 = vadd.f32 %v2476, 1e-05
        %v2479 = vrsqrt.pop %v2477
        %v2480 = vmul.f32 %v2479, %v2477
        %v2481 = vmul.f32 %v2480, %v2479
        %v2482 = vmul.f32 0.5, %v2481
        %v2483 = vsub.f32 1.5, %v2482
        %v2484 = vmul.f32 %v2479, %v2483
        %vm2485 = vweird.f32 %v2477
        %vm2486 = vweird.f32 %v2479
        %vm2487 = vmor %vm2485, %vm2486
        %v2488 = vsel %vm2487, %v2479, %v2484
        %v2489 = vrsqrt.pop %v2478
        %v2490 = vmul.f32 %v2489, %v2478
        %v2491 = vmul.f32 %v2490, %v2489
        %v2492 = vmul.f32 0.5, %v2491
        %v2493 = vsub.f32 1.5, %v2492
        %v2494 = vmul.f32 %v2489, %v2493
        %vm2495 = vweird.f32 %v2478
        %vm2496 = vweird.f32 %v2489
        %vm2497 = vmor %vm2495, %vm2496
        %v2498 = vsel %vm2497, %v2489, %v2494
        %v2499 = vmul.f32 %v2459, %v2488
        %v2500 = vmul.f32 %v2460, %v2498
        %v2501 = vmul.f32 %v2499, %v2432
        %v2502 = vmul.f32 %v2500, %v2432
        %v2503 = vadd.f32 %v2501, %v2439
        %v2504 = vadd.f32 %v2502, %v2439
        %2506 = vset.pattern.permute.xlu0 0
        %2507 = vperm.xlu0 %2506, %v2362
        %v2508 = vpop.permute.xlu0 %2507
        %2511 = vset.pattern.permute.xlu0 0
        %2512 = vperm.xlu0 %2511, %v2363
        %v2513 = vpop.permute.xlu0 %2512
        %v2516 = vsel %vm330, %v2360, 0
        %v2519 = vsel %vm330, %v2361, 0
        %2521 = vmatpush.msra.mxu0 0.0
        %2522 = vmatpush.msra.mxu0 0.0
        %2523 = vmatpush.msra.mxu0 0.0
        %2524 = vmatpush.msra.mxu0 0.0
        %2525 = vmatpush.msra.mxu0 0.0
        %2526 = vmatpush.msra.mxu0 0.0
        %2527 = vmatpush.msra.mxu0 0.0
        %2528 = vmatpush.msra.mxu0 0.0
        %2529 = vmatpush.msra.mxu0 0.0
        %2530 = vmatpush.msra.mxu0 0.0
        %2531 = vmatpush.msra.mxu0 0.0
        %2532 = vmatpush.msra.mxu0 0.0
        %2533 = vmatpush.msra.mxu0 0.0
        %2534 = vmatpush.msra.mxu0 0.0
        %2535 = vmatpush.msra.mxu0 0.0
        %v2536 = vand.u32 %v2503, 4294901760
        %2537 = vmatpush.msra.mxu0 %v2536
        %v2538 = vand.u32 %v2516, 4294901760
        %v2539 = vsub.f32 %v2516, %v2538
        %v2540 = vand.u32 %v2539, 4294901760
        %v2541 = vsub.f32 %v2539, %v2540
        %v2542 = vand.u32 %v2541, 4294901760
        %2543 = vmatmul.f32.gmra.mxu0 %v2542
        %v2544 = vpop.f32.mrf.mxu0
        %v2545 = vadd.f32 %v2508, %v2544
        %v2546 = vand.u32 %v2519, 4294901760
        %v2547 = vsub.f32 %v2519, %v2546
        %v2548 = vand.u32 %v2547, 4294901760
        %v2549 = vsub.f32 %v2547, %v2548
        %v2550 = vand.u32 %v2549, 4294901760
        %2551 = vmatmul.f32.gmra.mxu0 %v2550
        %v2552 = vpop.f32.mrf.mxu0
        %v2553 = vadd.f32 %v2513, %v2552
        %2554 = vdwg.mxu0
        %2555 = vmatpush.msra.mxu0 0.0
        %2556 = vmatpush.msra.mxu0 0.0
        %2557 = vmatpush.msra.mxu0 0.0
        %2558 = vmatpush.msra.mxu0 0.0
        %2559 = vmatpush.msra.mxu0 0.0
        %2560 = vmatpush.msra.mxu0 0.0
        %2561 = vmatpush.msra.mxu0 0.0
        %2562 = vmatpush.msra.mxu0 0.0
        %2563 = vmatpush.msra.mxu0 0.0
        %2564 = vmatpush.msra.mxu0 0.0
        %2565 = vmatpush.msra.mxu0 0.0
        %2566 = vmatpush.msra.mxu0 0.0
        %2567 = vmatpush.msra.mxu0 0.0
        %2568 = vmatpush.msra.mxu0 0.0
        %2569 = vmatpush.msra.mxu0 0.0
        %v2570 = vand.u32 %v2503, 4294901760
        %v2571 = vsub.f32 %v2503, %v2570
        %v2572 = vand.u32 %v2571, 4294901760
        %v2573 = vsub.f32 %v2571, %v2572
        %v2574 = vand.u32 %v2573, 4294901760
        %2575 = vmatpush.msra.mxu0 %v2574
        %v2576 = vand.u32 %v2516, 4294901760
        %2577 = vmatmul.f32.gmra.mxu0 %v2576
        %v2578 = vpop.f32.mrf.mxu0
        %v2579 = vadd.f32 %v2545, %v2578
        %v2580 = vand.u32 %v2519, 4294901760
        %2581 = vmatmul.f32.gmra.mxu0 %v2580
        %v2582 = vpop.f32.mrf.mxu0
        %v2583 = vadd.f32 %v2553, %v2582
        %2584 = vdwg.mxu0
        %2585 = vmatpush.msra.mxu0 0.0
        %2586 = vmatpush.msra.mxu0 0.0
        %2587 = vmatpush.msra.mxu0 0.0
        %2588 = vmatpush.msra.mxu0 0.0
        %2589 = vmatpush.msra.mxu0 0.0
        %2590 = vmatpush.msra.mxu0 0.0
        %2591 = vmatpush.msra.mxu0 0.0
        %2592 = vmatpush.msra.mxu0 0.0
        %2593 = vmatpush.msra.mxu0 0.0
        %2594 = vmatpush.msra.mxu0 0.0
        %2595 = vmatpush.msra.mxu0 0.0
        %2596 = vmatpush.msra.mxu0 0.0
        %2597 = vmatpush.msra.mxu0 0.0
        %2598 = vmatpush.msra.mxu0 0.0
        %2599 = vmatpush.msra.mxu0 0.0
        %v2600 = vand.u32 %v2503, 4294901760
        %v2601 = vsub.f32 %v2503, %v2600
        %2602 = vmatpush.msra.mxu0 %v2601
        %v2603 = vand.u32 %v2516, 4294901760
        %v2604 = vsub.f32 %v2516, %v2603
        %2605 = vmatmul.f32.gmra.mxu0 %v2604
        %v2606 = vpop.f32.mrf.mxu0
        %v2607 = vadd.f32 %v2579, %v2606
        %v2608 = vand.u32 %v2519, 4294901760
        %v2609 = vsub.f32 %v2519, %v2608
        %2610 = vmatmul.f32.gmra.mxu0 %v2609
        %v2611 = vpop.f32.mrf.mxu0
        %v2612 = vadd.f32 %v2583, %v2611
        %2613 = vdwg.mxu0
        %2614 = vmatpush.msra.mxu0 0.0
        %2615 = vmatpush.msra.mxu0 0.0
        %2616 = vmatpush.msra.mxu0 0.0
        %2617 = vmatpush.msra.mxu0 0.0
        %2618 = vmatpush.msra.mxu0 0.0
        %2619 = vmatpush.msra.mxu0 0.0
        %2620 = vmatpush.msra.mxu0 0.0
        %2621 = vmatpush.msra.mxu0 0.0
        %2622 = vmatpush.msra.mxu0 0.0
        %2623 = vmatpush.msra.mxu0 0.0
        %2624 = vmatpush.msra.mxu0 0.0
        %2625 = vmatpush.msra.mxu0 0.0
        %2626 = vmatpush.msra.mxu0 0.0
        %2627 = vmatpush.msra.mxu0 0.0
        %2628 = vmatpush.msra.mxu0 0.0
        %v2629 = vand.u32 %v2503, 4294901760
        %2630 = vmatpush.msra.mxu0 %v2629
        %v2631 = vand.u32 %v2516, 4294901760
        %v2632 = vsub.f32 %v2516, %v2631
        %v2633 = vand.u32 %v2632, 4294901760
        %2634 = vmatmul.f32.gmra.mxu0 %v2633
        %v2635 = vpop.f32.mrf.mxu0
        %v2636 = vadd.f32 %v2607, %v2635
        %v2637 = vand.u32 %v2519, 4294901760
        %v2638 = vsub.f32 %v2519, %v2637
        %v2639 = vand.u32 %v2638, 4294901760
        %2640 = vmatmul.f32.gmra.mxu0 %v2639
        %v2641 = vpop.f32.mrf.mxu0
        %v2642 = vadd.f32 %v2612, %v2641
        %2643 = vdwg.mxu0
        %2644 = vmatpush.msra.mxu0 0.0
        %2645 = vmatpush.msra.mxu0 0.0
        %2646 = vmatpush.msra.mxu0 0.0
        %2647 = vmatpush.msra.mxu0 0.0
        %2648 = vmatpush.msra.mxu0 0.0
        %2649 = vmatpush.msra.mxu0 0.0
        %2650 = vmatpush.msra.mxu0 0.0
        %2651 = vmatpush.msra.mxu0 0.0
        %2652 = vmatpush.msra.mxu0 0.0
        %2653 = vmatpush.msra.mxu0 0.0
        %2654 = vmatpush.msra.mxu0 0.0
        %2655 = vmatpush.msra.mxu0 0.0
        %2656 = vmatpush.msra.mxu0 0.0
        %2657 = vmatpush.msra.mxu0 0.0
        %2658 = vmatpush.msra.mxu0 0.0
        %v2659 = vand.u32 %v2503, 4294901760
        %v2660 = vsub.f32 %v2503, %v2659
        %v2661 = vand.u32 %v2660, 4294901760
        %2662 = vmatpush.msra.mxu0 %v2661
        %v2663 = vand.u32 %v2516, 4294901760
        %2664 = vmatmul.f32.gmra.mxu0 %v2663
        %v2665 = vpop.f32.mrf.mxu0
        %v2666 = vadd.f32 %v2636, %v2665
        %v2667 = vand.u32 %v2519, 4294901760
        %2668 = vmatmul.f32.gmra.mxu0 %v2667
        %v2669 = vpop.f32.mrf.mxu0
        %v2670 = vadd.f32 %v2642, %v2669
        %2671 = vdwg.mxu0
        %2672 = vmatpush.msra.mxu0 0.0
        %2673 = vmatpush.msra.mxu0 0.0
        %2674 = vmatpush.msra.mxu0 0.0
        %2675 = vmatpush.msra.mxu0 0.0
        %2676 = vmatpush.msra.mxu0 0.0
        %2677 = vmatpush.msra.mxu0 0.0
        %2678 = vmatpush.msra.mxu0 0.0
        %2679 = vmatpush.msra.mxu0 0.0
        %2680 = vmatpush.msra.mxu0 0.0
        %2681 = vmatpush.msra.mxu0 0.0
        %2682 = vmatpush.msra.mxu0 0.0
        %2683 = vmatpush.msra.mxu0 0.0
        %2684 = vmatpush.msra.mxu0 0.0
        %2685 = vmatpush.msra.mxu0 0.0
        %2686 = vmatpush.msra.mxu0 0.0
        %v2687 = vand.u32 %v2503, 4294901760
        %2688 = vmatpush.msra.mxu0 %v2687
        %v2689 = vand.u32 %v2516, 4294901760
        %2690 = vmatmul.f32.gmra.mxu0 %v2689
        %v2691 = vpop.f32.mrf.mxu0
        %v2692 = vadd.f32 %v2666, %v2691
        %v2693 = vand.u32 %v2519, 4294901760
        %2694 = vmatmul.f32.gmra.mxu0 %v2693
        %v2695 = vpop.f32.mrf.mxu0
        %v2696 = vadd.f32 %v2670, %v2695
        %2697 = vdwg.mxu0
        %2698 = vmatpush.msra.mxu0 0.0
        %2699 = vmatpush.msra.mxu0 0.0
        %2700 = vmatpush.msra.mxu0 0.0
        %2701 = vmatpush.msra.mxu0 0.0
        %2702 = vmatpush.msra.mxu0 0.0
        %2703 = vmatpush.msra.mxu0 0.0
        %2704 = vmatpush.msra.mxu0 0.0
        %2705 = vmatpush.msra.mxu0 0.0
        %2706 = vmatpush.msra.mxu0 0.0
        %2707 = vmatpush.msra.mxu0 0.0
        %2708 = vmatpush.msra.mxu0 0.0
        %2709 = vmatpush.msra.mxu0 0.0
        %2710 = vmatpush.msra.mxu0 0.0
        %2711 = vmatpush.msra.mxu0 0.0
        %2712 = vmatpush.msra.mxu0 0.0
        %v2713 = vand.u32 %v2504, 4294901760
        %2714 = vmatpush.msra.mxu0 %v2713
        %v2715 = vand.u32 %v2516, 4294901760
        %v2716 = vsub.f32 %v2516, %v2715
        %v2717 = vand.u32 %v2716, 4294901760
        %v2718 = vsub.f32 %v2716, %v2717
        %v2719 = vand.u32 %v2718, 4294901760
        %2720 = vmatmul.f32.gmra.mxu0 %v2719
        %v2721 = vpop.f32.mrf.mxu0
        %v2722 = vadd.f32 %v2508, %v2721
        %v2723 = vand.u32 %v2519, 4294901760
        %v2724 = vsub.f32 %v2519, %v2723
        %v2725 = vand.u32 %v2724, 4294901760
        %v2726 = vsub.f32 %v2724, %v2725
        %v2727 = vand.u32 %v2726, 4294901760
        %2728 = vmatmul.f32.gmra.mxu0 %v2727
        %v2729 = vpop.f32.mrf.mxu0
        %v2730 = vadd.f32 %v2513, %v2729
        %2731 = vdwg.mxu0
        %2732 = vmatpush.msra.mxu0 0.0
        %2733 = vmatpush.msra.mxu0 0.0
        %2734 = vmatpush.msra.mxu0 0.0
        %2735 = vmatpush.msra.mxu0 0.0
        %2736 = vmatpush.msra.mxu0 0.0
        %2737 = vmatpush.msra.mxu0 0.0
        %2738 = vmatpush.msra.mxu0 0.0
        %2739 = vmatpush.msra.mxu0 0.0
        %2740 = vmatpush.msra.mxu0 0.0
        %2741 = vmatpush.msra.mxu0 0.0
        %2742 = vmatpush.msra.mxu0 0.0
        %2743 = vmatpush.msra.mxu0 0.0
        %2744 = vmatpush.msra.mxu0 0.0
        %2745 = vmatpush.msra.mxu0 0.0
        %2746 = vmatpush.msra.mxu0 0.0
        %v2747 = vand.u32 %v2504, 4294901760
        %v2748 = vsub.f32 %v2504, %v2747
        %v2749 = vand.u32 %v2748, 4294901760
        %v2750 = vsub.f32 %v2748, %v2749
        %v2751 = vand.u32 %v2750, 4294901760
        %2752 = vmatpush.msra.mxu0 %v2751
        %v2753 = vand.u32 %v2516, 4294901760
        %2754 = vmatmul.f32.gmra.mxu0 %v2753
        %v2755 = vpop.f32.mrf.mxu0
        %v2756 = vadd.f32 %v2722, %v2755
        %v2757 = vand.u32 %v2519, 4294901760
        %2758 = vmatmul.f32.gmra.mxu0 %v2757
        %v2759 = vpop.f32.mrf.mxu0
        %v2760 = vadd.f32 %v2730, %v2759
        %2761 = vdwg.mxu0
        %2762 = vmatpush.msra.mxu0 0.0
        %2763 = vmatpush.msra.mxu0 0.0
        %2764 = vmatpush.msra.mxu0 0.0
        %2765 = vmatpush.msra.mxu0 0.0
        %2766 = vmatpush.msra.mxu0 0.0
        %2767 = vmatpush.msra.mxu0 0.0
        %2768 = vmatpush.msra.mxu0 0.0
        %2769 = vmatpush.msra.mxu0 0.0
        %2770 = vmatpush.msra.mxu0 0.0
        %2771 = vmatpush.msra.mxu0 0.0
        %2772 = vmatpush.msra.mxu0 0.0
        %2773 = vmatpush.msra.mxu0 0.0
        %2774 = vmatpush.msra.mxu0 0.0
        %2775 = vmatpush.msra.mxu0 0.0
        %2776 = vmatpush.msra.mxu0 0.0
        %v2777 = vand.u32 %v2504, 4294901760
        %v2778 = vsub.f32 %v2504, %v2777
        %2779 = vmatpush.msra.mxu0 %v2778
        %v2780 = vand.u32 %v2516, 4294901760
        %v2781 = vsub.f32 %v2516, %v2780
        %2782 = vmatmul.f32.gmra.mxu0 %v2781
        %v2783 = vpop.f32.mrf.mxu0
        %v2784 = vadd.f32 %v2756, %v2783
        %v2785 = vand.u32 %v2519, 4294901760
        %v2786 = vsub.f32 %v2519, %v2785
        %2787 = vmatmul.f32.gmra.mxu0 %v2786
        %v2788 = vpop.f32.mrf.mxu0
        %v2789 = vadd.f32 %v2760, %v2788
        %2790 = vdwg.mxu0
        %2791 = vmatpush.msra.mxu0 0.0
        %2792 = vmatpush.msra.mxu0 0.0
        %2793 = vmatpush.msra.mxu0 0.0
        %2794 = vmatpush.msra.mxu0 0.0
        %2795 = vmatpush.msra.mxu0 0.0
        %2796 = vmatpush.msra.mxu0 0.0
        %2797 = vmatpush.msra.mxu0 0.0
        %2798 = vmatpush.msra.mxu0 0.0
        %2799 = vmatpush.msra.mxu0 0.0
        %2800 = vmatpush.msra.mxu0 0.0
        %2801 = vmatpush.msra.mxu0 0.0
        %2802 = vmatpush.msra.mxu0 0.0
        %2803 = vmatpush.msra.mxu0 0.0
        %2804 = vmatpush.msra.mxu0 0.0
        %2805 = vmatpush.msra.mxu0 0.0
        %v2806 = vand.u32 %v2504, 4294901760
        %2807 = vmatpush.msra.mxu0 %v2806
        %v2808 = vand.u32 %v2516, 4294901760
        %v2809 = vsub.f32 %v2516, %v2808
        %v2810 = vand.u32 %v2809, 4294901760
        %2811 = vmatmul.f32.gmra.mxu0 %v2810
        %v2812 = vpop.f32.mrf.mxu0
        %v2813 = vadd.f32 %v2784, %v2812
        %v2814 = vand.u32 %v2519, 4294901760
        %v2815 = vsub.f32 %v2519, %v2814
        %v2816 = vand.u32 %v2815, 4294901760
        %2817 = vmatmul.f32.gmra.mxu0 %v2816
        %v2818 = vpop.f32.mrf.mxu0
        %v2819 = vadd.f32 %v2789, %v2818
        %2820 = vdwg.mxu0
        %2821 = vmatpush.msra.mxu0 0.0
        %2822 = vmatpush.msra.mxu0 0.0
        %2823 = vmatpush.msra.mxu0 0.0
        %2824 = vmatpush.msra.mxu0 0.0
        %2825 = vmatpush.msra.mxu0 0.0
        %2826 = vmatpush.msra.mxu0 0.0
        %2827 = vmatpush.msra.mxu0 0.0
        %2828 = vmatpush.msra.mxu0 0.0
        %2829 = vmatpush.msra.mxu0 0.0
        %2830 = vmatpush.msra.mxu0 0.0
        %2831 = vmatpush.msra.mxu0 0.0
        %2832 = vmatpush.msra.mxu0 0.0
        %2833 = vmatpush.msra.mxu0 0.0
        %2834 = vmatpush.msra.mxu0 0.0
        %2835 = vmatpush.msra.mxu0 0.0
        %v2836 = vand.u32 %v2504, 4294901760
        %v2837 = vsub.f32 %v2504, %v2836
        %v2838 = vand.u32 %v2837, 4294901760
        %2839 = vmatpush.msra.mxu0 %v2838
        %v2840 = vand.u32 %v2516, 4294901760
        %2841 = vmatmul.f32.gmra.mxu0 %v2840
        %v2842 = vpop.f32.mrf.mxu0
        %v2843 = vadd.f32 %v2813, %v2842
        %v2844 = vand.u32 %v2519, 4294901760
        %2845 = vmatmul.f32.gmra.mxu0 %v2844
        %v2846 = vpop.f32.mrf.mxu0
        %v2847 = vadd.f32 %v2819, %v2846
        %2848 = vdwg.mxu0
        %2849 = vmatpush.msra.mxu0 0.0
        %2850 = vmatpush.msra.mxu0 0.0
        %2851 = vmatpush.msra.mxu0 0.0
        %2852 = vmatpush.msra.mxu0 0.0
        %2853 = vmatpush.msra.mxu0 0.0
        %2854 = vmatpush.msra.mxu0 0.0
        %2855 = vmatpush.msra.mxu0 0.0
        %2856 = vmatpush.msra.mxu0 0.0
        %2857 = vmatpush.msra.mxu0 0.0
        %2858 = vmatpush.msra.mxu0 0.0
        %2859 = vmatpush.msra.mxu0 0.0
        %2860 = vmatpush.msra.mxu0 0.0
        %2861 = vmatpush.msra.mxu0 0.0
        %2862 = vmatpush.msra.mxu0 0.0
        %2863 = vmatpush.msra.mxu0 0.0
        %v2864 = vand.u32 %v2504, 4294901760
        %2865 = vmatpush.msra.mxu0 %v2864
        %v2866 = vand.u32 %v2516, 4294901760
        %2867 = vmatmul.f32.gmra.mxu0 %v2866
        %v2868 = vpop.f32.mrf.mxu0
        %v2869 = vadd.f32 %v2843, %v2868
        %v2870 = vand.u32 %v2519, 4294901760
        %2871 = vmatmul.f32.gmra.mxu0 %v2870
        %v2872 = vpop.f32.mrf.mxu0
        %v2873 = vadd.f32 %v2847, %v2872
        %2874 = vdwg.mxu0
        %v2875 = vmul.f32 %v2692, 0.5
        %v2876 = vmul.f32 %v2869, 0.5
        %v2877 = vmul.f32 %v2696, 0.5
        %v2878 = vmul.f32 %v2873, 0.5
        %v2879 = vmul.f32 %v2692, 0.044715
        %v2880 = vmul.f32 %v2869, 0.044715
        %v2881 = vmul.f32 %v2696, 0.044715
        %v2882 = vmul.f32 %v2873, 0.044715
        %v2883 = vmul.f32 %v2879, %v2692
        %v2884 = vmul.f32 %v2880, %v2869
        %v2885 = vmul.f32 %v2881, %v2696
        %v2886 = vmul.f32 %v2882, %v2873
        %v2887 = vmul.f32 %v2883, %v2692
        %v2888 = vmul.f32 %v2884, %v2869
        %v2889 = vmul.f32 %v2885, %v2696
        %v2890 = vmul.f32 %v2886, %v2873
        %v2891 = vadd.f32 %v2692, %v2887
        %v2892 = vadd.f32 %v2869, %v2888
        %v2893 = vadd.f32 %v2696, %v2889
        %v2894 = vadd.f32 %v2873, %v2890
        %v2895 = vmul.f32 %v2891, 0.7978846
        %v2896 = vmul.f32 %v2892, 0.7978846
        %v2897 = vmul.f32 %v2893, 0.7978846
        %v2898 = vmul.f32 %v2894, 0.7978846
        %v2899 = vtanh.pop %v2895
        %v2900 = vtanh.pop %v2896
        %v2901 = vtanh.pop %v2897
        %v2902 = vtanh.pop %v2898
        %v2903 = vadd.f32 %v2899, 1.0
        %v2904 = vadd.f32 %v2900, 1.0
        %v2905 = vadd.f32 %v2901, 1.0
        %v2906 = vadd.f32 %v2902, 1.0
        %v2907 = vmul.f32 %v2875, %v2903
        %v2908 = vmul.f32 %v2876, %v2904
        %v2909 = vmul.f32 %v2877, %v2905
        %v2910 = vmul.f32 %v2878, %v2906
        %2912 = vset.pattern.permute.xlu0 0
        %2913 = vperm.xlu0 %2912, %v2365
        %v2914 = vpop.permute.xlu0 %2913
        %vm2916 = vcmask 130048
        %v2918 = vsel %vm2916, %v2364, 0
        %2920 = vmatpush.msra.mxu0 0.0
        %2921 = vmatpush.msra.mxu0 0.0
        %2922 = vmatpush.msra.mxu0 0.0
        %2923 = vmatpush.msra.mxu0 0.0
        %2924 = vmatpush.msra.mxu0 0.0
        %2925 = vmatpush.msra.mxu0 0.0
        %2926 = vmatpush.msra.mxu0 0.0
        %2927 = vmatpush.msra.mxu0 0.0
        %2928 = vmatpush.msra.mxu0 0.0
        %2929 = vmatpush.msra.mxu0 0.0
        %2930 = vmatpush.msra.mxu0 0.0
        %2931 = vmatpush.msra.mxu0 0.0
        %2932 = vmatpush.msra.mxu0 0.0
        %2933 = vmatpush.msra.mxu0 0.0
        %v2934 = vand.u32 %v2909, 4294901760
        %2935 = vmatpush.msra.mxu0 %v2934
        %v2936 = vand.u32 %v2907, 4294901760
        %2937 = vmatpush.msra.mxu0 %v2936
        %v2938 = vand.u32 %v2918, 4294901760
        %v2939 = vsub.f32 %v2918, %v2938
        %v2940 = vand.u32 %v2939, 4294901760
        %v2941 = vsub.f32 %v2939, %v2940
        %v2942 = vand.u32 %v2941, 4294901760
        %2943 = vmatmul.f32.gmra.mxu0 %v2942
        %v2944 = vpop.f32.mrf.mxu0
        %v2945 = vadd.f32 %v2914, %v2944
        %2946 = vdwg.mxu0
        %2947 = vmatpush.msra.mxu0 0.0
        %2948 = vmatpush.msra.mxu0 0.0
        %2949 = vmatpush.msra.mxu0 0.0
        %2950 = vmatpush.msra.mxu0 0.0
        %2951 = vmatpush.msra.mxu0 0.0
        %2952 = vmatpush.msra.mxu0 0.0
        %2953 = vmatpush.msra.mxu0 0.0
        %2954 = vmatpush.msra.mxu0 0.0
        %2955 = vmatpush.msra.mxu0 0.0
        %2956 = vmatpush.msra.mxu0 0.0
        %2957 = vmatpush.msra.mxu0 0.0
        %2958 = vmatpush.msra.mxu0 0.0
        %2959 = vmatpush.msra.mxu0 0.0
        %2960 = vmatpush.msra.mxu0 0.0
        %v2961 = vand.u32 %v2909, 4294901760
        %v2962 = vsub.f32 %v2909, %v2961
        %v2963 = vand.u32 %v2962, 4294901760
        %v2964 = vsub.f32 %v2962, %v2963
        %v2965 = vand.u32 %v2964, 4294901760
        %2966 = vmatpush.msra.mxu0 %v2965
        %v2967 = vand.u32 %v2907, 4294901760
        %v2968 = vsub.f32 %v2907, %v2967
        %v2969 = vand.u32 %v2968, 4294901760
        %v2970 = vsub.f32 %v2968, %v2969
        %v2971 = vand.u32 %v2970, 4294901760
        %2972 = vmatpush.msra.mxu0 %v2971
        %v2973 = vand.u32 %v2918, 4294901760
        %2974 = vmatmul.f32.gmra.mxu0 %v2973
        %v2975 = vpop.f32.mrf.mxu0
        %v2976 = vadd.f32 %v2945, %v2975
        %2977 = vdwg.mxu0
        %2978 = vmatpush.msra.mxu0 0.0
        %2979 = vmatpush.msra.mxu0 0.0
        %2980 = vmatpush.msra.mxu0 0.0
        %2981 = vmatpush.msra.mxu0 0.0
        %2982 = vmatpush.msra.mxu0 0.0
        %2983 = vmatpush.msra.mxu0 0.0
        %2984 = vmatpush.msra.mxu0 0.0
        %2985 = vmatpush.msra.mxu0 0.0
        %2986 = vmatpush.msra.mxu0 0.0
        %2987 = vmatpush.msra.mxu0 0.0
        %2988 = vmatpush.msra.mxu0 0.0
        %2989 = vmatpush.msra.mxu0 0.0
        %2990 = vmatpush.msra.mxu0 0.0
        %2991 = vmatpush.msra.mxu0 0.0
        %v2992 = vand.u32 %v2909, 4294901760
        %v2993 = vsub.f32 %v2909, %v2992
        %2994 = vmatpush.msra.mxu0 %v2993
        %v2995 = vand.u32 %v2907, 4294901760
        %v2996 = vsub.f32 %v2907, %v2995
        %2997 = vmatpush.msra.mxu0 %v2996
        %v2998 = vand.u32 %v2918, 4294901760
        %v2999 = vsub.f32 %v2918, %v2998
        %3000 = vmatmul.f32.gmra.mxu0 %v2999
        %v3001 = vpop.f32.mrf.mxu0
        %v3002 = vadd.f32 %v2976, %v3001
        %3003 = vdwg.mxu0
        %3004 = vmatpush.msra.mxu0 0.0
        %3005 = vmatpush.msra.mxu0 0.0
        %3006 = vmatpush.msra.mxu0 0.0
        %3007 = vmatpush.msra.mxu0 0.0
        %3008 = vmatpush.msra.mxu0 0.0
        %3009 = vmatpush.msra.mxu0 0.0
        %3010 = vmatpush.msra.mxu0 0.0
        %3011 = vmatpush.msra.mxu0 0.0
        %3012 = vmatpush.msra.mxu0 0.0
        %3013 = vmatpush.msra.mxu0 0.0
        %3014 = vmatpush.msra.mxu0 0.0
        %3015 = vmatpush.msra.mxu0 0.0
        %3016 = vmatpush.msra.mxu0 0.0
        %3017 = vmatpush.msra.mxu0 0.0
        %v3018 = vand.u32 %v2909, 4294901760
        %3019 = vmatpush.msra.mxu0 %v3018
        %v3020 = vand.u32 %v2907, 4294901760
        %3021 = vmatpush.msra.mxu0 %v3020
        %v3022 = vand.u32 %v2918, 4294901760
        %v3023 = vsub.f32 %v2918, %v3022
        %v3024 = vand.u32 %v3023, 4294901760
        %3025 = vmatmul.f32.gmra.mxu0 %v3024
        %v3026 = vpop.f32.mrf.mxu0
        %v3027 = vadd.f32 %v3002, %v3026
        %3028 = vdwg.mxu0
        %3029 = vmatpush.msra.mxu0 0.0
        %3030 = vmatpush.msra.mxu0 0.0
        %3031 = vmatpush.msra.mxu0 0.0
        %3032 = vmatpush.msra.mxu0 0.0
        %3033 = vmatpush.msra.mxu0 0.0
        %3034 = vmatpush.msra.mxu0 0.0
        %3035 = vmatpush.msra.mxu0 0.0
        %3036 = vmatpush.msra.mxu0 0.0
        %3037 = vmatpush.msra.mxu0 0.0
        %3038 = vmatpush.msra.mxu0 0.0
        %3039 = vmatpush.msra.mxu0 0.0
        %3040 = vmatpush.msra.mxu0 0.0
        %3041 = vmatpush.msra.mxu0 0.0
        %3042 = vmatpush.msra.mxu0 0.0
        %v3043 = vand.u32 %v2909, 4294901760
        %v3044 = vsub.f32 %v2909, %v3043
        %v3045 = vand.u32 %v3044, 4294901760
        %3046 = vmatpush.msra.mxu0 %v3045
        %v3047 = vand.u32 %v2907, 4294901760
        %v3048 = vsub.f32 %v2907, %v3047
        %v3049 = vand.u32 %v3048, 4294901760
        %3050 = vmatpush.msra.mxu0 %v3049
        %v3051 = vand.u32 %v2918, 4294901760
        %3052 = vmatmul.f32.gmra.mxu0 %v3051
        %v3053 = vpop.f32.mrf.mxu0
        %v3054 = vadd.f32 %v3027, %v3053
        %3055 = vdwg.mxu0
        %3056 = vmatpush.msra.mxu0 0.0
        %3057 = vmatpush.msra.mxu0 0.0
        %3058 = vmatpush.msra.mxu0 0.0
        %3059 = vmatpush.msra.mxu0 0.0
        %3060 = vmatpush.msra.mxu0 0.0
        %3061 = vmatpush.msra.mxu0 0.0
        %3062 = vmatpush.msra.mxu0 0.0
        %3063 = vmatpush.msra.mxu0 0.0
        %3064 = vmatpush.msra.mxu0 0.0
        %3065 = vmatpush.msra.mxu0 0.0
        %3066 = vmatpush.msra.mxu0 0.0
        %3067 = vmatpush.msra.mxu0 0.0
        %3068 = vmatpush.msra.mxu0 0.0
        %3069 = vmatpush.msra.mxu0 0.0
        %v3070 = vand.u32 %v2909, 4294901760
        %3071 = vmatpush.msra.mxu0 %v3070
        %v3072 = vand.u32 %v2907, 4294901760
        %3073 = vmatpush.msra.mxu0 %v3072
        %v3074 = vand.u32 %v2918, 4294901760
        %3075 = vmatmul.f32.gmra.mxu0 %v3074
        %v3076 = vpop.f32.mrf.mxu0
        %v3077 = vadd.f32 %v3054, %v3076
        %3078 = vdwg.mxu0
        %3079 = vmatpush.msra.mxu0 0.0
        %3080 = vmatpush.msra.mxu0 0.0
        %3081 = vmatpush.msra.mxu0 0.0
        %3082 = vmatpush.msra.mxu0 0.0
        %3083 = vmatpush.msra.mxu0 0.0
        %3084 = vmatpush.msra.mxu0 0.0
        %3085 = vmatpush.msra.mxu0 0.0
        %3086 = vmatpush.msra.mxu0 0.0
        %3087 = vmatpush.msra.mxu0 0.0
        %3088 = vmatpush.msra.mxu0 0.0
        %3089 = vmatpush.msra.mxu0 0.0
        %3090 = vmatpush.msra.mxu0 0.0
        %3091 = vmatpush.msra.mxu0 0.0
        %3092 = vmatpush.msra.mxu0 0.0
        %v3093 = vand.u32 %v2910, 4294901760
        %3094 = vmatpush.msra.mxu0 %v3093
        %v3095 = vand.u32 %v2908, 4294901760
        %3096 = vmatpush.msra.mxu0 %v3095
        %v3097 = vand.u32 %v2918, 4294901760
        %v3098 = vsub.f32 %v2918, %v3097
        %v3099 = vand.u32 %v3098, 4294901760
        %v3100 = vsub.f32 %v3098, %v3099
        %v3101 = vand.u32 %v3100, 4294901760
        %3102 = vmatmul.f32.gmra.mxu0 %v3101
        %v3103 = vpop.f32.mrf.mxu0
        %v3104 = vadd.f32 %v2914, %v3103
        %3105 = vdwg.mxu0
        %3106 = vmatpush.msra.mxu0 0.0
        %3107 = vmatpush.msra.mxu0 0.0
        %3108 = vmatpush.msra.mxu0 0.0
        %3109 = vmatpush.msra.mxu0 0.0
        %3110 = vmatpush.msra.mxu0 0.0
        %3111 = vmatpush.msra.mxu0 0.0
        %3112 = vmatpush.msra.mxu0 0.0
        %3113 = vmatpush.msra.mxu0 0.0
        %3114 = vmatpush.msra.mxu0 0.0
        %3115 = vmatpush.msra.mxu0 0.0
        %3116 = vmatpush.msra.mxu0 0.0
        %3117 = vmatpush.msra.mxu0 0.0
        %3118 = vmatpush.msra.mxu0 0.0
        %3119 = vmatpush.msra.mxu0 0.0
        %v3120 = vand.u32 %v2910, 4294901760
        %v3121 = vsub.f32 %v2910, %v3120
        %v3122 = vand.u32 %v3121, 4294901760
        %v3123 = vsub.f32 %v3121, %v3122
        %v3124 = vand.u32 %v3123, 4294901760
        %3125 = vmatpush.msra.mxu0 %v3124
        %v3126 = vand.u32 %v2908, 4294901760
        %v3127 = vsub.f32 %v2908, %v3126
        %v3128 = vand.u32 %v3127, 4294901760
        %v3129 = vsub.f32 %v3127, %v3128
        %v3130 = vand.u32 %v3129, 4294901760
        %3131 = vmatpush.msra.mxu0 %v3130
        %v3132 = vand.u32 %v2918, 4294901760
        %3133 = vmatmul.f32.gmra.mxu0 %v3132
        %v3134 = vpop.f32.mrf.mxu0
        %v3135 = vadd.f32 %v3104, %v3134
        %3136 = vdwg.mxu0
        %3137 = vmatpush.msra.mxu0 0.0
        %3138 = vmatpush.msra.mxu0 0.0
        %3139 = vmatpush.msra.mxu0 0.0
        %3140 = vmatpush.msra.mxu0 0.0
        %3141 = vmatpush.msra.mxu0 0.0
        %3142 = vmatpush.msra.mxu0 0.0
        %3143 = vmatpush.msra.mxu0 0.0
        %3144 = vmatpush.msra.mxu0 0.0
        %3145 = vmatpush.msra.mxu0 0.0
        %3146 = vmatpush.msra.mxu0 0.0
        %3147 = vmatpush.msra.mxu0 0.0
        %3148 = vmatpush.msra.mxu0 0.0
        %3149 = vmatpush.msra.mxu0 0.0
        %3150 = vmatpush.msra.mxu0 0.0
        %v3151 = vand.u32 %v2910, 4294901760
        %v3152 = vsub.f32 %v2910, %v3151
        %3153 = vmatpush.msra.mxu0 %v3152
        %v3154 = vand.u32 %v2908, 4294901760
        %v3155 = vsub.f32 %v2908, %v3154
        %3156 = vmatpush.msra.mxu0 %v3155
        %v3157 = vand.u32 %v2918, 4294901760
        %v3158 = vsub.f32 %v2918, %v3157
        %3159 = vmatmul.f32.gmra.mxu0 %v3158
        %v3160 = vpop.f32.mrf.mxu0
        %v3161 = vadd.f32 %v3135, %v3160
        %3162 = vdwg.mxu0
        %3163 = vmatpush.msra.mxu0 0.0
        %3164 = vmatpush.msra.mxu0 0.0
        %3165 = vmatpush.msra.mxu0 0.0
        %3166 = vmatpush.msra.mxu0 0.0
        %3167 = vmatpush.msra.mxu0 0.0
        %3168 = vmatpush.msra.mxu0 0.0
        %3169 = vmatpush.msra.mxu0 0.0
        %3170 = vmatpush.msra.mxu0 0.0
        %3171 = vmatpush.msra.mxu0 0.0
        %3172 = vmatpush.msra.mxu0 0.0
        %3173 = vmatpush.msra.mxu0 0.0
        %3174 = vmatpush.msra.mxu0 0.0
        %3175 = vmatpush.msra.mxu0 0.0
        %3176 = vmatpush.msra.mxu0 0.0
        %v3177 = vand.u32 %v2910, 4294901760
        %3178 = vmatpush.msra.mxu0 %v3177
        %v3179 = vand.u32 %v2908, 4294901760
        %3180 = vmatpush.msra.mxu0 %v3179
        %v3181 = vand.u32 %v2918, 4294901760
        %v3182 = vsub.f32 %v2918, %v3181
        %v3183 = vand.u32 %v3182, 4294901760
        %3184 = vmatmul.f32.gmra.mxu0 %v3183
        %v3185 = vpop.f32.mrf.mxu0
        %v3186 = vadd.f32 %v3161, %v3185
        %3187 = vdwg.mxu0
        %3188 = vmatpush.msra.mxu0 0.0
        %3189 = vmatpush.msra.mxu0 0.0
        %3190 = vmatpush.msra.mxu0 0.0
        %3191 = vmatpush.msra.mxu0 0.0
        %3192 = vmatpush.msra.mxu0 0.0
        %3193 = vmatpush.msra.mxu0 0.0
        %3194 = vmatpush.msra.mxu0 0.0
        %3195 = vmatpush.msra.mxu0 0.0
        %3196 = vmatpush.msra.mxu0 0.0
        %3197 = vmatpush.msra.mxu0 0.0
        %3198 = vmatpush.msra.mxu0 0.0
        %3199 = vmatpush.msra.mxu0 0.0
        %3200 = vmatpush.msra.mxu0 0.0
        %3201 = vmatpush.msra.mxu0 0.0
        %v3202 = vand.u32 %v2910, 4294901760
        %v3203 = vsub.f32 %v2910, %v3202
        %v3204 = vand.u32 %v3203, 4294901760
        %3205 = vmatpush.msra.mxu0 %v3204
        %v3206 = vand.u32 %v2908, 4294901760
        %v3207 = vsub.f32 %v2908, %v3206
        %v3208 = vand.u32 %v3207, 4294901760
        %3209 = vmatpush.msra.mxu0 %v3208
        %v3210 = vand.u32 %v2918, 4294901760
        %3211 = vmatmul.f32.gmra.mxu0 %v3210
        %v3212 = vpop.f32.mrf.mxu0
        %v3213 = vadd.f32 %v3186, %v3212
        %3214 = vdwg.mxu0
        %3215 = vmatpush.msra.mxu0 0.0
        %3216 = vmatpush.msra.mxu0 0.0
        %3217 = vmatpush.msra.mxu0 0.0
        %3218 = vmatpush.msra.mxu0 0.0
        %3219 = vmatpush.msra.mxu0 0.0
        %3220 = vmatpush.msra.mxu0 0.0
        %3221 = vmatpush.msra.mxu0 0.0
        %3222 = vmatpush.msra.mxu0 0.0
        %3223 = vmatpush.msra.mxu0 0.0
        %3224 = vmatpush.msra.mxu0 0.0
        %3225 = vmatpush.msra.mxu0 0.0
        %3226 = vmatpush.msra.mxu0 0.0
        %3227 = vmatpush.msra.mxu0 0.0
        %3228 = vmatpush.msra.mxu0 0.0
        %v3229 = vand.u32 %v2910, 4294901760
        %3230 = vmatpush.msra.mxu0 %v3229
        %v3231 = vand.u32 %v2908, 4294901760
        %3232 = vmatpush.msra.mxu0 %v3231
        %v3233 = vand.u32 %v2918, 4294901760
        %3234 = vmatmul.f32.gmra.mxu0 %v3233
        %v3235 = vpop.f32.mrf.mxu0
        %v3236 = vadd.f32 %v3213, %v3235
        %3237 = vdwg.mxu0
        %v3238 = vadd.f32 %v3077, %v308
        %v3239 = vadd.f32 %v3236, %v309
        %v3240 = vld [vmem:[%s1 + $0x28] sm:$0xf]
        %v3241 = vld [vmem:[%s6 + $0x38] sm:$0xf]
        %v3242 = vld [vmem:[%s2 + $0x10] sm:$0xff]
        %v3243 = vld [vmem:[%s6 + $0x40] sm:$0xff]
        %v3244 = vld [vmem:[%s1 + $0x30] sm:$0xff]
        %v3245 = vld [vmem:[%s1 + $0x38] sm:$0xff]
        %v3246 = vld [vmem:[%s6 + $0x48] sm:$0xff]
        %v3247 = vld [vmem:[%s1 + $0x40] sm:$0xf]
        %v3248 = vld [vmem:[%s6 + $0x50] sm:$0xf]
        %v3249 = vld [vmem:[%s2 + $0x18] sm:$0xff]
        %v3250 = vld [vmem:[%s6 + $0x58] sm:$0xff]
        %v3251 = vld [vmem:[%s5 + $0x8] sm:$0xff]
        %v3252 = vld [vmem:[%s6 + $0x60] sm:$0xff]
        %v3253 = vld [vmem:[%s1 + $0x48] sm:$0xff]
        %v3254 = vld [vmem:[%s6 + $0x68] sm:$0xff]
        %3256 = vset.pattern.permute.xlu0 0
        %3257 = vperm.xlu0 %3256, %v3241
        %v3258 = vpop.permute.xlu0 %3257
        %v3261 = vsel %vm330, %v3240, 0
        %3263 = vmatpush.msra.mxu0 0.0
        %3264 = vmatpush.msra.mxu0 0.0
        %3265 = vmatpush.msra.mxu0 0.0
        %3266 = vmatpush.msra.mxu0 0.0
        %3267 = vmatpush.msra.mxu0 0.0
        %3268 = vmatpush.msra.mxu0 0.0
        %3269 = vmatpush.msra.mxu0 0.0
        %3270 = vmatpush.msra.mxu0 0.0
        %3271 = vmatpush.msra.mxu0 0.0
        %3272 = vmatpush.msra.mxu0 0.0
        %3273 = vmatpush.msra.mxu0 0.0
        %3274 = vmatpush.msra.mxu0 0.0
        %3275 = vmatpush.msra.mxu0 0.0
        %3276 = vmatpush.msra.mxu0 0.0
        %3277 = vmatpush.msra.mxu0 0.0
        %v3278 = vand.u32 %v3238, 4294901760
        %3279 = vmatpush.msra.mxu0 %v3278
        %v3280 = vand.u32 %v3261, 4294901760
        %v3281 = vsub.f32 %v3261, %v3280
        %v3282 = vand.u32 %v3281, 4294901760
        %v3283 = vsub.f32 %v3281, %v3282
        %v3284 = vand.u32 %v3283, 4294901760
        %3285 = vmatmul.f32.gmra.mxu0 %v3284
        %v3286 = vpop.f32.mrf.mxu0
        %v3287 = vadd.f32 %v3258, %v3286
        %3288 = vdwg.mxu0
        %3289 = vmatpush.msra.mxu0 0.0
        %3290 = vmatpush.msra.mxu0 0.0
        %3291 = vmatpush.msra.mxu0 0.0
        %3292 = vmatpush.msra.mxu0 0.0
        %3293 = vmatpush.msra.mxu0 0.0
        %3294 = vmatpush.msra.mxu0 0.0
        %3295 = vmatpush.msra.mxu0 0.0
        %3296 = vmatpush.msra.mxu0 0.0
        %3297 = vmatpush.msra.mxu0 0.0
        %3298 = vmatpush.msra.mxu0 0.0
        %3299 = vmatpush.msra.mxu0 0.0
        %3300 = vmatpush.msra.mxu0 0.0
        %3301 = vmatpush.msra.mxu0 0.0
        %3302 = vmatpush.msra.mxu0 0.0
        %3303 = vmatpush.msra.mxu0 0.0
        %v3304 = vand.u32 %v3238, 4294901760
        %v3305 = vsub.f32 %v3238, %v3304
        %v3306 = vand.u32 %v3305, 4294901760
        %v3307 = vsub.f32 %v3305, %v3306
        %v3308 = vand.u32 %v3307, 4294901760
        %3309 = vmatpush.msra.mxu0 %v3308
        %v3310 = vand.u32 %v3261, 4294901760
        %3311 = vmatmul.f32.gmra.mxu0 %v3310
        %v3312 = vpop.f32.mrf.mxu0
        %v3313 = vadd.f32 %v3287, %v3312
        %3314 = vdwg.mxu0
        %3315 = vmatpush.msra.mxu0 0.0
        %3316 = vmatpush.msra.mxu0 0.0
        %3317 = vmatpush.msra.mxu0 0.0
        %3318 = vmatpush.msra.mxu0 0.0
        %3319 = vmatpush.msra.mxu0 0.0
        %3320 = vmatpush.msra.mxu0 0.0
        %3321 = vmatpush.msra.mxu0 0.0
        %3322 = vmatpush.msra.mxu0 0.0
        %3323 = vmatpush.msra.mxu0 0.0
        %3324 = vmatpush.msra.mxu0 0.0
        %3325 = vmatpush.msra.mxu0 0.0
        %3326 = vmatpush.msra.mxu0 0.0
        %3327 = vmatpush.msra.mxu0 0.0
        %3328 = vmatpush.msra.mxu0 0.0
        %3329 = vmatpush.msra.mxu0 0.0
        %v3330 = vand.u32 %v3238, 4294901760
        %v3331 = vsub.f32 %v3238, %v3330
        %3332 = vmatpush.msra.mxu0 %v3331
        %v3333 = vand.u32 %v3261, 4294901760
        %v3334 = vsub.f32 %v3261, %v3333
        %3335 = vmatmul.f32.gmra.mxu0 %v3334
        %v3336 = vpop.f32.mrf.mxu0
        %v3337 = vadd.f32 %v3313, %v3336
        %3338 = vdwg.mxu0
        %3339 = vmatpush.msra.mxu0 0.0
        %3340 = vmatpush.msra.mxu0 0.0
        %3341 = vmatpush.msra.mxu0 0.0
        %3342 = vmatpush.msra.mxu0 0.0
        %3343 = vmatpush.msra.mxu0 0.0
        %3344 = vmatpush.msra.mxu0 0.0
        %3345 = vmatpush.msra.mxu0 0.0
        %3346 = vmatpush.msra.mxu0 0.0
        %3347 = vmatpush.msra.mxu0 0.0
        %3348 = vmatpush.msra.mxu0 0.0
        %3349 = vmatpush.msra.mxu0 0.0
        %3350 = vmatpush.msra.mxu0 0.0
        %3351 = vmatpush.msra.mxu0 0.0
        %3352 = vmatpush.msra.mxu0 0.0
        %3353 = vmatpush.msra.mxu0 0.0
        %v3354 = vand.u32 %v3238, 4294901760
        %3355 = vmatpush.msra.mxu0 %v3354
        %v3356 = vand.u32 %v3261, 4294901760
        %v3357 = vsub.f32 %v3261, %v3356
        %v3358 = vand.u32 %v3357, 4294901760
        %3359 = vmatmul.f32.gmra.mxu0 %v3358
        %v3360 = vpop.f32.mrf.mxu0
        %v3361 = vadd.f32 %v3337, %v3360
        %3362 = vdwg.mxu0
        %3363 = vmatpush.msra.mxu0 0.0
        %3364 = vmatpush.msra.mxu0 0.0
        %3365 = vmatpush.msra.mxu0 0.0
        %3366 = vmatpush.msra.mxu0 0.0
        %3367 = vmatpush.msra.mxu0 0.0
        %3368 = vmatpush.msra.mxu0 0.0
        %3369 = vmatpush.msra.mxu0 0.0
        %3370 = vmatpush.msra.mxu0 0.0
        %3371 = vmatpush.msra.mxu0 0.0
        %3372 = vmatpush.msra.mxu0 0.0
        %3373 = vmatpush.msra.mxu0 0.0
        %3374 = vmatpush.msra.mxu0 0.0
        %3375 = vmatpush.msra.mxu0 0.0
        %3376 = vmatpush.msra.mxu0 0.0
        %3377 = vmatpush.msra.mxu0 0.0
        %v3378 = vand.u32 %v3238, 4294901760
        %v3379 = vsub.f32 %v3238, %v3378
        %v3380 = vand.u32 %v3379, 4294901760
        %3381 = vmatpush.msra.mxu0 %v3380
        %v3382 = vand.u32 %v3261, 4294901760
        %3383 = vmatmul.f32.gmra.mxu0 %v3382
        %v3384 = vpop.f32.mrf.mxu0
        %v3385 = vadd.f32 %v3361, %v3384
        %3386 = vdwg.mxu0
        %3387 = vmatpush.msra.mxu0 0.0
        %3388 = vmatpush.msra.mxu0 0.0
        %3389 = vmatpush.msra.mxu0 0.0
        %3390 = vmatpush.msra.mxu0 0.0
        %3391 = vmatpush.msra.mxu0 0.0
        %3392 = vmatpush.msra.mxu0 0.0
        %3393 = vmatpush.msra.mxu0 0.0
        %3394 = vmatpush.msra.mxu0 0.0
        %3395 = vmatpush.msra.mxu0 0.0
        %3396 = vmatpush.msra.mxu0 0.0
        %3397 = vmatpush.msra.mxu0 0.0
        %3398 = vmatpush.msra.mxu0 0.0
        %3399 = vmatpush.msra.mxu0 0.0
        %3400 = vmatpush.msra.mxu0 0.0
        %3401 = vmatpush.msra.mxu0 0.0
        %v3402 = vand.u32 %v3238, 4294901760
        %3403 = vmatpush.msra.mxu0 %v3402
        %v3404 = vand.u32 %v3261, 4294901760
        %3405 = vmatmul.f32.gmra.mxu0 %v3404
        %v3406 = vpop.f32.mrf.mxu0
        %v3407 = vadd.f32 %v3385, %v3406
        %3408 = vdwg.mxu0
        %3409 = vmatpush.msra.mxu0 0.0
        %3410 = vmatpush.msra.mxu0 0.0
        %3411 = vmatpush.msra.mxu0 0.0
        %3412 = vmatpush.msra.mxu0 0.0
        %3413 = vmatpush.msra.mxu0 0.0
        %3414 = vmatpush.msra.mxu0 0.0
        %3415 = vmatpush.msra.mxu0 0.0
        %3416 = vmatpush.msra.mxu0 0.0
        %3417 = vmatpush.msra.mxu0 0.0
        %3418 = vmatpush.msra.mxu0 0.0
        %3419 = vmatpush.msra.mxu0 0.0
        %3420 = vmatpush.msra.mxu0 0.0
        %3421 = vmatpush.msra.mxu0 0.0
        %3422 = vmatpush.msra.mxu0 0.0
        %3423 = vmatpush.msra.mxu0 0.0
        %v3424 = vand.u32 %v3239, 4294901760
        %3425 = vmatpush.msra.mxu0 %v3424
        %v3426 = vand.u32 %v3261, 4294901760
        %v3427 = vsub.f32 %v3261, %v3426
        %v3428 = vand.u32 %v3427, 4294901760
        %v3429 = vsub.f32 %v3427, %v3428
        %v3430 = vand.u32 %v3429, 4294901760
        %3431 = vmatmul.f32.gmra.mxu0 %v3430
        %v3432 = vpop.f32.mrf.mxu0
        %v3433 = vadd.f32 %v3258, %v3432
        %3434 = vdwg.mxu0
        %3435 = vmatpush.msra.mxu0 0.0
        %3436 = vmatpush.msra.mxu0 0.0
        %3437 = vmatpush.msra.mxu0 0.0
        %3438 = vmatpush.msra.mxu0 0.0
        %3439 = vmatpush.msra.mxu0 0.0
        %3440 = vmatpush.msra.mxu0 0.0
        %3441 = vmatpush.msra.mxu0 0.0
        %3442 = vmatpush.msra.mxu0 0.0
        %3443 = vmatpush.msra.mxu0 0.0
        %3444 = vmatpush.msra.mxu0 0.0
        %3445 = vmatpush.msra.mxu0 0.0
        %3446 = vmatpush.msra.mxu0 0.0
        %3447 = vmatpush.msra.mxu0 0.0
        %3448 = vmatpush.msra.mxu0 0.0
        %3449 = vmatpush.msra.mxu0 0.0
        %v3450 = vand.u32 %v3239, 4294901760
        %v3451 = vsub.f32 %v3239, %v3450
        %v3452 = vand.u32 %v3451, 4294901760
        %v3453 = vsub.f32 %v3451, %v3452
        %v3454 = vand.u32 %v3453, 4294901760
        %3455 = vmatpush.msra.mxu0 %v3454
        %v3456 = vand.u32 %v3261, 4294901760
        %3457 = vmatmul.f32.gmra.mxu0 %v3456
        %v3458 = vpop.f32.mrf.mxu0
        %v3459 = vadd.f32 %v3433, %v3458
        %3460 = vdwg.mxu0
        %3461 = vmatpush.msra.mxu0 0.0
        %3462 = vmatpush.msra.mxu0 0.0
        %3463 = vmatpush.msra.mxu0 0.0
        %3464 = vmatpush.msra.mxu0 0.0
        %3465 = vmatpush.msra.mxu0 0.0
        %3466 = vmatpush.msra.mxu0 0.0
        %3467 = vmatpush.msra.mxu0 0.0
        %3468 = vmatpush.msra.mxu0 0.0
        %3469 = vmatpush.msra.mxu0 0.0
        %3470 = vmatpush.msra.mxu0 0.0
        %3471 = vmatpush.msra.mxu0 0.0
        %3472 = vmatpush.msra.mxu0 0.0
        %3473 = vmatpush.msra.mxu0 0.0
        %3474 = vmatpush.msra.mxu0 0.0
        %3475 = vmatpush.msra.mxu0 0.0
        %v3476 = vand.u32 %v3239, 4294901760
        %v3477 = vsub.f32 %v3239, %v3476
        %3478 = vmatpush.msra.mxu0 %v3477
        %v3479 = vand.u32 %v3261, 4294901760
        %v3480 = vsub.f32 %v3261, %v3479
        %3481 = vmatmul.f32.gmra.mxu0 %v3480
        %v3482 = vpop.f32.mrf.mxu0
        %v3483 = vadd.f32 %v3459, %v3482
        %3484 = vdwg.mxu0
        %3485 = vmatpush.msra.mxu0 0.0
        %3486 = vmatpush.msra.mxu0 0.0
        %3487 = vmatpush.msra.mxu0 0.0
        %3488 = vmatpush.msra.mxu0 0.0
        %3489 = vmatpush.msra.mxu0 0.0
        %3490 = vmatpush.msra.mxu0 0.0
        %3491 = vmatpush.msra.mxu0 0.0
        %3492 = vmatpush.msra.mxu0 0.0
        %3493 = vmatpush.msra.mxu0 0.0
        %3494 = vmatpush.msra.mxu0 0.0
        %3495 = vmatpush.msra.mxu0 0.0
        %3496 = vmatpush.msra.mxu0 0.0
        %3497 = vmatpush.msra.mxu0 0.0
        %3498 = vmatpush.msra.mxu0 0.0
        %3499 = vmatpush.msra.mxu0 0.0
        %v3500 = vand.u32 %v3239, 4294901760
        %3501 = vmatpush.msra.mxu0 %v3500
        %v3502 = vand.u32 %v3261, 4294901760
        %v3503 = vsub.f32 %v3261, %v3502
        %v3504 = vand.u32 %v3503, 4294901760
        %3505 = vmatmul.f32.gmra.mxu0 %v3504
        %v3506 = vpop.f32.mrf.mxu0
        %v3507 = vadd.f32 %v3483, %v3506
        %3508 = vdwg.mxu0
        %3509 = vmatpush.msra.mxu0 0.0
        %3510 = vmatpush.msra.mxu0 0.0
        %3511 = vmatpush.msra.mxu0 0.0
        %3512 = vmatpush.msra.mxu0 0.0
        %3513 = vmatpush.msra.mxu0 0.0
        %3514 = vmatpush.msra.mxu0 0.0
        %3515 = vmatpush.msra.mxu0 0.0
        %3516 = vmatpush.msra.mxu0 0.0
        %3517 = vmatpush.msra.mxu0 0.0
        %3518 = vmatpush.msra.mxu0 0.0
        %3519 = vmatpush.msra.mxu0 0.0
        %3520 = vmatpush.msra.mxu0 0.0
        %3521 = vmatpush.msra.mxu0 0.0
        %3522 = vmatpush.msra.mxu0 0.0
        %3523 = vmatpush.msra.mxu0 0.0
        %v3524 = vand.u32 %v3239, 4294901760
        %v3525 = vsub.f32 %v3239, %v3524
        %v3526 = vand.u32 %v3525, 4294901760
        %3527 = vmatpush.msra.mxu0 %v3526
        %v3528 = vand.u32 %v3261, 4294901760
        %3529 = vmatmul.f32.gmra.mxu0 %v3528
        %v3530 = vpop.f32.mrf.mxu0
        %v3531 = vadd.f32 %v3507, %v3530
        %3532 = vdwg.mxu0
        %3533 = vmatpush.msra.mxu0 0.0
        %3534 = vmatpush.msra.mxu0 0.0
        %3535 = vmatpush.msra.mxu0 0.0
        %3536 = vmatpush.msra.mxu0 0.0
        %3537 = vmatpush.msra.mxu0 0.0
        %3538 = vmatpush.msra.mxu0 0.0
        %3539 = vmatpush.msra.mxu0 0.0
        %3540 = vmatpush.msra.mxu0 0.0
        %3541 = vmatpush.msra.mxu0 0.0
        %3542 = vmatpush.msra.mxu0 0.0
        %3543 = vmatpush.msra.mxu0 0.0
        %3544 = vmatpush.msra.mxu0 0.0
        %3545 = vmatpush.msra.mxu0 0.0
        %3546 = vmatpush.msra.mxu0 0.0
        %3547 = vmatpush.msra.mxu0 0.0
        %v3548 = vand.u32 %v3239, 4294901760
        %3549 = vmatpush.msra.mxu0 %v3548
        %v3550 = vand.u32 %v3261, 4294901760
        %3551 = vmatmul.f32.gmra.mxu0 %v3550
        %v3552 = vpop.f32.mrf.mxu0
        %v3553 = vadd.f32 %v3531, %v3552
        %3554 = vdwg.mxu0
        %vm3555 = vcmp.gt.f32.partialorder %v3407, 0.0
        %vm3556 = vcmp.gt.f32.partialorder %v3553, 0.0
        %v3557 = vmul.f32 %v3407, 0.01
        %v3558 = vmul.f32 %v3553, 0.01
        %v3559 = vsel %vm3555, %v3407, %v3557
        %v3560 = vsel %vm3556, %v3553, %v3558
        %3562 = vset.pattern.permute.xlu0 0
        %3563 = vperm.xlu0 %3562, %v3243
        %v3564 = vpop.permute.xlu0 %3563
        %v3567 = vsel %vm637, %v3242, 0
        %v3570 = vsel %vm641, %v3559, 0
        %v3573 = vsel %vm641, %v3560, 0
        %3575 = vmatpush.msra.mxu0 0.0
        %3576 = vmatpush.msra.mxu0 0.0
        %3577 = vmatpush.msra.mxu0 0.0
        %3578 = vmatpush.msra.mxu0 0.0
        %3579 = vmatpush.msra.mxu0 0.0
        %3580 = vmatpush.msra.mxu0 0.0
        %3581 = vmatpush.msra.mxu0 0.0
        %3582 = vmatpush.msra.mxu0 0.0
        %3583 = vmatpush.msra.mxu0 0.0
        %3584 = vmatpush.msra.mxu0 0.0
        %3585 = vmatpush.msra.mxu0 0.0
        %3586 = vmatpush.msra.mxu0 0.0
        %3587 = vmatpush.msra.mxu0 0.0
        %3588 = vmatpush.msra.mxu0 0.0
        %3589 = vmatpush.msra.mxu0 0.0
        %v3590 = vand.u32 %v3570, 4294901760
        %3591 = vmatpush.msra.mxu0 %v3590
        %v3592 = vand.u32 %v3567, 4294901760
        %v3593 = vsub.f32 %v3567, %v3592
        %v3594 = vand.u32 %v3593, 4294901760
        %v3595 = vsub.f32 %v3593, %v3594
        %v3596 = vand.u32 %v3595, 4294901760
        %3597 = vmatmul.f32.gmra.mxu0 %v3596
        %v3598 = vpop.f32.mrf.mxu0
        %v3599 = vadd.f32 %v3564, %v3598
        %3600 = vdwg.mxu0
        %3601 = vmatpush.msra.mxu0 0.0
        %3602 = vmatpush.msra.mxu0 0.0
        %3603 = vmatpush.msra.mxu0 0.0
        %3604 = vmatpush.msra.mxu0 0.0
        %3605 = vmatpush.msra.mxu0 0.0
        %3606 = vmatpush.msra.mxu0 0.0
        %3607 = vmatpush.msra.mxu0 0.0
        %3608 = vmatpush.msra.mxu0 0.0
        %3609 = vmatpush.msra.mxu0 0.0
        %3610 = vmatpush.msra.mxu0 0.0
        %3611 = vmatpush.msra.mxu0 0.0
        %3612 = vmatpush.msra.mxu0 0.0
        %3613 = vmatpush.msra.mxu0 0.0
        %3614 = vmatpush.msra.mxu0 0.0
        %3615 = vmatpush.msra.mxu0 0.0
        %v3616 = vand.u32 %v3570, 4294901760
        %v3617 = vsub.f32 %v3570, %v3616
        %v3618 = vand.u32 %v3617, 4294901760
        %v3619 = vsub.f32 %v3617, %v3618
        %v3620 = vand.u32 %v3619, 4294901760
        %3621 = vmatpush.msra.mxu0 %v3620
        %v3622 = vand.u32 %v3567, 4294901760
        %3623 = vmatmul.f32.gmra.mxu0 %v3622
        %v3624 = vpop.f32.mrf.mxu0
        %v3625 = vadd.f32 %v3599, %v3624
        %3626 = vdwg.mxu0
        %3627 = vmatpush.msra.mxu0 0.0
        %3628 = vmatpush.msra.mxu0 0.0
        %3629 = vmatpush.msra.mxu0 0.0
        %3630 = vmatpush.msra.mxu0 0.0
        %3631 = vmatpush.msra.mxu0 0.0
        %3632 = vmatpush.msra.mxu0 0.0
        %3633 = vmatpush.msra.mxu0 0.0
        %3634 = vmatpush.msra.mxu0 0.0
        %3635 = vmatpush.msra.mxu0 0.0
        %3636 = vmatpush.msra.mxu0 0.0
        %3637 = vmatpush.msra.mxu0 0.0
        %3638 = vmatpush.msra.mxu0 0.0
        %3639 = vmatpush.msra.mxu0 0.0
        %3640 = vmatpush.msra.mxu0 0.0
        %3641 = vmatpush.msra.mxu0 0.0
        %v3642 = vand.u32 %v3570, 4294901760
        %v3643 = vsub.f32 %v3570, %v3642
        %3644 = vmatpush.msra.mxu0 %v3643
        %v3645 = vand.u32 %v3567, 4294901760
        %v3646 = vsub.f32 %v3567, %v3645
        %3647 = vmatmul.f32.gmra.mxu0 %v3646
        %v3648 = vpop.f32.mrf.mxu0
        %v3649 = vadd.f32 %v3625, %v3648
        %3650 = vdwg.mxu0
        %3651 = vmatpush.msra.mxu0 0.0
        %3652 = vmatpush.msra.mxu0 0.0
        %3653 = vmatpush.msra.mxu0 0.0
        %3654 = vmatpush.msra.mxu0 0.0
        %3655 = vmatpush.msra.mxu0 0.0
        %3656 = vmatpush.msra.mxu0 0.0
        %3657 = vmatpush.msra.mxu0 0.0
        %3658 = vmatpush.msra.mxu0 0.0
        %3659 = vmatpush.msra.mxu0 0.0
        %3660 = vmatpush.msra.mxu0 0.0
        %3661 = vmatpush.msra.mxu0 0.0
        %3662 = vmatpush.msra.mxu0 0.0
        %3663 = vmatpush.msra.mxu0 0.0
        %3664 = vmatpush.msra.mxu0 0.0
        %3665 = vmatpush.msra.mxu0 0.0
        %v3666 = vand.u32 %v3570, 4294901760
        %3667 = vmatpush.msra.mxu0 %v3666
        %v3668 = vand.u32 %v3567, 4294901760
        %v3669 = vsub.f32 %v3567, %v3668
        %v3670 = vand.u32 %v3669, 4294901760
        %3671 = vmatmul.f32.gmra.mxu0 %v3670
        %v3672 = vpop.f32.mrf.mxu0
        %v3673 = vadd.f32 %v3649, %v3672
        %3674 = vdwg.mxu0
        %3675 = vmatpush.msra.mxu0 0.0
        %3676 = vmatpush.msra.mxu0 0.0
        %3677 = vmatpush.msra.mxu0 0.0
        %3678 = vmatpush.msra.mxu0 0.0
        %3679 = vmatpush.msra.mxu0 0.0
        %3680 = vmatpush.msra.mxu0 0.0
        %3681 = vmatpush.msra.mxu0 0.0
        %3682 = vmatpush.msra.mxu0 0.0
        %3683 = vmatpush.msra.mxu0 0.0
        %3684 = vmatpush.msra.mxu0 0.0
        %3685 = vmatpush.msra.mxu0 0.0
        %3686 = vmatpush.msra.mxu0 0.0
        %3687 = vmatpush.msra.mxu0 0.0
        %3688 = vmatpush.msra.mxu0 0.0
        %3689 = vmatpush.msra.mxu0 0.0
        %v3690 = vand.u32 %v3570, 4294901760
        %v3691 = vsub.f32 %v3570, %v3690
        %v3692 = vand.u32 %v3691, 4294901760
        %3693 = vmatpush.msra.mxu0 %v3692
        %v3694 = vand.u32 %v3567, 4294901760
        %3695 = vmatmul.f32.gmra.mxu0 %v3694
        %v3696 = vpop.f32.mrf.mxu0
        %v3697 = vadd.f32 %v3673, %v3696
        %3698 = vdwg.mxu0
        %3699 = vmatpush.msra.mxu0 0.0
        %3700 = vmatpush.msra.mxu0 0.0
        %3701 = vmatpush.msra.mxu0 0.0
        %3702 = vmatpush.msra.mxu0 0.0
        %3703 = vmatpush.msra.mxu0 0.0
        %3704 = vmatpush.msra.mxu0 0.0
        %3705 = vmatpush.msra.mxu0 0.0
        %3706 = vmatpush.msra.mxu0 0.0
        %3707 = vmatpush.msra.mxu0 0.0
        %3708 = vmatpush.msra.mxu0 0.0
        %3709 = vmatpush.msra.mxu0 0.0
        %3710 = vmatpush.msra.mxu0 0.0
        %3711 = vmatpush.msra.mxu0 0.0
        %3712 = vmatpush.msra.mxu0 0.0
        %3713 = vmatpush.msra.mxu0 0.0
        %v3714 = vand.u32 %v3570, 4294901760
        %3715 = vmatpush.msra.mxu0 %v3714
        %v3716 = vand.u32 %v3567, 4294901760
        %3717 = vmatmul.f32.gmra.mxu0 %v3716
        %v3718 = vpop.f32.mrf.mxu0
        %v3719 = vadd.f32 %v3697, %v3718
        %3720 = vdwg.mxu0
        %3721 = vmatpush.msra.mxu0 0.0
        %3722 = vmatpush.msra.mxu0 0.0
        %3723 = vmatpush.msra.mxu0 0.0
        %3724 = vmatpush.msra.mxu0 0.0
        %3725 = vmatpush.msra.mxu0 0.0
        %3726 = vmatpush.msra.mxu0 0.0
        %3727 = vmatpush.msra.mxu0 0.0
        %3728 = vmatpush.msra.mxu0 0.0
        %3729 = vmatpush.msra.mxu0 0.0
        %3730 = vmatpush.msra.mxu0 0.0
        %3731 = vmatpush.msra.mxu0 0.0
        %3732 = vmatpush.msra.mxu0 0.0
        %3733 = vmatpush.msra.mxu0 0.0
        %3734 = vmatpush.msra.mxu0 0.0
        %3735 = vmatpush.msra.mxu0 0.0
        %v3736 = vand.u32 %v3573, 4294901760
        %3737 = vmatpush.msra.mxu0 %v3736
        %v3738 = vand.u32 %v3567, 4294901760
        %v3739 = vsub.f32 %v3567, %v3738
        %v3740 = vand.u32 %v3739, 4294901760
        %v3741 = vsub.f32 %v3739, %v3740
        %v3742 = vand.u32 %v3741, 4294901760
        %3743 = vmatmul.f32.gmra.mxu0 %v3742
        %v3744 = vpop.f32.mrf.mxu0
        %v3745 = vadd.f32 %v3564, %v3744
        %3746 = vdwg.mxu0
        %3747 = vmatpush.msra.mxu0 0.0
        %3748 = vmatpush.msra.mxu0 0.0
        %3749 = vmatpush.msra.mxu0 0.0
        %3750 = vmatpush.msra.mxu0 0.0
        %3751 = vmatpush.msra.mxu0 0.0
        %3752 = vmatpush.msra.mxu0 0.0
        %3753 = vmatpush.msra.mxu0 0.0
        %3754 = vmatpush.msra.mxu0 0.0
        %3755 = vmatpush.msra.mxu0 0.0
        %3756 = vmatpush.msra.mxu0 0.0
        %3757 = vmatpush.msra.mxu0 0.0
        %3758 = vmatpush.msra.mxu0 0.0
        %3759 = vmatpush.msra.mxu0 0.0
        %3760 = vmatpush.msra.mxu0 0.0
        %3761 = vmatpush.msra.mxu0 0.0
        %v3762 = vand.u32 %v3573, 4294901760
        %v3763 = vsub.f32 %v3573, %v3762
        %v3764 = vand.u32 %v3763, 4294901760
        %v3765 = vsub.f32 %v3763, %v3764
        %v3766 = vand.u32 %v3765, 4294901760
        %3767 = vmatpush.msra.mxu0 %v3766
        %v3768 = vand.u32 %v3567, 4294901760
        %3769 = vmatmul.f32.gmra.mxu0 %v3768
        %v3770 = vpop.f32.mrf.mxu0
        %v3771 = vadd.f32 %v3745, %v3770
        %3772 = vdwg.mxu0
        %3773 = vmatpush.msra.mxu0 0.0
        %3774 = vmatpush.msra.mxu0 0.0
        %3775 = vmatpush.msra.mxu0 0.0
        %3776 = vmatpush.msra.mxu0 0.0
        %3777 = vmatpush.msra.mxu0 0.0
        %3778 = vmatpush.msra.mxu0 0.0
        %3779 = vmatpush.msra.mxu0 0.0
        %3780 = vmatpush.msra.mxu0 0.0
        %3781 = vmatpush.msra.mxu0 0.0
        %3782 = vmatpush.msra.mxu0 0.0
        %3783 = vmatpush.msra.mxu0 0.0
        %3784 = vmatpush.msra.mxu0 0.0
        %3785 = vmatpush.msra.mxu0 0.0
        %3786 = vmatpush.msra.mxu0 0.0
        %3787 = vmatpush.msra.mxu0 0.0
        %v3788 = vand.u32 %v3573, 4294901760
        %v3789 = vsub.f32 %v3573, %v3788
        %3790 = vmatpush.msra.mxu0 %v3789
        %v3791 = vand.u32 %v3567, 4294901760
        %v3792 = vsub.f32 %v3567, %v3791
        %3793 = vmatmul.f32.gmra.mxu0 %v3792
        %v3794 = vpop.f32.mrf.mxu0
        %v3795 = vadd.f32 %v3771, %v3794
        %3796 = vdwg.mxu0
        %3797 = vmatpush.msra.mxu0 0.0
        %3798 = vmatpush.msra.mxu0 0.0
        %3799 = vmatpush.msra.mxu0 0.0
        %3800 = vmatpush.msra.mxu0 0.0
        %3801 = vmatpush.msra.mxu0 0.0
        %3802 = vmatpush.msra.mxu0 0.0
        %3803 = vmatpush.msra.mxu0 0.0
        %3804 = vmatpush.msra.mxu0 0.0
        %3805 = vmatpush.msra.mxu0 0.0
        %3806 = vmatpush.msra.mxu0 0.0
        %3807 = vmatpush.msra.mxu0 0.0
        %3808 = vmatpush.msra.mxu0 0.0
        %3809 = vmatpush.msra.mxu0 0.0
        %3810 = vmatpush.msra.mxu0 0.0
        %3811 = vmatpush.msra.mxu0 0.0
        %v3812 = vand.u32 %v3573, 4294901760
        %3813 = vmatpush.msra.mxu0 %v3812
        %v3814 = vand.u32 %v3567, 4294901760
        %v3815 = vsub.f32 %v3567, %v3814
        %v3816 = vand.u32 %v3815, 4294901760
        %3817 = vmatmul.f32.gmra.mxu0 %v3816
        %v3818 = vpop.f32.mrf.mxu0
        %v3819 = vadd.f32 %v3795, %v3818
        %3820 = vdwg.mxu0
        %3821 = vmatpush.msra.mxu0 0.0
        %3822 = vmatpush.msra.mxu0 0.0
        %3823 = vmatpush.msra.mxu0 0.0
        %3824 = vmatpush.msra.mxu0 0.0
        %3825 = vmatpush.msra.mxu0 0.0
        %3826 = vmatpush.msra.mxu0 0.0
        %3827 = vmatpush.msra.mxu0 0.0
        %3828 = vmatpush.msra.mxu0 0.0
        %3829 = vmatpush.msra.mxu0 0.0
        %3830 = vmatpush.msra.mxu0 0.0
        %3831 = vmatpush.msra.mxu0 0.0
        %3832 = vmatpush.msra.mxu0 0.0
        %3833 = vmatpush.msra.mxu0 0.0
        %3834 = vmatpush.msra.mxu0 0.0
        %3835 = vmatpush.msra.mxu0 0.0
        %v3836 = vand.u32 %v3573, 4294901760
        %v3837 = vsub.f32 %v3573, %v3836
        %v3838 = vand.u32 %v3837, 4294901760
        %3839 = vmatpush.msra.mxu0 %v3838
        %v3840 = vand.u32 %v3567, 4294901760
        %3841 = vmatmul.f32.gmra.mxu0 %v3840
        %v3842 = vpop.f32.mrf.mxu0
        %v3843 = vadd.f32 %v3819, %v3842
        %3844 = vdwg.mxu0
        %3845 = vmatpush.msra.mxu0 0.0
        %3846 = vmatpush.msra.mxu0 0.0
        %3847 = vmatpush.msra.mxu0 0.0
        %3848 = vmatpush.msra.mxu0 0.0
        %3849 = vmatpush.msra.mxu0 0.0
        %3850 = vmatpush.msra.mxu0 0.0
        %3851 = vmatpush.msra.mxu0 0.0
        %3852 = vmatpush.msra.mxu0 0.0
        %3853 = vmatpush.msra.mxu0 0.0
        %3854 = vmatpush.msra.mxu0 0.0
        %3855 = vmatpush.msra.mxu0 0.0
        %3856 = vmatpush.msra.mxu0 0.0
        %3857 = vmatpush.msra.mxu0 0.0
        %3858 = vmatpush.msra.mxu0 0.0
        %3859 = vmatpush.msra.mxu0 0.0
        %v3860 = vand.u32 %v3573, 4294901760
        %3861 = vmatpush.msra.mxu0 %v3860
        %v3862 = vand.u32 %v3567, 4294901760
        %3863 = vmatmul.f32.gmra.mxu0 %v3862
        %v3864 = vpop.f32.mrf.mxu0
        %v3865 = vadd.f32 %v3843, %v3864
        %3866 = vdwg.mxu0
        %v3868 = vsel %vm330, %v3245, 0
        %3870 = vmatpush.msra.mxu0 0.0
        %3871 = vmatpush.msra.mxu0 0.0
        %3872 = vmatpush.msra.mxu0 0.0
        %3873 = vmatpush.msra.mxu0 0.0
        %3874 = vmatpush.msra.mxu0 0.0
        %3875 = vmatpush.msra.mxu0 0.0
        %3876 = vmatpush.msra.mxu0 0.0
        %3877 = vmatpush.msra.mxu0 0.0
        %3878 = vmatpush.msra.mxu0 0.0
        %3879 = vmatpush.msra.mxu0 0.0
        %3880 = vmatpush.msra.mxu0 0.0
        %3881 = vmatpush.msra.mxu0 0.0
        %3882 = vmatpush.msra.mxu0 0.0
        %3883 = vmatpush.msra.mxu0 0.0
        %3884 = vmatpush.msra.mxu0 0.0
        %v3885 = vand.u32 %v3238, 4294901760
        %3886 = vmatpush.msra.mxu0 %v3885
        %v3887 = vand.u32 %v3868, 4294901760
        %v3888 = vsub.f32 %v3868, %v3887
        %v3889 = vand.u32 %v3888, 4294901760
        %v3890 = vsub.f32 %v3888, %v3889
        %v3891 = vand.u32 %v3890, 4294901760
        %3892 = vmatmul.f32.gmra.mxu0 %v3891
        %v3893 = vpop.f32.mrf.mxu0
        %v3894 = vadd.f32 0.0, %v3893
        %3895 = vdwg.mxu0
        %3896 = vmatpush.msra.mxu0 0.0
        %3897 = vmatpush.msra.mxu0 0.0
        %3898 = vmatpush.msra.mxu0 0.0
        %3899 = vmatpush.msra.mxu0 0.0
        %3900 = vmatpush.msra.mxu0 0.0
        %3901 = vmatpush.msra.mxu0 0.0
        %3902 = vmatpush.msra.mxu0 0.0
        %3903 = vmatpush.msra.mxu0 0.0
        %3904 = vmatpush.msra.mxu0 0.0
        %3905 = vmatpush.msra.mxu0 0.0
        %3906 = vmatpush.msra.mxu0 0.0
        %3907 = vmatpush.msra.mxu0 0.0
        %3908 = vmatpush.msra.mxu0 0.0
        %3909 = vmatpush.msra.mxu0 0.0
        %3910 = vmatpush.msra.mxu0 0.0
        %v3911 = vand.u32 %v3238, 4294901760
        %v3912 = vsub.f32 %v3238, %v3911
        %v3913 = vand.u32 %v3912, 4294901760
        %v3914 = vsub.f32 %v3912, %v3913
        %v3915 = vand.u32 %v3914, 4294901760
        %3916 = vmatpush.msra.mxu0 %v3915
        %v3917 = vand.u32 %v3868, 4294901760
        %3918 = vmatmul.f32.gmra.mxu0 %v3917
        %v3919 = vpop.f32.mrf.mxu0
        %v3920 = vadd.f32 %v3894, %v3919
        %3921 = vdwg.mxu0
        %3922 = vmatpush.msra.mxu0 0.0
        %3923 = vmatpush.msra.mxu0 0.0
        %3924 = vmatpush.msra.mxu0 0.0
        %3925 = vmatpush.msra.mxu0 0.0
        %3926 = vmatpush.msra.mxu0 0.0
        %3927 = vmatpush.msra.mxu0 0.0
        %3928 = vmatpush.msra.mxu0 0.0
        %3929 = vmatpush.msra.mxu0 0.0
        %3930 = vmatpush.msra.mxu0 0.0
        %3931 = vmatpush.msra.mxu0 0.0
        %3932 = vmatpush.msra.mxu0 0.0
        %3933 = vmatpush.msra.mxu0 0.0
        %3934 = vmatpush.msra.mxu0 0.0
        %3935 = vmatpush.msra.mxu0 0.0
        %3936 = vmatpush.msra.mxu0 0.0
        %v3937 = vand.u32 %v3238, 4294901760
        %v3938 = vsub.f32 %v3238, %v3937
        %3939 = vmatpush.msra.mxu0 %v3938
        %v3940 = vand.u32 %v3868, 4294901760
        %v3941 = vsub.f32 %v3868, %v3940
        %3942 = vmatmul.f32.gmra.mxu0 %v3941
        %v3943 = vpop.f32.mrf.mxu0
        %v3944 = vadd.f32 %v3920, %v3943
        %3945 = vdwg.mxu0
        %3946 = vmatpush.msra.mxu0 0.0
        %3947 = vmatpush.msra.mxu0 0.0
        %3948 = vmatpush.msra.mxu0 0.0
        %3949 = vmatpush.msra.mxu0 0.0
        %3950 = vmatpush.msra.mxu0 0.0
        %3951 = vmatpush.msra.mxu0 0.0
        %3952 = vmatpush.msra.mxu0 0.0
        %3953 = vmatpush.msra.mxu0 0.0
        %3954 = vmatpush.msra.mxu0 0.0
        %3955 = vmatpush.msra.mxu0 0.0
        %3956 = vmatpush.msra.mxu0 0.0
        %3957 = vmatpush.msra.mxu0 0.0
        %3958 = vmatpush.msra.mxu0 0.0
        %3959 = vmatpush.msra.mxu0 0.0
        %3960 = vmatpush.msra.mxu0 0.0
        %v3961 = vand.u32 %v3238, 4294901760
        %3962 = vmatpush.msra.mxu0 %v3961
        %v3963 = vand.u32 %v3868, 4294901760
        %v3964 = vsub.f32 %v3868, %v3963
        %v3965 = vand.u32 %v3964, 4294901760
        %3966 = vmatmul.f32.gmra.mxu0 %v3965
        %v3967 = vpop.f32.mrf.mxu0
        %v3968 = vadd.f32 %v3944, %v3967
        %3969 = vdwg.mxu0
        %3970 = vmatpush.msra.mxu0 0.0
        %3971 = vmatpush.msra.mxu0 0.0
        %3972 = vmatpush.msra.mxu0 0.0
        %3973 = vmatpush.msra.mxu0 0.0
        %3974 = vmatpush.msra.mxu0 0.0
        %3975 = vmatpush.msra.mxu0 0.0
        %3976 = vmatpush.msra.mxu0 0.0
        %3977 = vmatpush.msra.mxu0 0.0
        %3978 = vmatpush.msra.mxu0 0.0
        %3979 = vmatpush.msra.mxu0 0.0
        %3980 = vmatpush.msra.mxu0 0.0
        %3981 = vmatpush.msra.mxu0 0.0
        %3982 = vmatpush.msra.mxu0 0.0
        %3983 = vmatpush.msra.mxu0 0.0
        %3984 = vmatpush.msra.mxu0 0.0
        %v3985 = vand.u32 %v3238, 4294901760
        %v3986 = vsub.f32 %v3238, %v3985
        %v3987 = vand.u32 %v3986, 4294901760
        %3988 = vmatpush.msra.mxu0 %v3987
        %v3989 = vand.u32 %v3868, 4294901760
        %3990 = vmatmul.f32.gmra.mxu0 %v3989
        %v3991 = vpop.f32.mrf.mxu0
        %v3992 = vadd.f32 %v3968, %v3991
        %3993 = vdwg.mxu0
        %3994 = vmatpush.msra.mxu0 0.0
        %3995 = vmatpush.msra.mxu0 0.0
        %3996 = vmatpush.msra.mxu0 0.0
        %3997 = vmatpush.msra.mxu0 0.0
        %3998 = vmatpush.msra.mxu0 0.0
        %3999 = vmatpush.msra.mxu0 0.0
        %4000 = vmatpush.msra.mxu0 0.0
        %4001 = vmatpush.msra.mxu0 0.0
        %4002 = vmatpush.msra.mxu0 0.0
        %4003 = vmatpush.msra.mxu0 0.0
        %4004 = vmatpush.msra.mxu0 0.0
        %4005 = vmatpush.msra.mxu0 0.0
        %4006 = vmatpush.msra.mxu0 0.0
        %4007 = vmatpush.msra.mxu0 0.0
        %4008 = vmatpush.msra.mxu0 0.0
        %v4009 = vand.u32 %v3238, 4294901760
        %4010 = vmatpush.msra.mxu0 %v4009
        %v4011 = vand.u32 %v3868, 4294901760
        %4012 = vmatmul.f32.gmra.mxu0 %v4011
        %v4013 = vpop.f32.mrf.mxu0
        %v4014 = vadd.f32 %v3992, %v4013
        %4015 = vdwg.mxu0
        %4016 = vmatpush.msra.mxu0 0.0
        %4017 = vmatpush.msra.mxu0 0.0
        %4018 = vmatpush.msra.mxu0 0.0
        %4019 = vmatpush.msra.mxu0 0.0
        %4020 = vmatpush.msra.mxu0 0.0
        %4021 = vmatpush.msra.mxu0 0.0
        %4022 = vmatpush.msra.mxu0 0.0
        %4023 = vmatpush.msra.mxu0 0.0
        %4024 = vmatpush.msra.mxu0 0.0
        %4025 = vmatpush.msra.mxu0 0.0
        %4026 = vmatpush.msra.mxu0 0.0
        %4027 = vmatpush.msra.mxu0 0.0
        %4028 = vmatpush.msra.mxu0 0.0
        %4029 = vmatpush.msra.mxu0 0.0
        %4030 = vmatpush.msra.mxu0 0.0
        %v4031 = vand.u32 %v3239, 4294901760
        %4032 = vmatpush.msra.mxu0 %v4031
        %v4033 = vand.u32 %v3868, 4294901760
        %v4034 = vsub.f32 %v3868, %v4033
        %v4035 = vand.u32 %v4034, 4294901760
        %v4036 = vsub.f32 %v4034, %v4035
        %v4037 = vand.u32 %v4036, 4294901760
        %4038 = vmatmul.f32.gmra.mxu0 %v4037
        %v4039 = vpop.f32.mrf.mxu0
        %v4040 = vadd.f32 0.0, %v4039
        %4041 = vdwg.mxu0
        %4042 = vmatpush.msra.mxu0 0.0
        %4043 = vmatpush.msra.mxu0 0.0
        %4044 = vmatpush.msra.mxu0 0.0
        %4045 = vmatpush.msra.mxu0 0.0
        %4046 = vmatpush.msra.mxu0 0.0
        %4047 = vmatpush.msra.mxu0 0.0
        %4048 = vmatpush.msra.mxu0 0.0
        %4049 = vmatpush.msra.mxu0 0.0
        %4050 = vmatpush.msra.mxu0 0.0
        %4051 = vmatpush.msra.mxu0 0.0
        %4052 = vmatpush.msra.mxu0 0.0
        %4053 = vmatpush.msra.mxu0 0.0
        %4054 = vmatpush.msra.mxu0 0.0
        %4055 = vmatpush.msra.mxu0 0.0
        %4056 = vmatpush.msra.mxu0 0.0
        %v4057 = vand.u32 %v3239, 4294901760
        %v4058 = vsub.f32 %v3239, %v4057
        %v4059 = vand.u32 %v4058, 4294901760
        %v4060 = vsub.f32 %v4058, %v4059
        %v4061 = vand.u32 %v4060, 4294901760
        %4062 = vmatpush.msra.mxu0 %v4061
        %v4063 = vand.u32 %v3868, 4294901760
        %4064 = vmatmul.f32.gmra.mxu0 %v4063
        %v4065 = vpop.f32.mrf.mxu0
        %v4066 = vadd.f32 %v4040, %v4065
        %4067 = vdwg.mxu0
        %4068 = vmatpush.msra.mxu0 0.0
        %4069 = vmatpush.msra.mxu0 0.0
        %4070 = vmatpush.msra.mxu0 0.0
        %4071 = vmatpush.msra.mxu0 0.0
        %4072 = vmatpush.msra.mxu0 0.0
        %4073 = vmatpush.msra.mxu0 0.0
        %4074 = vmatpush.msra.mxu0 0.0
        %4075 = vmatpush.msra.mxu0 0.0
        %4076 = vmatpush.msra.mxu0 0.0
        %4077 = vmatpush.msra.mxu0 0.0
        %4078 = vmatpush.msra.mxu0 0.0
        %4079 = vmatpush.msra.mxu0 0.0
        %4080 = vmatpush.msra.mxu0 0.0
        %4081 = vmatpush.msra.mxu0 0.0
        %4082 = vmatpush.msra.mxu0 0.0
        %v4083 = vand.u32 %v3239, 4294901760
        %v4084 = vsub.f32 %v3239, %v4083
        %4085 = vmatpush.msra.mxu0 %v4084
        %v4086 = vand.u32 %v3868, 4294901760
        %v4087 = vsub.f32 %v3868, %v4086
        %4088 = vmatmul.f32.gmra.mxu0 %v4087
        %v4089 = vpop.f32.mrf.mxu0
        %v4090 = vadd.f32 %v4066, %v4089
        %4091 = vdwg.mxu0
        %4092 = vmatpush.msra.mxu0 0.0
        %4093 = vmatpush.msra.mxu0 0.0
        %4094 = vmatpush.msra.mxu0 0.0
        %4095 = vmatpush.msra.mxu0 0.0
        %4096 = vmatpush.msra.mxu0 0.0
        %4097 = vmatpush.msra.mxu0 0.0
        %4098 = vmatpush.msra.mxu0 0.0
        %4099 = vmatpush.msra.mxu0 0.0
        %4100 = vmatpush.msra.mxu0 0.0
        %4101 = vmatpush.msra.mxu0 0.0
        %4102 = vmatpush.msra.mxu0 0.0
        %4103 = vmatpush.msra.mxu0 0.0
        %4104 = vmatpush.msra.mxu0 0.0
        %4105 = vmatpush.msra.mxu0 0.0
        %4106 = vmatpush.msra.mxu0 0.0
        %v4107 = vand.u32 %v3239, 4294901760
        %4108 = vmatpush.msra.mxu0 %v4107
        %v4109 = vand.u32 %v3868, 4294901760
        %v4110 = vsub.f32 %v3868, %v4109
        %v4111 = vand.u32 %v4110, 4294901760
        %4112 = vmatmul.f32.gmra.mxu0 %v4111
        %v4113 = vpop.f32.mrf.mxu0
        %v4114 = vadd.f32 %v4090, %v4113
        %4115 = vdwg.mxu0
        %4116 = vmatpush.msra.mxu0 0.0
        %4117 = vmatpush.msra.mxu0 0.0
        %4118 = vmatpush.msra.mxu0 0.0
        %4119 = vmatpush.msra.mxu0 0.0
        %4120 = vmatpush.msra.mxu0 0.0
        %4121 = vmatpush.msra.mxu0 0.0
        %4122 = vmatpush.msra.mxu0 0.0
        %4123 = vmatpush.msra.mxu0 0.0
        %4124 = vmatpush.msra.mxu0 0.0
        %4125 = vmatpush.msra.mxu0 0.0
        %4126 = vmatpush.msra.mxu0 0.0
        %4127 = vmatpush.msra.mxu0 0.0
        %4128 = vmatpush.msra.mxu0 0.0
        %4129 = vmatpush.msra.mxu0 0.0
        %4130 = vmatpush.msra.mxu0 0.0
        %v4131 = vand.u32 %v3239, 4294901760
        %v4132 = vsub.f32 %v3239, %v4131
        %v4133 = vand.u32 %v4132, 4294901760
        %4134 = vmatpush.msra.mxu0 %v4133
        %v4135 = vand.u32 %v3868, 4294901760
        %4136 = vmatmul.f32.gmra.mxu0 %v4135
        %v4137 = vpop.f32.mrf.mxu0
        %v4138 = vadd.f32 %v4114, %v4137
        %4139 = vdwg.mxu0
        %4140 = vmatpush.msra.mxu0 0.0
        %4141 = vmatpush.msra.mxu0 0.0
        %4142 = vmatpush.msra.mxu0 0.0
        %4143 = vmatpush.msra.mxu0 0.0
        %4144 = vmatpush.msra.mxu0 0.0
        %4145 = vmatpush.msra.mxu0 0.0
        %4146 = vmatpush.msra.mxu0 0.0
        %4147 = vmatpush.msra.mxu0 0.0
        %4148 = vmatpush.msra.mxu0 0.0
        %4149 = vmatpush.msra.mxu0 0.0
        %4150 = vmatpush.msra.mxu0 0.0
        %4151 = vmatpush.msra.mxu0 0.0
        %4152 = vmatpush.msra.mxu0 0.0
        %4153 = vmatpush.msra.mxu0 0.0
        %4154 = vmatpush.msra.mxu0 0.0
        %v4155 = vand.u32 %v3239, 4294901760
        %4156 = vmatpush.msra.mxu0 %v4155
        %v4157 = vand.u32 %v3868, 4294901760
        %4158 = vmatmul.f32.gmra.mxu0 %v4157
        %v4159 = vpop.f32.mrf.mxu0
        %v4160 = vadd.f32 %v4138, %v4159
        %4161 = vdwg.mxu0
        %v4163 = vsel %vm330, %v3244, 0
        %4165 = vmatpush.msra.mxu0 0.0
        %4166 = vmatpush.msra.mxu0 0.0
        %4167 = vmatpush.msra.mxu0 0.0
        %4168 = vmatpush.msra.mxu0 0.0
        %4169 = vmatpush.msra.mxu0 0.0
        %4170 = vmatpush.msra.mxu0 0.0
        %4171 = vmatpush.msra.mxu0 0.0
        %4172 = vmatpush.msra.mxu0 0.0
        %4173 = vmatpush.msra.mxu0 0.0
        %4174 = vmatpush.msra.mxu0 0.0
        %4175 = vmatpush.msra.mxu0 0.0
        %4176 = vmatpush.msra.mxu0 0.0
        %4177 = vmatpush.msra.mxu0 0.0
        %4178 = vmatpush.msra.mxu0 0.0
        %4179 = vmatpush.msra.mxu0 0.0
        %v4180 = vand.u32 %v3719, 4294901760
        %4181 = vmatpush.msra.mxu0 %v4180
        %v4182 = vand.u32 %v4163, 4294901760
        %v4183 = vsub.f32 %v4163, %v4182
        %v4184 = vand.u32 %v4183, 4294901760
        %v4185 = vsub.f32 %v4183, %v4184
        %v4186 = vand.u32 %v4185, 4294901760
        %4187 = vmatmul.f32.gmra.mxu0 %v4186
        %v4188 = vpop.f32.mrf.mxu0
        %v4189 = vadd.f32 %v4014, %v4188
        %4190 = vdwg.mxu0
        %4191 = vmatpush.msra.mxu0 0.0
        %4192 = vmatpush.msra.mxu0 0.0
        %4193 = vmatpush.msra.mxu0 0.0
        %4194 = vmatpush.msra.mxu0 0.0
        %4195 = vmatpush.msra.mxu0 0.0
        %4196 = vmatpush.msra.mxu0 0.0
        %4197 = vmatpush.msra.mxu0 0.0
        %4198 = vmatpush.msra.mxu0 0.0
        %4199 = vmatpush.msra.mxu0 0.0
        %4200 = vmatpush.msra.mxu0 0.0
        %4201 = vmatpush.msra.mxu0 0.0
        %4202 = vmatpush.msra.mxu0 0.0
        %4203 = vmatpush.msra.mxu0 0.0
        %4204 = vmatpush.msra.mxu0 0.0
        %4205 = vmatpush.msra.mxu0 0.0
        %v4206 = vand.u32 %v3719, 4294901760
        %v4207 = vsub.f32 %v3719, %v4206
        %v4208 = vand.u32 %v4207, 4294901760
        %v4209 = vsub.f32 %v4207, %v4208
        %v4210 = vand.u32 %v4209, 4294901760
        %4211 = vmatpush.msra.mxu0 %v4210
        %v4212 = vand.u32 %v4163, 4294901760
        %4213 = vmatmul.f32.gmra.mxu0 %v4212
        %v4214 = vpop.f32.mrf.mxu0
        %v4215 = vadd.f32 %v4189, %v4214
        %4216 = vdwg.mxu0
        %4217 = vmatpush.msra.mxu0 0.0
        %4218 = vmatpush.msra.mxu0 0.0
        %4219 = vmatpush.msra.mxu0 0.0
        %4220 = vmatpush.msra.mxu0 0.0
        %4221 = vmatpush.msra.mxu0 0.0
        %4222 = vmatpush.msra.mxu0 0.0
        %4223 = vmatpush.msra.mxu0 0.0
        %4224 = vmatpush.msra.mxu0 0.0
        %4225 = vmatpush.msra.mxu0 0.0
        %4226 = vmatpush.msra.mxu0 0.0
        %4227 = vmatpush.msra.mxu0 0.0
        %4228 = vmatpush.msra.mxu0 0.0
        %4229 = vmatpush.msra.mxu0 0.0
        %4230 = vmatpush.msra.mxu0 0.0
        %4231 = vmatpush.msra.mxu0 0.0
        %v4232 = vand.u32 %v3719, 4294901760
        %v4233 = vsub.f32 %v3719, %v4232
        %4234 = vmatpush.msra.mxu0 %v4233
        %v4235 = vand.u32 %v4163, 4294901760
        %v4236 = vsub.f32 %v4163, %v4235
        %4237 = vmatmul.f32.gmra.mxu0 %v4236
        %v4238 = vpop.f32.mrf.mxu0
        %v4239 = vadd.f32 %v4215, %v4238
        %4240 = vdwg.mxu0
        %4241 = vmatpush.msra.mxu0 0.0
        %4242 = vmatpush.msra.mxu0 0.0
        %4243 = vmatpush.msra.mxu0 0.0
        %4244 = vmatpush.msra.mxu0 0.0
        %4245 = vmatpush.msra.mxu0 0.0
        %4246 = vmatpush.msra.mxu0 0.0
        %4247 = vmatpush.msra.mxu0 0.0
        %4248 = vmatpush.msra.mxu0 0.0
        %4249 = vmatpush.msra.mxu0 0.0
        %4250 = vmatpush.msra.mxu0 0.0
        %4251 = vmatpush.msra.mxu0 0.0
        %4252 = vmatpush.msra.mxu0 0.0
        %4253 = vmatpush.msra.mxu0 0.0
        %4254 = vmatpush.msra.mxu0 0.0
        %4255 = vmatpush.msra.mxu0 0.0
        %v4256 = vand.u32 %v3719, 4294901760
        %4257 = vmatpush.msra.mxu0 %v4256
        %v4258 = vand.u32 %v4163, 4294901760
        %v4259 = vsub.f32 %v4163, %v4258
        %v4260 = vand.u32 %v4259, 4294901760
        %4261 = vmatmul.f32.gmra.mxu0 %v4260
        %v4262 = vpop.f32.mrf.mxu0
        %v4263 = vadd.f32 %v4239, %v4262
        %4264 = vdwg.mxu0
        %4265 = vmatpush.msra.mxu0 0.0
        %4266 = vmatpush.msra.mxu0 0.0
        %4267 = vmatpush.msra.mxu0 0.0
        %4268 = vmatpush.msra.mxu0 0.0
        %4269 = vmatpush.msra.mxu0 0.0
        %4270 = vmatpush.msra.mxu0 0.0
        %4271 = vmatpush.msra.mxu0 0.0
        %4272 = vmatpush.msra.mxu0 0.0
        %4273 = vmatpush.msra.mxu0 0.0
        %4274 = vmatpush.msra.mxu0 0.0
        %4275 = vmatpush.msra.mxu0 0.0
        %4276 = vmatpush.msra.mxu0 0.0
        %4277 = vmatpush.msra.mxu0 0.0
        %4278 = vmatpush.msra.mxu0 0.0
        %4279 = vmatpush.msra.mxu0 0.0
        %v4280 = vand.u32 %v3719, 4294901760
        %v4281 = vsub.f32 %v3719, %v4280
        %v4282 = vand.u32 %v4281, 4294901760
        %4283 = vmatpush.msra.mxu0 %v4282
        %v4284 = vand.u32 %v4163, 4294901760
        %4285 = vmatmul.f32.gmra.mxu0 %v4284
        %v4286 = vpop.f32.mrf.mxu0
        %v4287 = vadd.f32 %v4263, %v4286
        %4288 = vdwg.mxu0
        %4289 = vmatpush.msra.mxu0 0.0
        %4290 = vmatpush.msra.mxu0 0.0
        %4291 = vmatpush.msra.mxu0 0.0
        %4292 = vmatpush.msra.mxu0 0.0
        %4293 = vmatpush.msra.mxu0 0.0
        %4294 = vmatpush.msra.mxu0 0.0
        %4295 = vmatpush.msra.mxu0 0.0
        %4296 = vmatpush.msra.mxu0 0.0
        %4297 = vmatpush.msra.mxu0 0.0
        %4298 = vmatpush.msra.mxu0 0.0
        %4299 = vmatpush.msra.mxu0 0.0
        %4300 = vmatpush.msra.mxu0 0.0
        %4301 = vmatpush.msra.mxu0 0.0
        %4302 = vmatpush.msra.mxu0 0.0
        %4303 = vmatpush.msra.mxu0 0.0
        %v4304 = vand.u32 %v3719, 4294901760
        %4305 = vmatpush.msra.mxu0 %v4304
        %v4306 = vand.u32 %v4163, 4294901760
        %4307 = vmatmul.f32.gmra.mxu0 %v4306
        %v4308 = vpop.f32.mrf.mxu0
        %v4309 = vadd.f32 %v4287, %v4308
        %4310 = vdwg.mxu0
        %4311 = vmatpush.msra.mxu0 0.0
        %4312 = vmatpush.msra.mxu0 0.0
        %4313 = vmatpush.msra.mxu0 0.0
        %4314 = vmatpush.msra.mxu0 0.0
        %4315 = vmatpush.msra.mxu0 0.0
        %4316 = vmatpush.msra.mxu0 0.0
        %4317 = vmatpush.msra.mxu0 0.0
        %4318 = vmatpush.msra.mxu0 0.0
        %4319 = vmatpush.msra.mxu0 0.0
        %4320 = vmatpush.msra.mxu0 0.0
        %4321 = vmatpush.msra.mxu0 0.0
        %4322 = vmatpush.msra.mxu0 0.0
        %4323 = vmatpush.msra.mxu0 0.0
        %4324 = vmatpush.msra.mxu0 0.0
        %4325 = vmatpush.msra.mxu0 0.0
        %v4326 = vand.u32 %v3865, 4294901760
        %4327 = vmatpush.msra.mxu0 %v4326
        %v4328 = vand.u32 %v4163, 4294901760
        %v4329 = vsub.f32 %v4163, %v4328
        %v4330 = vand.u32 %v4329, 4294901760
        %v4331 = vsub.f32 %v4329, %v4330
        %v4332 = vand.u32 %v4331, 4294901760
        %4333 = vmatmul.f32.gmra.mxu0 %v4332
        %v4334 = vpop.f32.mrf.mxu0
        %v4335 = vadd.f32 %v4160, %v4334
        %4336 = vdwg.mxu0
        %4337 = vmatpush.msra.mxu0 0.0
        %4338 = vmatpush.msra.mxu0 0.0
        %4339 = vmatpush.msra.mxu0 0.0
        %4340 = vmatpush.msra.mxu0 0.0
        %4341 = vmatpush.msra.mxu0 0.0
        %4342 = vmatpush.msra.mxu0 0.0
        %4343 = vmatpush.msra.mxu0 0.0
        %4344 = vmatpush.msra.mxu0 0.0
        %4345 = vmatpush.msra.mxu0 0.0
        %4346 = vmatpush.msra.mxu0 0.0
        %4347 = vmatpush.msra.mxu0 0.0
        %4348 = vmatpush.msra.mxu0 0.0
        %4349 = vmatpush.msra.mxu0 0.0
        %4350 = vmatpush.msra.mxu0 0.0
        %4351 = vmatpush.msra.mxu0 0.0
        %v4352 = vand.u32 %v3865, 4294901760
        %v4353 = vsub.f32 %v3865, %v4352
        %v4354 = vand.u32 %v4353, 4294901760
        %v4355 = vsub.f32 %v4353, %v4354
        %v4356 = vand.u32 %v4355, 4294901760
        %4357 = vmatpush.msra.mxu0 %v4356
        %v4358 = vand.u32 %v4163, 4294901760
        %4359 = vmatmul.f32.gmra.mxu0 %v4358
        %v4360 = vpop.f32.mrf.mxu0
        %v4361 = vadd.f32 %v4335, %v4360
        %4362 = vdwg.mxu0
        %4363 = vmatpush.msra.mxu0 0.0
        %4364 = vmatpush.msra.mxu0 0.0
        %4365 = vmatpush.msra.mxu0 0.0
        %4366 = vmatpush.msra.mxu0 0.0
        %4367 = vmatpush.msra.mxu0 0.0
        %4368 = vmatpush.msra.mxu0 0.0
        %4369 = vmatpush.msra.mxu0 0.0
        %4370 = vmatpush.msra.mxu0 0.0
        %4371 = vmatpush.msra.mxu0 0.0
        %4372 = vmatpush.msra.mxu0 0.0
        %4373 = vmatpush.msra.mxu0 0.0
        %4374 = vmatpush.msra.mxu0 0.0
        %4375 = vmatpush.msra.mxu0 0.0
        %4376 = vmatpush.msra.mxu0 0.0
        %4377 = vmatpush.msra.mxu0 0.0
        %v4378 = vand.u32 %v3865, 4294901760
        %v4379 = vsub.f32 %v3865, %v4378
        %4380 = vmatpush.msra.mxu0 %v4379
        %v4381 = vand.u32 %v4163, 4294901760
        %v4382 = vsub.f32 %v4163, %v4381
        %4383 = vmatmul.f32.gmra.mxu0 %v4382
        %v4384 = vpop.f32.mrf.mxu0
        %v4385 = vadd.f32 %v4361, %v4384
        %4386 = vdwg.mxu0
        %4387 = vmatpush.msra.mxu0 0.0
        %4388 = vmatpush.msra.mxu0 0.0
        %4389 = vmatpush.msra.mxu0 0.0
        %4390 = vmatpush.msra.mxu0 0.0
        %4391 = vmatpush.msra.mxu0 0.0
        %4392 = vmatpush.msra.mxu0 0.0
        %4393 = vmatpush.msra.mxu0 0.0
        %4394 = vmatpush.msra.mxu0 0.0
        %4395 = vmatpush.msra.mxu0 0.0
        %4396 = vmatpush.msra.mxu0 0.0
        %4397 = vmatpush.msra.mxu0 0.0
        %4398 = vmatpush.msra.mxu0 0.0
        %4399 = vmatpush.msra.mxu0 0.0
        %4400 = vmatpush.msra.mxu0 0.0
        %4401 = vmatpush.msra.mxu0 0.0
        %v4402 = vand.u32 %v3865, 4294901760
        %4403 = vmatpush.msra.mxu0 %v4402
        %v4404 = vand.u32 %v4163, 4294901760
        %v4405 = vsub.f32 %v4163, %v4404
        %v4406 = vand.u32 %v4405, 4294901760
        %4407 = vmatmul.f32.gmra.mxu0 %v4406
        %v4408 = vpop.f32.mrf.mxu0
        %v4409 = vadd.f32 %v4385, %v4408
        %4410 = vdwg.mxu0
        %4411 = vmatpush.msra.mxu0 0.0
        %4412 = vmatpush.msra.mxu0 0.0
        %4413 = vmatpush.msra.mxu0 0.0
        %4414 = vmatpush.msra.mxu0 0.0
        %4415 = vmatpush.msra.mxu0 0.0
        %4416 = vmatpush.msra.mxu0 0.0
        %4417 = vmatpush.msra.mxu0 0.0
        %4418 = vmatpush.msra.mxu0 0.0
        %4419 = vmatpush.msra.mxu0 0.0
        %4420 = vmatpush.msra.mxu0 0.0
        %4421 = vmatpush.msra.mxu0 0.0
        %4422 = vmatpush.msra.mxu0 0.0
        %4423 = vmatpush.msra.mxu0 0.0
        %4424 = vmatpush.msra.mxu0 0.0
        %4425 = vmatpush.msra.mxu0 0.0
        %v4426 = vand.u32 %v3865, 4294901760
        %v4427 = vsub.f32 %v3865, %v4426
        %v4428 = vand.u32 %v4427, 4294901760
        %4429 = vmatpush.msra.mxu0 %v4428
        %v4430 = vand.u32 %v4163, 4294901760
        %4431 = vmatmul.f32.gmra.mxu0 %v4430
        %v4432 = vpop.f32.mrf.mxu0
        %v4433 = vadd.f32 %v4409, %v4432
        %4434 = vdwg.mxu0
        %4435 = vmatpush.msra.mxu0 0.0
        %4436 = vmatpush.msra.mxu0 0.0
        %4437 = vmatpush.msra.mxu0 0.0
        %4438 = vmatpush.msra.mxu0 0.0
        %4439 = vmatpush.msra.mxu0 0.0
        %4440 = vmatpush.msra.mxu0 0.0
        %4441 = vmatpush.msra.mxu0 0.0
        %4442 = vmatpush.msra.mxu0 0.0
        %4443 = vmatpush.msra.mxu0 0.0
        %4444 = vmatpush.msra.mxu0 0.0
        %4445 = vmatpush.msra.mxu0 0.0
        %4446 = vmatpush.msra.mxu0 0.0
        %4447 = vmatpush.msra.mxu0 0.0
        %4448 = vmatpush.msra.mxu0 0.0
        %4449 = vmatpush.msra.mxu0 0.0
        %v4450 = vand.u32 %v3865, 4294901760
        %4451 = vmatpush.msra.mxu0 %v4450
        %v4452 = vand.u32 %v4163, 4294901760
        %4453 = vmatmul.f32.gmra.mxu0 %v4452
        %v4454 = vpop.f32.mrf.mxu0
        %v4455 = vadd.f32 %v4433, %v4454
        %4456 = vdwg.mxu0
        %4458 = vset.pattern.permute.xlu0 0
        %4459 = vperm.xlu0 %4458, %v3246
        %v4460 = vpop.permute.xlu0 %4459
        %v4462 = vadd.f32 %v4309, %v4460
        %v4463 = vadd.f32 %v4455, %v4460
        %vm4464 = vcmp.gt.f32.partialorder %v4462, 0.0
        %vm4465 = vcmp.gt.f32.partialorder %v4463, 0.0
        %v4466 = vmul.f32 %v4462, 0.01
        %v4467 = vmul.f32 %v4463, 0.01
        %v4468 = vsel %vm4464, %v4462, %v4466
        %v4469 = vsel %vm4465, %v4463, %v4467
        %v4470 = vadd.f32 %v4468, %v4469
        %4471 = vadd.xlane.f32.xlu0 %v4470
        %v4472 = vpop.xlane.xlu0 %4471
        %v4473 = vmul.f32 %v4472, %v1552
        %v4475 = vsel %vm330, %v3247, 0
        %4477 = vmatpush.msra.mxu0 0.0
        %4478 = vmatpush.msra.mxu0 0.0
        %4479 = vmatpush.msra.mxu0 0.0
        %4480 = vmatpush.msra.mxu0 0.0
        %4481 = vmatpush.msra.mxu0 0.0
        %4482 = vmatpush.msra.mxu0 0.0
        %4483 = vmatpush.msra.mxu0 0.0
        %4484 = vmatpush.msra.mxu0 0.0
        %4485 = vmatpush.msra.mxu0 0.0
        %4486 = vmatpush.msra.mxu0 0.0
        %4487 = vmatpush.msra.mxu0 0.0
        %4488 = vmatpush.msra.mxu0 0.0
        %4489 = vmatpush.msra.mxu0 0.0
        %4490 = vmatpush.msra.mxu0 0.0
        %4491 = vmatpush.msra.mxu0 0.0
        %v4492 = vand.u32 %v4473, 4294901760
        %4493 = vmatpush.msra.mxu0 %v4492
        %v4494 = vand.u32 %v4475, 4294901760
        %v4495 = vsub.f32 %v4475, %v4494
        %v4496 = vand.u32 %v4495, 4294901760
        %v4497 = vsub.f32 %v4495, %v4496
        %v4498 = vand.u32 %v4497, 4294901760
        %4499 = vmatmul.f32.gmra.mxu0 %v4498
        %v4500 = vpop.f32.mrf.mxu0
        %v4501 = vadd.f32 %v3248, %v4500
        %4502 = vdwg.mxu0
        %4503 = vmatpush.msra.mxu0 0.0
        %4504 = vmatpush.msra.mxu0 0.0
        %4505 = vmatpush.msra.mxu0 0.0
        %4506 = vmatpush.msra.mxu0 0.0
        %4507 = vmatpush.msra.mxu0 0.0
        %4508 = vmatpush.msra.mxu0 0.0
        %4509 = vmatpush.msra.mxu0 0.0
        %4510 = vmatpush.msra.mxu0 0.0
        %4511 = vmatpush.msra.mxu0 0.0
        %4512 = vmatpush.msra.mxu0 0.0
        %4513 = vmatpush.msra.mxu0 0.0
        %4514 = vmatpush.msra.mxu0 0.0
        %4515 = vmatpush.msra.mxu0 0.0
        %4516 = vmatpush.msra.mxu0 0.0
        %4517 = vmatpush.msra.mxu0 0.0
        %v4518 = vand.u32 %v4473, 4294901760
        %v4519 = vsub.f32 %v4473, %v4518
        %v4520 = vand.u32 %v4519, 4294901760
        %v4521 = vsub.f32 %v4519, %v4520
        %v4522 = vand.u32 %v4521, 4294901760
        %4523 = vmatpush.msra.mxu0 %v4522
        %v4524 = vand.u32 %v4475, 4294901760
        %4525 = vmatmul.f32.gmra.mxu0 %v4524
        %v4526 = vpop.f32.mrf.mxu0
        %v4527 = vadd.f32 %v4501, %v4526
        %4528 = vdwg.mxu0
        %4529 = vmatpush.msra.mxu0 0.0
        %4530 = vmatpush.msra.mxu0 0.0
        %4531 = vmatpush.msra.mxu0 0.0
        %4532 = vmatpush.msra.mxu0 0.0
        %4533 = vmatpush.msra.mxu0 0.0
        %4534 = vmatpush.msra.mxu0 0.0
        %4535 = vmatpush.msra.mxu0 0.0
        %4536 = vmatpush.msra.mxu0 0.0
        %4537 = vmatpush.msra.mxu0 0.0
        %4538 = vmatpush.msra.mxu0 0.0
        %4539 = vmatpush.msra.mxu0 0.0
        %4540 = vmatpush.msra.mxu0 0.0
        %4541 = vmatpush.msra.mxu0 0.0
        %4542 = vmatpush.msra.mxu0 0.0
        %4543 = vmatpush.msra.mxu0 0.0
        %v4544 = vand.u32 %v4473, 4294901760
        %v4545 = vsub.f32 %v4473, %v4544
        %4546 = vmatpush.msra.mxu0 %v4545
        %v4547 = vand.u32 %v4475, 4294901760
        %v4548 = vsub.f32 %v4475, %v4547
        %4549 = vmatmul.f32.gmra.mxu0 %v4548
        %v4550 = vpop.f32.mrf.mxu0
        %v4551 = vadd.f32 %v4527, %v4550
        %4552 = vdwg.mxu0
        %4553 = vmatpush.msra.mxu0 0.0
        %4554 = vmatpush.msra.mxu0 0.0
        %4555 = vmatpush.msra.mxu0 0.0
        %4556 = vmatpush.msra.mxu0 0.0
        %4557 = vmatpush.msra.mxu0 0.0
        %4558 = vmatpush.msra.mxu0 0.0
        %4559 = vmatpush.msra.mxu0 0.0
        %4560 = vmatpush.msra.mxu0 0.0
        %4561 = vmatpush.msra.mxu0 0.0
        %4562 = vmatpush.msra.mxu0 0.0
        %4563 = vmatpush.msra.mxu0 0.0
        %4564 = vmatpush.msra.mxu0 0.0
        %4565 = vmatpush.msra.mxu0 0.0
        %4566 = vmatpush.msra.mxu0 0.0
        %4567 = vmatpush.msra.mxu0 0.0
        %v4568 = vand.u32 %v4473, 4294901760
        %4569 = vmatpush.msra.mxu0 %v4568
        %v4570 = vand.u32 %v4475, 4294901760
        %v4571 = vsub.f32 %v4475, %v4570
        %v4572 = vand.u32 %v4571, 4294901760
        %4573 = vmatmul.f32.gmra.mxu0 %v4572
        %v4574 = vpop.f32.mrf.mxu0
        %v4575 = vadd.f32 %v4551, %v4574
        %4576 = vdwg.mxu0
        %4577 = vmatpush.msra.mxu0 0.0
        %4578 = vmatpush.msra.mxu0 0.0
        %4579 = vmatpush.msra.mxu0 0.0
        %4580 = vmatpush.msra.mxu0 0.0
        %4581 = vmatpush.msra.mxu0 0.0
        %4582 = vmatpush.msra.mxu0 0.0
        %4583 = vmatpush.msra.mxu0 0.0
        %4584 = vmatpush.msra.mxu0 0.0
        %4585 = vmatpush.msra.mxu0 0.0
        %4586 = vmatpush.msra.mxu0 0.0
        %4587 = vmatpush.msra.mxu0 0.0
        %4588 = vmatpush.msra.mxu0 0.0
        %4589 = vmatpush.msra.mxu0 0.0
        %4590 = vmatpush.msra.mxu0 0.0
        %4591 = vmatpush.msra.mxu0 0.0
        %v4592 = vand.u32 %v4473, 4294901760
        %v4593 = vsub.f32 %v4473, %v4592
        %v4594 = vand.u32 %v4593, 4294901760
        %4595 = vmatpush.msra.mxu0 %v4594
        %v4596 = vand.u32 %v4475, 4294901760
        %4597 = vmatmul.f32.gmra.mxu0 %v4596
        %v4598 = vpop.f32.mrf.mxu0
        %v4599 = vadd.f32 %v4575, %v4598
        %4600 = vdwg.mxu0
        %4601 = vmatpush.msra.mxu0 0.0
        %4602 = vmatpush.msra.mxu0 0.0
        %4603 = vmatpush.msra.mxu0 0.0
        %4604 = vmatpush.msra.mxu0 0.0
        %4605 = vmatpush.msra.mxu0 0.0
        %4606 = vmatpush.msra.mxu0 0.0
        %4607 = vmatpush.msra.mxu0 0.0
        %4608 = vmatpush.msra.mxu0 0.0
        %4609 = vmatpush.msra.mxu0 0.0
        %4610 = vmatpush.msra.mxu0 0.0
        %4611 = vmatpush.msra.mxu0 0.0
        %4612 = vmatpush.msra.mxu0 0.0
        %4613 = vmatpush.msra.mxu0 0.0
        %4614 = vmatpush.msra.mxu0 0.0
        %4615 = vmatpush.msra.mxu0 0.0
        %v4616 = vand.u32 %v4473, 4294901760
        %4617 = vmatpush.msra.mxu0 %v4616
        %v4618 = vand.u32 %v4475, 4294901760
        %4619 = vmatmul.f32.gmra.mxu0 %v4618
        %v4620 = vpop.f32.mrf.mxu0
        %v4621 = vadd.f32 %v4599, %v4620
        %4622 = vdwg.mxu0
        %v4623 = vmax.f32 %v4621, 0.0
        %v4625 = vsel %vm637, %v3249, 0
        %v4628 = vsel %vm641, %v4623, 0
        %4630 = vmatpush.msra.mxu0 0.0
        %4631 = vmatpush.msra.mxu0 0.0
        %4632 = vmatpush.msra.mxu0 0.0
        %4633 = vmatpush.msra.mxu0 0.0
        %4634 = vmatpush.msra.mxu0 0.0
        %4635 = vmatpush.msra.mxu0 0.0
        %4636 = vmatpush.msra.mxu0 0.0
        %4637 = vmatpush.msra.mxu0 0.0
        %4638 = vmatpush.msra.mxu0 0.0
        %4639 = vmatpush.msra.mxu0 0.0
        %4640 = vmatpush.msra.mxu0 0.0
        %4641 = vmatpush.msra.mxu0 0.0
        %4642 = vmatpush.msra.mxu0 0.0
        %4643 = vmatpush.msra.mxu0 0.0
        %4644 = vmatpush.msra.mxu0 0.0
        %v4645 = vand.u32 %v4628, 4294901760
        %4646 = vmatpush.msra.mxu0 %v4645
        %v4647 = vand.u32 %v4625, 4294901760
        %v4648 = vsub.f32 %v4625, %v4647
        %v4649 = vand.u32 %v4648, 4294901760
        %v4650 = vsub.f32 %v4648, %v4649
        %v4651 = vand.u32 %v4650, 4294901760
        %4652 = vmatmul.f32.gmra.mxu0 %v4651
        %v4653 = vpop.f32.mrf.mxu0
        %v4654 = vadd.f32 %v3250, %v4653
        %4655 = vdwg.mxu0
        %4656 = vmatpush.msra.mxu0 0.0
        %4657 = vmatpush.msra.mxu0 0.0
        %4658 = vmatpush.msra.mxu0 0.0
        %4659 = vmatpush.msra.mxu0 0.0
        %4660 = vmatpush.msra.mxu0 0.0
        %4661 = vmatpush.msra.mxu0 0.0
        %4662 = vmatpush.msra.mxu0 0.0
        %4663 = vmatpush.msra.mxu0 0.0
        %4664 = vmatpush.msra.mxu0 0.0
        %4665 = vmatpush.msra.mxu0 0.0
        %4666 = vmatpush.msra.mxu0 0.0
        %4667 = vmatpush.msra.mxu0 0.0
        %4668 = vmatpush.msra.mxu0 0.0
        %4669 = vmatpush.msra.mxu0 0.0
        %4670 = vmatpush.msra.mxu0 0.0
        %v4671 = vand.u32 %v4628, 4294901760
        %v4672 = vsub.f32 %v4628, %v4671
        %v4673 = vand.u32 %v4672, 4294901760
        %v4674 = vsub.f32 %v4672, %v4673
        %v4675 = vand.u32 %v4674, 4294901760
        %4676 = vmatpush.msra.mxu0 %v4675
        %v4677 = vand.u32 %v4625, 4294901760
        %4678 = vmatmul.f32.gmra.mxu0 %v4677
        %v4679 = vpop.f32.mrf.mxu0
        %v4680 = vadd.f32 %v4654, %v4679
        %4681 = vdwg.mxu0
        %4682 = vmatpush.msra.mxu0 0.0
        %4683 = vmatpush.msra.mxu0 0.0
        %4684 = vmatpush.msra.mxu0 0.0
        %4685 = vmatpush.msra.mxu0 0.0
        %4686 = vmatpush.msra.mxu0 0.0
        %4687 = vmatpush.msra.mxu0 0.0
        %4688 = vmatpush.msra.mxu0 0.0
        %4689 = vmatpush.msra.mxu0 0.0
        %4690 = vmatpush.msra.mxu0 0.0
        %4691 = vmatpush.msra.mxu0 0.0
        %4692 = vmatpush.msra.mxu0 0.0
        %4693 = vmatpush.msra.mxu0 0.0
        %4694 = vmatpush.msra.mxu0 0.0
        %4695 = vmatpush.msra.mxu0 0.0
        %4696 = vmatpush.msra.mxu0 0.0
        %v4697 = vand.u32 %v4628, 4294901760
        %v4698 = vsub.f32 %v4628, %v4697
        %4699 = vmatpush.msra.mxu0 %v4698
        %v4700 = vand.u32 %v4625, 4294901760
        %v4701 = vsub.f32 %v4625, %v4700
        %4702 = vmatmul.f32.gmra.mxu0 %v4701
        %v4703 = vpop.f32.mrf.mxu0
        %v4704 = vadd.f32 %v4680, %v4703
        %4705 = vdwg.mxu0
        %4706 = vmatpush.msra.mxu0 0.0
        %4707 = vmatpush.msra.mxu0 0.0
        %4708 = vmatpush.msra.mxu0 0.0
        %4709 = vmatpush.msra.mxu0 0.0
        %4710 = vmatpush.msra.mxu0 0.0
        %4711 = vmatpush.msra.mxu0 0.0
        %4712 = vmatpush.msra.mxu0 0.0
        %4713 = vmatpush.msra.mxu0 0.0
        %4714 = vmatpush.msra.mxu0 0.0
        %4715 = vmatpush.msra.mxu0 0.0
        %4716 = vmatpush.msra.mxu0 0.0
        %4717 = vmatpush.msra.mxu0 0.0
        %4718 = vmatpush.msra.mxu0 0.0
        %4719 = vmatpush.msra.mxu0 0.0
        %4720 = vmatpush.msra.mxu0 0.0
        %v4721 = vand.u32 %v4628, 4294901760
        %4722 = vmatpush.msra.mxu0 %v4721
        %v4723 = vand.u32 %v4625, 4294901760
        %v4724 = vsub.f32 %v4625, %v4723
        %v4725 = vand.u32 %v4724, 4294901760
        %4726 = vmatmul.f32.gmra.mxu0 %v4725
        %v4727 = vpop.f32.mrf.mxu0
        %v4728 = vadd.f32 %v4704, %v4727
        %4729 = vdwg.mxu0
        %4730 = vmatpush.msra.mxu0 0.0
        %4731 = vmatpush.msra.mxu0 0.0
        %4732 = vmatpush.msra.mxu0 0.0
        %4733 = vmatpush.msra.mxu0 0.0
        %4734 = vmatpush.msra.mxu0 0.0
        %4735 = vmatpush.msra.mxu0 0.0
        %4736 = vmatpush.msra.mxu0 0.0
        %4737 = vmatpush.msra.mxu0 0.0
        %4738 = vmatpush.msra.mxu0 0.0
        %4739 = vmatpush.msra.mxu0 0.0
        %4740 = vmatpush.msra.mxu0 0.0
        %4741 = vmatpush.msra.mxu0 0.0
        %4742 = vmatpush.msra.mxu0 0.0
        %4743 = vmatpush.msra.mxu0 0.0
        %4744 = vmatpush.msra.mxu0 0.0
        %v4745 = vand.u32 %v4628, 4294901760
        %v4746 = vsub.f32 %v4628, %v4745
        %v4747 = vand.u32 %v4746, 4294901760
        %4748 = vmatpush.msra.mxu0 %v4747
        %v4749 = vand.u32 %v4625, 4294901760
        %4750 = vmatmul.f32.gmra.mxu0 %v4749
        %v4751 = vpop.f32.mrf.mxu0
        %v4752 = vadd.f32 %v4728, %v4751
        %4753 = vdwg.mxu0
        %4754 = vmatpush.msra.mxu0 0.0
        %4755 = vmatpush.msra.mxu0 0.0
        %4756 = vmatpush.msra.mxu0 0.0
        %4757 = vmatpush.msra.mxu0 0.0
        %4758 = vmatpush.msra.mxu0 0.0
        %4759 = vmatpush.msra.mxu0 0.0
        %4760 = vmatpush.msra.mxu0 0.0
        %4761 = vmatpush.msra.mxu0 0.0
        %4762 = vmatpush.msra.mxu0 0.0
        %4763 = vmatpush.msra.mxu0 0.0
        %4764 = vmatpush.msra.mxu0 0.0
        %4765 = vmatpush.msra.mxu0 0.0
        %4766 = vmatpush.msra.mxu0 0.0
        %4767 = vmatpush.msra.mxu0 0.0
        %4768 = vmatpush.msra.mxu0 0.0
        %v4769 = vand.u32 %v4628, 4294901760
        %4770 = vmatpush.msra.mxu0 %v4769
        %v4771 = vand.u32 %v4625, 4294901760
        %4772 = vmatmul.f32.gmra.mxu0 %v4771
        %v4773 = vpop.f32.mrf.mxu0
        %v4774 = vadd.f32 %v4752, %v4773
        %4775 = vdwg.mxu0
        %v4776 = vsub.f32 0.0, %v4774
        %v4777 = vmul.f32 %v4776, 1.442695
        %v4778 = vpow.pop %v4777
        %v4779 = vadd.f32 %v4778, 1.0
        %v4780 = vrcp.pop %v4779
        %v4781 = vmul.f32 %v4779, %v4780
        %v4782 = vsub.f32 1.0, %v4781
        %v4783 = vmul.f32 %v4780, %v4782
        %v4784 = vadd.f32 %v4780, %v4783
        %vm4785 = vweird.f32 %v4779
        %vm4786 = vweird.f32 %v4780
        %vm4787 = vmor %vm4785, %vm4786
        %v4788 = vsel %vm4787, %v4780, %v4784
        %v4789 = vand.u32 2147483647, %v4779
        %vm4790 = vcmp.eq.f32.partialorder %v4789, 8.507059e+37
        %v4791 = vand.u32 %v4779, 2147483648
        %v4792 = vor.u32 1.1754944e-38, %v4791
        %v4793 = vsel %vm4790, %v4792, %v4788
        %v4794 = vmul.f32 1.0, %v4793
        %4796 = vset.pattern.permute.xlu0 0
        %4797 = vperm.xlu0 %4796, %v4794
        %v4798 = vpop.permute.xlu0 %4797
        %v4800 = vmul.f32 %v4468, %v4798
        %v4801 = vmul.f32 %v4469, %v4798
        %4803 = vset.pattern.permute.xlu0 4
        %4804 = vperm.xlu0 %4803, %v3251
        %v4805 = vpop.permute.xlu0 %4804
        %v4807 = vmul.f32 %v4800, %v4805
        %v4808 = vmul.f32 %v4801, %v4805
        %4809 = vrot.lane.b32.xlu0 %v4800, 17
        %v4810 = vpop.permute.xlu0 %4809
        %4811 = vrot.lane.b32.xlu0 %v4801, 17
        %v4812 = vpop.permute.xlu0 %4811
        %v4813 = vsel %vm1895, %v4810, %v4812
        %v4814 = vsel %vm1895, %v4812, %v4810
        %v4815 = vmul.f32 %v4814, %v1898
        %v4816 = vmul.f32 %v4813, %v1899
        %4817 = vset.pattern.permute.xlu0 0
        %4818 = vperm.xlu0 %4817, %v3251
        %v4819 = vpop.permute.xlu0 %4818
        %v4821 = vmul.f32 %v4815, %v4819
        %v4822 = vmul.f32 %v4816, %v4819
        %v4823 = vadd.f32 %v4807, %v4821
        %v4824 = vadd.f32 %v4808, %v4822
        %4825 = vrot.lane.b32.xlu0 %v4800, 16
        %v4826 = vpop.permute.xlu0 %4825
        %4827 = vrot.lane.b32.xlu0 %v4801, 16
        %v4828 = vpop.permute.xlu0 %4827
        %v4829 = vsel %vm1914, %v4826, %v4828
        %v4830 = vsel %vm1914, %v4828, %v4826
        %v4831 = vmul.f32 %v4830, %v1917
        %v4832 = vmul.f32 %v4829, %v1918
        %4833 = vset.pattern.permute.xlu0 1
        %4834 = vperm.xlu0 %4833, %v3251
        %v4835 = vpop.permute.xlu0 %4834
        %v4837 = vmul.f32 %v4831, %v4835
        %v4838 = vmul.f32 %v4832, %v4835
        %v4839 = vadd.f32 %v4823, %v4837
        %v4840 = vadd.f32 %v4824, %v4838
        %4841 = vrot.lane.b32.xlu0 %v4800, 15
        %v4842 = vpop.permute.xlu0 %4841
        %4843 = vrot.lane.b32.xlu0 %v4801, 15
        %v4844 = vpop.permute.xlu0 %4843
        %v4845 = vsel %vm1933, %v4842, %v4844
        %v4846 = vsel %vm1933, %v4844, %v4842
        %v4847 = vmul.f32 %v4846, %v1936
        %v4848 = vmul.f32 %v4845, %v1937
        %4849 = vset.pattern.permute.xlu0 2
        %4850 = vperm.xlu0 %4849, %v3251
        %v4851 = vpop.permute.xlu0 %4850
        %v4853 = vmul.f32 %v4847, %v4851
        %v4854 = vmul.f32 %v4848, %v4851
        %v4855 = vadd.f32 %v4839, %v4853
        %v4856 = vadd.f32 %v4840, %v4854
        %4857 = vrot.lane.b32.xlu0 %v4800, 1
        %v4858 = vpop.permute.xlu0 %4857
        %4859 = vrot.lane.b32.xlu0 %v4801, 1
        %v4860 = vpop.permute.xlu0 %4859
        %v4861 = vsel %vm1952, %v4858, %v4860
        %v4862 = vsel %vm1952, %v4860, %v4858
        %v4863 = vmul.f32 %v4862, %v1955
        %v4864 = vmul.f32 %v4861, %v1956
        %4865 = vset.pattern.permute.xlu0 3
        %4866 = vperm.xlu0 %4865, %v3251
        %v4867 = vpop.permute.xlu0 %4866
        %v4869 = vmul.f32 %v4863, %v4867
        %v4870 = vmul.f32 %v4864, %v4867
        %v4871 = vadd.f32 %v4855, %v4869
        %v4872 = vadd.f32 %v4856, %v4870
        %4873 = vrot.lane.b32.xlu0 %v4800, 127
        %v4874 = vpop.permute.xlu0 %4873
        %4875 = vrot.lane.b32.xlu0 %v4801, 127
        %v4876 = vpop.permute.xlu0 %4875
        %v4877 = vsel %vm1971, %v4874, %v4876
        %v4878 = vsel %vm1971, %v4876, %v4874
        %v4879 = vmul.f32 %v4877, %v1974
        %v4880 = vmul.f32 %v4878, %v1975
        %4881 = vset.pattern.permute.xlu0 5
        %4882 = vperm.xlu0 %4881, %v3251
        %v4883 = vpop.permute.xlu0 %4882
        %v4885 = vmul.f32 %v4879, %v4883
        %v4886 = vmul.f32 %v4880, %v4883
        %v4887 = vadd.f32 %v4871, %v4885
        %v4888 = vadd.f32 %v4872, %v4886
        %4889 = vrot.lane.b32.xlu0 %v4800, 113
        %v4890 = vpop.permute.xlu0 %4889
        %4891 = vrot.lane.b32.xlu0 %v4801, 113
        %v4892 = vpop.permute.xlu0 %4891
        %v4893 = vsel %vm1990, %v4890, %v4892
        %v4894 = vsel %vm1990, %v4892, %v4890
        %v4895 = vmul.f32 %v4893, %v1993
        %v4896 = vmul.f32 %v4894, %v1994
        %4897 = vset.pattern.permute.xlu0 6
        %4898 = vperm.xlu0 %4897, %v3251
        %v4899 = vpop.permute.xlu0 %4898
        %v4901 = vmul.f32 %v4895, %v4899
        %v4902 = vmul.f32 %v4896, %v4899
        %v4903 = vadd.f32 %v4887, %v4901
        %v4904 = vadd.f32 %v4888, %v4902
        %4905 = vrot.lane.b32.xlu0 %v4800, 112
        %v4906 = vpop.permute.xlu0 %4905
        %4907 = vrot.lane.b32.xlu0 %v4801, 112
        %v4908 = vpop.permute.xlu0 %4907
        %v4909 = vsel %vm2009, %v4906, %v4908
        %v4910 = vsel %vm2009, %v4908, %v4906
        %v4911 = vmul.f32 %v4909, %v2012
        %v4912 = vmul.f32 %v4910, %v2013
        %4913 = vset.pattern.permute.xlu0 7
        %4914 = vperm.xlu0 %4913, %v3251
        %v4915 = vpop.permute.xlu0 %4914
        %v4917 = vmul.f32 %v4911, %v4915
        %v4918 = vmul.f32 %v4912, %v4915
        %v4919 = vadd.f32 %v4903, %v4917
        %v4920 = vadd.f32 %v4904, %v4918
        %4921 = vrot.lane.b32.xlu0 %v4800, 111
        %v4922 = vpop.permute.xlu0 %4921
        %4923 = vrot.lane.b32.xlu0 %v4801, 111
        %v4924 = vpop.permute.xlu0 %4923
        %v4925 = vsel %vm2028, %v4922, %v4924
        %v4926 = vsel %vm2028, %v4924, %v4922
        %v4927 = vmul.f32 %v4925, %v2031
        %v4928 = vmul.f32 %v4926, %v2032
        %4929 = vset.pattern.permute.xlu0 8
        %4930 = vperm.xlu0 %4929, %v3251
        %v4931 = vpop.permute.xlu0 %4930
        %v4933 = vmul.f32 %v4927, %v4931
        %v4934 = vmul.f32 %v4928, %v4931
        %v4935 = vadd.f32 %v4919, %v4933
        %v4936 = vadd.f32 %v4920, %v4934
        %4938 = vset.pattern.permute.xlu0 0
        %4939 = vperm.xlu0 %4938, %v3252
        %v4940 = vpop.permute.xlu0 %4939
        %v4942 = vadd.f32 %v4935, %v4940
        %v4943 = vadd.f32 %v4936, %v4940
        %4945 = vset.pattern.permute.xlu0 0
        %4946 = vperm.xlu0 %4945, %v3254
        %v4947 = vpop.permute.xlu0 %4946
        %v4950 = vsel %vm330, %v3253, 0
        %4952 = vmatpush.msra.mxu0 0.0
        %4953 = vmatpush.msra.mxu0 0.0
        %4954 = vmatpush.msra.mxu0 0.0
        %4955 = vmatpush.msra.mxu0 0.0
        %4956 = vmatpush.msra.mxu0 0.0
        %4957 = vmatpush.msra.mxu0 0.0
        %4958 = vmatpush.msra.mxu0 0.0
        %4959 = vmatpush.msra.mxu0 0.0
        %4960 = vmatpush.msra.mxu0 0.0
        %4961 = vmatpush.msra.mxu0 0.0
        %4962 = vmatpush.msra.mxu0 0.0
        %4963 = vmatpush.msra.mxu0 0.0
        %4964 = vmatpush.msra.mxu0 0.0
        %4965 = vmatpush.msra.mxu0 0.0
        %4966 = vmatpush.msra.mxu0 0.0
        %v4967 = vand.u32 %v4942, 4294901760
        %4968 = vmatpush.msra.mxu0 %v4967
        %v4969 = vand.u32 %v4950, 4294901760
        %v4970 = vsub.f32 %v4950, %v4969
        %v4971 = vand.u32 %v4970, 4294901760
        %v4972 = vsub.f32 %v4970, %v4971
        %v4973 = vand.u32 %v4972, 4294901760
        %4974 = vmatmul.f32.gmra.mxu0 %v4973
        %v4975 = vpop.f32.mrf.mxu0
        %v4976 = vadd.f32 %v4947, %v4975
        %4977 = vdwg.mxu0
        %4978 = vmatpush.msra.mxu0 0.0
        %4979 = vmatpush.msra.mxu0 0.0
        %4980 = vmatpush.msra.mxu0 0.0
        %4981 = vmatpush.msra.mxu0 0.0
        %4982 = vmatpush.msra.mxu0 0.0
        %4983 = vmatpush.msra.mxu0 0.0
        %4984 = vmatpush.msra.mxu0 0.0
        %4985 = vmatpush.msra.mxu0 0.0
        %4986 = vmatpush.msra.mxu0 0.0
        %4987 = vmatpush.msra.mxu0 0.0
        %4988 = vmatpush.msra.mxu0 0.0
        %4989 = vmatpush.msra.mxu0 0.0
        %4990 = vmatpush.msra.mxu0 0.0
        %4991 = vmatpush.msra.mxu0 0.0
        %4992 = vmatpush.msra.mxu0 0.0
        %v4993 = vand.u32 %v4942, 4294901760
        %v4994 = vsub.f32 %v4942, %v4993
        %v4995 = vand.u32 %v4994, 4294901760
        %v4996 = vsub.f32 %v4994, %v4995
        %v4997 = vand.u32 %v4996, 4294901760
        %4998 = vmatpush.msra.mxu0 %v4997
        %v4999 = vand.u32 %v4950, 4294901760
        %5000 = vmatmul.f32.gmra.mxu0 %v4999
        %v5001 = vpop.f32.mrf.mxu0
        %v5002 = vadd.f32 %v4976, %v5001
        %5003 = vdwg.mxu0
        %5004 = vmatpush.msra.mxu0 0.0
        %5005 = vmatpush.msra.mxu0 0.0
        %5006 = vmatpush.msra.mxu0 0.0
        %5007 = vmatpush.msra.mxu0 0.0
        %5008 = vmatpush.msra.mxu0 0.0
        %5009 = vmatpush.msra.mxu0 0.0
        %5010 = vmatpush.msra.mxu0 0.0
        %5011 = vmatpush.msra.mxu0 0.0
        %5012 = vmatpush.msra.mxu0 0.0
        %5013 = vmatpush.msra.mxu0 0.0
        %5014 = vmatpush.msra.mxu0 0.0
        %5015 = vmatpush.msra.mxu0 0.0
        %5016 = vmatpush.msra.mxu0 0.0
        %5017 = vmatpush.msra.mxu0 0.0
        %5018 = vmatpush.msra.mxu0 0.0
        %v5019 = vand.u32 %v4942, 4294901760
        %v5020 = vsub.f32 %v4942, %v5019
        %5021 = vmatpush.msra.mxu0 %v5020
        %v5022 = vand.u32 %v4950, 4294901760
        %v5023 = vsub.f32 %v4950, %v5022
        %5024 = vmatmul.f32.gmra.mxu0 %v5023
        %v5025 = vpop.f32.mrf.mxu0
        %v5026 = vadd.f32 %v5002, %v5025
        %5027 = vdwg.mxu0
        %5028 = vmatpush.msra.mxu0 0.0
        %5029 = vmatpush.msra.mxu0 0.0
        %5030 = vmatpush.msra.mxu0 0.0
        %5031 = vmatpush.msra.mxu0 0.0
        %5032 = vmatpush.msra.mxu0 0.0
        %5033 = vmatpush.msra.mxu0 0.0
        %5034 = vmatpush.msra.mxu0 0.0
        %5035 = vmatpush.msra.mxu0 0.0
        %5036 = vmatpush.msra.mxu0 0.0
        %5037 = vmatpush.msra.mxu0 0.0
        %5038 = vmatpush.msra.mxu0 0.0
        %5039 = vmatpush.msra.mxu0 0.0
        %5040 = vmatpush.msra.mxu0 0.0
        %5041 = vmatpush.msra.mxu0 0.0
        %5042 = vmatpush.msra.mxu0 0.0
        %v5043 = vand.u32 %v4942, 4294901760
        %5044 = vmatpush.msra.mxu0 %v5043
        %v5045 = vand.u32 %v4950, 4294901760
        %v5046 = vsub.f32 %v4950, %v5045
        %v5047 = vand.u32 %v5046, 4294901760
        %5048 = vmatmul.f32.gmra.mxu0 %v5047
        %v5049 = vpop.f32.mrf.mxu0
        %v5050 = vadd.f32 %v5026, %v5049
        %5051 = vdwg.mxu0
        %5052 = vmatpush.msra.mxu0 0.0
        %5053 = vmatpush.msra.mxu0 0.0
        %5054 = vmatpush.msra.mxu0 0.0
        %5055 = vmatpush.msra.mxu0 0.0
        %5056 = vmatpush.msra.mxu0 0.0
        %5057 = vmatpush.msra.mxu0 0.0
        %5058 = vmatpush.msra.mxu0 0.0
        %5059 = vmatpush.msra.mxu0 0.0
        %5060 = vmatpush.msra.mxu0 0.0
        %5061 = vmatpush.msra.mxu0 0.0
        %5062 = vmatpush.msra.mxu0 0.0
        %5063 = vmatpush.msra.mxu0 0.0
        %5064 = vmatpush.msra.mxu0 0.0
        %5065 = vmatpush.msra.mxu0 0.0
        %5066 = vmatpush.msra.mxu0 0.0
        %v5067 = vand.u32 %v4942, 4294901760
        %v5068 = vsub.f32 %v4942, %v5067
        %v5069 = vand.u32 %v5068, 4294901760
        %5070 = vmatpush.msra.mxu0 %v5069
        %v5071 = vand.u32 %v4950, 4294901760
        %5072 = vmatmul.f32.gmra.mxu0 %v5071
        %v5073 = vpop.f32.mrf.mxu0
        %v5074 = vadd.f32 %v5050, %v5073
        %5075 = vdwg.mxu0
        %5076 = vmatpush.msra.mxu0 0.0
        %5077 = vmatpush.msra.mxu0 0.0
        %5078 = vmatpush.msra.mxu0 0.0
        %5079 = vmatpush.msra.mxu0 0.0
        %5080 = vmatpush.msra.mxu0 0.0
        %5081 = vmatpush.msra.mxu0 0.0
        %5082 = vmatpush.msra.mxu0 0.0
        %5083 = vmatpush.msra.mxu0 0.0
        %5084 = vmatpush.msra.mxu0 0.0
        %5085 = vmatpush.msra.mxu0 0.0
        %5086 = vmatpush.msra.mxu0 0.0
        %5087 = vmatpush.msra.mxu0 0.0
        %5088 = vmatpush.msra.mxu0 0.0
        %5089 = vmatpush.msra.mxu0 0.0
        %5090 = vmatpush.msra.mxu0 0.0
        %v5091 = vand.u32 %v4942, 4294901760
        %5092 = vmatpush.msra.mxu0 %v5091
        %v5093 = vand.u32 %v4950, 4294901760
        %5094 = vmatmul.f32.gmra.mxu0 %v5093
        %v5095 = vpop.f32.mrf.mxu0
        %v5096 = vadd.f32 %v5074, %v5095
        %5097 = vdwg.mxu0
        %5098 = vmatpush.msra.mxu0 0.0
        %5099 = vmatpush.msra.mxu0 0.0
        %5100 = vmatpush.msra.mxu0 0.0
        %5101 = vmatpush.msra.mxu0 0.0
        %5102 = vmatpush.msra.mxu0 0.0
        %5103 = vmatpush.msra.mxu0 0.0
        %5104 = vmatpush.msra.mxu0 0.0
        %5105 = vmatpush.msra.mxu0 0.0
        %5106 = vmatpush.msra.mxu0 0.0
        %5107 = vmatpush.msra.mxu0 0.0
        %5108 = vmatpush.msra.mxu0 0.0
        %5109 = vmatpush.msra.mxu0 0.0
        %5110 = vmatpush.msra.mxu0 0.0
        %5111 = vmatpush.msra.mxu0 0.0
        %5112 = vmatpush.msra.mxu0 0.0
        %v5113 = vand.u32 %v4943, 4294901760
        %5114 = vmatpush.msra.mxu0 %v5113
        %v5115 = vand.u32 %v4950, 4294901760
        %v5116 = vsub.f32 %v4950, %v5115
        %v5117 = vand.u32 %v5116, 4294901760
        %v5118 = vsub.f32 %v5116, %v5117
        %v5119 = vand.u32 %v5118, 4294901760
        %5120 = vmatmul.f32.gmra.mxu0 %v5119
        %v5121 = vpop.f32.mrf.mxu0
        %v5122 = vadd.f32 %v4947, %v5121
        %5123 = vdwg.mxu0
        %5124 = vmatpush.msra.mxu0 0.0
        %5125 = vmatpush.msra.mxu0 0.0
        %5126 = vmatpush.msra.mxu0 0.0
        %5127 = vmatpush.msra.mxu0 0.0
        %5128 = vmatpush.msra.mxu0 0.0
        %5129 = vmatpush.msra.mxu0 0.0
        %5130 = vmatpush.msra.mxu0 0.0
        %5131 = vmatpush.msra.mxu0 0.0
        %5132 = vmatpush.msra.mxu0 0.0
        %5133 = vmatpush.msra.mxu0 0.0
        %5134 = vmatpush.msra.mxu0 0.0
        %5135 = vmatpush.msra.mxu0 0.0
        %5136 = vmatpush.msra.mxu0 0.0
        %5137 = vmatpush.msra.mxu0 0.0
        %5138 = vmatpush.msra.mxu0 0.0
        %v5139 = vand.u32 %v4943, 4294901760
        %v5140 = vsub.f32 %v4943, %v5139
        %v5141 = vand.u32 %v5140, 4294901760
        %v5142 = vsub.f32 %v5140, %v5141
        %v5143 = vand.u32 %v5142, 4294901760
        %5144 = vmatpush.msra.mxu0 %v5143
        %v5145 = vand.u32 %v4950, 4294901760
        %5146 = vmatmul.f32.gmra.mxu0 %v5145
        %v5147 = vpop.f32.mrf.mxu0
        %v5148 = vadd.f32 %v5122, %v5147
        %5149 = vdwg.mxu0
        %5150 = vmatpush.msra.mxu0 0.0
        %5151 = vmatpush.msra.mxu0 0.0
        %5152 = vmatpush.msra.mxu0 0.0
        %5153 = vmatpush.msra.mxu0 0.0
        %5154 = vmatpush.msra.mxu0 0.0
        %5155 = vmatpush.msra.mxu0 0.0
        %5156 = vmatpush.msra.mxu0 0.0
        %5157 = vmatpush.msra.mxu0 0.0
        %5158 = vmatpush.msra.mxu0 0.0
        %5159 = vmatpush.msra.mxu0 0.0
        %5160 = vmatpush.msra.mxu0 0.0
        %5161 = vmatpush.msra.mxu0 0.0
        %5162 = vmatpush.msra.mxu0 0.0
        %5163 = vmatpush.msra.mxu0 0.0
        %5164 = vmatpush.msra.mxu0 0.0
        %v5165 = vand.u32 %v4943, 4294901760
        %v5166 = vsub.f32 %v4943, %v5165
        %5167 = vmatpush.msra.mxu0 %v5166
        %v5168 = vand.u32 %v4950, 4294901760
        %v5169 = vsub.f32 %v4950, %v5168
        %5170 = vmatmul.f32.gmra.mxu0 %v5169
        %v5171 = vpop.f32.mrf.mxu0
        %v5172 = vadd.f32 %v5148, %v5171
        %5173 = vdwg.mxu0
        %5174 = vmatpush.msra.mxu0 0.0
        %5175 = vmatpush.msra.mxu0 0.0
        %5176 = vmatpush.msra.mxu0 0.0
        %5177 = vmatpush.msra.mxu0 0.0
        %5178 = vmatpush.msra.mxu0 0.0
        %5179 = vmatpush.msra.mxu0 0.0
        %5180 = vmatpush.msra.mxu0 0.0
        %5181 = vmatpush.msra.mxu0 0.0
        %5182 = vmatpush.msra.mxu0 0.0
        %5183 = vmatpush.msra.mxu0 0.0
        %5184 = vmatpush.msra.mxu0 0.0
        %5185 = vmatpush.msra.mxu0 0.0
        %5186 = vmatpush.msra.mxu0 0.0
        %5187 = vmatpush.msra.mxu0 0.0
        %5188 = vmatpush.msra.mxu0 0.0
        %v5189 = vand.u32 %v4943, 4294901760
        %5190 = vmatpush.msra.mxu0 %v5189
        %v5191 = vand.u32 %v4950, 4294901760
        %v5192 = vsub.f32 %v4950, %v5191
        %v5193 = vand.u32 %v5192, 4294901760
        %5194 = vmatmul.f32.gmra.mxu0 %v5193
        %v5195 = vpop.f32.mrf.mxu0
        %v5196 = vadd.f32 %v5172, %v5195
        %5197 = vdwg.mxu0
        %5198 = vmatpush.msra.mxu0 0.0
        %5199 = vmatpush.msra.mxu0 0.0
        %5200 = vmatpush.msra.mxu0 0.0
        %5201 = vmatpush.msra.mxu0 0.0
        %5202 = vmatpush.msra.mxu0 0.0
        %5203 = vmatpush.msra.mxu0 0.0
        %5204 = vmatpush.msra.mxu0 0.0
        %5205 = vmatpush.msra.mxu0 0.0
        %5206 = vmatpush.msra.mxu0 0.0
        %5207 = vmatpush.msra.mxu0 0.0
        %5208 = vmatpush.msra.mxu0 0.0
        %5209 = vmatpush.msra.mxu0 0.0
        %5210 = vmatpush.msra.mxu0 0.0
        %5211 = vmatpush.msra.mxu0 0.0
        %5212 = vmatpush.msra.mxu0 0.0
        %v5213 = vand.u32 %v4943, 4294901760
        %v5214 = vsub.f32 %v4943, %v5213
        %v5215 = vand.u32 %v5214, 4294901760
        %5216 = vmatpush.msra.mxu0 %v5215
        %v5217 = vand.u32 %v4950, 4294901760
        %5218 = vmatmul.f32.gmra.mxu0 %v5217
        %v5219 = vpop.f32.mrf.mxu0
        %v5220 = vadd.f32 %v5196, %v5219
        %5221 = vdwg.mxu0
        %5222 = vmatpush.msra.mxu0 0.0
        %5223 = vmatpush.msra.mxu0 0.0
        %5224 = vmatpush.msra.mxu0 0.0
        %5225 = vmatpush.msra.mxu0 0.0
        %5226 = vmatpush.msra.mxu0 0.0
        %5227 = vmatpush.msra.mxu0 0.0
        %5228 = vmatpush.msra.mxu0 0.0
        %5229 = vmatpush.msra.mxu0 0.0
        %5230 = vmatpush.msra.mxu0 0.0
        %5231 = vmatpush.msra.mxu0 0.0
        %5232 = vmatpush.msra.mxu0 0.0
        %5233 = vmatpush.msra.mxu0 0.0
        %5234 = vmatpush.msra.mxu0 0.0
        %5235 = vmatpush.msra.mxu0 0.0
        %5236 = vmatpush.msra.mxu0 0.0
        %v5237 = vand.u32 %v4943, 4294901760
        %5238 = vmatpush.msra.mxu0 %v5237
        %v5239 = vand.u32 %v4950, 4294901760
        %5240 = vmatmul.f32.gmra.mxu0 %v5239
        %v5241 = vpop.f32.mrf.mxu0
        %v5242 = vadd.f32 %v5220, %v5241
        %5243 = vdwg.mxu0
        %v5244 = vadd.f32 %v5096, %v3238
        %v5245 = vadd.f32 %v5242, %v3239
        %vm5246 = vcmp.gt.f32.partialorder %v5244, 0.0
        %vm5247 = vcmp.gt.f32.partialorder %v5245, 0.0
        %v5248 = vmul.f32 %v5244, 0.2
        %v5249 = vmul.f32 %v5245, 0.2
        %v5250 = vsel %vm5246, %v5244, %v5248
        %v5251 = vsel %vm5247, %v5245, %v5249
        %v5252 = vld [vmem:[%s6 + $0x98] sm:$0xff]
        %v5253 = vld [vmem:[%s6 + $0xa0] sm:$0xff]
        %v5254 = vld [vmem:[%s6 + $0xa8] sm:$0xff]
        %v5255 = vld [vmem:[%s6 + $0xb0] sm:$0xff]
        %v5256 = vld [vmem:[%s1 + $0x60] sm:$0xff]
        %v5257 = vld [vmem:[%s1 + $0x68] sm:$0xff]
        %v5258 = vld [vmem:[%s1 + $0x70] sm:$0xff]
        %v5259 = vld [vmem:[%s5 + $0x10] sm:$0xff]
        %v5260 = vld [vmem:[%s5 + $0x18] sm:$0xff]
        %v5261 = vld [vmem:[%s5 + $0x20] sm:$0xff]
        %v5262 = vld [vmem:[%s6 + $0xb8] sm:$0xff]
        %v5263 = vld [vmem:[%s1 + $0x80] sm:$0xff]
        %v5264 = vld [vmem:[%s1 + $0x78] sm:$0xff]
        %v5265 = vld [vmem:[%s1 + $0x88] sm:$0xff]
        %v5266 = vld [vmem:[%s1 + $0x90] sm:$0xff]
        %v5267 = vld [vmem:[%s1 + $0x98] sm:$0xff]
        %v5268 = vld [vmem:[%s1 + $0xa0] sm:$0xff]
        %v5269 = vld [vmem:[%s1 + $0xa8] sm:$0xff]
        %v5270 = vld [vmem:[%s1 + $0xb0] sm:$0xff]
        %v5271 = vld [vmem:[%s5 + $0x28] sm:$0xff]
        %v5272 = vld [vmem:[%s5 + $0x30] sm:$0xff]
        %v5273 = vld [vmem:[%s5 + $0x38] sm:$0xff]
        %v5274 = vld [vmem:[%s5 + $0x40] sm:$0xff]
        %v5275 = vld [vmem:[%s5 + $0x48] sm:$0xff]
        %v5276 = vld [vmem:[%s5 + $0x50] sm:$0xff]
        %v5277 = vld [vmem:[%s4] sm:$0xff]
        %v5278 = vrot.slane %v5250, 4
        %v5279 = vadd.f32 %v5250, %v5278
        %v5280 = vrot.slane %v5279, 2
        %v5281 = vadd.f32 %v5279, %v5280
        %v5282 = vrot.slane %v5281, 1
        %v5283 = vadd.f32 %v5281, %v5282
        %v5284 = vrot.slane %v5251, 4
        %v5285 = vadd.f32 %v5251, %v5284
        %v5286 = vrot.slane %v5285, 2
        %v5287 = vadd.f32 %v5285, %v5286
        %v5288 = vrot.slane %v5287, 1
        %v5289 = vadd.f32 %v5287, %v5288
        %v5290 = vmul.f32 %v5283, %v2384
        %v5291 = vmul.f32 %v5289, %v2384
        %v5292 = vsub.f32 %v5250, %v5290
        %v5293 = vsub.f32 %v5251, %v5291
        %v5294 = vmul.f32 %v5292, %v5292
        %v5295 = vmul.f32 %v5293, %v5293
        %v5296 = vrot.slane %v5294, 4
        %v5297 = vadd.f32 %v5294, %v5296
        %v5298 = vrot.slane %v5297, 2
        %v5299 = vadd.f32 %v5297, %v5298
        %v5300 = vrot.slane %v5299, 1
        %v5301 = vadd.f32 %v5299, %v5300
        %v5302 = vrot.slane %v5295, 4
        %v5303 = vadd.f32 %v5295, %v5302
        %v5304 = vrot.slane %v5303, 2
        %v5305 = vadd.f32 %v5303, %v5304
        %v5306 = vrot.slane %v5305, 1
        %v5307 = vadd.f32 %v5305, %v5306
        %v5308 = vmul.f32 %v5301, %v2384
        %v5309 = vmul.f32 %v5307, %v2384
        %v5310 = vadd.f32 %v5308, 1e-05
        %v5311 = vadd.f32 %v5309, 1e-05
        %v5312 = vrsqrt.pop %v5310
        %v5313 = vmul.f32 %v5312, %v5310
        %v5314 = vmul.f32 %v5313, %v5312
        %v5315 = vmul.f32 0.5, %v5314
        %v5316 = vsub.f32 1.5, %v5315
        %v5317 = vmul.f32 %v5312, %v5316
        %vm5318 = vweird.f32 %v5310
        %vm5319 = vweird.f32 %v5312
        %vm5320 = vmor %vm5318, %vm5319
        %v5321 = vsel %vm5320, %v5312, %v5317
        %v5322 = vrsqrt.pop %v5311
        %v5323 = vmul.f32 %v5322, %v5311
        %v5324 = vmul.f32 %v5323, %v5322
        %v5325 = vmul.f32 0.5, %v5324
        %v5326 = vsub.f32 1.5, %v5325
        %v5327 = vmul.f32 %v5322, %v5326
        %vm5328 = vweird.f32 %v5311
        %vm5329 = vweird.f32 %v5322
        %vm5330 = vmor %vm5328, %vm5329
        %v5331 = vsel %vm5330, %v5322, %v5327
        %v5332 = vmul.f32 %v5292, %v5321
        %v5333 = vmul.f32 %v5293, %v5331
        %5335 = vset.pattern.permute.xlu0 0
        %5336 = vperm.xlu0 %5335, %v5252
        %v5337 = vpop.permute.xlu0 %5336
        %v5339 = vmul.f32 %v5332, %v5337
        %v5340 = vmul.f32 %v5333, %v5337
        %5342 = vset.pattern.permute.xlu0 0
        %5343 = vperm.xlu0 %5342, %v5253
        %v5344 = vpop.permute.xlu0 %5343
        %v5346 = vadd.f32 %v5339, %v5344
        %v5347 = vadd.f32 %v5340, %v5344
        %v5349 = vsel %vm330, %v5256, 0
        %v5352 = vsel %vm330, %v5257, 0
        %v5355 = vsel %vm330, %v5258, 0
        %5357 = vmatpush.msra.mxu0 0.0
        %5358 = vmatpush.msra.mxu0 0.0
        %5359 = vmatpush.msra.mxu0 0.0
        %5360 = vmatpush.msra.mxu0 0.0
        %5361 = vmatpush.msra.mxu0 0.0
        %5362 = vmatpush.msra.mxu0 0.0
        %5363 = vmatpush.msra.mxu0 0.0
        %5364 = vmatpush.msra.mxu0 0.0
        %5365 = vmatpush.msra.mxu0 0.0
        %5366 = vmatpush.msra.mxu0 0.0
        %5367 = vmatpush.msra.mxu0 0.0
        %5368 = vmatpush.msra.mxu0 0.0
        %5369 = vmatpush.msra.mxu0 0.0
        %5370 = vmatpush.msra.mxu0 0.0
        %5371 = vmatpush.msra.mxu0 0.0
        %v5372 = vand.u32 %v5346, 4294901760
        %5373 = vmatpush.msra.mxu0 %v5372
        %v5374 = vand.u32 %v5349, 4294901760
        %v5375 = vsub.f32 %v5349, %v5374
        %v5376 = vand.u32 %v5375, 4294901760
        %v5377 = vsub.f32 %v5375, %v5376
        %v5378 = vand.u32 %v5377, 4294901760
        %5379 = vmatmul.f32.gmra.mxu0 %v5378
        %v5380 = vpop.f32.mrf.mxu0
        %v5381 = vadd.f32 0.0, %v5380
        %v5382 = vand.u32 %v5352, 4294901760
        %v5383 = vsub.f32 %v5352, %v5382
        %v5384 = vand.u32 %v5383, 4294901760
        %v5385 = vsub.f32 %v5383, %v5384
        %v5386 = vand.u32 %v5385, 4294901760
        %5387 = vmatmul.f32.gmra.mxu0 %v5386
        %v5388 = vpop.f32.mrf.mxu0
        %v5389 = vadd.f32 0.0, %v5388
        %v5390 = vand.u32 %v5355, 4294901760
        %v5391 = vsub.f32 %v5355, %v5390
        %v5392 = vand.u32 %v5391, 4294901760
        %v5393 = vsub.f32 %v5391, %v5392
        %v5394 = vand.u32 %v5393, 4294901760
        %5395 = vmatmul.f32.gmra.mxu0 %v5394
        %v5396 = vpop.f32.mrf.mxu0
        %v5397 = vadd.f32 0.0, %v5396
        %5398 = vdwg.mxu0
        %5399 = vmatpush.msra.mxu0 0.0
        %5400 = vmatpush.msra.mxu0 0.0
        %5401 = vmatpush.msra.mxu0 0.0
        %5402 = vmatpush.msra.mxu0 0.0
        %5403 = vmatpush.msra.mxu0 0.0
        %5404 = vmatpush.msra.mxu0 0.0
        %5405 = vmatpush.msra.mxu0 0.0
        %5406 = vmatpush.msra.mxu0 0.0
        %5407 = vmatpush.msra.mxu0 0.0
        %5408 = vmatpush.msra.mxu0 0.0
        %5409 = vmatpush.msra.mxu0 0.0
        %5410 = vmatpush.msra.mxu0 0.0
        %5411 = vmatpush.msra.mxu0 0.0
        %5412 = vmatpush.msra.mxu0 0.0
        %5413 = vmatpush.msra.mxu0 0.0
        %v5414 = vand.u32 %v5346, 4294901760
        %v5415 = vsub.f32 %v5346, %v5414
        %v5416 = vand.u32 %v5415, 4294901760
        %v5417 = vsub.f32 %v5415, %v5416
        %v5418 = vand.u32 %v5417, 4294901760
        %5419 = vmatpush.msra.mxu0 %v5418
        %v5420 = vand.u32 %v5349, 4294901760
        %5421 = vmatmul.f32.gmra.mxu0 %v5420
        %v5422 = vpop.f32.mrf.mxu0
        %v5423 = vadd.f32 %v5381, %v5422
        %v5424 = vand.u32 %v5352, 4294901760
        %5425 = vmatmul.f32.gmra.mxu0 %v5424
        %v5426 = vpop.f32.mrf.mxu0
        %v5427 = vadd.f32 %v5389, %v5426
        %v5428 = vand.u32 %v5355, 4294901760
        %5429 = vmatmul.f32.gmra.mxu0 %v5428
        %v5430 = vpop.f32.mrf.mxu0
        %v5431 = vadd.f32 %v5397, %v5430
        %5432 = vdwg.mxu0
        %5433 = vmatpush.msra.mxu0 0.0
        %5434 = vmatpush.msra.mxu0 0.0
        %5435 = vmatpush.msra.mxu0 0.0
        %5436 = vmatpush.msra.mxu0 0.0
        %5437 = vmatpush.msra.mxu0 0.0
        %5438 = vmatpush.msra.mxu0 0.0
        %5439 = vmatpush.msra.mxu0 0.0
        %5440 = vmatpush.msra.mxu0 0.0
        %5441 = vmatpush.msra.mxu0 0.0
        %5442 = vmatpush.msra.mxu0 0.0
        %5443 = vmatpush.msra.mxu0 0.0
        %5444 = vmatpush.msra.mxu0 0.0
        %5445 = vmatpush.msra.mxu0 0.0
        %5446 = vmatpush.msra.mxu0 0.0
        %5447 = vmatpush.msra.mxu0 0.0
        %v5448 = vand.u32 %v5346, 4294901760
        %v5449 = vsub.f32 %v5346, %v5448
        %5450 = vmatpush.msra.mxu0 %v5449
        %v5451 = vand.u32 %v5349, 4294901760
        %v5452 = vsub.f32 %v5349, %v5451
        %5453 = vmatmul.f32.gmra.mxu0 %v5452
        %v5454 = vpop.f32.mrf.mxu0
        %v5455 = vadd.f32 %v5423, %v5454
        %v5456 = vand.u32 %v5352, 4294901760
        %v5457 = vsub.f32 %v5352, %v5456
        %5458 = vmatmul.f32.gmra.mxu0 %v5457
        %v5459 = vpop.f32.mrf.mxu0
        %v5460 = vadd.f32 %v5427, %v5459
        %v5461 = vand.u32 %v5355, 4294901760
        %v5462 = vsub.f32 %v5355, %v5461
        %5463 = vmatmul.f32.gmra.mxu0 %v5462
        %v5464 = vpop.f32.mrf.mxu0
        %v5465 = vadd.f32 %v5431, %v5464
        %5466 = vdwg.mxu0
        %5467 = vmatpush.msra.mxu0 0.0
        %5468 = vmatpush.msra.mxu0 0.0
        %5469 = vmatpush.msra.mxu0 0.0
        %5470 = vmatpush.msra.mxu0 0.0
        %5471 = vmatpush.msra.mxu0 0.0
        %5472 = vmatpush.msra.mxu0 0.0
        %5473 = vmatpush.msra.mxu0 0.0
        %5474 = vmatpush.msra.mxu0 0.0
        %5475 = vmatpush.msra.mxu0 0.0
        %5476 = vmatpush.msra.mxu0 0.0
        %5477 = vmatpush.msra.mxu0 0.0
        %5478 = vmatpush.msra.mxu0 0.0
        %5479 = vmatpush.msra.mxu0 0.0
        %5480 = vmatpush.msra.mxu0 0.0
        %5481 = vmatpush.msra.mxu0 0.0
        %v5482 = vand.u32 %v5346, 4294901760
        %5483 = vmatpush.msra.mxu0 %v5482
        %v5484 = vand.u32 %v5349, 4294901760
        %v5485 = vsub.f32 %v5349, %v5484
        %v5486 = vand.u32 %v5485, 4294901760
        %5487 = vmatmul.f32.gmra.mxu0 %v5486
        %v5488 = vpop.f32.mrf.mxu0
        %v5489 = vadd.f32 %v5455, %v5488
        %v5490 = vand.u32 %v5352, 4294901760
        %v5491 = vsub.f32 %v5352, %v5490
        %v5492 = vand.u32 %v5491, 4294901760
        %5493 = vmatmul.f32.gmra.mxu0 %v5492
        %v5494 = vpop.f32.mrf.mxu0
        %v5495 = vadd.f32 %v5460, %v5494
        %v5496 = vand.u32 %v5355, 4294901760
        %v5497 = vsub.f32 %v5355, %v5496
        %v5498 = vand.u32 %v5497, 4294901760
        %5499 = vmatmul.f32.gmra.mxu0 %v5498
        %v5500 = vpop.f32.mrf.mxu0
        %v5501 = vadd.f32 %v5465, %v5500
        %5502 = vdwg.mxu0
        %5503 = vmatpush.msra.mxu0 0.0
        %5504 = vmatpush.msra.mxu0 0.0
        %5505 = vmatpush.msra.mxu0 0.0
        %5506 = vmatpush.msra.mxu0 0.0
        %5507 = vmatpush.msra.mxu0 0.0
        %5508 = vmatpush.msra.mxu0 0.0
        %5509 = vmatpush.msra.mxu0 0.0
        %5510 = vmatpush.msra.mxu0 0.0
        %5511 = vmatpush.msra.mxu0 0.0
        %5512 = vmatpush.msra.mxu0 0.0
        %5513 = vmatpush.msra.mxu0 0.0
        %5514 = vmatpush.msra.mxu0 0.0
        %5515 = vmatpush.msra.mxu0 0.0
        %5516 = vmatpush.msra.mxu0 0.0
        %5517 = vmatpush.msra.mxu0 0.0
        %v5518 = vand.u32 %v5346, 4294901760
        %v5519 = vsub.f32 %v5346, %v5518
        %v5520 = vand.u32 %v5519, 4294901760
        %5521 = vmatpush.msra.mxu0 %v5520
        %v5522 = vand.u32 %v5349, 4294901760
        %5523 = vmatmul.f32.gmra.mxu0 %v5522
        %v5524 = vpop.f32.mrf.mxu0
        %v5525 = vadd.f32 %v5489, %v5524
        %v5526 = vand.u32 %v5352, 4294901760
        %5527 = vmatmul.f32.gmra.mxu0 %v5526
        %v5528 = vpop.f32.mrf.mxu0
        %v5529 = vadd.f32 %v5495, %v5528
        %v5530 = vand.u32 %v5355, 4294901760
        %5531 = vmatmul.f32.gmra.mxu0 %v5530
        %v5532 = vpop.f32.mrf.mxu0
        %v5533 = vadd.f32 %v5501, %v5532
        %5534 = vdwg.mxu0
        %5535 = vmatpush.msra.mxu0 0.0
        %5536 = vmatpush.msra.mxu0 0.0
        %5537 = vmatpush.msra.mxu0 0.0
        %5538 = vmatpush.msra.mxu0 0.0
        %5539 = vmatpush.msra.mxu0 0.0
        %5540 = vmatpush.msra.mxu0 0.0
        %5541 = vmatpush.msra.mxu0 0.0
        %5542 = vmatpush.msra.mxu0 0.0
        %5543 = vmatpush.msra.mxu0 0.0
        %5544 = vmatpush.msra.mxu0 0.0
        %5545 = vmatpush.msra.mxu0 0.0
        %5546 = vmatpush.msra.mxu0 0.0
        %5547 = vmatpush.msra.mxu0 0.0
        %5548 = vmatpush.msra.mxu0 0.0
        %5549 = vmatpush.msra.mxu0 0.0
        %v5550 = vand.u32 %v5346, 4294901760
        %5551 = vmatpush.msra.mxu0 %v5550
        %v5552 = vand.u32 %v5349, 4294901760
        %5553 = vmatmul.f32.gmra.mxu0 %v5552
        %v5554 = vpop.f32.mrf.mxu0
        %v5555 = vadd.f32 %v5525, %v5554
        %v5556 = vand.u32 %v5352, 4294901760
        %5557 = vmatmul.f32.gmra.mxu0 %v5556
        %v5558 = vpop.f32.mrf.mxu0
        %v5559 = vadd.f32 %v5529, %v5558
        %v5560 = vand.u32 %v5355, 4294901760
        %5561 = vmatmul.f32.gmra.mxu0 %v5560
        %v5562 = vpop.f32.mrf.mxu0
        %v5563 = vadd.f32 %v5533, %v5562
        %5564 = vdwg.mxu0
        %5565 = vmatpush.msra.mxu0 0.0
        %5566 = vmatpush.msra.mxu0 0.0
        %5567 = vmatpush.msra.mxu0 0.0
        %5568 = vmatpush.msra.mxu0 0.0
        %5569 = vmatpush.msra.mxu0 0.0
        %5570 = vmatpush.msra.mxu0 0.0
        %5571 = vmatpush.msra.mxu0 0.0
        %5572 = vmatpush.msra.mxu0 0.0
        %5573 = vmatpush.msra.mxu0 0.0
        %5574 = vmatpush.msra.mxu0 0.0
        %5575 = vmatpush.msra.mxu0 0.0
        %5576 = vmatpush.msra.mxu0 0.0
        %5577 = vmatpush.msra.mxu0 0.0
        %5578 = vmatpush.msra.mxu0 0.0
        %5579 = vmatpush.msra.mxu0 0.0
        %v5580 = vand.u32 %v5347, 4294901760
        %5581 = vmatpush.msra.mxu0 %v5580
        %v5582 = vand.u32 %v5349, 4294901760
        %v5583 = vsub.f32 %v5349, %v5582
        %v5584 = vand.u32 %v5583, 4294901760
        %v5585 = vsub.f32 %v5583, %v5584
        %v5586 = vand.u32 %v5585, 4294901760
        %5587 = vmatmul.f32.gmra.mxu0 %v5586
        %v5588 = vpop.f32.mrf.mxu0
        %v5589 = vadd.f32 0.0, %v5588
        %v5590 = vand.u32 %v5352, 4294901760
        %v5591 = vsub.f32 %v5352, %v5590
        %v5592 = vand.u32 %v5591, 4294901760
        %v5593 = vsub.f32 %v5591, %v5592
        %v5594 = vand.u32 %v5593, 4294901760
        %5595 = vmatmul.f32.gmra.mxu0 %v5594
        %v5596 = vpop.f32.mrf.mxu0
        %v5597 = vadd.f32 0.0, %v5596
        %v5598 = vand.u32 %v5355, 4294901760
        %v5599 = vsub.f32 %v5355, %v5598
        %v5600 = vand.u32 %v5599, 4294901760
        %v5601 = vsub.f32 %v5599, %v5600
        %v5602 = vand.u32 %v5601, 4294901760
        %5603 = vmatmul.f32.gmra.mxu0 %v5602
        %v5604 = vpop.f32.mrf.mxu0
        %v5605 = vadd.f32 0.0, %v5604
        %5606 = vdwg.mxu0
        %5607 = vmatpush.msra.mxu0 0.0
        %5608 = vmatpush.msra.mxu0 0.0
        %5609 = vmatpush.msra.mxu0 0.0
        %5610 = vmatpush.msra.mxu0 0.0
        %5611 = vmatpush.msra.mxu0 0.0
        %5612 = vmatpush.msra.mxu0 0.0
        %5613 = vmatpush.msra.mxu0 0.0
        %5614 = vmatpush.msra.mxu0 0.0
        %5615 = vmatpush.msra.mxu0 0.0
        %5616 = vmatpush.msra.mxu0 0.0
        %5617 = vmatpush.msra.mxu0 0.0
        %5618 = vmatpush.msra.mxu0 0.0
        %5619 = vmatpush.msra.mxu0 0.0
        %5620 = vmatpush.msra.mxu0 0.0
        %5621 = vmatpush.msra.mxu0 0.0
        %v5622 = vand.u32 %v5347, 4294901760
        %v5623 = vsub.f32 %v5347, %v5622
        %v5624 = vand.u32 %v5623, 4294901760
        %v5625 = vsub.f32 %v5623, %v5624
        %v5626 = vand.u32 %v5625, 4294901760
        %5627 = vmatpush.msra.mxu0 %v5626
        %v5628 = vand.u32 %v5349, 4294901760
        %5629 = vmatmul.f32.gmra.mxu0 %v5628
        %v5630 = vpop.f32.mrf.mxu0
        %v5631 = vadd.f32 %v5589, %v5630
        %v5632 = vand.u32 %v5352, 4294901760
        %5633 = vmatmul.f32.gmra.mxu0 %v5632
        %v5634 = vpop.f32.mrf.mxu0
        %v5635 = vadd.f32 %v5597, %v5634
        %v5636 = vand.u32 %v5355, 4294901760
        %5637 = vmatmul.f32.gmra.mxu0 %v5636
        %v5638 = vpop.f32.mrf.mxu0
        %v5639 = vadd.f32 %v5605, %v5638
        %5640 = vdwg.mxu0
        %5641 = vmatpush.msra.mxu0 0.0
        %5642 = vmatpush.msra.mxu0 0.0
        %5643 = vmatpush.msra.mxu0 0.0
        %5644 = vmatpush.msra.mxu0 0.0
        %5645 = vmatpush.msra.mxu0 0.0
        %5646 = vmatpush.msra.mxu0 0.0
        %5647 = vmatpush.msra.mxu0 0.0
        %5648 = vmatpush.msra.mxu0 0.0
        %5649 = vmatpush.msra.mxu0 0.0
        %5650 = vmatpush.msra.mxu0 0.0
        %5651 = vmatpush.msra.mxu0 0.0
        %5652 = vmatpush.msra.mxu0 0.0
        %5653 = vmatpush.msra.mxu0 0.0
        %5654 = vmatpush.msra.mxu0 0.0
        %5655 = vmatpush.msra.mxu0 0.0
        %v5656 = vand.u32 %v5347, 4294901760
        %v5657 = vsub.f32 %v5347, %v5656
        %5658 = vmatpush.msra.mxu0 %v5657
        %v5659 = vand.u32 %v5349, 4294901760
        %v5660 = vsub.f32 %v5349, %v5659
        %5661 = vmatmul.f32.gmra.mxu0 %v5660
        %v5662 = vpop.f32.mrf.mxu0
        %v5663 = vadd.f32 %v5631, %v5662
        %v5664 = vand.u32 %v5352, 4294901760
        %v5665 = vsub.f32 %v5352, %v5664
        %5666 = vmatmul.f32.gmra.mxu0 %v5665
        %v5667 = vpop.f32.mrf.mxu0
        %v5668 = vadd.f32 %v5635, %v5667
        %v5669 = vand.u32 %v5355, 4294901760
        %v5670 = vsub.f32 %v5355, %v5669
        %5671 = vmatmul.f32.gmra.mxu0 %v5670
        %v5672 = vpop.f32.mrf.mxu0
        %v5673 = vadd.f32 %v5639, %v5672
        %5674 = vdwg.mxu0
        %5675 = vmatpush.msra.mxu0 0.0
        %5676 = vmatpush.msra.mxu0 0.0
        %5677 = vmatpush.msra.mxu0 0.0
        %5678 = vmatpush.msra.mxu0 0.0
        %5679 = vmatpush.msra.mxu0 0.0
        %5680 = vmatpush.msra.mxu0 0.0
        %5681 = vmatpush.msra.mxu0 0.0
        %5682 = vmatpush.msra.mxu0 0.0
        %5683 = vmatpush.msra.mxu0 0.0
        %5684 = vmatpush.msra.mxu0 0.0
        %5685 = vmatpush.msra.mxu0 0.0
        %5686 = vmatpush.msra.mxu0 0.0
        %5687 = vmatpush.msra.mxu0 0.0
        %5688 = vmatpush.msra.mxu0 0.0
        %5689 = vmatpush.msra.mxu0 0.0
        %v5690 = vand.u32 %v5347, 4294901760
        %5691 = vmatpush.msra.mxu0 %v5690
        %v5692 = vand.u32 %v5349, 4294901760
        %v5693 = vsub.f32 %v5349, %v5692
        %v5694 = vand.u32 %v5693, 4294901760
        %5695 = vmatmul.f32.gmra.mxu0 %v5694
        %v5696 = vpop.f32.mrf.mxu0
        %v5697 = vadd.f32 %v5663, %v5696
        %v5698 = vand.u32 %v5352, 4294901760
        %v5699 = vsub.f32 %v5352, %v5698
        %v5700 = vand.u32 %v5699, 4294901760
        %5701 = vmatmul.f32.gmra.mxu0 %v5700
        %v5702 = vpop.f32.mrf.mxu0
        %v5703 = vadd.f32 %v5668, %v5702
        %v5704 = vand.u32 %v5355, 4294901760
        %v5705 = vsub.f32 %v5355, %v5704
        %v5706 = vand.u32 %v5705, 4294901760
        %5707 = vmatmul.f32.gmra.mxu0 %v5706
        %v5708 = vpop.f32.mrf.mxu0
        %v5709 = vadd.f32 %v5673, %v5708
        %5710 = vdwg.mxu0
        %5711 = vmatpush.msra.mxu0 0.0
        %5712 = vmatpush.msra.mxu0 0.0
        %5713 = vmatpush.msra.mxu0 0.0
        %5714 = vmatpush.msra.mxu0 0.0
        %5715 = vmatpush.msra.mxu0 0.0
        %5716 = vmatpush.msra.mxu0 0.0
        %5717 = vmatpush.msra.mxu0 0.0
        %5718 = vmatpush.msra.mxu0 0.0
        %5719 = vmatpush.msra.mxu0 0.0
        %5720 = vmatpush.msra.mxu0 0.0
        %5721 = vmatpush.msra.mxu0 0.0
        %5722 = vmatpush.msra.mxu0 0.0
        %5723 = vmatpush.msra.mxu0 0.0
        %5724 = vmatpush.msra.mxu0 0.0
        %5725 = vmatpush.msra.mxu0 0.0
        %v5726 = vand.u32 %v5347, 4294901760
        %v5727 = vsub.f32 %v5347, %v5726
        %v5728 = vand.u32 %v5727, 4294901760
        %5729 = vmatpush.msra.mxu0 %v5728
        %v5730 = vand.u32 %v5349, 4294901760
        %5731 = vmatmul.f32.gmra.mxu0 %v5730
        %v5732 = vpop.f32.mrf.mxu0
        %v5733 = vadd.f32 %v5697, %v5732
        %v5734 = vand.u32 %v5352, 4294901760
        %5735 = vmatmul.f32.gmra.mxu0 %v5734
        %v5736 = vpop.f32.mrf.mxu0
        %v5737 = vadd.f32 %v5703, %v5736
        %v5738 = vand.u32 %v5355, 4294901760
        %5739 = vmatmul.f32.gmra.mxu0 %v5738
        %v5740 = vpop.f32.mrf.mxu0
        %v5741 = vadd.f32 %v5709, %v5740
        %5742 = vdwg.mxu0
        %5743 = vmatpush.msra.mxu0 0.0
        %5744 = vmatpush.msra.mxu0 0.0
        %5745 = vmatpush.msra.mxu0 0.0
        %5746 = vmatpush.msra.mxu0 0.0
        %5747 = vmatpush.msra.mxu0 0.0
        %5748 = vmatpush.msra.mxu0 0.0
        %5749 = vmatpush.msra.mxu0 0.0
        %5750 = vmatpush.msra.mxu0 0.0
        %5751 = vmatpush.msra.mxu0 0.0
        %5752 = vmatpush.msra.mxu0 0.0
        %5753 = vmatpush.msra.mxu0 0.0
        %5754 = vmatpush.msra.mxu0 0.0
        %5755 = vmatpush.msra.mxu0 0.0
        %5756 = vmatpush.msra.mxu0 0.0
        %5757 = vmatpush.msra.mxu0 0.0
        %v5758 = vand.u32 %v5347, 4294901760
        %5759 = vmatpush.msra.mxu0 %v5758
        %v5760 = vand.u32 %v5349, 4294901760
        %5761 = vmatmul.f32.gmra.mxu0 %v5760
        %v5762 = vpop.f32.mrf.mxu0
        %v5763 = vadd.f32 %v5733, %v5762
        %v5764 = vand.u32 %v5352, 4294901760
        %5765 = vmatmul.f32.gmra.mxu0 %v5764
        %v5766 = vpop.f32.mrf.mxu0
        %v5767 = vadd.f32 %v5737, %v5766
        %v5768 = vand.u32 %v5355, 4294901760
        %5769 = vmatmul.f32.gmra.mxu0 %v5768
        %v5770 = vpop.f32.mrf.mxu0
        %v5771 = vadd.f32 %v5741, %v5770
        %5772 = vdwg.mxu0
        %5774 = vset.pattern.permute.xlu0 4
        %5775 = vperm.xlu0 %5774, %v5259
        %v5776 = vpop.permute.xlu0 %5775
        %5779 = vset.pattern.permute.xlu0 4
        %5780 = vperm.xlu0 %5779, %v5260
        %v5781 = vpop.permute.xlu0 %5780
        %5784 = vset.pattern.permute.xlu0 4
        %5785 = vperm.xlu0 %5784, %v5261
        %v5786 = vpop.permute.xlu0 %5785
        %v5788 = vmul.f32 %v5555, %v5776
        %v5789 = vmul.f32 %v5763, %v5776
        %v5790 = vmul.f32 %v5559, %v5781
        %v5791 = vmul.f32 %v5767, %v5781
        %v5792 = vmul.f32 %v5563, %v5786
        %v5793 = vmul.f32 %v5771, %v5786
        %5794 = vrot.lane.b32.xlu0 %v5555, 17
        %v5795 = vpop.permute.xlu0 %5794
        %5796 = vrot.lane.b32.xlu0 %v5559, 17
        %v5797 = vpop.permute.xlu0 %5796
        %5798 = vrot.lane.b32.xlu0 %v5563, 17
        %v5799 = vpop.permute.xlu0 %5798
        %5800 = vrot.lane.b32.xlu0 %v5763, 17
        %v5801 = vpop.permute.xlu0 %5800
        %5802 = vrot.lane.b32.xlu0 %v5767, 17
        %v5803 = vpop.permute.xlu0 %5802
        %5804 = vrot.lane.b32.xlu0 %v5771, 17
        %v5805 = vpop.permute.xlu0 %5804
        %v5806 = vsel %vm1895, %v5795, %v5801
        %v5807 = vsel %vm1895, %v5797, %v5803
        %v5808 = vsel %vm1895, %v5799, %v5805
        %v5809 = vsel %vm1895, %v5801, %v5795
        %v5810 = vsel %vm1895, %v5803, %v5797
        %v5811 = vsel %vm1895, %v5805, %v5799
        %v5812 = vmul.f32 %v5809, %v1898
        %v5813 = vmul.f32 %v5806, %v1899
        %v5814 = vmul.f32 %v5810, %v1898
        %v5815 = vmul.f32 %v5807, %v1899
        %v5816 = vmul.f32 %v5811, %v1898
        %v5817 = vmul.f32 %v5808, %v1899
        %5818 = vset.pattern.permute.xlu0 0
        %5819 = vperm.xlu0 %5818, %v5259
        %v5820 = vpop.permute.xlu0 %5819
        %5822 = vset.pattern.permute.xlu0 0
        %5823 = vperm.xlu0 %5822, %v5260
        %v5824 = vpop.permute.xlu0 %5823
        %5826 = vset.pattern.permute.xlu0 0
        %5827 = vperm.xlu0 %5826, %v5261
        %v5828 = vpop.permute.xlu0 %5827
        %v5830 = vmul.f32 %v5812, %v5820
        %v5831 = vmul.f32 %v5813, %v5820
        %v5832 = vmul.f32 %v5814, %v5824
        %v5833 = vmul.f32 %v5815, %v5824
        %v5834 = vmul.f32 %v5816, %v5828
        %v5835 = vmul.f32 %v5817, %v5828
        %v5836 = vadd.f32 %v5788, %v5830
        %v5837 = vadd.f32 %v5789, %v5831
        %v5838 = vadd.f32 %v5790, %v5832
        %v5839 = vadd.f32 %v5791, %v5833
        %v5840 = vadd.f32 %v5792, %v5834
        %v5841 = vadd.f32 %v5793, %v5835
        %5842 = vrot.lane.b32.xlu0 %v5555, 16
        %v5843 = vpop.permute.xlu0 %5842
        %5844 = vrot.lane.b32.xlu0 %v5559, 16
        %v5845 = vpop.permute.xlu0 %5844
        %5846 = vrot.lane.b32.xlu0 %v5563, 16
        %v5847 = vpop.permute.xlu0 %5846
        %5848 = vrot.lane.b32.xlu0 %v5763, 16
        %v5849 = vpop.permute.xlu0 %5848
        %5850 = vrot.lane.b32.xlu0 %v5767, 16
        %v5851 = vpop.permute.xlu0 %5850
        %5852 = vrot.lane.b32.xlu0 %v5771, 16
        %v5853 = vpop.permute.xlu0 %5852
        %v5854 = vsel %vm1914, %v5843, %v5849
        %v5855 = vsel %vm1914, %v5845, %v5851
        %v5856 = vsel %vm1914, %v5847, %v5853
        %v5857 = vsel %vm1914, %v5849, %v5843
        %v5858 = vsel %vm1914, %v5851, %v5845
        %v5859 = vsel %vm1914, %v5853, %v5847
        %v5860 = vmul.f32 %v5857, %v1917
        %v5861 = vmul.f32 %v5854, %v1918
        %v5862 = vmul.f32 %v5858, %v1917
        %v5863 = vmul.f32 %v5855, %v1918
        %v5864 = vmul.f32 %v5859, %v1917
        %v5865 = vmul.f32 %v5856, %v1918
        %5866 = vset.pattern.permute.xlu0 1
        %5867 = vperm.xlu0 %5866, %v5259
        %v5868 = vpop.permute.xlu0 %5867
        %5870 = vset.pattern.permute.xlu0 1
        %5871 = vperm.xlu0 %5870, %v5260
        %v5872 = vpop.permute.xlu0 %5871
        %5874 = vset.pattern.permute.xlu0 1
        %5875 = vperm.xlu0 %5874, %v5261
        %v5876 = vpop.permute.xlu0 %5875
        %v5878 = vmul.f32 %v5860, %v5868
        %v5879 = vmul.f32 %v5861, %v5868
        %v5880 = vmul.f32 %v5862, %v5872
        %v5881 = vmul.f32 %v5863, %v5872
        %v5882 = vmul.f32 %v5864, %v5876
        %v5883 = vmul.f32 %v5865, %v5876
        %v5884 = vadd.f32 %v5836, %v5878
        %v5885 = vadd.f32 %v5837, %v5879
        %v5886 = vadd.f32 %v5838, %v5880
        %v5887 = vadd.f32 %v5839, %v5881
        %v5888 = vadd.f32 %v5840, %v5882
        %v5889 = vadd.f32 %v5841, %v5883
        %5890 = vrot.lane.b32.xlu0 %v5555, 15
        %v5891 = vpop.permute.xlu0 %5890
        %5892 = vrot.lane.b32.xlu0 %v5559, 15
        %v5893 = vpop.permute.xlu0 %5892
        %5894 = vrot.lane.b32.xlu0 %v5563, 15
        %v5895 = vpop.permute.xlu0 %5894
        %5896 = vrot.lane.b32.xlu0 %v5763, 15
        %v5897 = vpop.permute.xlu0 %5896
        %5898 = vrot.lane.b32.xlu0 %v5767, 15
        %v5899 = vpop.permute.xlu0 %5898
        %5900 = vrot.lane.b32.xlu0 %v5771, 15
        %v5901 = vpop.permute.xlu0 %5900
        %v5902 = vsel %vm1933, %v5891, %v5897
        %v5903 = vsel %vm1933, %v5893, %v5899
        %v5904 = vsel %vm1933, %v5895, %v5901
        %v5905 = vsel %vm1933, %v5897, %v5891
        %v5906 = vsel %vm1933, %v5899, %v5893
        %v5907 = vsel %vm1933, %v5901, %v5895
        %v5908 = vmul.f32 %v5905, %v1936
        %v5909 = vmul.f32 %v5902, %v1937
        %v5910 = vmul.f32 %v5906, %v1936
        %v5911 = vmul.f32 %v5903, %v1937
        %v5912 = vmul.f32 %v5907, %v1936
        %v5913 = vmul.f32 %v5904, %v1937
        %5914 = vset.pattern.permute.xlu0 2
        %5915 = vperm.xlu0 %5914, %v5259
        %v5916 = vpop.permute.xlu0 %5915
        %5918 = vset.pattern.permute.xlu0 2
        %5919 = vperm.xlu0 %5918, %v5260
        %v5920 = vpop.permute.xlu0 %5919
        %5922 = vset.pattern.permute.xlu0 2
        %5923 = vperm.xlu0 %5922, %v5261
        %v5924 = vpop.permute.xlu0 %5923
        %v5926 = vmul.f32 %v5908, %v5916
        %v5927 = vmul.f32 %v5909, %v5916
        %v5928 = vmul.f32 %v5910, %v5920
        %v5929 = vmul.f32 %v5911, %v5920
        %v5930 = vmul.f32 %v5912, %v5924
        %v5931 = vmul.f32 %v5913, %v5924
        %v5932 = vadd.f32 %v5884, %v5926
        %v5933 = vadd.f32 %v5885, %v5927
        %v5934 = vadd.f32 %v5886, %v5928
        %v5935 = vadd.f32 %v5887, %v5929
        %v5936 = vadd.f32 %v5888, %v5930
        %v5937 = vadd.f32 %v5889, %v5931
        %5938 = vrot.lane.b32.xlu0 %v5555, 1
        %v5939 = vpop.permute.xlu0 %5938
        %5940 = vrot.lane.b32.xlu0 %v5559, 1
        %v5941 = vpop.permute.xlu0 %5940
        %5942 = vrot.lane.b32.xlu0 %v5563, 1
        %v5943 = vpop.permute.xlu0 %5942
        %5944 = vrot.lane.b32.xlu0 %v5763, 1
        %v5945 = vpop.permute.xlu0 %5944
        %5946 = vrot.lane.b32.xlu0 %v5767, 1
        %v5947 = vpop.permute.xlu0 %5946
        %5948 = vrot.lane.b32.xlu0 %v5771, 1
        %v5949 = vpop.permute.xlu0 %5948
        %v5950 = vsel %vm1952, %v5939, %v5945
        %v5951 = vsel %vm1952, %v5941, %v5947
        %v5952 = vsel %vm1952, %v5943, %v5949
        %v5953 = vsel %vm1952, %v5945, %v5939
        %v5954 = vsel %vm1952, %v5947, %v5941
        %v5955 = vsel %vm1952, %v5949, %v5943
        %v5956 = vmul.f32 %v5953, %v1955
        %v5957 = vmul.f32 %v5950, %v1956
        %v5958 = vmul.f32 %v5954, %v1955
        %v5959 = vmul.f32 %v5951, %v1956
        %v5960 = vmul.f32 %v5955, %v1955
        %v5961 = vmul.f32 %v5952, %v1956
        %5962 = vset.pattern.permute.xlu0 3
        %5963 = vperm.xlu0 %5962, %v5259
        %v5964 = vpop.permute.xlu0 %5963
        %5966 = vset.pattern.permute.xlu0 3
        %5967 = vperm.xlu0 %5966, %v5260
        %v5968 = vpop.permute.xlu0 %5967
        %5970 = vset.pattern.permute.xlu0 3
        %5971 = vperm.xlu0 %5970, %v5261
        %v5972 = vpop.permute.xlu0 %5971
        %v5974 = vmul.f32 %v5956, %v5964
        %v5975 = vmul.f32 %v5957, %v5964
        %v5976 = vmul.f32 %v5958, %v5968
        %v5977 = vmul.f32 %v5959, %v5968
        %v5978 = vmul.f32 %v5960, %v5972
        %v5979 = vmul.f32 %v5961, %v5972
        %v5980 = vadd.f32 %v5932, %v5974
        %v5981 = vadd.f32 %v5933, %v5975
        %v5982 = vadd.f32 %v5934, %v5976
        %v5983 = vadd.f32 %v5935, %v5977
        %v5984 = vadd.f32 %v5936, %v5978
        %v5985 = vadd.f32 %v5937, %v5979
        %5986 = vrot.lane.b32.xlu0 %v5555, 127
        %v5987 = vpop.permute.xlu0 %5986
        %5988 = vrot.lane.b32.xlu0 %v5559, 127
        %v5989 = vpop.permute.xlu0 %5988
        %5990 = vrot.lane.b32.xlu0 %v5563, 127
        %v5991 = vpop.permute.xlu0 %5990
        %5992 = vrot.lane.b32.xlu0 %v5763, 127
        %v5993 = vpop.permute.xlu0 %5992
        %5994 = vrot.lane.b32.xlu0 %v5767, 127
        %v5995 = vpop.permute.xlu0 %5994
        %5996 = vrot.lane.b32.xlu0 %v5771, 127
        %v5997 = vpop.permute.xlu0 %5996
        %v5998 = vsel %vm1971, %v5987, %v5993
        %v5999 = vsel %vm1971, %v5989, %v5995
        %v6000 = vsel %vm1971, %v5991, %v5997
        %v6001 = vsel %vm1971, %v5993, %v5987
        %v6002 = vsel %vm1971, %v5995, %v5989
        %v6003 = vsel %vm1971, %v5997, %v5991
        %v6004 = vmul.f32 %v5998, %v1974
        %v6005 = vmul.f32 %v6001, %v1975
        %v6006 = vmul.f32 %v5999, %v1974
        %v6007 = vmul.f32 %v6002, %v1975
        %v6008 = vmul.f32 %v6000, %v1974
        %v6009 = vmul.f32 %v6003, %v1975
        %6010 = vset.pattern.permute.xlu0 5
        %6011 = vperm.xlu0 %6010, %v5259
        %v6012 = vpop.permute.xlu0 %6011
        %6014 = vset.pattern.permute.xlu0 5
        %6015 = vperm.xlu0 %6014, %v5260
        %v6016 = vpop.permute.xlu0 %6015
        %6018 = vset.pattern.permute.xlu0 5
        %6019 = vperm.xlu0 %6018, %v5261
        %v6020 = vpop.permute.xlu0 %6019
        %v6022 = vmul.f32 %v6004, %v6012
        %v6023 = vmul.f32 %v6005, %v6012
        %v6024 = vmul.f32 %v6006, %v6016
        %v6025 = vmul.f32 %v6007, %v6016
        %v6026 = vmul.f32 %v6008, %v6020
        %v6027 = vmul.f32 %v6009, %v6020
        %v6028 = vadd.f32 %v5980, %v6022
        %v6029 = vadd.f32 %v5981, %v6023
        %v6030 = vadd.f32 %v5982, %v6024
        %v6031 = vadd.f32 %v5983, %v6025
        %v6032 = vadd.f32 %v5984, %v6026
        %v6033 = vadd.f32 %v5985, %v6027
        %6034 = vrot.lane.b32.xlu0 %v5555, 113
        %v6035 = vpop.permute.xlu0 %6034
        %6036 = vrot.lane.b32.xlu0 %v5559, 113
        %v6037 = vpop.permute.xlu0 %6036
        %6038 = vrot.lane.b32.xlu0 %v5563, 113
        %v6039 = vpop.permute.xlu0 %6038
        %6040 = vrot.lane.b32.xlu0 %v5763, 113
        %v6041 = vpop.permute.xlu0 %6040
        %6042 = vrot.lane.b32.xlu0 %v5767, 113
        %v6043 = vpop.permute.xlu0 %6042
        %6044 = vrot.lane.b32.xlu0 %v5771, 113
        %v6045 = vpop.permute.xlu0 %6044
        %v6046 = vsel %vm1990, %v6035, %v6041
        %v6047 = vsel %vm1990, %v6037, %v6043
        %v6048 = vsel %vm1990, %v6039, %v6045
        %v6049 = vsel %vm1990, %v6041, %v6035
        %v6050 = vsel %vm1990, %v6043, %v6037
        %v6051 = vsel %vm1990, %v6045, %v6039
        %v6052 = vmul.f32 %v6046, %v1993
        %v6053 = vmul.f32 %v6049, %v1994
        %v6054 = vmul.f32 %v6047, %v1993
        %v6055 = vmul.f32 %v6050, %v1994
        %v6056 = vmul.f32 %v6048, %v1993
        %v6057 = vmul.f32 %v6051, %v1994
        %6058 = vset.pattern.permute.xlu0 6
        %6059 = vperm.xlu0 %6058, %v5259
        %v6060 = vpop.permute.xlu0 %6059
        %6062 = vset.pattern.permute.xlu0 6
        %6063 = vperm.xlu0 %6062, %v5260
        %v6064 = vpop.permute.xlu0 %6063
        %6066 = vset.pattern.permute.xlu0 6
        %6067 = vperm.xlu0 %6066, %v5261
        %v6068 = vpop.permute.xlu0 %6067
        %v6070 = vmul.f32 %v6052, %v6060
        %v6071 = vmul.f32 %v6053, %v6060
        %v6072 = vmul.f32 %v6054, %v6064
        %v6073 = vmul.f32 %v6055, %v6064
        %v6074 = vmul.f32 %v6056, %v6068
        %v6075 = vmul.f32 %v6057, %v6068
        %v6076 = vadd.f32 %v6028, %v6070
        %v6077 = vadd.f32 %v6029, %v6071
        %v6078 = vadd.f32 %v6030, %v6072
        %v6079 = vadd.f32 %v6031, %v6073
        %v6080 = vadd.f32 %v6032, %v6074
        %v6081 = vadd.f32 %v6033, %v6075
        %6082 = vrot.lane.b32.xlu0 %v5555, 112
        %v6083 = vpop.permute.xlu0 %6082
        %6084 = vrot.lane.b32.xlu0 %v5559, 112
        %v6085 = vpop.permute.xlu0 %6084
        %6086 = vrot.lane.b32.xlu0 %v5563, 112
        %v6087 = vpop.permute.xlu0 %6086
        %6088 = vrot.lane.b32.xlu0 %v5763, 112
        %v6089 = vpop.permute.xlu0 %6088
        %6090 = vrot.lane.b32.xlu0 %v5767, 112
        %v6091 = vpop.permute.xlu0 %6090
        %6092 = vrot.lane.b32.xlu0 %v5771, 112
        %v6093 = vpop.permute.xlu0 %6092
        %v6094 = vsel %vm2009, %v6083, %v6089
        %v6095 = vsel %vm2009, %v6085, %v6091
        %v6096 = vsel %vm2009, %v6087, %v6093
        %v6097 = vsel %vm2009, %v6089, %v6083
        %v6098 = vsel %vm2009, %v6091, %v6085
        %v6099 = vsel %vm2009, %v6093, %v6087
        %v6100 = vmul.f32 %v6094, %v2012
        %v6101 = vmul.f32 %v6097, %v2013
        %v6102 = vmul.f32 %v6095, %v2012
        %v6103 = vmul.f32 %v6098, %v2013
        %v6104 = vmul.f32 %v6096, %v2012
        %v6105 = vmul.f32 %v6099, %v2013
        %6106 = vset.pattern.permute.xlu0 7
        %6107 = vperm.xlu0 %6106, %v5259
        %v6108 = vpop.permute.xlu0 %6107
        %6110 = vset.pattern.permute.xlu0 7
        %6111 = vperm.xlu0 %6110, %v5260
        %v6112 = vpop.permute.xlu0 %6111
        %6114 = vset.pattern.permute.xlu0 7
        %6115 = vperm.xlu0 %6114, %v5261
        %v6116 = vpop.permute.xlu0 %6115
        %v6118 = vmul.f32 %v6100, %v6108
        %v6119 = vmul.f32 %v6101, %v6108
        %v6120 = vmul.f32 %v6102, %v6112
        %v6121 = vmul.f32 %v6103, %v6112
        %v6122 = vmul.f32 %v6104, %v6116
        %v6123 = vmul.f32 %v6105, %v6116
        %v6124 = vadd.f32 %v6076, %v6118
        %v6125 = vadd.f32 %v6077, %v6119
        %v6126 = vadd.f32 %v6078, %v6120
        %v6127 = vadd.f32 %v6079, %v6121
        %v6128 = vadd.f32 %v6080, %v6122
        %v6129 = vadd.f32 %v6081, %v6123
        %6130 = vrot.lane.b32.xlu0 %v5555, 111
        %v6131 = vpop.permute.xlu0 %6130
        %6132 = vrot.lane.b32.xlu0 %v5559, 111
        %v6133 = vpop.permute.xlu0 %6132
        %6134 = vrot.lane.b32.xlu0 %v5563, 111
        %v6135 = vpop.permute.xlu0 %6134
        %6136 = vrot.lane.b32.xlu0 %v5763, 111
        %v6137 = vpop.permute.xlu0 %6136
        %6138 = vrot.lane.b32.xlu0 %v5767, 111
        %v6139 = vpop.permute.xlu0 %6138
        %6140 = vrot.lane.b32.xlu0 %v5771, 111
        %v6141 = vpop.permute.xlu0 %6140
        %v6142 = vsel %vm2028, %v6131, %v6137
        %v6143 = vsel %vm2028, %v6133, %v6139
        %v6144 = vsel %vm2028, %v6135, %v6141
        %v6145 = vsel %vm2028, %v6137, %v6131
        %v6146 = vsel %vm2028, %v6139, %v6133
        %v6147 = vsel %vm2028, %v6141, %v6135
        %v6148 = vmul.f32 %v6142, %v2031
        %v6149 = vmul.f32 %v6145, %v2032
        %v6150 = vmul.f32 %v6143, %v2031
        %v6151 = vmul.f32 %v6146, %v2032
        %v6152 = vmul.f32 %v6144, %v2031
        %v6153 = vmul.f32 %v6147, %v2032
        %6154 = vset.pattern.permute.xlu0 8
        %6155 = vperm.xlu0 %6154, %v5259
        %v6156 = vpop.permute.xlu0 %6155
        %6158 = vset.pattern.permute.xlu0 8
        %6159 = vperm.xlu0 %6158, %v5260
        %v6160 = vpop.permute.xlu0 %6159
        %6162 = vset.pattern.permute.xlu0 8
        %6163 = vperm.xlu0 %6162, %v5261
        %v6164 = vpop.permute.xlu0 %6163
        %v6166 = vmul.f32 %v6148, %v6156
        %v6167 = vmul.f32 %v6149, %v6156
        %v6168 = vmul.f32 %v6150, %v6160
        %v6169 = vmul.f32 %v6151, %v6160
        %v6170 = vmul.f32 %v6152, %v6164
        %v6171 = vmul.f32 %v6153, %v6164
        %v6172 = vadd.f32 %v6124, %v6166
        %v6173 = vadd.f32 %v6125, %v6167
        %v6174 = vadd.f32 %v6126, %v6168
        %v6175 = vadd.f32 %v6127, %v6169
        %v6176 = vadd.f32 %v6128, %v6170
        %v6177 = vadd.f32 %v6129, %v6171
        %v6178 = vmul.f32 %v6172, %v6172
        %v6179 = vmul.f32 %v6173, %v6173
        %v6180 = vadd.f32 %v6178, %v6179
        %6181 = vadd.xlane.f32.xlu0 %v6180
        %v6182 = vpop.xlane.xlu0 %6181
        %v6183 = vmax.f32 %v6182, 1e-24
        %v6184 = vrsqrt.pop %v6183
        %v6185 = vmul.f32 %v6184, %v6183
        %v6186 = vmul.f32 %v6185, %v6184
        %v6187 = vmul.f32 0.5, %v6186
        %v6188 = vsub.f32 1.5, %v6187
        %v6189 = vmul.f32 %v6184, %v6188
        %vm6190 = vweird.f32 %v6183
        %vm6191 = vweird.f32 %v6184
        %vm6192 = vmor %vm6190, %vm6191
        %v6193 = vsel %vm6192, %v6184, %v6189
        %v6194 = vmul.f32 %v6172, %v6193
        %v6195 = vmul.f32 %v6173, %v6193
        %v6196 = vmul.f32 %v6174, %v6174
        %v6197 = vmul.f32 %v6175, %v6175
        %v6198 = vadd.f32 %v6196, %v6197
        %6199 = vadd.xlane.f32.xlu0 %v6198
        %v6200 = vpop.xlane.xlu0 %6199
        %v6201 = vmax.f32 %v6200, 1e-24
        %v6202 = vrsqrt.pop %v6201
        %v6203 = vmul.f32 %v6202, %v6201
        %v6204 = vmul.f32 %v6203, %v6202
        %v6205 = vmul.f32 0.5, %v6204
        %v6206 = vsub.f32 1.5, %v6205
        %v6207 = vmul.f32 %v6202, %v6206
        %vm6208 = vweird.f32 %v6201
        %vm6209 = vweird.f32 %v6202
        %vm6210 = vmor %vm6208, %vm6209
        %v6211 = vsel %vm6210, %v6202, %v6207
        %v6212 = vmul.f32 %v6174, %v6211
        %v6213 = vmul.f32 %v6175, %v6211
        %6214 = vmatpush.xpose.msra.mxu0 0.0
        %6215 = vmatpush.xpose.msra.mxu0 0.0
        %6216 = vmatpush.xpose.msra.mxu0 0.0
        %6217 = vmatpush.xpose.msra.mxu0 0.0
        %6218 = vmatpush.xpose.msra.mxu0 0.0
        %6219 = vmatpush.xpose.msra.mxu0 0.0
        %6220 = vmatpush.xpose.msra.mxu0 0.0
        %6221 = vmatpush.xpose.msra.mxu0 0.0
        %6222 = vmatpush.xpose.msra.mxu0 0.0
        %6223 = vmatpush.xpose.msra.mxu0 0.0
        %6224 = vmatpush.xpose.msra.mxu0 0.0
        %6225 = vmatpush.xpose.msra.mxu0 0.0
        %6226 = vmatpush.xpose.msra.mxu0 0.0
        %6227 = vmatpush.xpose.msra.mxu0 0.0
        %6228 = vmatpush.xpose.msra.mxu0 0.0
        %v6229 = vand.u32 %v6212, 4294901760
        %6230 = vmatpush.xpose.msra.mxu0 %v6229
        %v6231 = vand.u32 %v6194, 4294901760
        %v6232 = vsub.f32 %v6194, %v6231
        %v6233 = vand.u32 %v6232, 4294901760
        %v6234 = vsub.f32 %v6232, %v6233
        %v6235 = vand.u32 %v6234, 4294901760
        %6236 = vmatmul.f32.gmra.mxu0 %v6235
        %v6237 = vpop.f32.mrf.mxu0
        %v6238 = vadd.f32 0.0, %v6237
        %6239 = vdwg.mxu0
        %6240 = vmatpush.xpose.msra.mxu0 0.0
        %6241 = vmatpush.xpose.msra.mxu0 0.0
        %6242 = vmatpush.xpose.msra.mxu0 0.0
        %6243 = vmatpush.xpose.msra.mxu0 0.0
        %6244 = vmatpush.xpose.msra.mxu0 0.0
        %6245 = vmatpush.xpose.msra.mxu0 0.0
        %6246 = vmatpush.xpose.msra.mxu0 0.0
        %6247 = vmatpush.xpose.msra.mxu0 0.0
        %6248 = vmatpush.xpose.msra.mxu0 0.0
        %6249 = vmatpush.xpose.msra.mxu0 0.0
        %6250 = vmatpush.xpose.msra.mxu0 0.0
        %6251 = vmatpush.xpose.msra.mxu0 0.0
        %6252 = vmatpush.xpose.msra.mxu0 0.0
        %6253 = vmatpush.xpose.msra.mxu0 0.0
        %6254 = vmatpush.xpose.msra.mxu0 0.0
        %v6255 = vand.u32 %v6212, 4294901760
        %v6256 = vsub.f32 %v6212, %v6255
        %v6257 = vand.u32 %v6256, 4294901760
        %v6258 = vsub.f32 %v6256, %v6257
        %v6259 = vand.u32 %v6258, 4294901760
        %6260 = vmatpush.xpose.msra.mxu0 %v6259
        %v6261 = vand.u32 %v6194, 4294901760
        %6262 = vmatmul.f32.gmra.mxu0 %v6261
        %v6263 = vpop.f32.mrf.mxu0
        %v6264 = vadd.f32 %v6238, %v6263
        %6265 = vdwg.mxu0
        %6266 = vmatpush.xpose.msra.mxu0 0.0
        %6267 = vmatpush.xpose.msra.mxu0 0.0
        %6268 = vmatpush.xpose.msra.mxu0 0.0
        %6269 = vmatpush.xpose.msra.mxu0 0.0
        %6270 = vmatpush.xpose.msra.mxu0 0.0
        %6271 = vmatpush.xpose.msra.mxu0 0.0
        %6272 = vmatpush.xpose.msra.mxu0 0.0
        %6273 = vmatpush.xpose.msra.mxu0 0.0
        %6274 = vmatpush.xpose.msra.mxu0 0.0
        %6275 = vmatpush.xpose.msra.mxu0 0.0
        %6276 = vmatpush.xpose.msra.mxu0 0.0
        %6277 = vmatpush.xpose.msra.mxu0 0.0
        %6278 = vmatpush.xpose.msra.mxu0 0.0
        %6279 = vmatpush.xpose.msra.mxu0 0.0
        %6280 = vmatpush.xpose.msra.mxu0 0.0
        %v6281 = vand.u32 %v6212, 4294901760
        %v6282 = vsub.f32 %v6212, %v6281
        %6283 = vmatpush.xpose.msra.mxu0 %v6282
        %v6284 = vand.u32 %v6194, 4294901760
        %v6285 = vsub.f32 %v6194, %v6284
        %6286 = vmatmul.f32.gmra.mxu0 %v6285
        %v6287 = vpop.f32.mrf.mxu0
        %v6288 = vadd.f32 %v6264, %v6287
        %6289 = vdwg.mxu0
        %6290 = vmatpush.xpose.msra.mxu0 0.0
        %6291 = vmatpush.xpose.msra.mxu0 0.0
        %6292 = vmatpush.xpose.msra.mxu0 0.0
        %6293 = vmatpush.xpose.msra.mxu0 0.0
        %6294 = vmatpush.xpose.msra.mxu0 0.0
        %6295 = vmatpush.xpose.msra.mxu0 0.0
        %6296 = vmatpush.xpose.msra.mxu0 0.0
        %6297 = vmatpush.xpose.msra.mxu0 0.0
        %6298 = vmatpush.xpose.msra.mxu0 0.0
        %6299 = vmatpush.xpose.msra.mxu0 0.0
        %6300 = vmatpush.xpose.msra.mxu0 0.0
        %6301 = vmatpush.xpose.msra.mxu0 0.0
        %6302 = vmatpush.xpose.msra.mxu0 0.0
        %6303 = vmatpush.xpose.msra.mxu0 0.0
        %6304 = vmatpush.xpose.msra.mxu0 0.0
        %v6305 = vand.u32 %v6212, 4294901760
        %6306 = vmatpush.xpose.msra.mxu0 %v6305
        %v6307 = vand.u32 %v6194, 4294901760
        %v6308 = vsub.f32 %v6194, %v6307
        %v6309 = vand.u32 %v6308, 4294901760
        %6310 = vmatmul.f32.gmra.mxu0 %v6309
        %v6311 = vpop.f32.mrf.mxu0
        %v6312 = vadd.f32 %v6288, %v6311
        %6313 = vdwg.mxu0
        %6314 = vmatpush.xpose.msra.mxu0 0.0
        %6315 = vmatpush.xpose.msra.mxu0 0.0
        %6316 = vmatpush.xpose.msra.mxu0 0.0
        %6317 = vmatpush.xpose.msra.mxu0 0.0
        %6318 = vmatpush.xpose.msra.mxu0 0.0
        %6319 = vmatpush.xpose.msra.mxu0 0.0
        %6320 = vmatpush.xpose.msra.mxu0 0.0
        %6321 = vmatpush.xpose.msra.mxu0 0.0
        %6322 = vmatpush.xpose.msra.mxu0 0.0
        %6323 = vmatpush.xpose.msra.mxu0 0.0
        %6324 = vmatpush.xpose.msra.mxu0 0.0
        %6325 = vmatpush.xpose.msra.mxu0 0.0
        %6326 = vmatpush.xpose.msra.mxu0 0.0
        %6327 = vmatpush.xpose.msra.mxu0 0.0
        %6328 = vmatpush.xpose.msra.mxu0 0.0
        %v6329 = vand.u32 %v6212, 4294901760
        %v6330 = vsub.f32 %v6212, %v6329
        %v6331 = vand.u32 %v6330, 4294901760
        %6332 = vmatpush.xpose.msra.mxu0 %v6331
        %v6333 = vand.u32 %v6194, 4294901760
        %6334 = vmatmul.f32.gmra.mxu0 %v6333
        %v6335 = vpop.f32.mrf.mxu0
        %v6336 = vadd.f32 %v6312, %v6335
        %6337 = vdwg.mxu0
        %6338 = vmatpush.xpose.msra.mxu0 0.0
        %6339 = vmatpush.xpose.msra.mxu0 0.0
        %6340 = vmatpush.xpose.msra.mxu0 0.0
        %6341 = vmatpush.xpose.msra.mxu0 0.0
        %6342 = vmatpush.xpose.msra.mxu0 0.0
        %6343 = vmatpush.xpose.msra.mxu0 0.0
        %6344 = vmatpush.xpose.msra.mxu0 0.0
        %6345 = vmatpush.xpose.msra.mxu0 0.0
        %6346 = vmatpush.xpose.msra.mxu0 0.0
        %6347 = vmatpush.xpose.msra.mxu0 0.0
        %6348 = vmatpush.xpose.msra.mxu0 0.0
        %6349 = vmatpush.xpose.msra.mxu0 0.0
        %6350 = vmatpush.xpose.msra.mxu0 0.0
        %6351 = vmatpush.xpose.msra.mxu0 0.0
        %6352 = vmatpush.xpose.msra.mxu0 0.0
        %v6353 = vand.u32 %v6212, 4294901760
        %6354 = vmatpush.xpose.msra.mxu0 %v6353
        %v6355 = vand.u32 %v6194, 4294901760
        %6356 = vmatmul.f32.gmra.mxu0 %v6355
        %v6357 = vpop.f32.mrf.mxu0
        %v6358 = vadd.f32 %v6336, %v6357
        %6359 = vdwg.mxu0
        %6360 = vmatpush.xpose.msra.mxu0 0.0
        %6361 = vmatpush.xpose.msra.mxu0 0.0
        %6362 = vmatpush.xpose.msra.mxu0 0.0
        %6363 = vmatpush.xpose.msra.mxu0 0.0
        %6364 = vmatpush.xpose.msra.mxu0 0.0
        %6365 = vmatpush.xpose.msra.mxu0 0.0
        %6366 = vmatpush.xpose.msra.mxu0 0.0
        %6367 = vmatpush.xpose.msra.mxu0 0.0
        %6368 = vmatpush.xpose.msra.mxu0 0.0
        %6369 = vmatpush.xpose.msra.mxu0 0.0
        %6370 = vmatpush.xpose.msra.mxu0 0.0
        %6371 = vmatpush.xpose.msra.mxu0 0.0
        %6372 = vmatpush.xpose.msra.mxu0 0.0
        %6373 = vmatpush.xpose.msra.mxu0 0.0
        %6374 = vmatpush.xpose.msra.mxu0 0.0
        %v6375 = vand.u32 %v6213, 4294901760
        %6376 = vmatpush.xpose.msra.mxu0 %v6375
        %v6377 = vand.u32 %v6195, 4294901760
        %v6378 = vsub.f32 %v6195, %v6377
        %v6379 = vand.u32 %v6378, 4294901760
        %v6380 = vsub.f32 %v6378, %v6379
        %v6381 = vand.u32 %v6380, 4294901760
        %6382 = vmatmul.f32.gmra.mxu0 %v6381
        %v6383 = vpop.f32.mrf.mxu0
        %v6384 = vadd.f32 %v6358, %v6383
        %6385 = vdwg.mxu0
        %6386 = vmatpush.xpose.msra.mxu0 0.0
        %6387 = vmatpush.xpose.msra.mxu0 0.0
        %6388 = vmatpush.xpose.msra.mxu0 0.0
        %6389 = vmatpush.xpose.msra.mxu0 0.0
        %6390 = vmatpush.xpose.msra.mxu0 0.0
        %6391 = vmatpush.xpose.msra.mxu0 0.0
        %6392 = vmatpush.xpose.msra.mxu0 0.0
        %6393 = vmatpush.xpose.msra.mxu0 0.0
        %6394 = vmatpush.xpose.msra.mxu0 0.0
        %6395 = vmatpush.xpose.msra.mxu0 0.0
        %6396 = vmatpush.xpose.msra.mxu0 0.0
        %6397 = vmatpush.xpose.msra.mxu0 0.0
        %6398 = vmatpush.xpose.msra.mxu0 0.0
        %6399 = vmatpush.xpose.msra.mxu0 0.0
        %6400 = vmatpush.xpose.msra.mxu0 0.0
        %v6401 = vand.u32 %v6213, 4294901760
        %v6402 = vsub.f32 %v6213, %v6401
        %v6403 = vand.u32 %v6402, 4294901760
        %v6404 = vsub.f32 %v6402, %v6403
        %v6405 = vand.u32 %v6404, 4294901760
        %6406 = vmatpush.xpose.msra.mxu0 %v6405
        %v6407 = vand.u32 %v6195, 4294901760
        %6408 = vmatmul.f32.gmra.mxu0 %v6407
        %v6409 = vpop.f32.mrf.mxu0
        %v6410 = vadd.f32 %v6384, %v6409
        %6411 = vdwg.mxu0
        %6412 = vmatpush.xpose.msra.mxu0 0.0
        %6413 = vmatpush.xpose.msra.mxu0 0.0
        %6414 = vmatpush.xpose.msra.mxu0 0.0
        %6415 = vmatpush.xpose.msra.mxu0 0.0
        %6416 = vmatpush.xpose.msra.mxu0 0.0
        %6417 = vmatpush.xpose.msra.mxu0 0.0
        %6418 = vmatpush.xpose.msra.mxu0 0.0
        %6419 = vmatpush.xpose.msra.mxu0 0.0
        %6420 = vmatpush.xpose.msra.mxu0 0.0
        %6421 = vmatpush.xpose.msra.mxu0 0.0
        %6422 = vmatpush.xpose.msra.mxu0 0.0
        %6423 = vmatpush.xpose.msra.mxu0 0.0
        %6424 = vmatpush.xpose.msra.mxu0 0.0
        %6425 = vmatpush.xpose.msra.mxu0 0.0
        %6426 = vmatpush.xpose.msra.mxu0 0.0
        %v6427 = vand.u32 %v6213, 4294901760
        %v6428 = vsub.f32 %v6213, %v6427
        %6429 = vmatpush.xpose.msra.mxu0 %v6428
        %v6430 = vand.u32 %v6195, 4294901760
        %v6431 = vsub.f32 %v6195, %v6430
        %6432 = vmatmul.f32.gmra.mxu0 %v6431
        %v6433 = vpop.f32.mrf.mxu0
        %v6434 = vadd.f32 %v6410, %v6433
        %6435 = vdwg.mxu0
        %6436 = vmatpush.xpose.msra.mxu0 0.0
        %6437 = vmatpush.xpose.msra.mxu0 0.0
        %6438 = vmatpush.xpose.msra.mxu0 0.0
        %6439 = vmatpush.xpose.msra.mxu0 0.0
        %6440 = vmatpush.xpose.msra.mxu0 0.0
        %6441 = vmatpush.xpose.msra.mxu0 0.0
        %6442 = vmatpush.xpose.msra.mxu0 0.0
        %6443 = vmatpush.xpose.msra.mxu0 0.0
        %6444 = vmatpush.xpose.msra.mxu0 0.0
        %6445 = vmatpush.xpose.msra.mxu0 0.0
        %6446 = vmatpush.xpose.msra.mxu0 0.0
        %6447 = vmatpush.xpose.msra.mxu0 0.0
        %6448 = vmatpush.xpose.msra.mxu0 0.0
        %6449 = vmatpush.xpose.msra.mxu0 0.0
        %6450 = vmatpush.xpose.msra.mxu0 0.0
        %v6451 = vand.u32 %v6213, 4294901760
        %6452 = vmatpush.xpose.msra.mxu0 %v6451
        %v6453 = vand.u32 %v6195, 4294901760
        %v6454 = vsub.f32 %v6195, %v6453
        %v6455 = vand.u32 %v6454, 4294901760
        %6456 = vmatmul.f32.gmra.mxu0 %v6455
        %v6457 = vpop.f32.mrf.mxu0
        %v6458 = vadd.f32 %v6434, %v6457
        %6459 = vdwg.mxu0
        %6460 = vmatpush.xpose.msra.mxu0 0.0
        %6461 = vmatpush.xpose.msra.mxu0 0.0
        %6462 = vmatpush.xpose.msra.mxu0 0.0
        %6463 = vmatpush.xpose.msra.mxu0 0.0
        %6464 = vmatpush.xpose.msra.mxu0 0.0
        %6465 = vmatpush.xpose.msra.mxu0 0.0
        %6466 = vmatpush.xpose.msra.mxu0 0.0
        %6467 = vmatpush.xpose.msra.mxu0 0.0
        %6468 = vmatpush.xpose.msra.mxu0 0.0
        %6469 = vmatpush.xpose.msra.mxu0 0.0
        %6470 = vmatpush.xpose.msra.mxu0 0.0
        %6471 = vmatpush.xpose.msra.mxu0 0.0
        %6472 = vmatpush.xpose.msra.mxu0 0.0
        %6473 = vmatpush.xpose.msra.mxu0 0.0
        %6474 = vmatpush.xpose.msra.mxu0 0.0
        %v6475 = vand.u32 %v6213, 4294901760
        %v6476 = vsub.f32 %v6213, %v6475
        %v6477 = vand.u32 %v6476, 4294901760
        %6478 = vmatpush.xpose.msra.mxu0 %v6477
        %v6479 = vand.u32 %v6195, 4294901760
        %6480 = vmatmul.f32.gmra.mxu0 %v6479
        %v6481 = vpop.f32.mrf.mxu0
        %v6482 = vadd.f32 %v6458, %v6481
        %6483 = vdwg.mxu0
        %6484 = vmatpush.xpose.msra.mxu0 0.0
        %6485 = vmatpush.xpose.msra.mxu0 0.0
        %6486 = vmatpush.xpose.msra.mxu0 0.0
        %6487 = vmatpush.xpose.msra.mxu0 0.0
        %6488 = vmatpush.xpose.msra.mxu0 0.0
        %6489 = vmatpush.xpose.msra.mxu0 0.0
        %6490 = vmatpush.xpose.msra.mxu0 0.0
        %6491 = vmatpush.xpose.msra.mxu0 0.0
        %6492 = vmatpush.xpose.msra.mxu0 0.0
        %6493 = vmatpush.xpose.msra.mxu0 0.0
        %6494 = vmatpush.xpose.msra.mxu0 0.0
        %6495 = vmatpush.xpose.msra.mxu0 0.0
        %6496 = vmatpush.xpose.msra.mxu0 0.0
        %6497 = vmatpush.xpose.msra.mxu0 0.0
        %6498 = vmatpush.xpose.msra.mxu0 0.0
        %v6499 = vand.u32 %v6213, 4294901760
        %6500 = vmatpush.xpose.msra.mxu0 %v6499
        %v6501 = vand.u32 %v6195, 4294901760
        %6502 = vmatmul.f32.gmra.mxu0 %v6501
        %v6503 = vpop.f32.mrf.mxu0
        %v6504 = vadd.f32 %v6482, %v6503
        %6505 = vdwg.mxu0
        %6507 = vset.pattern.permute.xlu0 0
        %6508 = vperm.xlu0 %6507, %v5262
        %v6509 = vpop.permute.xlu0 %6508
        %v6511 = vmul.f32 %v6504, %v6509
        %v6512 = vadd.f32 %v6511, %v5263
        %v6513 = vsel %vm330, %v6512, -inf
        %6514 = vmax.xlane.f32.xlu0 %v6513
        %v6515 = vpop.xlane.xlu0 %6514
        %v6516 = vsub.f32 %v6512, %v6515
        %v6517 = vmul.f32 %v6516, 1.442695
        %v6518 = vpow.pop %v6517
        %v6519 = vsel %vm330, %v6518, 0.0
        %6520 = vadd.xlane.f32.xlu0 %v6519
        %v6521 = vpop.xlane.xlu0 %6520
        %v6522 = vrcp.pop %v6521
        %v6523 = vmul.f32 %v6521, %v6522
        %v6524 = vsub.f32 1.0, %v6523
        %v6525 = vmul.f32 %v6522, %v6524
        %v6526 = vadd.f32 %v6522, %v6525
        %vm6527 = vweird.f32 %v6521
        %vm6528 = vweird.f32 %v6522
        %vm6529 = vmor %vm6527, %vm6528
        %v6530 = vsel %vm6529, %v6522, %v6526
        %v6531 = vand.u32 2147483647, %v6521
        %vm6532 = vcmp.eq.f32.partialorder %v6531, 8.507059e+37
        %v6533 = vand.u32 %v6521, 2147483648
        %v6534 = vor.u32 1.1754944e-38, %v6533
        %v6535 = vsel %vm6532, %v6534, %v6530
        %v6536 = vmul.f32 %v6518, %v6535
        %v6538 = vsel %vm330, %v6536, 0
        %6540 = vmatpush.msra.mxu0 0.0
        %6541 = vmatpush.msra.mxu0 0.0
        %6542 = vmatpush.msra.mxu0 0.0
        %6543 = vmatpush.msra.mxu0 0.0
        %6544 = vmatpush.msra.mxu0 0.0
        %6545 = vmatpush.msra.mxu0 0.0
        %6546 = vmatpush.msra.mxu0 0.0
        %6547 = vmatpush.msra.mxu0 0.0
        %6548 = vmatpush.msra.mxu0 0.0
        %6549 = vmatpush.msra.mxu0 0.0
        %6550 = vmatpush.msra.mxu0 0.0
        %6551 = vmatpush.msra.mxu0 0.0
        %6552 = vmatpush.msra.mxu0 0.0
        %6553 = vmatpush.msra.mxu0 0.0
        %6554 = vmatpush.msra.mxu0 0.0
        %v6555 = vand.u32 %v6176, 4294901760
        %6556 = vmatpush.msra.mxu0 %v6555
        %v6557 = vand.u32 %v6538, 4294901760
        %v6558 = vsub.f32 %v6538, %v6557
        %v6559 = vand.u32 %v6558, 4294901760
        %v6560 = vsub.f32 %v6558, %v6559
        %v6561 = vand.u32 %v6560, 4294901760
        %6562 = vmatmul.f32.gmra.mxu0 %v6561
        %v6563 = vpop.f32.mrf.mxu0
        %v6564 = vadd.f32 0.0, %v6563
        %6565 = vdwg.mxu0
        %6566 = vmatpush.msra.mxu0 0.0
        %6567 = vmatpush.msra.mxu0 0.0
        %6568 = vmatpush.msra.mxu0 0.0
        %6569 = vmatpush.msra.mxu0 0.0
        %6570 = vmatpush.msra.mxu0 0.0
        %6571 = vmatpush.msra.mxu0 0.0
        %6572 = vmatpush.msra.mxu0 0.0
        %6573 = vmatpush.msra.mxu0 0.0
        %6574 = vmatpush.msra.mxu0 0.0
        %6575 = vmatpush.msra.mxu0 0.0
        %6576 = vmatpush.msra.mxu0 0.0
        %6577 = vmatpush.msra.mxu0 0.0
        %6578 = vmatpush.msra.mxu0 0.0
        %6579 = vmatpush.msra.mxu0 0.0
        %6580 = vmatpush.msra.mxu0 0.0
        %v6581 = vand.u32 %v6176, 4294901760
        %v6582 = vsub.f32 %v6176, %v6581
        %v6583 = vand.u32 %v6582, 4294901760
        %v6584 = vsub.f32 %v6582, %v6583
        %v6585 = vand.u32 %v6584, 4294901760
        %6586 = vmatpush.msra.mxu0 %v6585
        %v6587 = vand.u32 %v6538, 4294901760
        %6588 = vmatmul.f32.gmra.mxu0 %v6587
        %v6589 = vpop.f32.mrf.mxu0
        %v6590 = vadd.f32 %v6564, %v6589
        %6591 = vdwg.mxu0
        %6592 = vmatpush.msra.mxu0 0.0
        %6593 = vmatpush.msra.mxu0 0.0
        %6594 = vmatpush.msra.mxu0 0.0
        %6595 = vmatpush.msra.mxu0 0.0
        %6596 = vmatpush.msra.mxu0 0.0
        %6597 = vmatpush.msra.mxu0 0.0
        %6598 = vmatpush.msra.mxu0 0.0
        %6599 = vmatpush.msra.mxu0 0.0
        %6600 = vmatpush.msra.mxu0 0.0
        %6601 = vmatpush.msra.mxu0 0.0
        %6602 = vmatpush.msra.mxu0 0.0
        %6603 = vmatpush.msra.mxu0 0.0
        %6604 = vmatpush.msra.mxu0 0.0
        %6605 = vmatpush.msra.mxu0 0.0
        %6606 = vmatpush.msra.mxu0 0.0
        %v6607 = vand.u32 %v6176, 4294901760
        %v6608 = vsub.f32 %v6176, %v6607
        %6609 = vmatpush.msra.mxu0 %v6608
        %v6610 = vand.u32 %v6538, 4294901760
        %v6611 = vsub.f32 %v6538, %v6610
        %6612 = vmatmul.f32.gmra.mxu0 %v6611
        %v6613 = vpop.f32.mrf.mxu0
        %v6614 = vadd.f32 %v6590, %v6613
        %6615 = vdwg.mxu0
        %6616 = vmatpush.msra.mxu0 0.0
        %6617 = vmatpush.msra.mxu0 0.0
        %6618 = vmatpush.msra.mxu0 0.0
        %6619 = vmatpush.msra.mxu0 0.0
        %6620 = vmatpush.msra.mxu0 0.0
        %6621 = vmatpush.msra.mxu0 0.0
        %6622 = vmatpush.msra.mxu0 0.0
        %6623 = vmatpush.msra.mxu0 0.0
        %6624 = vmatpush.msra.mxu0 0.0
        %6625 = vmatpush.msra.mxu0 0.0
        %6626 = vmatpush.msra.mxu0 0.0
        %6627 = vmatpush.msra.mxu0 0.0
        %6628 = vmatpush.msra.mxu0 0.0
        %6629 = vmatpush.msra.mxu0 0.0
        %6630 = vmatpush.msra.mxu0 0.0
        %v6631 = vand.u32 %v6176, 4294901760
        %6632 = vmatpush.msra.mxu0 %v6631
        %v6633 = vand.u32 %v6538, 4294901760
        %v6634 = vsub.f32 %v6538, %v6633
        %v6635 = vand.u32 %v6634, 4294901760
        %6636 = vmatmul.f32.gmra.mxu0 %v6635
        %v6637 = vpop.f32.mrf.mxu0
        %v6638 = vadd.f32 %v6614, %v6637
        %6639 = vdwg.mxu0
        %6640 = vmatpush.msra.mxu0 0.0
        %6641 = vmatpush.msra.mxu0 0.0
        %6642 = vmatpush.msra.mxu0 0.0
        %6643 = vmatpush.msra.mxu0 0.0
        %6644 = vmatpush.msra.mxu0 0.0
        %6645 = vmatpush.msra.mxu0 0.0
        %6646 = vmatpush.msra.mxu0 0.0
        %6647 = vmatpush.msra.mxu0 0.0
        %6648 = vmatpush.msra.mxu0 0.0
        %6649 = vmatpush.msra.mxu0 0.0
        %6650 = vmatpush.msra.mxu0 0.0
        %6651 = vmatpush.msra.mxu0 0.0
        %6652 = vmatpush.msra.mxu0 0.0
        %6653 = vmatpush.msra.mxu0 0.0
        %6654 = vmatpush.msra.mxu0 0.0
        %v6655 = vand.u32 %v6176, 4294901760
        %v6656 = vsub.f32 %v6176, %v6655
        %v6657 = vand.u32 %v6656, 4294901760
        %6658 = vmatpush.msra.mxu0 %v6657
        %v6659 = vand.u32 %v6538, 4294901760
        %6660 = vmatmul.f32.gmra.mxu0 %v6659
        %v6661 = vpop.f32.mrf.mxu0
        %v6662 = vadd.f32 %v6638, %v6661
        %6663 = vdwg.mxu0
        %6664 = vmatpush.msra.mxu0 0.0
        %6665 = vmatpush.msra.mxu0 0.0
        %6666 = vmatpush.msra.mxu0 0.0
        %6667 = vmatpush.msra.mxu0 0.0
        %6668 = vmatpush.msra.mxu0 0.0
        %6669 = vmatpush.msra.mxu0 0.0
        %6670 = vmatpush.msra.mxu0 0.0
        %6671 = vmatpush.msra.mxu0 0.0
        %6672 = vmatpush.msra.mxu0 0.0
        %6673 = vmatpush.msra.mxu0 0.0
        %6674 = vmatpush.msra.mxu0 0.0
        %6675 = vmatpush.msra.mxu0 0.0
        %6676 = vmatpush.msra.mxu0 0.0
        %6677 = vmatpush.msra.mxu0 0.0
        %6678 = vmatpush.msra.mxu0 0.0
        %v6679 = vand.u32 %v6176, 4294901760
        %6680 = vmatpush.msra.mxu0 %v6679
        %v6681 = vand.u32 %v6538, 4294901760
        %6682 = vmatmul.f32.gmra.mxu0 %v6681
        %v6683 = vpop.f32.mrf.mxu0
        %v6684 = vadd.f32 %v6662, %v6683
        %6685 = vdwg.mxu0
        %6686 = vmatpush.msra.mxu0 0.0
        %6687 = vmatpush.msra.mxu0 0.0
        %6688 = vmatpush.msra.mxu0 0.0
        %6689 = vmatpush.msra.mxu0 0.0
        %6690 = vmatpush.msra.mxu0 0.0
        %6691 = vmatpush.msra.mxu0 0.0
        %6692 = vmatpush.msra.mxu0 0.0
        %6693 = vmatpush.msra.mxu0 0.0
        %6694 = vmatpush.msra.mxu0 0.0
        %6695 = vmatpush.msra.mxu0 0.0
        %6696 = vmatpush.msra.mxu0 0.0
        %6697 = vmatpush.msra.mxu0 0.0
        %6698 = vmatpush.msra.mxu0 0.0
        %6699 = vmatpush.msra.mxu0 0.0
        %6700 = vmatpush.msra.mxu0 0.0
        %v6701 = vand.u32 %v6177, 4294901760
        %6702 = vmatpush.msra.mxu0 %v6701
        %v6703 = vand.u32 %v6538, 4294901760
        %v6704 = vsub.f32 %v6538, %v6703
        %v6705 = vand.u32 %v6704, 4294901760
        %v6706 = vsub.f32 %v6704, %v6705
        %v6707 = vand.u32 %v6706, 4294901760
        %6708 = vmatmul.f32.gmra.mxu0 %v6707
        %v6709 = vpop.f32.mrf.mxu0
        %v6710 = vadd.f32 0.0, %v6709
        %6711 = vdwg.mxu0
        %6712 = vmatpush.msra.mxu0 0.0
        %6713 = vmatpush.msra.mxu0 0.0
        %6714 = vmatpush.msra.mxu0 0.0
        %6715 = vmatpush.msra.mxu0 0.0
        %6716 = vmatpush.msra.mxu0 0.0
        %6717 = vmatpush.msra.mxu0 0.0
        %6718 = vmatpush.msra.mxu0 0.0
        %6719 = vmatpush.msra.mxu0 0.0
        %6720 = vmatpush.msra.mxu0 0.0
        %6721 = vmatpush.msra.mxu0 0.0
        %6722 = vmatpush.msra.mxu0 0.0
        %6723 = vmatpush.msra.mxu0 0.0
        %6724 = vmatpush.msra.mxu0 0.0
        %6725 = vmatpush.msra.mxu0 0.0
        %6726 = vmatpush.msra.mxu0 0.0
        %v6727 = vand.u32 %v6177, 4294901760
        %v6728 = vsub.f32 %v6177, %v6727
        %v6729 = vand.u32 %v6728, 4294901760
        %v6730 = vsub.f32 %v6728, %v6729
        %v6731 = vand.u32 %v6730, 4294901760
        %6732 = vmatpush.msra.mxu0 %v6731
        %v6733 = vand.u32 %v6538, 4294901760
        %6734 = vmatmul.f32.gmra.mxu0 %v6733
        %v6735 = vpop.f32.mrf.mxu0
        %v6736 = vadd.f32 %v6710, %v6735
        %6737 = vdwg.mxu0
        %6738 = vmatpush.msra.mxu0 0.0
        %6739 = vmatpush.msra.mxu0 0.0
        %6740 = vmatpush.msra.mxu0 0.0
        %6741 = vmatpush.msra.mxu0 0.0
        %6742 = vmatpush.msra.mxu0 0.0
        %6743 = vmatpush.msra.mxu0 0.0
        %6744 = vmatpush.msra.mxu0 0.0
        %6745 = vmatpush.msra.mxu0 0.0
        %6746 = vmatpush.msra.mxu0 0.0
        %6747 = vmatpush.msra.mxu0 0.0
        %6748 = vmatpush.msra.mxu0 0.0
        %6749 = vmatpush.msra.mxu0 0.0
        %6750 = vmatpush.msra.mxu0 0.0
        %6751 = vmatpush.msra.mxu0 0.0
        %6752 = vmatpush.msra.mxu0 0.0
        %v6753 = vand.u32 %v6177, 4294901760
        %v6754 = vsub.f32 %v6177, %v6753
        %6755 = vmatpush.msra.mxu0 %v6754
        %v6756 = vand.u32 %v6538, 4294901760
        %v6757 = vsub.f32 %v6538, %v6756
        %6758 = vmatmul.f32.gmra.mxu0 %v6757
        %v6759 = vpop.f32.mrf.mxu0
        %v6760 = vadd.f32 %v6736, %v6759
        %6761 = vdwg.mxu0
        %6762 = vmatpush.msra.mxu0 0.0
        %6763 = vmatpush.msra.mxu0 0.0
        %6764 = vmatpush.msra.mxu0 0.0
        %6765 = vmatpush.msra.mxu0 0.0
        %6766 = vmatpush.msra.mxu0 0.0
        %6767 = vmatpush.msra.mxu0 0.0
        %6768 = vmatpush.msra.mxu0 0.0
        %6769 = vmatpush.msra.mxu0 0.0
        %6770 = vmatpush.msra.mxu0 0.0
        %6771 = vmatpush.msra.mxu0 0.0
        %6772 = vmatpush.msra.mxu0 0.0
        %6773 = vmatpush.msra.mxu0 0.0
        %6774 = vmatpush.msra.mxu0 0.0
        %6775 = vmatpush.msra.mxu0 0.0
        %6776 = vmatpush.msra.mxu0 0.0
        %v6777 = vand.u32 %v6177, 4294901760
        %6778 = vmatpush.msra.mxu0 %v6777
        %v6779 = vand.u32 %v6538, 4294901760
        %v6780 = vsub.f32 %v6538, %v6779
        %v6781 = vand.u32 %v6780, 4294901760
        %6782 = vmatmul.f32.gmra.mxu0 %v6781
        %v6783 = vpop.f32.mrf.mxu0
        %v6784 = vadd.f32 %v6760, %v6783
        %6785 = vdwg.mxu0
        %6786 = vmatpush.msra.mxu0 0.0
        %6787 = vmatpush.msra.mxu0 0.0
        %6788 = vmatpush.msra.mxu0 0.0
        %6789 = vmatpush.msra.mxu0 0.0
        %6790 = vmatpush.msra.mxu0 0.0
        %6791 = vmatpush.msra.mxu0 0.0
        %6792 = vmatpush.msra.mxu0 0.0
        %6793 = vmatpush.msra.mxu0 0.0
        %6794 = vmatpush.msra.mxu0 0.0
        %6795 = vmatpush.msra.mxu0 0.0
        %6796 = vmatpush.msra.mxu0 0.0
        %6797 = vmatpush.msra.mxu0 0.0
        %6798 = vmatpush.msra.mxu0 0.0
        %6799 = vmatpush.msra.mxu0 0.0
        %6800 = vmatpush.msra.mxu0 0.0
        %v6801 = vand.u32 %v6177, 4294901760
        %v6802 = vsub.f32 %v6177, %v6801
        %v6803 = vand.u32 %v6802, 4294901760
        %6804 = vmatpush.msra.mxu0 %v6803
        %v6805 = vand.u32 %v6538, 4294901760
        %6806 = vmatmul.f32.gmra.mxu0 %v6805
        %v6807 = vpop.f32.mrf.mxu0
        %v6808 = vadd.f32 %v6784, %v6807
        %6809 = vdwg.mxu0
        %6810 = vmatpush.msra.mxu0 0.0
        %6811 = vmatpush.msra.mxu0 0.0
        %6812 = vmatpush.msra.mxu0 0.0
        %6813 = vmatpush.msra.mxu0 0.0
        %6814 = vmatpush.msra.mxu0 0.0
        %6815 = vmatpush.msra.mxu0 0.0
        %6816 = vmatpush.msra.mxu0 0.0
        %6817 = vmatpush.msra.mxu0 0.0
        %6818 = vmatpush.msra.mxu0 0.0
        %6819 = vmatpush.msra.mxu0 0.0
        %6820 = vmatpush.msra.mxu0 0.0
        %6821 = vmatpush.msra.mxu0 0.0
        %6822 = vmatpush.msra.mxu0 0.0
        %6823 = vmatpush.msra.mxu0 0.0
        %6824 = vmatpush.msra.mxu0 0.0
        %v6825 = vand.u32 %v6177, 4294901760
        %6826 = vmatpush.msra.mxu0 %v6825
        %v6827 = vand.u32 %v6538, 4294901760
        %6828 = vmatmul.f32.gmra.mxu0 %v6827
        %v6829 = vpop.f32.mrf.mxu0
        %v6830 = vadd.f32 %v6808, %v6829
        %6831 = vdwg.mxu0
        %v6833 = vsel %vm330, %v5264, 0
        %6835 = vmatpush.msra.mxu0 0.0
        %6836 = vmatpush.msra.mxu0 0.0
        %6837 = vmatpush.msra.mxu0 0.0
        %6838 = vmatpush.msra.mxu0 0.0
        %6839 = vmatpush.msra.mxu0 0.0
        %6840 = vmatpush.msra.mxu0 0.0
        %6841 = vmatpush.msra.mxu0 0.0
        %6842 = vmatpush.msra.mxu0 0.0
        %6843 = vmatpush.msra.mxu0 0.0
        %6844 = vmatpush.msra.mxu0 0.0
        %6845 = vmatpush.msra.mxu0 0.0
        %6846 = vmatpush.msra.mxu0 0.0
        %6847 = vmatpush.msra.mxu0 0.0
        %6848 = vmatpush.msra.mxu0 0.0
        %6849 = vmatpush.msra.mxu0 0.0
        %v6850 = vand.u32 %v6684, 4294901760
        %6851 = vmatpush.msra.mxu0 %v6850
        %v6852 = vand.u32 %v6833, 4294901760
        %v6853 = vsub.f32 %v6833, %v6852
        %v6854 = vand.u32 %v6853, 4294901760
        %v6855 = vsub.f32 %v6853, %v6854
        %v6856 = vand.u32 %v6855, 4294901760
        %6857 = vmatmul.f32.gmra.mxu0 %v6856
        %v6858 = vpop.f32.mrf.mxu0
        %v6859 = vadd.f32 0.0, %v6858
        %6860 = vdwg.mxu0
        %6861 = vmatpush.msra.mxu0 0.0
        %6862 = vmatpush.msra.mxu0 0.0
        %6863 = vmatpush.msra.mxu0 0.0
        %6864 = vmatpush.msra.mxu0 0.0
        %6865 = vmatpush.msra.mxu0 0.0
        %6866 = vmatpush.msra.mxu0 0.0
        %6867 = vmatpush.msra.mxu0 0.0
        %6868 = vmatpush.msra.mxu0 0.0
        %6869 = vmatpush.msra.mxu0 0.0
        %6870 = vmatpush.msra.mxu0 0.0
        %6871 = vmatpush.msra.mxu0 0.0
        %6872 = vmatpush.msra.mxu0 0.0
        %6873 = vmatpush.msra.mxu0 0.0
        %6874 = vmatpush.msra.mxu0 0.0
        %6875 = vmatpush.msra.mxu0 0.0
        %v6876 = vand.u32 %v6684, 4294901760
        %v6877 = vsub.f32 %v6684, %v6876
        %v6878 = vand.u32 %v6877, 4294901760
        %v6879 = vsub.f32 %v6877, %v6878
        %v6880 = vand.u32 %v6879, 4294901760
        %6881 = vmatpush.msra.mxu0 %v6880
        %v6882 = vand.u32 %v6833, 4294901760
        %6883 = vmatmul.f32.gmra.mxu0 %v6882
        %v6884 = vpop.f32.mrf.mxu0
        %v6885 = vadd.f32 %v6859, %v6884
        %6886 = vdwg.mxu0
        %6887 = vmatpush.msra.mxu0 0.0
        %6888 = vmatpush.msra.mxu0 0.0
        %6889 = vmatpush.msra.mxu0 0.0
        %6890 = vmatpush.msra.mxu0 0.0
        %6891 = vmatpush.msra.mxu0 0.0
        %6892 = vmatpush.msra.mxu0 0.0
        %6893 = vmatpush.msra.mxu0 0.0
        %6894 = vmatpush.msra.mxu0 0.0
        %6895 = vmatpush.msra.mxu0 0.0
        %6896 = vmatpush.msra.mxu0 0.0
        %6897 = vmatpush.msra.mxu0 0.0
        %6898 = vmatpush.msra.mxu0 0.0
        %6899 = vmatpush.msra.mxu0 0.0
        %6900 = vmatpush.msra.mxu0 0.0
        %6901 = vmatpush.msra.mxu0 0.0
        %v6902 = vand.u32 %v6684, 4294901760
        %v6903 = vsub.f32 %v6684, %v6902
        %6904 = vmatpush.msra.mxu0 %v6903
        %v6905 = vand.u32 %v6833, 4294901760
        %v6906 = vsub.f32 %v6833, %v6905
        %6907 = vmatmul.f32.gmra.mxu0 %v6906
        %v6908 = vpop.f32.mrf.mxu0
        %v6909 = vadd.f32 %v6885, %v6908
        %6910 = vdwg.mxu0
        %6911 = vmatpush.msra.mxu0 0.0
        %6912 = vmatpush.msra.mxu0 0.0
        %6913 = vmatpush.msra.mxu0 0.0
        %6914 = vmatpush.msra.mxu0 0.0
        %6915 = vmatpush.msra.mxu0 0.0
        %6916 = vmatpush.msra.mxu0 0.0
        %6917 = vmatpush.msra.mxu0 0.0
        %6918 = vmatpush.msra.mxu0 0.0
        %6919 = vmatpush.msra.mxu0 0.0
        %6920 = vmatpush.msra.mxu0 0.0
        %6921 = vmatpush.msra.mxu0 0.0
        %6922 = vmatpush.msra.mxu0 0.0
        %6923 = vmatpush.msra.mxu0 0.0
        %6924 = vmatpush.msra.mxu0 0.0
        %6925 = vmatpush.msra.mxu0 0.0
        %v6926 = vand.u32 %v6684, 4294901760
        %6927 = vmatpush.msra.mxu0 %v6926
        %v6928 = vand.u32 %v6833, 4294901760
        %v6929 = vsub.f32 %v6833, %v6928
        %v6930 = vand.u32 %v6929, 4294901760
        %6931 = vmatmul.f32.gmra.mxu0 %v6930
        %v6932 = vpop.f32.mrf.mxu0
        %v6933 = vadd.f32 %v6909, %v6932
        %6934 = vdwg.mxu0
        %6935 = vmatpush.msra.mxu0 0.0
        %6936 = vmatpush.msra.mxu0 0.0
        %6937 = vmatpush.msra.mxu0 0.0
        %6938 = vmatpush.msra.mxu0 0.0
        %6939 = vmatpush.msra.mxu0 0.0
        %6940 = vmatpush.msra.mxu0 0.0
        %6941 = vmatpush.msra.mxu0 0.0
        %6942 = vmatpush.msra.mxu0 0.0
        %6943 = vmatpush.msra.mxu0 0.0
        %6944 = vmatpush.msra.mxu0 0.0
        %6945 = vmatpush.msra.mxu0 0.0
        %6946 = vmatpush.msra.mxu0 0.0
        %6947 = vmatpush.msra.mxu0 0.0
        %6948 = vmatpush.msra.mxu0 0.0
        %6949 = vmatpush.msra.mxu0 0.0
        %v6950 = vand.u32 %v6684, 4294901760
        %v6951 = vsub.f32 %v6684, %v6950
        %v6952 = vand.u32 %v6951, 4294901760
        %6953 = vmatpush.msra.mxu0 %v6952
        %v6954 = vand.u32 %v6833, 4294901760
        %6955 = vmatmul.f32.gmra.mxu0 %v6954
        %v6956 = vpop.f32.mrf.mxu0
        %v6957 = vadd.f32 %v6933, %v6956
        %6958 = vdwg.mxu0
        %6959 = vmatpush.msra.mxu0 0.0
        %6960 = vmatpush.msra.mxu0 0.0
        %6961 = vmatpush.msra.mxu0 0.0
        %6962 = vmatpush.msra.mxu0 0.0
        %6963 = vmatpush.msra.mxu0 0.0
        %6964 = vmatpush.msra.mxu0 0.0
        %6965 = vmatpush.msra.mxu0 0.0
        %6966 = vmatpush.msra.mxu0 0.0
        %6967 = vmatpush.msra.mxu0 0.0
        %6968 = vmatpush.msra.mxu0 0.0
        %6969 = vmatpush.msra.mxu0 0.0
        %6970 = vmatpush.msra.mxu0 0.0
        %6971 = vmatpush.msra.mxu0 0.0
        %6972 = vmatpush.msra.mxu0 0.0
        %6973 = vmatpush.msra.mxu0 0.0
        %v6974 = vand.u32 %v6684, 4294901760
        %6975 = vmatpush.msra.mxu0 %v6974
        %v6976 = vand.u32 %v6833, 4294901760
        %6977 = vmatmul.f32.gmra.mxu0 %v6976
        %v6978 = vpop.f32.mrf.mxu0
        %v6979 = vadd.f32 %v6957, %v6978
        %6980 = vdwg.mxu0
        %6981 = vmatpush.msra.mxu0 0.0
        %6982 = vmatpush.msra.mxu0 0.0
        %6983 = vmatpush.msra.mxu0 0.0
        %6984 = vmatpush.msra.mxu0 0.0
        %6985 = vmatpush.msra.mxu0 0.0
        %6986 = vmatpush.msra.mxu0 0.0
        %6987 = vmatpush.msra.mxu0 0.0
        %6988 = vmatpush.msra.mxu0 0.0
        %6989 = vmatpush.msra.mxu0 0.0
        %6990 = vmatpush.msra.mxu0 0.0
        %6991 = vmatpush.msra.mxu0 0.0
        %6992 = vmatpush.msra.mxu0 0.0
        %6993 = vmatpush.msra.mxu0 0.0
        %6994 = vmatpush.msra.mxu0 0.0
        %6995 = vmatpush.msra.mxu0 0.0
        %v6996 = vand.u32 %v6830, 4294901760
        %6997 = vmatpush.msra.mxu0 %v6996
        %v6998 = vand.u32 %v6833, 4294901760
        %v6999 = vsub.f32 %v6833, %v6998
        %v7000 = vand.u32 %v6999, 4294901760
        %v7001 = vsub.f32 %v6999, %v7000
        %v7002 = vand.u32 %v7001, 4294901760
        %7003 = vmatmul.f32.gmra.mxu0 %v7002
        %v7004 = vpop.f32.mrf.mxu0
        %v7005 = vadd.f32 0.0, %v7004
        %7006 = vdwg.mxu0
        %7007 = vmatpush.msra.mxu0 0.0
        %7008 = vmatpush.msra.mxu0 0.0
        %7009 = vmatpush.msra.mxu0 0.0
        %7010 = vmatpush.msra.mxu0 0.0
        %7011 = vmatpush.msra.mxu0 0.0
        %7012 = vmatpush.msra.mxu0 0.0
        %7013 = vmatpush.msra.mxu0 0.0
        %7014 = vmatpush.msra.mxu0 0.0
        %7015 = vmatpush.msra.mxu0 0.0
        %7016 = vmatpush.msra.mxu0 0.0
        %7017 = vmatpush.msra.mxu0 0.0
        %7018 = vmatpush.msra.mxu0 0.0
        %7019 = vmatpush.msra.mxu0 0.0
        %7020 = vmatpush.msra.mxu0 0.0
        %7021 = vmatpush.msra.mxu0 0.0
        %v7022 = vand.u32 %v6830, 4294901760
        %v7023 = vsub.f32 %v6830, %v7022
        %v7024 = vand.u32 %v7023, 4294901760
        %v7025 = vsub.f32 %v7023, %v7024
        %v7026 = vand.u32 %v7025, 4294901760
        %7027 = vmatpush.msra.mxu0 %v7026
        %v7028 = vand.u32 %v6833, 4294901760
        %7029 = vmatmul.f32.gmra.mxu0 %v7028
        %v7030 = vpop.f32.mrf.mxu0
        %v7031 = vadd.f32 %v7005, %v7030
        %7032 = vdwg.mxu0
        %7033 = vmatpush.msra.mxu0 0.0
        %7034 = vmatpush.msra.mxu0 0.0
        %7035 = vmatpush.msra.mxu0 0.0
        %7036 = vmatpush.msra.mxu0 0.0
        %7037 = vmatpush.msra.mxu0 0.0
        %7038 = vmatpush.msra.mxu0 0.0
        %7039 = vmatpush.msra.mxu0 0.0
        %7040 = vmatpush.msra.mxu0 0.0
        %7041 = vmatpush.msra.mxu0 0.0
        %7042 = vmatpush.msra.mxu0 0.0
        %7043 = vmatpush.msra.mxu0 0.0
        %7044 = vmatpush.msra.mxu0 0.0
        %7045 = vmatpush.msra.mxu0 0.0
        %7046 = vmatpush.msra.mxu0 0.0
        %7047 = vmatpush.msra.mxu0 0.0
        %v7048 = vand.u32 %v6830, 4294901760
        %v7049 = vsub.f32 %v6830, %v7048
        %7050 = vmatpush.msra.mxu0 %v7049
        %v7051 = vand.u32 %v6833, 4294901760
        %v7052 = vsub.f32 %v6833, %v7051
        %7053 = vmatmul.f32.gmra.mxu0 %v7052
        %v7054 = vpop.f32.mrf.mxu0
        %v7055 = vadd.f32 %v7031, %v7054
        %7056 = vdwg.mxu0
        %7057 = vmatpush.msra.mxu0 0.0
        %7058 = vmatpush.msra.mxu0 0.0
        %7059 = vmatpush.msra.mxu0 0.0
        %7060 = vmatpush.msra.mxu0 0.0
        %7061 = vmatpush.msra.mxu0 0.0
        %7062 = vmatpush.msra.mxu0 0.0
        %7063 = vmatpush.msra.mxu0 0.0
        %7064 = vmatpush.msra.mxu0 0.0
        %7065 = vmatpush.msra.mxu0 0.0
        %7066 = vmatpush.msra.mxu0 0.0
        %7067 = vmatpush.msra.mxu0 0.0
        %7068 = vmatpush.msra.mxu0 0.0
        %7069 = vmatpush.msra.mxu0 0.0
        %7070 = vmatpush.msra.mxu0 0.0
        %7071 = vmatpush.msra.mxu0 0.0
        %v7072 = vand.u32 %v6830, 4294901760
        %7073 = vmatpush.msra.mxu0 %v7072
        %v7074 = vand.u32 %v6833, 4294901760
        %v7075 = vsub.f32 %v6833, %v7074
        %v7076 = vand.u32 %v7075, 4294901760
        %7077 = vmatmul.f32.gmra.mxu0 %v7076
        %v7078 = vpop.f32.mrf.mxu0
        %v7079 = vadd.f32 %v7055, %v7078
        %7080 = vdwg.mxu0
        %7081 = vmatpush.msra.mxu0 0.0
        %7082 = vmatpush.msra.mxu0 0.0
        %7083 = vmatpush.msra.mxu0 0.0
        %7084 = vmatpush.msra.mxu0 0.0
        %7085 = vmatpush.msra.mxu0 0.0
        %7086 = vmatpush.msra.mxu0 0.0
        %7087 = vmatpush.msra.mxu0 0.0
        %7088 = vmatpush.msra.mxu0 0.0
        %7089 = vmatpush.msra.mxu0 0.0
        %7090 = vmatpush.msra.mxu0 0.0
        %7091 = vmatpush.msra.mxu0 0.0
        %7092 = vmatpush.msra.mxu0 0.0
        %7093 = vmatpush.msra.mxu0 0.0
        %7094 = vmatpush.msra.mxu0 0.0
        %7095 = vmatpush.msra.mxu0 0.0
        %v7096 = vand.u32 %v6830, 4294901760
        %v7097 = vsub.f32 %v6830, %v7096
        %v7098 = vand.u32 %v7097, 4294901760
        %7099 = vmatpush.msra.mxu0 %v7098
        %v7100 = vand.u32 %v6833, 4294901760
        %7101 = vmatmul.f32.gmra.mxu0 %v7100
        %v7102 = vpop.f32.mrf.mxu0
        %v7103 = vadd.f32 %v7079, %v7102
        %7104 = vdwg.mxu0
        %7105 = vmatpush.msra.mxu0 0.0
        %7106 = vmatpush.msra.mxu0 0.0
        %7107 = vmatpush.msra.mxu0 0.0
        %7108 = vmatpush.msra.mxu0 0.0
        %7109 = vmatpush.msra.mxu0 0.0
        %7110 = vmatpush.msra.mxu0 0.0
        %7111 = vmatpush.msra.mxu0 0.0
        %7112 = vmatpush.msra.mxu0 0.0
        %7113 = vmatpush.msra.mxu0 0.0
        %7114 = vmatpush.msra.mxu0 0.0
        %7115 = vmatpush.msra.mxu0 0.0
        %7116 = vmatpush.msra.mxu0 0.0
        %7117 = vmatpush.msra.mxu0 0.0
        %7118 = vmatpush.msra.mxu0 0.0
        %7119 = vmatpush.msra.mxu0 0.0
        %v7120 = vand.u32 %v6830, 4294901760
        %7121 = vmatpush.msra.mxu0 %v7120
        %v7122 = vand.u32 %v6833, 4294901760
        %7123 = vmatmul.f32.gmra.mxu0 %v7122
        %v7124 = vpop.f32.mrf.mxu0
        %v7125 = vadd.f32 %v7103, %v7124
        %7126 = vdwg.mxu0
        %v7127 = vadd.f32 %v5250, %v6979
        %v7128 = vadd.f32 %v5251, %v7125
        %v7129 = vrot.slane %v7127, 4
        %v7130 = vadd.f32 %v7127, %v7129
        %v7131 = vrot.slane %v7130, 2
        %v7132 = vadd.f32 %v7130, %v7131
        %v7133 = vrot.slane %v7132, 1
        %v7134 = vadd.f32 %v7132, %v7133
        %v7135 = vrot.slane %v7128, 4
        %v7136 = vadd.f32 %v7128, %v7135
        %v7137 = vrot.slane %v7136, 2
        %v7138 = vadd.f32 %v7136, %v7137
        %v7139 = vrot.slane %v7138, 1
        %v7140 = vadd.f32 %v7138, %v7139
        %v7141 = vmul.f32 %v7134, %v2384
        %v7142 = vmul.f32 %v7140, %v2384
        %v7143 = vsub.f32 %v7127, %v7141
        %v7144 = vsub.f32 %v7128, %v7142
        %v7145 = vmul.f32 %v7143, %v7143
        %v7146 = vmul.f32 %v7144, %v7144
        %v7147 = vrot.slane %v7145, 4
        %v7148 = vadd.f32 %v7145, %v7147
        %v7149 = vrot.slane %v7148, 2
        %v7150 = vadd.f32 %v7148, %v7149
        %v7151 = vrot.slane %v7150, 1
        %v7152 = vadd.f32 %v7150, %v7151
        %v7153 = vrot.slane %v7146, 4
        %v7154 = vadd.f32 %v7146, %v7153
        %v7155 = vrot.slane %v7154, 2
        %v7156 = vadd.f32 %v7154, %v7155
        %v7157 = vrot.slane %v7156, 1
        %v7158 = vadd.f32 %v7156, %v7157
        %v7159 = vmul.f32 %v7152, %v2384
        %v7160 = vmul.f32 %v7158, %v2384
        %v7161 = vadd.f32 %v7159, 1e-05
        %v7162 = vadd.f32 %v7160, 1e-05
        %v7163 = vrsqrt.pop %v7161
        %v7164 = vmul.f32 %v7163, %v7161
        %v7165 = vmul.f32 %v7164, %v7163
        %v7166 = vmul.f32 0.5, %v7165
        %v7167 = vsub.f32 1.5, %v7166
        %v7168 = vmul.f32 %v7163, %v7167
        %vm7169 = vweird.f32 %v7161
        %vm7170 = vweird.f32 %v7163
        %vm7171 = vmor %vm7169, %vm7170
        %v7172 = vsel %vm7171, %v7163, %v7168
        %v7173 = vrsqrt.pop %v7162
        %v7174 = vmul.f32 %v7173, %v7162
        %v7175 = vmul.f32 %v7174, %v7173
        %v7176 = vmul.f32 0.5, %v7175
        %v7177 = vsub.f32 1.5, %v7176
        %v7178 = vmul.f32 %v7173, %v7177
        %vm7179 = vweird.f32 %v7162
        %vm7180 = vweird.f32 %v7173
        %vm7181 = vmor %vm7179, %vm7180
        %v7182 = vsel %vm7181, %v7173, %v7178
        %v7183 = vmul.f32 %v7143, %v7172
        %v7184 = vmul.f32 %v7144, %v7182
        %7186 = vset.pattern.permute.xlu0 0
        %7187 = vperm.xlu0 %7186, %v5254
        %v7188 = vpop.permute.xlu0 %7187
        %v7190 = vmul.f32 %v7183, %v7188
        %v7191 = vmul.f32 %v7184, %v7188
        %7193 = vset.pattern.permute.xlu0 0
        %7194 = vperm.xlu0 %7193, %v5255
        %v7195 = vpop.permute.xlu0 %7194
        %v7197 = vadd.f32 %v7190, %v7195
        %v7198 = vadd.f32 %v7191, %v7195
        %v7200 = vsel %vm330, %v5265, 0
        %v7203 = vsel %vm330, %v5266, 0
        %v7206 = vsel %vm330, %v5267, 0
        %v7209 = vsel %vm330, %v5268, 0
        %v7212 = vsel %vm330, %v5269, 0
        %v7215 = vsel %vm330, %v5270, 0
        %7217 = vmatpush.msra.mxu0 0.0
        %7218 = vmatpush.msra.mxu0 0.0
        %7219 = vmatpush.msra.mxu0 0.0
        %7220 = vmatpush.msra.mxu0 0.0
        %7221 = vmatpush.msra.mxu0 0.0
        %7222 = vmatpush.msra.mxu0 0.0
        %7223 = vmatpush.msra.mxu0 0.0
        %7224 = vmatpush.msra.mxu0 0.0
        %7225 = vmatpush.msra.mxu0 0.0
        %7226 = vmatpush.msra.mxu0 0.0
        %7227 = vmatpush.msra.mxu0 0.0
        %7228 = vmatpush.msra.mxu0 0.0
        %7229 = vmatpush.msra.mxu0 0.0
        %7230 = vmatpush.msra.mxu0 0.0
        %7231 = vmatpush.msra.mxu0 0.0
        %v7232 = vand.u32 %v7197, 4294901760
        %7233 = vmatpush.msra.mxu0 %v7232
        %v7234 = vand.u32 %v7200, 4294901760
        %v7235 = vsub.f32 %v7200, %v7234
        %v7236 = vand.u32 %v7235, 4294901760
        %v7237 = vsub.f32 %v7235, %v7236
        %v7238 = vand.u32 %v7237, 4294901760
        %7239 = vmatmul.f32.gmra.mxu0 %v7238
        %v7240 = vpop.f32.mrf.mxu0
        %v7241 = vadd.f32 0.0, %v7240
        %v7242 = vand.u32 %v7203, 4294901760
        %v7243 = vsub.f32 %v7203, %v7242
        %v7244 = vand.u32 %v7243, 4294901760
        %v7245 = vsub.f32 %v7243, %v7244
        %v7246 = vand.u32 %v7245, 4294901760
        %7247 = vmatmul.f32.gmra.mxu0 %v7246
        %v7248 = vpop.f32.mrf.mxu0
        %v7249 = vadd.f32 0.0, %v7248
        %v7250 = vand.u32 %v7206, 4294901760
        %v7251 = vsub.f32 %v7206, %v7250
        %v7252 = vand.u32 %v7251, 4294901760
        %v7253 = vsub.f32 %v7251, %v7252
        %v7254 = vand.u32 %v7253, 4294901760
        %7255 = vmatmul.f32.gmra.mxu0 %v7254
        %v7256 = vpop.f32.mrf.mxu0
        %v7257 = vadd.f32 0.0, %v7256
        %v7258 = vand.u32 %v7209, 4294901760
        %v7259 = vsub.f32 %v7209, %v7258
        %v7260 = vand.u32 %v7259, 4294901760
        %v7261 = vsub.f32 %v7259, %v7260
        %v7262 = vand.u32 %v7261, 4294901760
        %7263 = vmatmul.f32.gmra.mxu0 %v7262
        %v7264 = vpop.f32.mrf.mxu0
        %v7265 = vadd.f32 0.0, %v7264
        %v7266 = vand.u32 %v7212, 4294901760
        %v7267 = vsub.f32 %v7212, %v7266
        %v7268 = vand.u32 %v7267, 4294901760
        %v7269 = vsub.f32 %v7267, %v7268
        %v7270 = vand.u32 %v7269, 4294901760
        %7271 = vmatmul.f32.gmra.mxu0 %v7270
        %v7272 = vpop.f32.mrf.mxu0
        %v7273 = vadd.f32 0.0, %v7272
        %v7274 = vand.u32 %v7215, 4294901760
        %v7275 = vsub.f32 %v7215, %v7274
        %v7276 = vand.u32 %v7275, 4294901760
        %v7277 = vsub.f32 %v7275, %v7276
        %v7278 = vand.u32 %v7277, 4294901760
        %7279 = vmatmul.f32.gmra.mxu0 %v7278
        %v7280 = vpop.f32.mrf.mxu0
        %v7281 = vadd.f32 0.0, %v7280
        %7282 = vdwg.mxu0
        %7283 = vmatpush.msra.mxu0 0.0
        %7284 = vmatpush.msra.mxu0 0.0
        %7285 = vmatpush.msra.mxu0 0.0
        %7286 = vmatpush.msra.mxu0 0.0
        %7287 = vmatpush.msra.mxu0 0.0
        %7288 = vmatpush.msra.mxu0 0.0
        %7289 = vmatpush.msra.mxu0 0.0
        %7290 = vmatpush.msra.mxu0 0.0
        %7291 = vmatpush.msra.mxu0 0.0
        %7292 = vmatpush.msra.mxu0 0.0
        %7293 = vmatpush.msra.mxu0 0.0
        %7294 = vmatpush.msra.mxu0 0.0
        %7295 = vmatpush.msra.mxu0 0.0
        %7296 = vmatpush.msra.mxu0 0.0
        %7297 = vmatpush.msra.mxu0 0.0
        %v7298 = vand.u32 %v7197, 4294901760
        %v7299 = vsub.f32 %v7197, %v7298
        %v7300 = vand.u32 %v7299, 4294901760
        %v7301 = vsub.f32 %v7299, %v7300
        %v7302 = vand.u32 %v7301, 4294901760
        %7303 = vmatpush.msra.mxu0 %v7302
        %v7304 = vand.u32 %v7200, 4294901760
        %7305 = vmatmul.f32.gmra.mxu0 %v7304
        %v7306 = vpop.f32.mrf.mxu0
        %v7307 = vadd.f32 %v7241, %v7306
        %v7308 = vand.u32 %v7203, 4294901760
        %7309 = vmatmul.f32.gmra.mxu0 %v7308
        %v7310 = vpop.f32.mrf.mxu0
        %v7311 = vadd.f32 %v7249, %v7310
        %v7312 = vand.u32 %v7206, 4294901760
        %7313 = vmatmul.f32.gmra.mxu0 %v7312
        %v7314 = vpop.f32.mrf.mxu0
        %v7315 = vadd.f32 %v7257, %v7314
        %v7316 = vand.u32 %v7209, 4294901760
        %7317 = vmatmul.f32.gmra.mxu0 %v7316
        %v7318 = vpop.f32.mrf.mxu0
        %v7319 = vadd.f32 %v7265, %v7318
        %v7320 = vand.u32 %v7212, 4294901760
        %7321 = vmatmul.f32.gmra.mxu0 %v7320
        %v7322 = vpop.f32.mrf.mxu0
        %v7323 = vadd.f32 %v7273, %v7322
        %v7324 = vand.u32 %v7215, 4294901760
        %7325 = vmatmul.f32.gmra.mxu0 %v7324
        %v7326 = vpop.f32.mrf.mxu0
        %v7327 = vadd.f32 %v7281, %v7326
        %7328 = vdwg.mxu0
        %7329 = vmatpush.msra.mxu0 0.0
        %7330 = vmatpush.msra.mxu0 0.0
        %7331 = vmatpush.msra.mxu0 0.0
        %7332 = vmatpush.msra.mxu0 0.0
        %7333 = vmatpush.msra.mxu0 0.0
        %7334 = vmatpush.msra.mxu0 0.0
        %7335 = vmatpush.msra.mxu0 0.0
        %7336 = vmatpush.msra.mxu0 0.0
        %7337 = vmatpush.msra.mxu0 0.0
        %7338 = vmatpush.msra.mxu0 0.0
        %7339 = vmatpush.msra.mxu0 0.0
        %7340 = vmatpush.msra.mxu0 0.0
        %7341 = vmatpush.msra.mxu0 0.0
        %7342 = vmatpush.msra.mxu0 0.0
        %7343 = vmatpush.msra.mxu0 0.0
        %v7344 = vand.u32 %v7197, 4294901760
        %v7345 = vsub.f32 %v7197, %v7344
        %7346 = vmatpush.msra.mxu0 %v7345
        %v7347 = vand.u32 %v7200, 4294901760
        %v7348 = vsub.f32 %v7200, %v7347
        %7349 = vmatmul.f32.gmra.mxu0 %v7348
        %v7350 = vpop.f32.mrf.mxu0
        %v7351 = vadd.f32 %v7307, %v7350
        %v7352 = vand.u32 %v7203, 4294901760
        %v7353 = vsub.f32 %v7203, %v7352
        %7354 = vmatmul.f32.gmra.mxu0 %v7353
        %v7355 = vpop.f32.mrf.mxu0
        %v7356 = vadd.f32 %v7311, %v7355
        %v7357 = vand.u32 %v7206, 4294901760
        %v7358 = vsub.f32 %v7206, %v7357
        %7359 = vmatmul.f32.gmra.mxu0 %v7358
        %v7360 = vpop.f32.mrf.mxu0
        %v7361 = vadd.f32 %v7315, %v7360
        %v7362 = vand.u32 %v7209, 4294901760
        %v7363 = vsub.f32 %v7209, %v7362
        %7364 = vmatmul.f32.gmra.mxu0 %v7363
        %v7365 = vpop.f32.mrf.mxu0
        %v7366 = vadd.f32 %v7319, %v7365
        %v7367 = vand.u32 %v7212, 4294901760
        %v7368 = vsub.f32 %v7212, %v7367
        %7369 = vmatmul.f32.gmra.mxu0 %v7368
        %v7370 = vpop.f32.mrf.mxu0
        %v7371 = vadd.f32 %v7323, %v7370
        %v7372 = vand.u32 %v7215, 4294901760
        %v7373 = vsub.f32 %v7215, %v7372
        %7374 = vmatmul.f32.gmra.mxu0 %v7373
        %v7375 = vpop.f32.mrf.mxu0
        %v7376 = vadd.f32 %v7327, %v7375
        %7377 = vdwg.mxu0
        %7378 = vmatpush.msra.mxu0 0.0
        %7379 = vmatpush.msra.mxu0 0.0
        %7380 = vmatpush.msra.mxu0 0.0
        %7381 = vmatpush.msra.mxu0 0.0
        %7382 = vmatpush.msra.mxu0 0.0
        %7383 = vmatpush.msra.mxu0 0.0
        %7384 = vmatpush.msra.mxu0 0.0
        %7385 = vmatpush.msra.mxu0 0.0
        %7386 = vmatpush.msra.mxu0 0.0
        %7387 = vmatpush.msra.mxu0 0.0
        %7388 = vmatpush.msra.mxu0 0.0
        %7389 = vmatpush.msra.mxu0 0.0
        %7390 = vmatpush.msra.mxu0 0.0
        %7391 = vmatpush.msra.mxu0 0.0
        %7392 = vmatpush.msra.mxu0 0.0
        %v7393 = vand.u32 %v7197, 4294901760
        %7394 = vmatpush.msra.mxu0 %v7393
        %v7395 = vand.u32 %v7200, 4294901760
        %v7396 = vsub.f32 %v7200, %v7395
        %v7397 = vand.u32 %v7396, 4294901760
        %7398 = vmatmul.f32.gmra.mxu0 %v7397
        %v7399 = vpop.f32.mrf.mxu0
        %v7400 = vadd.f32 %v7351, %v7399
        %v7401 = vand.u32 %v7203, 4294901760
        %v7402 = vsub.f32 %v7203, %v7401
        %v7403 = vand.u32 %v7402, 4294901760
        %7404 = vmatmul.f32.gmra.mxu0 %v7403
        %v7405 = vpop.f32.mrf.mxu0
        %v7406 = vadd.f32 %v7356, %v7405
        %v7407 = vand.u32 %v7206, 4294901760
        %v7408 = vsub.f32 %v7206, %v7407
        %v7409 = vand.u32 %v7408, 4294901760
        %7410 = vmatmul.f32.gmra.mxu0 %v7409
        %v7411 = vpop.f32.mrf.mxu0
        %v7412 = vadd.f32 %v7361, %v7411
        %v7413 = vand.u32 %v7209, 4294901760
        %v7414 = vsub.f32 %v7209, %v7413
        %v7415 = vand.u32 %v7414, 4294901760
        %7416 = vmatmul.f32.gmra.mxu0 %v7415
        %v7417 = vpop.f32.mrf.mxu0
        %v7418 = vadd.f32 %v7366, %v7417
        %v7419 = vand.u32 %v7212, 4294901760
        %v7420 = vsub.f32 %v7212, %v7419
        %v7421 = vand.u32 %v7420, 4294901760
        %7422 = vmatmul.f32.gmra.mxu0 %v7421
        %v7423 = vpop.f32.mrf.mxu0
        %v7424 = vadd.f32 %v7371, %v7423
        %v7425 = vand.u32 %v7215, 4294901760
        %v7426 = vsub.f32 %v7215, %v7425
        %v7427 = vand.u32 %v7426, 4294901760
        %7428 = vmatmul.f32.gmra.mxu0 %v7427
        %v7429 = vpop.f32.mrf.mxu0
        %v7430 = vadd.f32 %v7376, %v7429
        %7431 = vdwg.mxu0
        %7432 = vmatpush.msra.mxu0 0.0
        %7433 = vmatpush.msra.mxu0 0.0
        %7434 = vmatpush.msra.mxu0 0.0
        %7435 = vmatpush.msra.mxu0 0.0
        %7436 = vmatpush.msra.mxu0 0.0
        %7437 = vmatpush.msra.mxu0 0.0
        %7438 = vmatpush.msra.mxu0 0.0
        %7439 = vmatpush.msra.mxu0 0.0
        %7440 = vmatpush.msra.mxu0 0.0
        %7441 = vmatpush.msra.mxu0 0.0
        %7442 = vmatpush.msra.mxu0 0.0
        %7443 = vmatpush.msra.mxu0 0.0
        %7444 = vmatpush.msra.mxu0 0.0
        %7445 = vmatpush.msra.mxu0 0.0
        %7446 = vmatpush.msra.mxu0 0.0
        %v7447 = vand.u32 %v7197, 4294901760
        %v7448 = vsub.f32 %v7197, %v7447
        %v7449 = vand.u32 %v7448, 4294901760
        %7450 = vmatpush.msra.mxu0 %v7449
        %v7451 = vand.u32 %v7200, 4294901760
        %7452 = vmatmul.f32.gmra.mxu0 %v7451
        %v7453 = vpop.f32.mrf.mxu0
        %v7454 = vadd.f32 %v7400, %v7453
        %v7455 = vand.u32 %v7203, 4294901760
        %7456 = vmatmul.f32.gmra.mxu0 %v7455
        %v7457 = vpop.f32.mrf.mxu0
        %v7458 = vadd.f32 %v7406, %v7457
        %v7459 = vand.u32 %v7206, 4294901760
        %7460 = vmatmul.f32.gmra.mxu0 %v7459
        %v7461 = vpop.f32.mrf.mxu0
        %v7462 = vadd.f32 %v7412, %v7461
        %v7463 = vand.u32 %v7209, 4294901760
        %7464 = vmatmul.f32.gmra.mxu0 %v7463
        %v7465 = vpop.f32.mrf.mxu0
        %v7466 = vadd.f32 %v7418, %v7465
        %v7467 = vand.u32 %v7212, 4294901760
        %7468 = vmatmul.f32.gmra.mxu0 %v7467
        %v7469 = vpop.f32.mrf.mxu0
        %v7470 = vadd.f32 %v7424, %v7469
        %v7471 = vand.u32 %v7215, 4294901760
        %7472 = vmatmul.f32.gmra.mxu0 %v7471
        %v7473 = vpop.f32.mrf.mxu0
        %v7474 = vadd.f32 %v7430, %v7473
        %7475 = vdwg.mxu0
        %7476 = vmatpush.msra.mxu0 0.0
        %7477 = vmatpush.msra.mxu0 0.0
        %7478 = vmatpush.msra.mxu0 0.0
        %7479 = vmatpush.msra.mxu0 0.0
        %7480 = vmatpush.msra.mxu0 0.0
        %7481 = vmatpush.msra.mxu0 0.0
        %7482 = vmatpush.msra.mxu0 0.0
        %7483 = vmatpush.msra.mxu0 0.0
        %7484 = vmatpush.msra.mxu0 0.0
        %7485 = vmatpush.msra.mxu0 0.0
        %7486 = vmatpush.msra.mxu0 0.0
        %7487 = vmatpush.msra.mxu0 0.0
        %7488 = vmatpush.msra.mxu0 0.0
        %7489 = vmatpush.msra.mxu0 0.0
        %7490 = vmatpush.msra.mxu0 0.0
        %v7491 = vand.u32 %v7197, 4294901760
        %7492 = vmatpush.msra.mxu0 %v7491
        %v7493 = vand.u32 %v7200, 4294901760
        %7494 = vmatmul.f32.gmra.mxu0 %v7493
        %v7495 = vpop.f32.mrf.mxu0
        %v7496 = vadd.f32 %v7454, %v7495
        %v7497 = vand.u32 %v7203, 4294901760
        %7498 = vmatmul.f32.gmra.mxu0 %v7497
        %v7499 = vpop.f32.mrf.mxu0
        %v7500 = vadd.f32 %v7458, %v7499
        %v7501 = vand.u32 %v7206, 4294901760
        %7502 = vmatmul.f32.gmra.mxu0 %v7501
        %v7503 = vpop.f32.mrf.mxu0
        %v7504 = vadd.f32 %v7462, %v7503
        %v7505 = vand.u32 %v7209, 4294901760
        %7506 = vmatmul.f32.gmra.mxu0 %v7505
        %v7507 = vpop.f32.mrf.mxu0
        %v7508 = vadd.f32 %v7466, %v7507
        %v7509 = vand.u32 %v7212, 4294901760
        %7510 = vmatmul.f32.gmra.mxu0 %v7509
        %v7511 = vpop.f32.mrf.mxu0
        %v7512 = vadd.f32 %v7470, %v7511
        %v7513 = vand.u32 %v7215, 4294901760
        %7514 = vmatmul.f32.gmra.mxu0 %v7513
        %v7515 = vpop.f32.mrf.mxu0
        %v7516 = vadd.f32 %v7474, %v7515
        %7517 = vdwg.mxu0
        %7518 = vmatpush.msra.mxu0 0.0
        %7519 = vmatpush.msra.mxu0 0.0
        %7520 = vmatpush.msra.mxu0 0.0
        %7521 = vmatpush.msra.mxu0 0.0
        %7522 = vmatpush.msra.mxu0 0.0
        %7523 = vmatpush.msra.mxu0 0.0
        %7524 = vmatpush.msra.mxu0 0.0
        %7525 = vmatpush.msra.mxu0 0.0
        %7526 = vmatpush.msra.mxu0 0.0
        %7527 = vmatpush.msra.mxu0 0.0
        %7528 = vmatpush.msra.mxu0 0.0
        %7529 = vmatpush.msra.mxu0 0.0
        %7530 = vmatpush.msra.mxu0 0.0
        %7531 = vmatpush.msra.mxu0 0.0
        %7532 = vmatpush.msra.mxu0 0.0
        %v7533 = vand.u32 %v7198, 4294901760
        %7534 = vmatpush.msra.mxu0 %v7533
        %v7535 = vand.u32 %v7200, 4294901760
        %v7536 = vsub.f32 %v7200, %v7535
        %v7537 = vand.u32 %v7536, 4294901760
        %v7538 = vsub.f32 %v7536, %v7537
        %v7539 = vand.u32 %v7538, 4294901760
        %7540 = vmatmul.f32.gmra.mxu0 %v7539
        %v7541 = vpop.f32.mrf.mxu0
        %v7542 = vadd.f32 0.0, %v7541
        %v7543 = vand.u32 %v7203, 4294901760
        %v7544 = vsub.f32 %v7203, %v7543
        %v7545 = vand.u32 %v7544, 4294901760
        %v7546 = vsub.f32 %v7544, %v7545
        %v7547 = vand.u32 %v7546, 4294901760
        %7548 = vmatmul.f32.gmra.mxu0 %v7547
        %v7549 = vpop.f32.mrf.mxu0
        %v7550 = vadd.f32 0.0, %v7549
        %v7551 = vand.u32 %v7206, 4294901760
        %v7552 = vsub.f32 %v7206, %v7551
        %v7553 = vand.u32 %v7552, 4294901760
        %v7554 = vsub.f32 %v7552, %v7553
        %v7555 = vand.u32 %v7554, 4294901760
        %7556 = vmatmul.f32.gmra.mxu0 %v7555
        %v7557 = vpop.f32.mrf.mxu0
        %v7558 = vadd.f32 0.0, %v7557
        %v7559 = vand.u32 %v7209, 4294901760
        %v7560 = vsub.f32 %v7209, %v7559
        %v7561 = vand.u32 %v7560, 4294901760
        %v7562 = vsub.f32 %v7560, %v7561
        %v7563 = vand.u32 %v7562, 4294901760
        %7564 = vmatmul.f32.gmra.mxu0 %v7563
        %v7565 = vpop.f32.mrf.mxu0
        %v7566 = vadd.f32 0.0, %v7565
        %v7567 = vand.u32 %v7212, 4294901760
        %v7568 = vsub.f32 %v7212, %v7567
        %v7569 = vand.u32 %v7568, 4294901760
        %v7570 = vsub.f32 %v7568, %v7569
        %v7571 = vand.u32 %v7570, 4294901760
        %7572 = vmatmul.f32.gmra.mxu0 %v7571
        %v7573 = vpop.f32.mrf.mxu0
        %v7574 = vadd.f32 0.0, %v7573
        %v7575 = vand.u32 %v7215, 4294901760
        %v7576 = vsub.f32 %v7215, %v7575
        %v7577 = vand.u32 %v7576, 4294901760
        %v7578 = vsub.f32 %v7576, %v7577
        %v7579 = vand.u32 %v7578, 4294901760
        %7580 = vmatmul.f32.gmra.mxu0 %v7579
        %v7581 = vpop.f32.mrf.mxu0
        %v7582 = vadd.f32 0.0, %v7581
        %7583 = vdwg.mxu0
        %7584 = vmatpush.msra.mxu0 0.0
        %7585 = vmatpush.msra.mxu0 0.0
        %7586 = vmatpush.msra.mxu0 0.0
        %7587 = vmatpush.msra.mxu0 0.0
        %7588 = vmatpush.msra.mxu0 0.0
        %7589 = vmatpush.msra.mxu0 0.0
        %7590 = vmatpush.msra.mxu0 0.0
        %7591 = vmatpush.msra.mxu0 0.0
        %7592 = vmatpush.msra.mxu0 0.0
        %7593 = vmatpush.msra.mxu0 0.0
        %7594 = vmatpush.msra.mxu0 0.0
        %7595 = vmatpush.msra.mxu0 0.0
        %7596 = vmatpush.msra.mxu0 0.0
        %7597 = vmatpush.msra.mxu0 0.0
        %7598 = vmatpush.msra.mxu0 0.0
        %v7599 = vand.u32 %v7198, 4294901760
        %v7600 = vsub.f32 %v7198, %v7599
        %v7601 = vand.u32 %v7600, 4294901760
        %v7602 = vsub.f32 %v7600, %v7601
        %v7603 = vand.u32 %v7602, 4294901760
        %7604 = vmatpush.msra.mxu0 %v7603
        %v7605 = vand.u32 %v7200, 4294901760
        %7606 = vmatmul.f32.gmra.mxu0 %v7605
        %v7607 = vpop.f32.mrf.mxu0
        %v7608 = vadd.f32 %v7542, %v7607
        %v7609 = vand.u32 %v7203, 4294901760
        %7610 = vmatmul.f32.gmra.mxu0 %v7609
        %v7611 = vpop.f32.mrf.mxu0
        %v7612 = vadd.f32 %v7550, %v7611
        %v7613 = vand.u32 %v7206, 4294901760
        %7614 = vmatmul.f32.gmra.mxu0 %v7613
        %v7615 = vpop.f32.mrf.mxu0
        %v7616 = vadd.f32 %v7558, %v7615
        %v7617 = vand.u32 %v7209, 4294901760
        %7618 = vmatmul.f32.gmra.mxu0 %v7617
        %v7619 = vpop.f32.mrf.mxu0
        %v7620 = vadd.f32 %v7566, %v7619
        %v7621 = vand.u32 %v7212, 4294901760
        %7622 = vmatmul.f32.gmra.mxu0 %v7621
        %v7623 = vpop.f32.mrf.mxu0
        %v7624 = vadd.f32 %v7574, %v7623
        %v7625 = vand.u32 %v7215, 4294901760
        %7626 = vmatmul.f32.gmra.mxu0 %v7625
        %v7627 = vpop.f32.mrf.mxu0
        %v7628 = vadd.f32 %v7582, %v7627
        %7629 = vdwg.mxu0
        %7630 = vmatpush.msra.mxu0 0.0
        %7631 = vmatpush.msra.mxu0 0.0
        %7632 = vmatpush.msra.mxu0 0.0
        %7633 = vmatpush.msra.mxu0 0.0
        %7634 = vmatpush.msra.mxu0 0.0
        %7635 = vmatpush.msra.mxu0 0.0
        %7636 = vmatpush.msra.mxu0 0.0
        %7637 = vmatpush.msra.mxu0 0.0
        %7638 = vmatpush.msra.mxu0 0.0
        %7639 = vmatpush.msra.mxu0 0.0
        %7640 = vmatpush.msra.mxu0 0.0
        %7641 = vmatpush.msra.mxu0 0.0
        %7642 = vmatpush.msra.mxu0 0.0
        %7643 = vmatpush.msra.mxu0 0.0
        %7644 = vmatpush.msra.mxu0 0.0
        %v7645 = vand.u32 %v7198, 4294901760
        %v7646 = vsub.f32 %v7198, %v7645
        %7647 = vmatpush.msra.mxu0 %v7646
        %v7648 = vand.u32 %v7200, 4294901760
        %v7649 = vsub.f32 %v7200, %v7648
        %7650 = vmatmul.f32.gmra.mxu0 %v7649
        %v7651 = vpop.f32.mrf.mxu0
        %v7652 = vadd.f32 %v7608, %v7651
        %v7653 = vand.u32 %v7203, 4294901760
        %v7654 = vsub.f32 %v7203, %v7653
        %7655 = vmatmul.f32.gmra.mxu0 %v7654
        %v7656 = vpop.f32.mrf.mxu0
        %v7657 = vadd.f32 %v7612, %v7656
        %v7658 = vand.u32 %v7206, 4294901760
        %v7659 = vsub.f32 %v7206, %v7658
        %7660 = vmatmul.f32.gmra.mxu0 %v7659
        %v7661 = vpop.f32.mrf.mxu0
        %v7662 = vadd.f32 %v7616, %v7661
        %v7663 = vand.u32 %v7209, 4294901760
        %v7664 = vsub.f32 %v7209, %v7663
        %7665 = vmatmul.f32.gmra.mxu0 %v7664
        %v7666 = vpop.f32.mrf.mxu0
        %v7667 = vadd.f32 %v7620, %v7666
        %v7668 = vand.u32 %v7212, 4294901760
        %v7669 = vsub.f32 %v7212, %v7668
        %7670 = vmatmul.f32.gmra.mxu0 %v7669
        %v7671 = vpop.f32.mrf.mxu0
        %v7672 = vadd.f32 %v7624, %v7671
        %v7673 = vand.u32 %v7215, 4294901760
        %v7674 = vsub.f32 %v7215, %v7673
        %7675 = vmatmul.f32.gmra.mxu0 %v7674
        %v7676 = vpop.f32.mrf.mxu0
        %v7677 = vadd.f32 %v7628, %v7676
        %7678 = vdwg.mxu0
        %7679 = vmatpush.msra.mxu0 0.0
        %7680 = vmatpush.msra.mxu0 0.0
        %7681 = vmatpush.msra.mxu0 0.0
        %7682 = vmatpush.msra.mxu0 0.0
        %7683 = vmatpush.msra.mxu0 0.0
        %7684 = vmatpush.msra.mxu0 0.0
        %7685 = vmatpush.msra.mxu0 0.0
        %7686 = vmatpush.msra.mxu0 0.0
        %7687 = vmatpush.msra.mxu0 0.0
        %7688 = vmatpush.msra.mxu0 0.0
        %7689 = vmatpush.msra.mxu0 0.0
        %7690 = vmatpush.msra.mxu0 0.0
        %7691 = vmatpush.msra.mxu0 0.0
        %7692 = vmatpush.msra.mxu0 0.0
        %7693 = vmatpush.msra.mxu0 0.0
        %v7694 = vand.u32 %v7198, 4294901760
        %7695 = vmatpush.msra.mxu0 %v7694
        %v7696 = vand.u32 %v7200, 4294901760
        %v7697 = vsub.f32 %v7200, %v7696
        %v7698 = vand.u32 %v7697, 4294901760
        %7699 = vmatmul.f32.gmra.mxu0 %v7698
        %v7700 = vpop.f32.mrf.mxu0
        %v7701 = vadd.f32 %v7652, %v7700
        %v7702 = vand.u32 %v7203, 4294901760
        %v7703 = vsub.f32 %v7203, %v7702
        %v7704 = vand.u32 %v7703, 4294901760
        %7705 = vmatmul.f32.gmra.mxu0 %v7704
        %v7706 = vpop.f32.mrf.mxu0
        %v7707 = vadd.f32 %v7657, %v7706
        %v7708 = vand.u32 %v7206, 4294901760
        %v7709 = vsub.f32 %v7206, %v7708
        %v7710 = vand.u32 %v7709, 4294901760
        %7711 = vmatmul.f32.gmra.mxu0 %v7710
        %v7712 = vpop.f32.mrf.mxu0
        %v7713 = vadd.f32 %v7662, %v7712
        %v7714 = vand.u32 %v7209, 4294901760
        %v7715 = vsub.f32 %v7209, %v7714
        %v7716 = vand.u32 %v7715, 4294901760
        %7717 = vmatmul.f32.gmra.mxu0 %v7716
        %v7718 = vpop.f32.mrf.mxu0
        %v7719 = vadd.f32 %v7667, %v7718
        %v7720 = vand.u32 %v7212, 4294901760
        %v7721 = vsub.f32 %v7212, %v7720
        %v7722 = vand.u32 %v7721, 4294901760
        %7723 = vmatmul.f32.gmra.mxu0 %v7722
        %v7724 = vpop.f32.mrf.mxu0
        %v7725 = vadd.f32 %v7672, %v7724
        %v7726 = vand.u32 %v7215, 4294901760
        %v7727 = vsub.f32 %v7215, %v7726
        %v7728 = vand.u32 %v7727, 4294901760
        %7729 = vmatmul.f32.gmra.mxu0 %v7728
        %v7730 = vpop.f32.mrf.mxu0
        %v7731 = vadd.f32 %v7677, %v7730
        %7732 = vdwg.mxu0
        %7733 = vmatpush.msra.mxu0 0.0
        %7734 = vmatpush.msra.mxu0 0.0
        %7735 = vmatpush.msra.mxu0 0.0
        %7736 = vmatpush.msra.mxu0 0.0
        %7737 = vmatpush.msra.mxu0 0.0
        %7738 = vmatpush.msra.mxu0 0.0
        %7739 = vmatpush.msra.mxu0 0.0
        %7740 = vmatpush.msra.mxu0 0.0
        %7741 = vmatpush.msra.mxu0 0.0
        %7742 = vmatpush.msra.mxu0 0.0
        %7743 = vmatpush.msra.mxu0 0.0
        %7744 = vmatpush.msra.mxu0 0.0
        %7745 = vmatpush.msra.mxu0 0.0
        %7746 = vmatpush.msra.mxu0 0.0
        %7747 = vmatpush.msra.mxu0 0.0
        %v7748 = vand.u32 %v7198, 4294901760
        %v7749 = vsub.f32 %v7198, %v7748
        %v7750 = vand.u32 %v7749, 4294901760
        %7751 = vmatpush.msra.mxu0 %v7750
        %v7752 = vand.u32 %v7200, 4294901760
        %7753 = vmatmul.f32.gmra.mxu0 %v7752
        %v7754 = vpop.f32.mrf.mxu0
        %v7755 = vadd.f32 %v7701, %v7754
        %v7756 = vand.u32 %v7203, 4294901760
        %7757 = vmatmul.f32.gmra.mxu0 %v7756
        %v7758 = vpop.f32.mrf.mxu0
        %v7759 = vadd.f32 %v7707, %v7758
        %v7760 = vand.u32 %v7206, 4294901760
        %7761 = vmatmul.f32.gmra.mxu0 %v7760
        %v7762 = vpop.f32.mrf.mxu0
        %v7763 = vadd.f32 %v7713, %v7762
        %v7764 = vand.u32 %v7209, 4294901760
        %7765 = vmatmul.f32.gmra.mxu0 %v7764
        %v7766 = vpop.f32.mrf.mxu0
        %v7767 = vadd.f32 %v7719, %v7766
        %v7768 = vand.u32 %v7212, 4294901760
        %7769 = vmatmul.f32.gmra.mxu0 %v7768
        %v7770 = vpop.f32.mrf.mxu0
        %v7771 = vadd.f32 %v7725, %v7770
        %v7772 = vand.u32 %v7215, 4294901760
        %7773 = vmatmul.f32.gmra.mxu0 %v7772
        %v7774 = vpop.f32.mrf.mxu0
        %v7775 = vadd.f32 %v7731, %v7774
        %7776 = vdwg.mxu0
        %7777 = vmatpush.msra.mxu0 0.0
        %7778 = vmatpush.msra.mxu0 0.0
        %7779 = vmatpush.msra.mxu0 0.0
        %7780 = vmatpush.msra.mxu0 0.0
        %7781 = vmatpush.msra.mxu0 0.0
        %7782 = vmatpush.msra.mxu0 0.0
        %7783 = vmatpush.msra.mxu0 0.0
        %7784 = vmatpush.msra.mxu0 0.0
        %7785 = vmatpush.msra.mxu0 0.0
        %7786 = vmatpush.msra.mxu0 0.0
        %7787 = vmatpush.msra.mxu0 0.0
        %7788 = vmatpush.msra.mxu0 0.0
        %7789 = vmatpush.msra.mxu0 0.0
        %7790 = vmatpush.msra.mxu0 0.0
        %7791 = vmatpush.msra.mxu0 0.0
        %v7792 = vand.u32 %v7198, 4294901760
        %7793 = vmatpush.msra.mxu0 %v7792
        %v7794 = vand.u32 %v7200, 4294901760
        %7795 = vmatmul.f32.gmra.mxu0 %v7794
        %v7796 = vpop.f32.mrf.mxu0
        %v7797 = vadd.f32 %v7755, %v7796
        %v7798 = vand.u32 %v7203, 4294901760
        %7799 = vmatmul.f32.gmra.mxu0 %v7798
        %v7800 = vpop.f32.mrf.mxu0
        %v7801 = vadd.f32 %v7759, %v7800
        %v7802 = vand.u32 %v7206, 4294901760
        %7803 = vmatmul.f32.gmra.mxu0 %v7802
        %v7804 = vpop.f32.mrf.mxu0
        %v7805 = vadd.f32 %v7763, %v7804
        %v7806 = vand.u32 %v7209, 4294901760
        %7807 = vmatmul.f32.gmra.mxu0 %v7806
        %v7808 = vpop.f32.mrf.mxu0
        %v7809 = vadd.f32 %v7767, %v7808
        %v7810 = vand.u32 %v7212, 4294901760
        %7811 = vmatmul.f32.gmra.mxu0 %v7810
        %v7812 = vpop.f32.mrf.mxu0
        %v7813 = vadd.f32 %v7771, %v7812
        %v7814 = vand.u32 %v7215, 4294901760
        %7815 = vmatmul.f32.gmra.mxu0 %v7814
        %v7816 = vpop.f32.mrf.mxu0
        %v7817 = vadd.f32 %v7775, %v7816
        %7818 = vdwg.mxu0
        %7820 = vset.pattern.permute.xlu0 4
        %7821 = vperm.xlu0 %7820, %v5271
        %v7822 = vpop.permute.xlu0 %7821
        %7825 = vset.pattern.permute.xlu0 4
        %7826 = vperm.xlu0 %7825, %v5272
        %v7827 = vpop.permute.xlu0 %7826
        %7830 = vset.pattern.permute.xlu0 4
        %7831 = vperm.xlu0 %7830, %v5273
        %v7832 = vpop.permute.xlu0 %7831
        %7835 = vset.pattern.permute.xlu0 4
        %7836 = vperm.xlu0 %7835, %v5274
        %v7837 = vpop.permute.xlu0 %7836
        %7840 = vset.pattern.permute.xlu0 4
        %7841 = vperm.xlu0 %7840, %v5275
        %v7842 = vpop.permute.xlu0 %7841
        %7845 = vset.pattern.permute.xlu0 4
        %7846 = vperm.xlu0 %7845, %v5276
        %v7847 = vpop.permute.xlu0 %7846
        %v7849 = vmul.f32 %v7496, %v7822
        %v7850 = vmul.f32 %v7797, %v7822
        %v7851 = vmul.f32 %v7500, %v7827
        %v7852 = vmul.f32 %v7801, %v7827
        %v7853 = vmul.f32 %v7504, %v7832
        %v7854 = vmul.f32 %v7805, %v7832
        %v7855 = vmul.f32 %v7508, %v7837
        %v7856 = vmul.f32 %v7809, %v7837
        %v7857 = vmul.f32 %v7512, %v7842
        %v7858 = vmul.f32 %v7813, %v7842
        %v7859 = vmul.f32 %v7516, %v7847
        %v7860 = vmul.f32 %v7817, %v7847
        %7861 = vrot.lane.b32.xlu0 %v7496, 17
        %v7862 = vpop.permute.xlu0 %7861
        %7863 = vrot.lane.b32.xlu0 %v7500, 17
        %v7864 = vpop.permute.xlu0 %7863
        %7865 = vrot.lane.b32.xlu0 %v7504, 17
        %v7866 = vpop.permute.xlu0 %7865
        %7867 = vrot.lane.b32.xlu0 %v7508, 17
        %v7868 = vpop.permute.xlu0 %7867
        %7869 = vrot.lane.b32.xlu0 %v7512, 17
        %v7870 = vpop.permute.xlu0 %7869
        %7871 = vrot.lane.b32.xlu0 %v7516, 17
        %v7872 = vpop.permute.xlu0 %7871
        %7873 = vrot.lane.b32.xlu0 %v7797, 17
        %v7874 = vpop.permute.xlu0 %7873
        %7875 = vrot.lane.b32.xlu0 %v7801, 17
        %v7876 = vpop.permute.xlu0 %7875
        %7877 = vrot.lane.b32.xlu0 %v7805, 17
        %v7878 = vpop.permute.xlu0 %7877
        %7879 = vrot.lane.b32.xlu0 %v7809, 17
        %v7880 = vpop.permute.xlu0 %7879
        %7881 = vrot.lane.b32.xlu0 %v7813, 17
        %v7882 = vpop.permute.xlu0 %7881
        %7883 = vrot.lane.b32.xlu0 %v7817, 17
        %v7884 = vpop.permute.xlu0 %7883
        %v7885 = vsel %vm1895, %v7862, %v7874
        %v7886 = vsel %vm1895, %v7864, %v7876
        %v7887 = vsel %vm1895, %v7866, %v7878
        %v7888 = vsel %vm1895, %v7868, %v7880
        %v7889 = vsel %vm1895, %v7870, %v7882
        %v7890 = vsel %vm1895, %v7872, %v7884
        %v7891 = vsel %vm1895, %v7874, %v7862
        %v7892 = vsel %vm1895, %v7876, %v7864
        %v7893 = vsel %vm1895, %v7878, %v7866
        %v7894 = vsel %vm1895, %v7880, %v7868
        %v7895 = vsel %vm1895, %v7882, %v7870
        %v7896 = vsel %vm1895, %v7884, %v7872
        %v7897 = vmul.f32 %v7891, %v1898
        %v7898 = vmul.f32 %v7885, %v1899
        %v7899 = vmul.f32 %v7892, %v1898
        %v7900 = vmul.f32 %v7886, %v1899
        %v7901 = vmul.f32 %v7893, %v1898
        %v7902 = vmul.f32 %v7887, %v1899
        %v7903 = vmul.f32 %v7894, %v1898
        %v7904 = vmul.f32 %v7888, %v1899
        %v7905 = vmul.f32 %v7895, %v1898
        %v7906 = vmul.f32 %v7889, %v1899
        %v7907 = vmul.f32 %v7896, %v1898
        %v7908 = vmul.f32 %v7890, %v1899
        %7909 = vset.pattern.permute.xlu0 0
        %7910 = vperm.xlu0 %7909, %v5271
        %v7911 = vpop.permute.xlu0 %7910
        %7913 = vset.pattern.permute.xlu0 0
        %7914 = vperm.xlu0 %7913, %v5272
        %v7915 = vpop.permute.xlu0 %7914
        %7917 = vset.pattern.permute.xlu0 0
        %7918 = vperm.xlu0 %7917, %v5273
        %v7919 = vpop.permute.xlu0 %7918
        %7921 = vset.pattern.permute.xlu0 0
        %7922 = vperm.xlu0 %7921, %v5274
        %v7923 = vpop.permute.xlu0 %7922
        %7925 = vset.pattern.permute.xlu0 0
        %7926 = vperm.xlu0 %7925, %v5275
        %v7927 = vpop.permute.xlu0 %7926
        %7929 = vset.pattern.permute.xlu0 0
        %7930 = vperm.xlu0 %7929, %v5276
        %v7931 = vpop.permute.xlu0 %7930
        %v7933 = vmul.f32 %v7897, %v7911
        %v7934 = vmul.f32 %v7898, %v7911
        %v7935 = vmul.f32 %v7899, %v7915
        %v7936 = vmul.f32 %v7900, %v7915
        %v7937 = vmul.f32 %v7901, %v7919
        %v7938 = vmul.f32 %v7902, %v7919
        %v7939 = vmul.f32 %v7903, %v7923
        %v7940 = vmul.f32 %v7904, %v7923
        %v7941 = vmul.f32 %v7905, %v7927
        %v7942 = vmul.f32 %v7906, %v7927
        %v7943 = vmul.f32 %v7907, %v7931
        %v7944 = vmul.f32 %v7908, %v7931
        %v7945 = vadd.f32 %v7849, %v7933
        %v7946 = vadd.f32 %v7850, %v7934
        %v7947 = vadd.f32 %v7851, %v7935
        %v7948 = vadd.f32 %v7852, %v7936
        %v7949 = vadd.f32 %v7853, %v7937
        %v7950 = vadd.f32 %v7854, %v7938
        %v7951 = vadd.f32 %v7855, %v7939
        %v7952 = vadd.f32 %v7856, %v7940
        %v7953 = vadd.f32 %v7857, %v7941
        %v7954 = vadd.f32 %v7858, %v7942
        %v7955 = vadd.f32 %v7859, %v7943
        %v7956 = vadd.f32 %v7860, %v7944
        %7957 = vrot.lane.b32.xlu0 %v7496, 16
        %v7958 = vpop.permute.xlu0 %7957
        %7959 = vrot.lane.b32.xlu0 %v7500, 16
        %v7960 = vpop.permute.xlu0 %7959
        %7961 = vrot.lane.b32.xlu0 %v7504, 16
        %v7962 = vpop.permute.xlu0 %7961
        %7963 = vrot.lane.b32.xlu0 %v7508, 16
        %v7964 = vpop.permute.xlu0 %7963
        %7965 = vrot.lane.b32.xlu0 %v7512, 16
        %v7966 = vpop.permute.xlu0 %7965
        %7967 = vrot.lane.b32.xlu0 %v7516, 16
        %v7968 = vpop.permute.xlu0 %7967
        %7969 = vrot.lane.b32.xlu0 %v7797, 16
        %v7970 = vpop.permute.xlu0 %7969
        %7971 = vrot.lane.b32.xlu0 %v7801, 16
        %v7972 = vpop.permute.xlu0 %7971
        %7973 = vrot.lane.b32.xlu0 %v7805, 16
        %v7974 = vpop.permute.xlu0 %7973
        %7975 = vrot.lane.b32.xlu0 %v7809, 16
        %v7976 = vpop.permute.xlu0 %7975
        %7977 = vrot.lane.b32.xlu0 %v7813, 16
        %v7978 = vpop.permute.xlu0 %7977
        %7979 = vrot.lane.b32.xlu0 %v7817, 16
        %v7980 = vpop.permute.xlu0 %7979
        %v7981 = vsel %vm1914, %v7958, %v7970
        %v7982 = vsel %vm1914, %v7960, %v7972
        %v7983 = vsel %vm1914, %v7962, %v7974
        %v7984 = vsel %vm1914, %v7964, %v7976
        %v7985 = vsel %vm1914, %v7966, %v7978
        %v7986 = vsel %vm1914, %v7968, %v7980
        %v7987 = vsel %vm1914, %v7970, %v7958
        %v7988 = vsel %vm1914, %v7972, %v7960
        %v7989 = vsel %vm1914, %v7974, %v7962
        %v7990 = vsel %vm1914, %v7976, %v7964
        %v7991 = vsel %vm1914, %v7978, %v7966
        %v7992 = vsel %vm1914, %v7980, %v7968
        %v7993 = vmul.f32 %v7987, %v1917
        %v7994 = vmul.f32 %v7981, %v1918
        %v7995 = vmul.f32 %v7988, %v1917
        %v7996 = vmul.f32 %v7982, %v1918
        %v7997 = vmul.f32 %v7989, %v1917
        %v7998 = vmul.f32 %v7983, %v1918
        %v7999 = vmul.f32 %v7990, %v1917
        %v8000 = vmul.f32 %v7984, %v1918
        %v8001 = vmul.f32 %v7991, %v1917
        %v8002 = vmul.f32 %v7985, %v1918
        %v8003 = vmul.f32 %v7992, %v1917
        %v8004 = vmul.f32 %v7986, %v1918
        %8005 = vset.pattern.permute.xlu0 1
        %8006 = vperm.xlu0 %8005, %v5271
        %v8007 = vpop.permute.xlu0 %8006
        %8009 = vset.pattern.permute.xlu0 1
        %8010 = vperm.xlu0 %8009, %v5272
        %v8011 = vpop.permute.xlu0 %8010
        %8013 = vset.pattern.permute.xlu0 1
        %8014 = vperm.xlu0 %8013, %v5273
        %v8015 = vpop.permute.xlu0 %8014
        %8017 = vset.pattern.permute.xlu0 1
        %8018 = vperm.xlu0 %8017, %v5274
        %v8019 = vpop.permute.xlu0 %8018
        %8021 = vset.pattern.permute.xlu0 1
        %8022 = vperm.xlu0 %8021, %v5275
        %v8023 = vpop.permute.xlu0 %8022
        %8025 = vset.pattern.permute.xlu0 1
        %8026 = vperm.xlu0 %8025, %v5276
        %v8027 = vpop.permute.xlu0 %8026
        %v8029 = vmul.f32 %v7993, %v8007
        %v8030 = vmul.f32 %v7994, %v8007
        %v8031 = vmul.f32 %v7995, %v8011
        %v8032 = vmul.f32 %v7996, %v8011
        %v8033 = vmul.f32 %v7997, %v8015
        %v8034 = vmul.f32 %v7998, %v8015
        %v8035 = vmul.f32 %v7999, %v8019
        %v8036 = vmul.f32 %v8000, %v8019
        %v8037 = vmul.f32 %v8001, %v8023
        %v8038 = vmul.f32 %v8002, %v8023
        %v8039 = vmul.f32 %v8003, %v8027
        %v8040 = vmul.f32 %v8004, %v8027
        %v8041 = vadd.f32 %v7945, %v8029
        %v8042 = vadd.f32 %v7946, %v8030
        %v8043 = vadd.f32 %v7947, %v8031
        %v8044 = vadd.f32 %v7948, %v8032
        %v8045 = vadd.f32 %v7949, %v8033
        %v8046 = vadd.f32 %v7950, %v8034
        %v8047 = vadd.f32 %v7951, %v8035
        %v8048 = vadd.f32 %v7952, %v8036
        %v8049 = vadd.f32 %v7953, %v8037
        %v8050 = vadd.f32 %v7954, %v8038
        %v8051 = vadd.f32 %v7955, %v8039
        %v8052 = vadd.f32 %v7956, %v8040
        %8053 = vrot.lane.b32.xlu0 %v7496, 15
        %v8054 = vpop.permute.xlu0 %8053
        %8055 = vrot.lane.b32.xlu0 %v7500, 15
        %v8056 = vpop.permute.xlu0 %8055
        %8057 = vrot.lane.b32.xlu0 %v7504, 15
        %v8058 = vpop.permute.xlu0 %8057
        %8059 = vrot.lane.b32.xlu0 %v7508, 15
        %v8060 = vpop.permute.xlu0 %8059
        %8061 = vrot.lane.b32.xlu0 %v7512, 15
        %v8062 = vpop.permute.xlu0 %8061
        %8063 = vrot.lane.b32.xlu0 %v7516, 15
        %v8064 = vpop.permute.xlu0 %8063
        %8065 = vrot.lane.b32.xlu0 %v7797, 15
        %v8066 = vpop.permute.xlu0 %8065
        %8067 = vrot.lane.b32.xlu0 %v7801, 15
        %v8068 = vpop.permute.xlu0 %8067
        %8069 = vrot.lane.b32.xlu0 %v7805, 15
        %v8070 = vpop.permute.xlu0 %8069
        %8071 = vrot.lane.b32.xlu0 %v7809, 15
        %v8072 = vpop.permute.xlu0 %8071
        %8073 = vrot.lane.b32.xlu0 %v7813, 15
        %v8074 = vpop.permute.xlu0 %8073
        %8075 = vrot.lane.b32.xlu0 %v7817, 15
        %v8076 = vpop.permute.xlu0 %8075
        %v8077 = vsel %vm1933, %v8054, %v8066
        %v8078 = vsel %vm1933, %v8056, %v8068
        %v8079 = vsel %vm1933, %v8058, %v8070
        %v8080 = vsel %vm1933, %v8060, %v8072
        %v8081 = vsel %vm1933, %v8062, %v8074
        %v8082 = vsel %vm1933, %v8064, %v8076
        %v8083 = vsel %vm1933, %v8066, %v8054
        %v8084 = vsel %vm1933, %v8068, %v8056
        %v8085 = vsel %vm1933, %v8070, %v8058
        %v8086 = vsel %vm1933, %v8072, %v8060
        %v8087 = vsel %vm1933, %v8074, %v8062
        %v8088 = vsel %vm1933, %v8076, %v8064
        %v8089 = vmul.f32 %v8083, %v1936
        %v8090 = vmul.f32 %v8077, %v1937
        %v8091 = vmul.f32 %v8084, %v1936
        %v8092 = vmul.f32 %v8078, %v1937
        %v8093 = vmul.f32 %v8085, %v1936
        %v8094 = vmul.f32 %v8079, %v1937
        %v8095 = vmul.f32 %v8086, %v1936
        %v8096 = vmul.f32 %v8080, %v1937
        %v8097 = vmul.f32 %v8087, %v1936
        %v8098 = vmul.f32 %v8081, %v1937
        %v8099 = vmul.f32 %v8088, %v1936
        %v8100 = vmul.f32 %v8082, %v1937
        %8101 = vset.pattern.permute.xlu0 2
        %8102 = vperm.xlu0 %8101, %v5271
        %v8103 = vpop.permute.xlu0 %8102
        %8105 = vset.pattern.permute.xlu0 2
        %8106 = vperm.xlu0 %8105, %v5272
        %v8107 = vpop.permute.xlu0 %8106
        %8109 = vset.pattern.permute.xlu0 2
        %8110 = vperm.xlu0 %8109, %v5273
        %v8111 = vpop.permute.xlu0 %8110
        %8113 = vset.pattern.permute.xlu0 2
        %8114 = vperm.xlu0 %8113, %v5274
        %v8115 = vpop.permute.xlu0 %8114
        %8117 = vset.pattern.permute.xlu0 2
        %8118 = vperm.xlu0 %8117, %v5275
        %v8119 = vpop.permute.xlu0 %8118
        %8121 = vset.pattern.permute.xlu0 2
        %8122 = vperm.xlu0 %8121, %v5276
        %v8123 = vpop.permute.xlu0 %8122
        %v8125 = vmul.f32 %v8089, %v8103
        %v8126 = vmul.f32 %v8090, %v8103
        %v8127 = vmul.f32 %v8091, %v8107
        %v8128 = vmul.f32 %v8092, %v8107
        %v8129 = vmul.f32 %v8093, %v8111
        %v8130 = vmul.f32 %v8094, %v8111
        %v8131 = vmul.f32 %v8095, %v8115
        %v8132 = vmul.f32 %v8096, %v8115
        %v8133 = vmul.f32 %v8097, %v8119
        %v8134 = vmul.f32 %v8098, %v8119
        %v8135 = vmul.f32 %v8099, %v8123
        %v8136 = vmul.f32 %v8100, %v8123
        %v8137 = vadd.f32 %v8041, %v8125
        %v8138 = vadd.f32 %v8042, %v8126
        %v8139 = vadd.f32 %v8043, %v8127
        %v8140 = vadd.f32 %v8044, %v8128
        %v8141 = vadd.f32 %v8045, %v8129
        %v8142 = vadd.f32 %v8046, %v8130
        %v8143 = vadd.f32 %v8047, %v8131
        %v8144 = vadd.f32 %v8048, %v8132
        %v8145 = vadd.f32 %v8049, %v8133
        %v8146 = vadd.f32 %v8050, %v8134
        %v8147 = vadd.f32 %v8051, %v8135
        %v8148 = vadd.f32 %v8052, %v8136
        %8149 = vrot.lane.b32.xlu0 %v7496, 1
        %v8150 = vpop.permute.xlu0 %8149
        %8151 = vrot.lane.b32.xlu0 %v7500, 1
        %v8152 = vpop.permute.xlu0 %8151
        %8153 = vrot.lane.b32.xlu0 %v7504, 1
        %v8154 = vpop.permute.xlu0 %8153
        %8155 = vrot.lane.b32.xlu0 %v7508, 1
        %v8156 = vpop.permute.xlu0 %8155
        %8157 = vrot.lane.b32.xlu0 %v7512, 1
        %v8158 = vpop.permute.xlu0 %8157
        %8159 = vrot.lane.b32.xlu0 %v7516, 1
        %v8160 = vpop.permute.xlu0 %8159
        %8161 = vrot.lane.b32.xlu0 %v7797, 1
        %v8162 = vpop.permute.xlu0 %8161
        %8163 = vrot.lane.b32.xlu0 %v7801, 1
        %v8164 = vpop.permute.xlu0 %8163
        %8165 = vrot.lane.b32.xlu0 %v7805, 1
        %v8166 = vpop.permute.xlu0 %8165
        %8167 = vrot.lane.b32.xlu0 %v7809, 1
        %v8168 = vpop.permute.xlu0 %8167
        %8169 = vrot.lane.b32.xlu0 %v7813, 1
        %v8170 = vpop.permute.xlu0 %8169
        %8171 = vrot.lane.b32.xlu0 %v7817, 1
        %v8172 = vpop.permute.xlu0 %8171
        %v8173 = vsel %vm1952, %v8150, %v8162
        %v8174 = vsel %vm1952, %v8152, %v8164
        %v8175 = vsel %vm1952, %v8154, %v8166
        %v8176 = vsel %vm1952, %v8156, %v8168
        %v8177 = vsel %vm1952, %v8158, %v8170
        %v8178 = vsel %vm1952, %v8160, %v8172
        %v8179 = vsel %vm1952, %v8162, %v8150
        %v8180 = vsel %vm1952, %v8164, %v8152
        %v8181 = vsel %vm1952, %v8166, %v8154
        %v8182 = vsel %vm1952, %v8168, %v8156
        %v8183 = vsel %vm1952, %v8170, %v8158
        %v8184 = vsel %vm1952, %v8172, %v8160
        %v8185 = vmul.f32 %v8179, %v1955
        %v8186 = vmul.f32 %v8173, %v1956
        %v8187 = vmul.f32 %v8180, %v1955
        %v8188 = vmul.f32 %v8174, %v1956
        %v8189 = vmul.f32 %v8181, %v1955
        %v8190 = vmul.f32 %v8175, %v1956
        %v8191 = vmul.f32 %v8182, %v1955
        %v8192 = vmul.f32 %v8176, %v1956
        %v8193 = vmul.f32 %v8183, %v1955
        %v8194 = vmul.f32 %v8177, %v1956
        %v8195 = vmul.f32 %v8184, %v1955
        %v8196 = vmul.f32 %v8178, %v1956
        %8197 = vset.pattern.permute.xlu0 3
        %8198 = vperm.xlu0 %8197, %v5271
        %v8199 = vpop.permute.xlu0 %8198
        %8201 = vset.pattern.permute.xlu0 3
        %8202 = vperm.xlu0 %8201, %v5272
        %v8203 = vpop.permute.xlu0 %8202
        %8205 = vset.pattern.permute.xlu0 3
        %8206 = vperm.xlu0 %8205, %v5273
        %v8207 = vpop.permute.xlu0 %8206
        %8209 = vset.pattern.permute.xlu0 3
        %8210 = vperm.xlu0 %8209, %v5274
        %v8211 = vpop.permute.xlu0 %8210
        %8213 = vset.pattern.permute.xlu0 3
        %8214 = vperm.xlu0 %8213, %v5275
        %v8215 = vpop.permute.xlu0 %8214
        %8217 = vset.pattern.permute.xlu0 3
        %8218 = vperm.xlu0 %8217, %v5276
        %v8219 = vpop.permute.xlu0 %8218
        %v8221 = vmul.f32 %v8185, %v8199
        %v8222 = vmul.f32 %v8186, %v8199
        %v8223 = vmul.f32 %v8187, %v8203
        %v8224 = vmul.f32 %v8188, %v8203
        %v8225 = vmul.f32 %v8189, %v8207
        %v8226 = vmul.f32 %v8190, %v8207
        %v8227 = vmul.f32 %v8191, %v8211
        %v8228 = vmul.f32 %v8192, %v8211
        %v8229 = vmul.f32 %v8193, %v8215
        %v8230 = vmul.f32 %v8194, %v8215
        %v8231 = vmul.f32 %v8195, %v8219
        %v8232 = vmul.f32 %v8196, %v8219
        %v8233 = vadd.f32 %v8137, %v8221
        %v8234 = vadd.f32 %v8138, %v8222
        %v8235 = vadd.f32 %v8139, %v8223
        %v8236 = vadd.f32 %v8140, %v8224
        %v8237 = vadd.f32 %v8141, %v8225
        %v8238 = vadd.f32 %v8142, %v8226
        %v8239 = vadd.f32 %v8143, %v8227
        %v8240 = vadd.f32 %v8144, %v8228
        %v8241 = vadd.f32 %v8145, %v8229
        %v8242 = vadd.f32 %v8146, %v8230
        %v8243 = vadd.f32 %v8147, %v8231
        %v8244 = vadd.f32 %v8148, %v8232
        %8245 = vrot.lane.b32.xlu0 %v7496, 127
        %v8246 = vpop.permute.xlu0 %8245
        %8247 = vrot.lane.b32.xlu0 %v7500, 127
        %v8248 = vpop.permute.xlu0 %8247
        %8249 = vrot.lane.b32.xlu0 %v7504, 127
        %v8250 = vpop.permute.xlu0 %8249
        %8251 = vrot.lane.b32.xlu0 %v7508, 127
        %v8252 = vpop.permute.xlu0 %8251
        %8253 = vrot.lane.b32.xlu0 %v7512, 127
        %v8254 = vpop.permute.xlu0 %8253
        %8255 = vrot.lane.b32.xlu0 %v7516, 127
        %v8256 = vpop.permute.xlu0 %8255
        %8257 = vrot.lane.b32.xlu0 %v7797, 127
        %v8258 = vpop.permute.xlu0 %8257
        %8259 = vrot.lane.b32.xlu0 %v7801, 127
        %v8260 = vpop.permute.xlu0 %8259
        %8261 = vrot.lane.b32.xlu0 %v7805, 127
        %v8262 = vpop.permute.xlu0 %8261
        %8263 = vrot.lane.b32.xlu0 %v7809, 127
        %v8264 = vpop.permute.xlu0 %8263
        %8265 = vrot.lane.b32.xlu0 %v7813, 127
        %v8266 = vpop.permute.xlu0 %8265
        %8267 = vrot.lane.b32.xlu0 %v7817, 127
        %v8268 = vpop.permute.xlu0 %8267
        %v8269 = vsel %vm1971, %v8246, %v8258
        %v8270 = vsel %vm1971, %v8248, %v8260
        %v8271 = vsel %vm1971, %v8250, %v8262
        %v8272 = vsel %vm1971, %v8252, %v8264
        %v8273 = vsel %vm1971, %v8254, %v8266
        %v8274 = vsel %vm1971, %v8256, %v8268
        %v8275 = vsel %vm1971, %v8258, %v8246
        %v8276 = vsel %vm1971, %v8260, %v8248
        %v8277 = vsel %vm1971, %v8262, %v8250
        %v8278 = vsel %vm1971, %v8264, %v8252
        %v8279 = vsel %vm1971, %v8266, %v8254
        %v8280 = vsel %vm1971, %v8268, %v8256
        %v8281 = vmul.f32 %v8269, %v1974
        %v8282 = vmul.f32 %v8275, %v1975
        %v8283 = vmul.f32 %v8270, %v1974
        %v8284 = vmul.f32 %v8276, %v1975
        %v8285 = vmul.f32 %v8271, %v1974
        %v8286 = vmul.f32 %v8277, %v1975
        %v8287 = vmul.f32 %v8272, %v1974
        %v8288 = vmul.f32 %v8278, %v1975
        %v8289 = vmul.f32 %v8273, %v1974
        %v8290 = vmul.f32 %v8279, %v1975
        %v8291 = vmul.f32 %v8274, %v1974
        %v8292 = vmul.f32 %v8280, %v1975
        %8293 = vset.pattern.permute.xlu0 5
        %8294 = vperm.xlu0 %8293, %v5271
        %v8295 = vpop.permute.xlu0 %8294
        %8297 = vset.pattern.permute.xlu0 5
        %8298 = vperm.xlu0 %8297, %v5272
        %v8299 = vpop.permute.xlu0 %8298
        %8301 = vset.pattern.permute.xlu0 5
        %8302 = vperm.xlu0 %8301, %v5273
        %v8303 = vpop.permute.xlu0 %8302
        %8305 = vset.pattern.permute.xlu0 5
        %8306 = vperm.xlu0 %8305, %v5274
        %v8307 = vpop.permute.xlu0 %8306
        %8309 = vset.pattern.permute.xlu0 5
        %8310 = vperm.xlu0 %8309, %v5275
        %v8311 = vpop.permute.xlu0 %8310
        %8313 = vset.pattern.permute.xlu0 5
        %8314 = vperm.xlu0 %8313, %v5276
        %v8315 = vpop.permute.xlu0 %8314
        %v8317 = vmul.f32 %v8281, %v8295
        %v8318 = vmul.f32 %v8282, %v8295
        %v8319 = vmul.f32 %v8283, %v8299
        %v8320 = vmul.f32 %v8284, %v8299
        %v8321 = vmul.f32 %v8285, %v8303
        %v8322 = vmul.f32 %v8286, %v8303
        %v8323 = vmul.f32 %v8287, %v8307
        %v8324 = vmul.f32 %v8288, %v8307
        %v8325 = vmul.f32 %v8289, %v8311
        %v8326 = vmul.f32 %v8290, %v8311
        %v8327 = vmul.f32 %v8291, %v8315
        %v8328 = vmul.f32 %v8292, %v8315
        %v8329 = vadd.f32 %v8233, %v8317
        %v8330 = vadd.f32 %v8234, %v8318
        %v8331 = vadd.f32 %v8235, %v8319
        %v8332 = vadd.f32 %v8236, %v8320
        %v8333 = vadd.f32 %v8237, %v8321
        %v8334 = vadd.f32 %v8238, %v8322
        %v8335 = vadd.f32 %v8239, %v8323
        %v8336 = vadd.f32 %v8240, %v8324
        %v8337 = vadd.f32 %v8241, %v8325
        %v8338 = vadd.f32 %v8242, %v8326
        %v8339 = vadd.f32 %v8243, %v8327
        %v8340 = vadd.f32 %v8244, %v8328
        %8341 = vrot.lane.b32.xlu0 %v7496, 113
        %v8342 = vpop.permute.xlu0 %8341
        %8343 = vrot.lane.b32.xlu0 %v7500, 113
        %v8344 = vpop.permute.xlu0 %8343
        %8345 = vrot.lane.b32.xlu0 %v7504, 113
        %v8346 = vpop.permute.xlu0 %8345
        %8347 = vrot.lane.b32.xlu0 %v7508, 113
        %v8348 = vpop.permute.xlu0 %8347
        %8349 = vrot.lane.b32.xlu0 %v7512, 113
        %v8350 = vpop.permute.xlu0 %8349
        %8351 = vrot.lane.b32.xlu0 %v7516, 113
        %v8352 = vpop.permute.xlu0 %8351
        %8353 = vrot.lane.b32.xlu0 %v7797, 113
        %v8354 = vpop.permute.xlu0 %8353
        %8355 = vrot.lane.b32.xlu0 %v7801, 113
        %v8356 = vpop.permute.xlu0 %8355
        %8357 = vrot.lane.b32.xlu0 %v7805, 113
        %v8358 = vpop.permute.xlu0 %8357
        %8359 = vrot.lane.b32.xlu0 %v7809, 113
        %v8360 = vpop.permute.xlu0 %8359
        %8361 = vrot.lane.b32.xlu0 %v7813, 113
        %v8362 = vpop.permute.xlu0 %8361
        %8363 = vrot.lane.b32.xlu0 %v7817, 113
        %v8364 = vpop.permute.xlu0 %8363
        %v8365 = vsel %vm1990, %v8342, %v8354
        %v8366 = vsel %vm1990, %v8344, %v8356
        %v8367 = vsel %vm1990, %v8346, %v8358
        %v8368 = vsel %vm1990, %v8348, %v8360
        %v8369 = vsel %vm1990, %v8350, %v8362
        %v8370 = vsel %vm1990, %v8352, %v8364
        %v8371 = vsel %vm1990, %v8354, %v8342
        %v8372 = vsel %vm1990, %v8356, %v8344
        %v8373 = vsel %vm1990, %v8358, %v8346
        %v8374 = vsel %vm1990, %v8360, %v8348
        %v8375 = vsel %vm1990, %v8362, %v8350
        %v8376 = vsel %vm1990, %v8364, %v8352
        %v8377 = vmul.f32 %v8365, %v1993
        %v8378 = vmul.f32 %v8371, %v1994
        %v8379 = vmul.f32 %v8366, %v1993
        %v8380 = vmul.f32 %v8372, %v1994
        %v8381 = vmul.f32 %v8367, %v1993
        %v8382 = vmul.f32 %v8373, %v1994
        %v8383 = vmul.f32 %v8368, %v1993
        %v8384 = vmul.f32 %v8374, %v1994
        %v8385 = vmul.f32 %v8369, %v1993
        %v8386 = vmul.f32 %v8375, %v1994
        %v8387 = vmul.f32 %v8370, %v1993
        %v8388 = vmul.f32 %v8376, %v1994
        %8389 = vset.pattern.permute.xlu0 6
        %8390 = vperm.xlu0 %8389, %v5271
        %v8391 = vpop.permute.xlu0 %8390
        %8393 = vset.pattern.permute.xlu0 6
        %8394 = vperm.xlu0 %8393, %v5272
        %v8395 = vpop.permute.xlu0 %8394
        %8397 = vset.pattern.permute.xlu0 6
        %8398 = vperm.xlu0 %8397, %v5273
        %v8399 = vpop.permute.xlu0 %8398
        %8401 = vset.pattern.permute.xlu0 6
        %8402 = vperm.xlu0 %8401, %v5274
        %v8403 = vpop.permute.xlu0 %8402
        %8405 = vset.pattern.permute.xlu0 6
        %8406 = vperm.xlu0 %8405, %v5275
        %v8407 = vpop.permute.xlu0 %8406
        %8409 = vset.pattern.permute.xlu0 6
        %8410 = vperm.xlu0 %8409, %v5276
        %v8411 = vpop.permute.xlu0 %8410
        %v8413 = vmul.f32 %v8377, %v8391
        %v8414 = vmul.f32 %v8378, %v8391
        %v8415 = vmul.f32 %v8379, %v8395
        %v8416 = vmul.f32 %v8380, %v8395
        %v8417 = vmul.f32 %v8381, %v8399
        %v8418 = vmul.f32 %v8382, %v8399
        %v8419 = vmul.f32 %v8383, %v8403
        %v8420 = vmul.f32 %v8384, %v8403
        %v8421 = vmul.f32 %v8385, %v8407
        %v8422 = vmul.f32 %v8386, %v8407
        %v8423 = vmul.f32 %v8387, %v8411
        %v8424 = vmul.f32 %v8388, %v8411
        %v8425 = vadd.f32 %v8329, %v8413
        %v8426 = vadd.f32 %v8330, %v8414
        %v8427 = vadd.f32 %v8331, %v8415
        %v8428 = vadd.f32 %v8332, %v8416
        %v8429 = vadd.f32 %v8333, %v8417
        %v8430 = vadd.f32 %v8334, %v8418
        %v8431 = vadd.f32 %v8335, %v8419
        %v8432 = vadd.f32 %v8336, %v8420
        %v8433 = vadd.f32 %v8337, %v8421
        %v8434 = vadd.f32 %v8338, %v8422
        %v8435 = vadd.f32 %v8339, %v8423
        %v8436 = vadd.f32 %v8340, %v8424
        %8437 = vrot.lane.b32.xlu0 %v7496, 112
        %v8438 = vpop.permute.xlu0 %8437
        %8439 = vrot.lane.b32.xlu0 %v7500, 112
        %v8440 = vpop.permute.xlu0 %8439
        %8441 = vrot.lane.b32.xlu0 %v7504, 112
        %v8442 = vpop.permute.xlu0 %8441
        %8443 = vrot.lane.b32.xlu0 %v7508, 112
        %v8444 = vpop.permute.xlu0 %8443
        %8445 = vrot.lane.b32.xlu0 %v7512, 112
        %v8446 = vpop.permute.xlu0 %8445
        %8447 = vrot.lane.b32.xlu0 %v7516, 112
        %v8448 = vpop.permute.xlu0 %8447
        %8449 = vrot.lane.b32.xlu0 %v7797, 112
        %v8450 = vpop.permute.xlu0 %8449
        %8451 = vrot.lane.b32.xlu0 %v7801, 112
        %v8452 = vpop.permute.xlu0 %8451
        %8453 = vrot.lane.b32.xlu0 %v7805, 112
        %v8454 = vpop.permute.xlu0 %8453
        %8455 = vrot.lane.b32.xlu0 %v7809, 112
        %v8456 = vpop.permute.xlu0 %8455
        %8457 = vrot.lane.b32.xlu0 %v7813, 112
        %v8458 = vpop.permute.xlu0 %8457
        %8459 = vrot.lane.b32.xlu0 %v7817, 112
        %v8460 = vpop.permute.xlu0 %8459
        %v8461 = vsel %vm2009, %v8438, %v8450
        %v8462 = vsel %vm2009, %v8440, %v8452
        %v8463 = vsel %vm2009, %v8442, %v8454
        %v8464 = vsel %vm2009, %v8444, %v8456
        %v8465 = vsel %vm2009, %v8446, %v8458
        %v8466 = vsel %vm2009, %v8448, %v8460
        %v8467 = vsel %vm2009, %v8450, %v8438
        %v8468 = vsel %vm2009, %v8452, %v8440
        %v8469 = vsel %vm2009, %v8454, %v8442
        %v8470 = vsel %vm2009, %v8456, %v8444
        %v8471 = vsel %vm2009, %v8458, %v8446
        %v8472 = vsel %vm2009, %v8460, %v8448
        %v8473 = vmul.f32 %v8461, %v2012
        %v8474 = vmul.f32 %v8467, %v2013
        %v8475 = vmul.f32 %v8462, %v2012
        %v8476 = vmul.f32 %v8468, %v2013
        %v8477 = vmul.f32 %v8463, %v2012
        %v8478 = vmul.f32 %v8469, %v2013
        %v8479 = vmul.f32 %v8464, %v2012
        %v8480 = vmul.f32 %v8470, %v2013
        %v8481 = vmul.f32 %v8465, %v2012
        %v8482 = vmul.f32 %v8471, %v2013
        %v8483 = vmul.f32 %v8466, %v2012
        %v8484 = vmul.f32 %v8472, %v2013
        %8485 = vset.pattern.permute.xlu0 7
        %8486 = vperm.xlu0 %8485, %v5271
        %v8487 = vpop.permute.xlu0 %8486
        %8489 = vset.pattern.permute.xlu0 7
        %8490 = vperm.xlu0 %8489, %v5272
        %v8491 = vpop.permute.xlu0 %8490
        %8493 = vset.pattern.permute.xlu0 7
        %8494 = vperm.xlu0 %8493, %v5273
        %v8495 = vpop.permute.xlu0 %8494
        %8497 = vset.pattern.permute.xlu0 7
        %8498 = vperm.xlu0 %8497, %v5274
        %v8499 = vpop.permute.xlu0 %8498
        %8501 = vset.pattern.permute.xlu0 7
        %8502 = vperm.xlu0 %8501, %v5275
        %v8503 = vpop.permute.xlu0 %8502
        %8505 = vset.pattern.permute.xlu0 7
        %8506 = vperm.xlu0 %8505, %v5276
        %v8507 = vpop.permute.xlu0 %8506
        %v8509 = vmul.f32 %v8473, %v8487
        %v8510 = vmul.f32 %v8474, %v8487
        %v8511 = vmul.f32 %v8475, %v8491
        %v8512 = vmul.f32 %v8476, %v8491
        %v8513 = vmul.f32 %v8477, %v8495
        %v8514 = vmul.f32 %v8478, %v8495
        %v8515 = vmul.f32 %v8479, %v8499
        %v8516 = vmul.f32 %v8480, %v8499
        %v8517 = vmul.f32 %v8481, %v8503
        %v8518 = vmul.f32 %v8482, %v8503
        %v8519 = vmul.f32 %v8483, %v8507
        %v8520 = vmul.f32 %v8484, %v8507
        %v8521 = vadd.f32 %v8425, %v8509
        %v8522 = vadd.f32 %v8426, %v8510
        %v8523 = vadd.f32 %v8427, %v8511
        %v8524 = vadd.f32 %v8428, %v8512
        %v8525 = vadd.f32 %v8429, %v8513
        %v8526 = vadd.f32 %v8430, %v8514
        %v8527 = vadd.f32 %v8431, %v8515
        %v8528 = vadd.f32 %v8432, %v8516
        %v8529 = vadd.f32 %v8433, %v8517
        %v8530 = vadd.f32 %v8434, %v8518
        %v8531 = vadd.f32 %v8435, %v8519
        %v8532 = vadd.f32 %v8436, %v8520
        %8533 = vrot.lane.b32.xlu0 %v7496, 111
        %v8534 = vpop.permute.xlu0 %8533
        %8535 = vrot.lane.b32.xlu0 %v7500, 111
        %v8536 = vpop.permute.xlu0 %8535
        %8537 = vrot.lane.b32.xlu0 %v7504, 111
        %v8538 = vpop.permute.xlu0 %8537
        %8539 = vrot.lane.b32.xlu0 %v7508, 111
        %v8540 = vpop.permute.xlu0 %8539
        %8541 = vrot.lane.b32.xlu0 %v7512, 111
        %v8542 = vpop.permute.xlu0 %8541
        %8543 = vrot.lane.b32.xlu0 %v7516, 111
        %v8544 = vpop.permute.xlu0 %8543
        %8545 = vrot.lane.b32.xlu0 %v7797, 111
        %v8546 = vpop.permute.xlu0 %8545
        %8547 = vrot.lane.b32.xlu0 %v7801, 111
        %v8548 = vpop.permute.xlu0 %8547
        %8549 = vrot.lane.b32.xlu0 %v7805, 111
        %v8550 = vpop.permute.xlu0 %8549
        %8551 = vrot.lane.b32.xlu0 %v7809, 111
        %v8552 = vpop.permute.xlu0 %8551
        %8553 = vrot.lane.b32.xlu0 %v7813, 111
        %v8554 = vpop.permute.xlu0 %8553
        %8555 = vrot.lane.b32.xlu0 %v7817, 111
        %v8556 = vpop.permute.xlu0 %8555
        %v8557 = vsel %vm2028, %v8534, %v8546
        %v8558 = vsel %vm2028, %v8536, %v8548
        %v8559 = vsel %vm2028, %v8538, %v8550
        %v8560 = vsel %vm2028, %v8540, %v8552
        %v8561 = vsel %vm2028, %v8542, %v8554
        %v8562 = vsel %vm2028, %v8544, %v8556
        %v8563 = vsel %vm2028, %v8546, %v8534
        %v8564 = vsel %vm2028, %v8548, %v8536
        %v8565 = vsel %vm2028, %v8550, %v8538
        %v8566 = vsel %vm2028, %v8552, %v8540
        %v8567 = vsel %vm2028, %v8554, %v8542
        %v8568 = vsel %vm2028, %v8556, %v8544
        %v8569 = vmul.f32 %v8557, %v2031
        %v8570 = vmul.f32 %v8563, %v2032
        %v8571 = vmul.f32 %v8558, %v2031
        %v8572 = vmul.f32 %v8564, %v2032
        %v8573 = vmul.f32 %v8559, %v2031
        %v8574 = vmul.f32 %v8565, %v2032
        %v8575 = vmul.f32 %v8560, %v2031
        %v8576 = vmul.f32 %v8566, %v2032
        %v8577 = vmul.f32 %v8561, %v2031
        %v8578 = vmul.f32 %v8567, %v2032
        %v8579 = vmul.f32 %v8562, %v2031
        %v8580 = vmul.f32 %v8568, %v2032
        %8581 = vset.pattern.permute.xlu0 8
        %8582 = vperm.xlu0 %8581, %v5271
        %v8583 = vpop.permute.xlu0 %8582
        %8585 = vset.pattern.permute.xlu0 8
        %8586 = vperm.xlu0 %8585, %v5272
        %v8587 = vpop.permute.xlu0 %8586
        %8589 = vset.pattern.permute.xlu0 8
        %8590 = vperm.xlu0 %8589, %v5273
        %v8591 = vpop.permute.xlu0 %8590
        %8593 = vset.pattern.permute.xlu0 8
        %8594 = vperm.xlu0 %8593, %v5274
        %v8595 = vpop.permute.xlu0 %8594
        %8597 = vset.pattern.permute.xlu0 8
        %8598 = vperm.xlu0 %8597, %v5275
        %v8599 = vpop.permute.xlu0 %8598
        %8601 = vset.pattern.permute.xlu0 8
        %8602 = vperm.xlu0 %8601, %v5276
        %v8603 = vpop.permute.xlu0 %8602
        %v8605 = vmul.f32 %v8569, %v8583
        %v8606 = vmul.f32 %v8570, %v8583
        %v8607 = vmul.f32 %v8571, %v8587
        %v8608 = vmul.f32 %v8572, %v8587
        %v8609 = vmul.f32 %v8573, %v8591
        %v8610 = vmul.f32 %v8574, %v8591
        %v8611 = vmul.f32 %v8575, %v8595
        %v8612 = vmul.f32 %v8576, %v8595
        %v8613 = vmul.f32 %v8577, %v8599
        %v8614 = vmul.f32 %v8578, %v8599
        %v8615 = vmul.f32 %v8579, %v8603
        %v8616 = vmul.f32 %v8580, %v8603
        %v8617 = vadd.f32 %v8521, %v8605
        %v8618 = vadd.f32 %v8522, %v8606
        %v8619 = vadd.f32 %v8523, %v8607
        %v8620 = vadd.f32 %v8524, %v8608
        %v8621 = vadd.f32 %v8525, %v8609
        %v8622 = vadd.f32 %v8526, %v8610
        %v8623 = vadd.f32 %v8527, %v8611
        %v8624 = vadd.f32 %v8528, %v8612
        %v8625 = vadd.f32 %v8529, %v8613
        %v8626 = vadd.f32 %v8530, %v8614
        %v8627 = vadd.f32 %v8531, %v8615
        %v8628 = vadd.f32 %v8532, %v8616
        %v8629 = vmul.f32 %v8617, 0.5
        %v8630 = vmul.f32 %v8618, 0.5
        %v8631 = vmul.f32 %v8619, 0.5
        %v8632 = vmul.f32 %v8620, 0.5
        %v8633 = vmul.f32 %v8621, 0.5
        %v8634 = vmul.f32 %v8622, 0.5
        %v8635 = vmul.f32 %v8617, 0.044715
        %v8636 = vmul.f32 %v8618, 0.044715
        %v8637 = vmul.f32 %v8619, 0.044715
        %v8638 = vmul.f32 %v8620, 0.044715
        %v8639 = vmul.f32 %v8621, 0.044715
        %v8640 = vmul.f32 %v8622, 0.044715
        %v8641 = vmul.f32 %v8635, %v8617
        %v8642 = vmul.f32 %v8636, %v8618
        %v8643 = vmul.f32 %v8637, %v8619
        %v8644 = vmul.f32 %v8638, %v8620
        %v8645 = vmul.f32 %v8639, %v8621
        %v8646 = vmul.f32 %v8640, %v8622
        %v8647 = vmul.f32 %v8641, %v8617
        %v8648 = vmul.f32 %v8642, %v8618
        %v8649 = vmul.f32 %v8643, %v8619
        %v8650 = vmul.f32 %v8644, %v8620
        %v8651 = vmul.f32 %v8645, %v8621
        %v8652 = vmul.f32 %v8646, %v8622
        %v8653 = vadd.f32 %v8617, %v8647
        %v8654 = vadd.f32 %v8618, %v8648
        %v8655 = vadd.f32 %v8619, %v8649
        %v8656 = vadd.f32 %v8620, %v8650
        %v8657 = vadd.f32 %v8621, %v8651
        %v8658 = vadd.f32 %v8622, %v8652
        %v8659 = vmul.f32 %v8653, 0.7978846
        %v8660 = vmul.f32 %v8654, 0.7978846
        %v8661 = vmul.f32 %v8655, 0.7978846
        %v8662 = vmul.f32 %v8656, 0.7978846
        %v8663 = vmul.f32 %v8657, 0.7978846
        %v8664 = vmul.f32 %v8658, 0.7978846
        %v8665 = vtanh.pop %v8659
        %v8666 = vtanh.pop %v8660
        %v8667 = vtanh.pop %v8661
        %v8668 = vtanh.pop %v8662
        %v8669 = vtanh.pop %v8663
        %v8670 = vtanh.pop %v8664
        %v8671 = vadd.f32 %v8665, 1.0
        %v8672 = vadd.f32 %v8666, 1.0
        %v8673 = vadd.f32 %v8667, 1.0
        %v8674 = vadd.f32 %v8668, 1.0
        %v8675 = vadd.f32 %v8669, 1.0
        %v8676 = vadd.f32 %v8670, 1.0
        %v8677 = vmul.f32 %v8629, %v8671
        %v8678 = vmul.f32 %v8630, %v8672
        %v8679 = vmul.f32 %v8631, %v8673
        %v8680 = vmul.f32 %v8632, %v8674
        %v8681 = vmul.f32 %v8633, %v8675
        %v8682 = vmul.f32 %v8634, %v8676
        %v8683 = vmul.f32 %v8677, %v8623
        %v8684 = vmul.f32 %v8678, %v8624
        %v8685 = vmul.f32 %v8679, %v8625
        %v8686 = vmul.f32 %v8680, %v8626
        %v8687 = vmul.f32 %v8681, %v8627
        %v8688 = vmul.f32 %v8682, %v8628
        %vm8689 = vcmask 195584
        %v8691 = vsel %vm8689, %v5277, 0
        %8693 = vmatpush.msra.mxu0 0.0
        %8694 = vmatpush.msra.mxu0 0.0
        %8695 = vmatpush.msra.mxu0 0.0
        %8696 = vmatpush.msra.mxu0 0.0
        %8697 = vmatpush.msra.mxu0 0.0
        %8698 = vmatpush.msra.mxu0 0.0
        %8699 = vmatpush.msra.mxu0 0.0
        %8700 = vmatpush.msra.mxu0 0.0
        %8701 = vmatpush.msra.mxu0 0.0
        %8702 = vmatpush.msra.mxu0 0.0
        %8703 = vmatpush.msra.mxu0 0.0
        %8704 = vmatpush.msra.mxu0 0.0
        %8705 = vmatpush.msra.mxu0 0.0
        %v8706 = vand.u32 %v8687, 4294901760
        %8707 = vmatpush.msra.mxu0 %v8706
        %v8708 = vand.u32 %v8685, 4294901760
        %8709 = vmatpush.msra.mxu0 %v8708
        %v8710 = vand.u32 %v8683, 4294901760
        %8711 = vmatpush.msra.mxu0 %v8710
        %v8712 = vand.u32 %v8691, 4294901760
        %v8713 = vsub.f32 %v8691, %v8712
        %v8714 = vand.u32 %v8713, 4294901760
        %v8715 = vsub.f32 %v8713, %v8714
        %v8716 = vand.u32 %v8715, 4294901760
        %8717 = vmatmul.f32.gmra.mxu0 %v8716
        %v8718 = vpop.f32.mrf.mxu0
        %v8719 = vadd.f32 0.0, %v8718
        %8720 = vdwg.mxu0
        %8721 = vmatpush.msra.mxu0 0.0
        %8722 = vmatpush.msra.mxu0 0.0
        %8723 = vmatpush.msra.mxu0 0.0
        %8724 = vmatpush.msra.mxu0 0.0
        %8725 = vmatpush.msra.mxu0 0.0
        %8726 = vmatpush.msra.mxu0 0.0
        %8727 = vmatpush.msra.mxu0 0.0
        %8728 = vmatpush.msra.mxu0 0.0
        %8729 = vmatpush.msra.mxu0 0.0
        %8730 = vmatpush.msra.mxu0 0.0
        %8731 = vmatpush.msra.mxu0 0.0
        %8732 = vmatpush.msra.mxu0 0.0
        %8733 = vmatpush.msra.mxu0 0.0
        %v8734 = vand.u32 %v8687, 4294901760
        %v8735 = vsub.f32 %v8687, %v8734
        %v8736 = vand.u32 %v8735, 4294901760
        %v8737 = vsub.f32 %v8735, %v8736
        %v8738 = vand.u32 %v8737, 4294901760
        %8739 = vmatpush.msra.mxu0 %v8738
        %v8740 = vand.u32 %v8685, 4294901760
        %v8741 = vsub.f32 %v8685, %v8740
        %v8742 = vand.u32 %v8741, 4294901760
        %v8743 = vsub.f32 %v8741, %v8742
        %v8744 = vand.u32 %v8743, 4294901760
        %8745 = vmatpush.msra.mxu0 %v8744
        %v8746 = vand.u32 %v8683, 4294901760
        %v8747 = vsub.f32 %v8683, %v8746
        %v8748 = vand.u32 %v8747, 4294901760
        %v8749 = vsub.f32 %v8747, %v8748
        %v8750 = vand.u32 %v8749, 4294901760
        %8751 = vmatpush.msra.mxu0 %v8750
        %v8752 = vand.u32 %v8691, 4294901760
        %8753 = vmatmul.f32.gmra.mxu0 %v8752
        %v8754 = vpop.f32.mrf.mxu0
        %v8755 = vadd.f32 %v8719, %v8754
        %8756 = vdwg.mxu0
        %8757 = vmatpush.msra.mxu0 0.0
        %8758 = vmatpush.msra.mxu0 0.0
        %8759 = vmatpush.msra.mxu0 0.0
        %8760 = vmatpush.msra.mxu0 0.0
        %8761 = vmatpush.msra.mxu0 0.0
        %8762 = vmatpush.msra.mxu0 0.0
        %8763 = vmatpush.msra.mxu0 0.0
        %8764 = vmatpush.msra.mxu0 0.0
        %8765 = vmatpush.msra.mxu0 0.0
        %8766 = vmatpush.msra.mxu0 0.0
        %8767 = vmatpush.msra.mxu0 0.0
        %8768 = vmatpush.msra.mxu0 0.0
        %8769 = vmatpush.msra.mxu0 0.0
        %v8770 = vand.u32 %v8687, 4294901760
        %v8771 = vsub.f32 %v8687, %v8770
        %8772 = vmatpush.msra.mxu0 %v8771
        %v8773 = vand.u32 %v8685, 4294901760
        %v8774 = vsub.f32 %v8685, %v8773
        %8775 = vmatpush.msra.mxu0 %v8774
        %v8776 = vand.u32 %v8683, 4294901760
        %v8777 = vsub.f32 %v8683, %v8776
        %8778 = vmatpush.msra.mxu0 %v8777
        %v8779 = vand.u32 %v8691, 4294901760
        %v8780 = vsub.f32 %v8691, %v8779
        %8781 = vmatmul.f32.gmra.mxu0 %v8780
        %v8782 = vpop.f32.mrf.mxu0
        %v8783 = vadd.f32 %v8755, %v8782
        %8784 = vdwg.mxu0
        %8785 = vmatpush.msra.mxu0 0.0
        %8786 = vmatpush.msra.mxu0 0.0
        %8787 = vmatpush.msra.mxu0 0.0
        %8788 = vmatpush.msra.mxu0 0.0
        %8789 = vmatpush.msra.mxu0 0.0
        %8790 = vmatpush.msra.mxu0 0.0
        %8791 = vmatpush.msra.mxu0 0.0
        %8792 = vmatpush.msra.mxu0 0.0
        %8793 = vmatpush.msra.mxu0 0.0
        %8794 = vmatpush.msra.mxu0 0.0
        %8795 = vmatpush.msra.mxu0 0.0
        %8796 = vmatpush.msra.mxu0 0.0
        %8797 = vmatpush.msra.mxu0 0.0
        %v8798 = vand.u32 %v8687, 4294901760
        %8799 = vmatpush.msra.mxu0 %v8798
        %v8800 = vand.u32 %v8685, 4294901760
        %8801 = vmatpush.msra.mxu0 %v8800
        %v8802 = vand.u32 %v8683, 4294901760
        %8803 = vmatpush.msra.mxu0 %v8802
        %v8804 = vand.u32 %v8691, 4294901760
        %v8805 = vsub.f32 %v8691, %v8804
        %v8806 = vand.u32 %v8805, 4294901760
        %8807 = vmatmul.f32.gmra.mxu0 %v8806
        %v8808 = vpop.f32.mrf.mxu0
        %v8809 = vadd.f32 %v8783, %v8808
        %8810 = vdwg.mxu0
        %8811 = vmatpush.msra.mxu0 0.0
        %8812 = vmatpush.msra.mxu0 0.0
        %8813 = vmatpush.msra.mxu0 0.0
        %8814 = vmatpush.msra.mxu0 0.0
        %8815 = vmatpush.msra.mxu0 0.0
        %8816 = vmatpush.msra.mxu0 0.0
        %8817 = vmatpush.msra.mxu0 0.0
        %8818 = vmatpush.msra.mxu0 0.0
        %8819 = vmatpush.msra.mxu0 0.0
        %8820 = vmatpush.msra.mxu0 0.0
        %8821 = vmatpush.msra.mxu0 0.0
        %8822 = vmatpush.msra.mxu0 0.0
        %8823 = vmatpush.msra.mxu0 0.0
        %v8824 = vand.u32 %v8687, 4294901760
        %v8825 = vsub.f32 %v8687, %v8824
        %v8826 = vand.u32 %v8825, 4294901760
        %8827 = vmatpush.msra.mxu0 %v8826
        %v8828 = vand.u32 %v8685, 4294901760
        %v8829 = vsub.f32 %v8685, %v8828
        %v8830 = vand.u32 %v8829, 4294901760
        %8831 = vmatpush.msra.mxu0 %v8830
        %v8832 = vand.u32 %v8683, 4294901760
        %v8833 = vsub.f32 %v8683, %v8832
        %v8834 = vand.u32 %v8833, 4294901760
        %8835 = vmatpush.msra.mxu0 %v8834
        %v8836 = vand.u32 %v8691, 4294901760
        %8837 = vmatmul.f32.gmra.mxu0 %v8836
        %v8838 = vpop.f32.mrf.mxu0
        %v8839 = vadd.f32 %v8809, %v8838
        %8840 = vdwg.mxu0
        %8841 = vmatpush.msra.mxu0 0.0
        %8842 = vmatpush.msra.mxu0 0.0
        %8843 = vmatpush.msra.mxu0 0.0
        %8844 = vmatpush.msra.mxu0 0.0
        %8845 = vmatpush.msra.mxu0 0.0
        %8846 = vmatpush.msra.mxu0 0.0
        %8847 = vmatpush.msra.mxu0 0.0
        %8848 = vmatpush.msra.mxu0 0.0
        %8849 = vmatpush.msra.mxu0 0.0
        %8850 = vmatpush.msra.mxu0 0.0
        %8851 = vmatpush.msra.mxu0 0.0
        %8852 = vmatpush.msra.mxu0 0.0
        %8853 = vmatpush.msra.mxu0 0.0
        %v8854 = vand.u32 %v8687, 4294901760
        %8855 = vmatpush.msra.mxu0 %v8854
        %v8856 = vand.u32 %v8685, 4294901760
        %8857 = vmatpush.msra.mxu0 %v8856
        %v8858 = vand.u32 %v8683, 4294901760
        %8859 = vmatpush.msra.mxu0 %v8858
        %v8860 = vand.u32 %v8691, 4294901760
        %8861 = vmatmul.f32.gmra.mxu0 %v8860
        %v8862 = vpop.f32.mrf.mxu0
        %v8863 = vadd.f32 %v8839, %v8862
        %8864 = vdwg.mxu0
        %8865 = vmatpush.msra.mxu0 0.0
        %8866 = vmatpush.msra.mxu0 0.0
        %8867 = vmatpush.msra.mxu0 0.0
        %8868 = vmatpush.msra.mxu0 0.0
        %8869 = vmatpush.msra.mxu0 0.0
        %8870 = vmatpush.msra.mxu0 0.0
        %8871 = vmatpush.msra.mxu0 0.0
        %8872 = vmatpush.msra.mxu0 0.0
        %8873 = vmatpush.msra.mxu0 0.0
        %8874 = vmatpush.msra.mxu0 0.0
        %8875 = vmatpush.msra.mxu0 0.0
        %8876 = vmatpush.msra.mxu0 0.0
        %8877 = vmatpush.msra.mxu0 0.0
        %v8878 = vand.u32 %v8688, 4294901760
        %8879 = vmatpush.msra.mxu0 %v8878
        %v8880 = vand.u32 %v8686, 4294901760
        %8881 = vmatpush.msra.mxu0 %v8880
        %v8882 = vand.u32 %v8684, 4294901760
        %8883 = vmatpush.msra.mxu0 %v8882
        %v8884 = vand.u32 %v8691, 4294901760
        %v8885 = vsub.f32 %v8691, %v8884
        %v8886 = vand.u32 %v8885, 4294901760
        %v8887 = vsub.f32 %v8885, %v8886
        %v8888 = vand.u32 %v8887, 4294901760
        %8889 = vmatmul.f32.gmra.mxu0 %v8888
        %v8890 = vpop.f32.mrf.mxu0
        %v8891 = vadd.f32 0.0, %v8890
        %8892 = vdwg.mxu0
        %8893 = vmatpush.msra.mxu0 0.0
        %8894 = vmatpush.msra.mxu0 0.0
        %8895 = vmatpush.msra.mxu0 0.0
        %8896 = vmatpush.msra.mxu0 0.0
        %8897 = vmatpush.msra.mxu0 0.0
        %8898 = vmatpush.msra.mxu0 0.0
        %8899 = vmatpush.msra.mxu0 0.0
        %8900 = vmatpush.msra.mxu0 0.0
        %8901 = vmatpush.msra.mxu0 0.0
        %8902 = vmatpush.msra.mxu0 0.0
        %8903 = vmatpush.msra.mxu0 0.0
        %8904 = vmatpush.msra.mxu0 0.0
        %8905 = vmatpush.msra.mxu0 0.0
        %v8906 = vand.u32 %v8688, 4294901760
        %v8907 = vsub.f32 %v8688, %v8906
        %v8908 = vand.u32 %v8907, 4294901760
        %v8909 = vsub.f32 %v8907, %v8908
        %v8910 = vand.u32 %v8909, 4294901760
        %8911 = vmatpush.msra.mxu0 %v8910
        %v8912 = vand.u32 %v8686, 4294901760
        %v8913 = vsub.f32 %v8686, %v8912
        %v8914 = vand.u32 %v8913, 4294901760
        %v8915 = vsub.f32 %v8913, %v8914
        %v8916 = vand.u32 %v8915, 4294901760
        %8917 = vmatpush.msra.mxu0 %v8916
        %v8918 = vand.u32 %v8684, 4294901760
        %v8919 = vsub.f32 %v8684, %v8918
        %v8920 = vand.u32 %v8919, 4294901760
        %v8921 = vsub.f32 %v8919, %v8920
        %v8922 = vand.u32 %v8921, 4294901760
        %8923 = vmatpush.msra.mxu0 %v8922
        %v8924 = vand.u32 %v8691, 4294901760
        %8925 = vmatmul.f32.gmra.mxu0 %v8924
        %v8926 = vpop.f32.mrf.mxu0
        %v8927 = vadd.f32 %v8891, %v8926
        %8928 = vdwg.mxu0
        %8929 = vmatpush.msra.mxu0 0.0
        %8930 = vmatpush.msra.mxu0 0.0
        %8931 = vmatpush.msra.mxu0 0.0
        %8932 = vmatpush.msra.mxu0 0.0
        %8933 = vmatpush.msra.mxu0 0.0
        %8934 = vmatpush.msra.mxu0 0.0
        %8935 = vmatpush.msra.mxu0 0.0
        %8936 = vmatpush.msra.mxu0 0.0
        %8937 = vmatpush.msra.mxu0 0.0
        %8938 = vmatpush.msra.mxu0 0.0
        %8939 = vmatpush.msra.mxu0 0.0
        %8940 = vmatpush.msra.mxu0 0.0
        %8941 = vmatpush.msra.mxu0 0.0
        %v8942 = vand.u32 %v8688, 4294901760
        %v8943 = vsub.f32 %v8688, %v8942
        %8944 = vmatpush.msra.mxu0 %v8943
        %v8945 = vand.u32 %v8686, 4294901760
        %v8946 = vsub.f32 %v8686, %v8945
        %8947 = vmatpush.msra.mxu0 %v8946
        %v8948 = vand.u32 %v8684, 4294901760
        %v8949 = vsub.f32 %v8684, %v8948
        %8950 = vmatpush.msra.mxu0 %v8949
        %v8951 = vand.u32 %v8691, 4294901760
        %v8952 = vsub.f32 %v8691, %v8951
        %8953 = vmatmul.f32.gmra.mxu0 %v8952
        %v8954 = vpop.f32.mrf.mxu0
        %v8955 = vadd.f32 %v8927, %v8954
        %8956 = vdwg.mxu0
        %8957 = vmatpush.msra.mxu0 0.0
        %8958 = vmatpush.msra.mxu0 0.0
        %8959 = vmatpush.msra.mxu0 0.0
        %8960 = vmatpush.msra.mxu0 0.0
        %8961 = vmatpush.msra.mxu0 0.0
        %8962 = vmatpush.msra.mxu0 0.0
        %8963 = vmatpush.msra.mxu0 0.0
        %8964 = vmatpush.msra.mxu0 0.0
        %8965 = vmatpush.msra.mxu0 0.0
        %8966 = vmatpush.msra.mxu0 0.0
        %8967 = vmatpush.msra.mxu0 0.0
        %8968 = vmatpush.msra.mxu0 0.0
        %8969 = vmatpush.msra.mxu0 0.0
        %v8970 = vand.u32 %v8688, 4294901760
        %8971 = vmatpush.msra.mxu0 %v8970
        %v8972 = vand.u32 %v8686, 4294901760
        %8973 = vmatpush.msra.mxu0 %v8972
        %v8974 = vand.u32 %v8684, 4294901760
        %8975 = vmatpush.msra.mxu0 %v8974
        %v8976 = vand.u32 %v8691, 4294901760
        %v8977 = vsub.f32 %v8691, %v8976
        %v8978 = vand.u32 %v8977, 4294901760
        %8979 = vmatmul.f32.gmra.mxu0 %v8978
        %v8980 = vpop.f32.mrf.mxu0
        %v8981 = vadd.f32 %v8955, %v8980
        %8982 = vdwg.mxu0
        %8983 = vmatpush.msra.mxu0 0.0
        %8984 = vmatpush.msra.mxu0 0.0
        %8985 = vmatpush.msra.mxu0 0.0
        %8986 = vmatpush.msra.mxu0 0.0
        %8987 = vmatpush.msra.mxu0 0.0
        %8988 = vmatpush.msra.mxu0 0.0
        %8989 = vmatpush.msra.mxu0 0.0
        %8990 = vmatpush.msra.mxu0 0.0
        %8991 = vmatpush.msra.mxu0 0.0
        %8992 = vmatpush.msra.mxu0 0.0
        %8993 = vmatpush.msra.mxu0 0.0
        %8994 = vmatpush.msra.mxu0 0.0
        %8995 = vmatpush.msra.mxu0 0.0
        %v8996 = vand.u32 %v8688, 4294901760
        %v8997 = vsub.f32 %v8688, %v8996
        %v8998 = vand.u32 %v8997, 4294901760
        %8999 = vmatpush.msra.mxu0 %v8998
        %v9000 = vand.u32 %v8686, 4294901760
        %v9001 = vsub.f32 %v8686, %v9000
        %v9002 = vand.u32 %v9001, 4294901760
        %9003 = vmatpush.msra.mxu0 %v9002
        %v9004 = vand.u32 %v8684, 4294901760
        %v9005 = vsub.f32 %v8684, %v9004
        %v9006 = vand.u32 %v9005, 4294901760
        %9007 = vmatpush.msra.mxu0 %v9006
        %v9008 = vand.u32 %v8691, 4294901760
        %9009 = vmatmul.f32.gmra.mxu0 %v9008
        %v9010 = vpop.f32.mrf.mxu0
        %v9011 = vadd.f32 %v8981, %v9010
        %9012 = vdwg.mxu0
        %9013 = vmatpush.msra.mxu0 0.0
        %9014 = vmatpush.msra.mxu0 0.0
        %9015 = vmatpush.msra.mxu0 0.0
        %9016 = vmatpush.msra.mxu0 0.0
        %9017 = vmatpush.msra.mxu0 0.0
        %9018 = vmatpush.msra.mxu0 0.0
        %9019 = vmatpush.msra.mxu0 0.0
        %9020 = vmatpush.msra.mxu0 0.0
        %9021 = vmatpush.msra.mxu0 0.0
        %9022 = vmatpush.msra.mxu0 0.0
        %9023 = vmatpush.msra.mxu0 0.0
        %9024 = vmatpush.msra.mxu0 0.0
        %9025 = vmatpush.msra.mxu0 0.0
        %v9026 = vand.u32 %v8688, 4294901760
        %9027 = vmatpush.msra.mxu0 %v9026
        %v9028 = vand.u32 %v8686, 4294901760
        %9029 = vmatpush.msra.mxu0 %v9028
        %v9030 = vand.u32 %v8684, 4294901760
        %9031 = vmatpush.msra.mxu0 %v9030
        %v9032 = vand.u32 %v8691, 4294901760
        %9033 = vmatmul.f32.gmra.mxu0 %v9032
        %v9034 = vpop.f32.mrf.mxu0
        %v9035 = vadd.f32 %v9011, %v9034
        %9036 = vdwg.mxu0
        %v9037 = vadd.f32 %v7127, %v8863
        %v9038 = vadd.f32 %v7128, %v9035
        %v9039 = vadd.f32 %v9037, %v3238
        %v9040 = vadd.f32 %v9038, %v3239
        %9041 = vst [vmem:[%s298] sm:$0xff] %v9039
        %9042 = vst [vmem:[%s298 + $0x8] sm:$0xff] %v9040
        %s9043 = sand.u32 %s203, 1
        %s9044 = scalar_lea.sflag [#allocation3], %s9043
        %s9045 = sand.u32 %s203, 1
        %s9046 = smul.addr %s9045, 16
        %s9047 = scalar_lea.vmem [#allocation2], %s9046
        // Predicated region
        $region53: #{tpu_custom_call.1} parent=51 // pred_check
          %p9048 = pneg %p213
        $region54: #{tpu_custom_call.1} parent=51 // pred_check_branch
          %9050 = sbr.rel (%p9048) target = $region56
        $region55: #{tpu_custom_call.1} parent=51 // pred_region
          %9052 = vsyncadd %s9044, 0
          %s9053 = smul.addr %s22, 2
          %s9054 = smul.addr %s9053, 8
          %s9055 = scalar_lea.hbm %s8, %s9054
          %s9057 = sshll.u32 %s9047, 4
          %s9058 = int_to_ptr.vmem [resolvable:$true] %s9057
          %s9059 = sshll.u32 %s9055, 4
          %s9060 = int_to_ptr.hbm [resolvable:$true] %s9059
          %9062 = dma.vmem_to_hbm [thread:$0]  %s9058, 256, %s9060, %s9044
        $region56: #{tpu_custom_call.1} parent=51 // pred_fallthru
          _
      $region52: #{tpu_custom_call.1} parent=5 // pred_fallthru
        _
      %p9063 = scmp.le.s32.totalorder 2, %s17
      // Predicated region
      $region57: #{tpu_custom_call.1} parent=5 // pred_check
        %p9064 = pneg %p9063
      $region58: #{tpu_custom_call.1} parent=5 // pred_check_branch
        %9066 = sbr.rel (%p9064) target = $region60
      $region59: #{tpu_custom_call.1} parent=5 // pred_region
        %s9067 = ssub.s32 %s17, 2
        // Predicated region
        $region61: #{tpu_custom_call.1} parent=59 // pred_check
          %p9068 = pneg %p219
        $region62: #{tpu_custom_call.1} parent=59 // pred_check_branch
          %9070 = sbr.rel (%p9068) target = $region64
        $region63: #{tpu_custom_call.1} parent=59 // pred_region
          %s9071 = sand.u32 %s204, 1
          %s9072 = scalar_lea.sflag [#allocation3], %s9071
          %s9073 = sand.u32 %s204, 1
          %s9074 = smul.addr %s9073, 16
          %s9075 = scalar_lea.vmem [#allocation2], %s9074
          %9077 = dma.done %s9072, 256
        $region64: #{tpu_custom_call.1} parent=59 // pred_fallthru
          _
      $region60: #{tpu_custom_call.1} parent=5 // pred_fallthru
        _
    $region6: #{tpu_custom_call.1} parent=1 // loop_footer
      %s21 = sadd.s32 1, %s17
    $region7: #{tpu_custom_call.1} parent=1 // loop_footer_branch
      %16 = sbr.rel target = $region3
    $region8: #{tpu_custom_call.1} parent=1 // loop_exit
      _
    %9078 = vsyncpa [#allocation3], 1
    %s9079 = scalar_lea.sflag [#allocation3], 1
    %9080 = vsyncpa %s9079, 1

</llo_original>
